<compile_context>
chip_gen: v7x
topology: tpu7x:2x2x1
jax: 0.10.0
libtpu: 0.0.40
codegen_flags: <defaults>
</compile_context>

<pallas_src>
import functools

import jax
import jax.numpy as jnp
import numpy as np
from jax import lax
from jax.experimental import pallas as pl
from jax.experimental.pallas import tpu as pltpu


def resblock_kernel(xp_ref, w1_ref, s1_ref, b1_ref, w2_ref, s2_ref, b2_ref,
                    o_ref, mid_ref, *, padl, th):
    # xp_ref : (H+2, Wp, Cin)    bf16 padded input, image at rows [1,1+H),
    #                            cols [padl, padl+W)
    # w1_ref : (3, 3, Cin, Cmid) bf16 conv1 weights (HWIO)
    # s1/b1  : (1, Cmid)         f32 folded BN1 scale / bias (incl. conv bias)
    # w2_ref : (3, 3, Cmid, Cout) bf16
    # s2/b2  : (1, Cout)         f32
    # o_ref  : (H, W, Cout)      f32 output
    # mid_ref: (H+2, Wp, Cmid)   bf16 VMEM scratch (padded intermediate)
    H, W, Cout = o_ref.shape
    Cin = w1_ref.shape[2]
    Cmid = w1_ref.shape[3]
    Wp = xp_ref.shape[1]
    nblk = H // th

    # Zero only the halo strips of the mid scratch (interior is fully
    # overwritten below).  Re-done each grid step so results are correct when
    # the batch axis is sharded across TensorCores.
    zrow = jnp.zeros((1, Wp, Cmid), mid_ref.dtype)
    zcol = jnp.zeros((H, 1, Cmid), mid_ref.dtype)
    mid_ref[0:1, :, :] = zrow
    mid_ref[H + 1:H + 2, :, :] = zrow
    mid_ref[1:1 + H, padl - 1:padl, :] = zcol
    mid_ref[1:1 + H, padl + W:padl + W + 1, :] = zcol

    # ---- conv1 (3x3, pad=1) + BN1 + ReLU, row-block tiled ----
    for rb in range(nblk):
        r0 = rb * th
        acc = jnp.zeros((th * W, Cmid), jnp.float32)
        for dy in range(3):
            for dx in range(3):
                patch = xp_ref[r0 + dy:r0 + dy + th,
                               padl - 1 + dx:padl - 1 + dx + W, :]
                acc = acc + jnp.dot(patch.reshape(th * W, Cin),
                                    w1_ref[dy, dx],
                                    preferred_element_type=jnp.float32)
        y1 = jnp.maximum(acc * s1_ref[0] + b1_ref[0], 0.0)
        mid_ref[1 + r0:1 + r0 + th, padl:padl + W, :] = (
            y1.reshape(th, W, Cmid).astype(mid_ref.dtype))

    # ---- conv2 (3x3, pad=1) + BN2 + residual add + ReLU, row-block tiled ----
    for rb in range(nblk):
        r0 = rb * th
        acc = jnp.zeros((th * W, Cout), jnp.float32)
        for dy in range(3):
            for dx in range(3):
                patch = mid_ref[r0 + dy:r0 + dy + th,
                                padl - 1 + dx:padl - 1 + dx + W, :]
                acc = acc + jnp.dot(patch.reshape(th * W, Cmid),
                                    w2_ref[dy, dx],
                                    preferred_element_type=jnp.float32)
        y2 = acc * s2_ref[0] + b2_ref[0]
        xc = xp_ref[1 + r0:1 + r0 + th, padl:padl + W, :]
        xc = xc.reshape(th * W, Cin).astype(jnp.float32)
        out = jnp.maximum(xc + y2, 0.0)
        o_ref[r0:r0 + th, :, :] = out.reshape(th, W, Cout).astype(o_ref.dtype)


def _pick_row_block(H, W, Cmax, budget_bytes=64 * 1024):
    """Largest sublane-friendly row-block height dividing H whose per-block
    f32 accumulator (th*W x Cmax) stays roughly vreg-file sized."""
    for th in (8, 4, 2):
        if H % th == 0 and th * W * Cmax * 4 <= budget_bytes:
            return th
    return 1


def resblock_pallas(x_nchw, w1, s1, b1, w2, s2, b2):
    """x_nchw: (N, Cin, H, W) float32. Returns (N, Cout, H, W) float32."""
    N, Cin, H, W = x_nchw.shape
    Cmid = w1.shape[3]
    Cout = w2.shape[3]
    if Cin != Cout:
        raise ValueError("ResBlock residual add requires in_channels == "
                         f"out_channels (got {Cin} vs {Cout}).")

    Hp = H + 2
    # Left halo padded to a full sublane group so interior loads/stores start
    # at an aligned W offset; total padded width is a multiple of 8.
    padl = 8
    Wp = ((padl + W + 1 + 7) // 8) * 8
    th = _pick_row_block(H, W, max(Cmid, Cout))

    # bf16 activations / weights; BN + residual math and accumulation in f32.
    x_nhwc = jnp.transpose(x_nchw, (0, 2, 3, 1)).astype(jnp.bfloat16)
    x_pad = jnp.pad(x_nhwc, ((0, 0), (1, 1), (padl, Wp - padl - W), (0, 0)))
    w1 = w1.astype(jnp.bfloat16)
    w2 = w2.astype(jnp.bfloat16)
    s1 = s1.astype(jnp.float32)
    b1 = b1.astype(jnp.float32)
    s2 = s2.astype(jnp.float32)
    b2 = b2.astype(jnp.float32)

    kernel = functools.partial(resblock_kernel, padl=padl, th=th)

    out_nhwc = pl.pallas_call(
        kernel,
        out_shape=jax.ShapeDtypeStruct((N, H, W, Cout), jnp.float32),
        grid_spec=pltpu.PrefetchScalarGridSpec(
            num_scalar_prefetch=0,
            grid=(N,),
            in_specs=[
                pl.BlockSpec((None, Hp, Wp, Cin), lambda n: (n, 0, 0, 0)),
                pl.BlockSpec((3, 3, Cin, Cmid), lambda n: (0, 0, 0, 0)),
                pl.BlockSpec((1, Cmid), lambda n: (0, 0)),
                pl.BlockSpec((1, Cmid), lambda n: (0, 0)),
                pl.BlockSpec((3, 3, Cmid, Cout), lambda n: (0, 0, 0, 0)),
                pl.BlockSpec((1, Cout), lambda n: (0, 0)),
                pl.BlockSpec((1, Cout), lambda n: (0, 0)),
            ],
            out_specs=pl.BlockSpec((None, H, W, Cout), lambda n: (n, 0, 0, 0)),
            scratch_shapes=[pltpu.VMEM((Hp, Wp, Cmid), jnp.bfloat16)],
        ),
        compiler_params=pltpu.CompilerParams(
            dimension_semantics=("parallel",),   # batch elements independent
            vmem_limit_bytes=64 * 1024 * 1024),
    )(x_pad, w1, s1, b1, w2, s2, b2)

    return jnp.transpose(out_nhwc, (0, 3, 1, 2))


def resblock_reference(x_nchw, w1, s1, b1, w2, s2, b2):
    """Pure-JAX reference with the same bf16 operand / f32 accumulation scheme."""
    dn = ('NHWC', 'HWIO', 'NHWC')
    x = jnp.transpose(x_nchw, (0, 2, 3, 1)).astype(jnp.bfloat16)
    w1 = w1.astype(jnp.bfloat16)
    w2 = w2.astype(jnp.bfloat16)
    y = lax.conv_general_dilated(x, w1, (1, 1), 'SAME', dimension_numbers=dn,
                                 preferred_element_type=jnp.float32)
    y = jnp.maximum(y * s1 + b1, 0.0).astype(jnp.bfloat16)
    y = lax.conv_general_dilated(y, w2, (1, 1), 'SAME', dimension_numbers=dn,
                                 preferred_element_type=jnp.float32)
    y = y * s2 + b2
    out = jnp.maximum(x.astype(jnp.float32) + y, 0.0)
    return jnp.transpose(out, (0, 3, 1, 2))


def fold_bn(conv_bias, gamma, beta, mean, var, eps=1e-5):
    """Fold conv bias + eval-mode BatchNorm into per-channel scale/bias."""
    scale = gamma / jnp.sqrt(var + eps)
    bias = beta + scale * (conv_bias - mean)
    return scale[None, :], bias[None, :]   # (1, C) each


if __name__ == "__main__":
    # Small synthetic config (ResBlock defaults are 256/256/256; scaled down).
    N, Cin, Cmid, Cout, H, W = 2, 4, 8, 4, 16, 16
    assert Cin == Cout  # residual add requires matching channels

    key = jax.random.PRNGKey(0)
    ks = jax.random.split(key, 16)

    x = jax.random.normal(ks[0], (N, Cin, H, W), jnp.float32)

    # Conv weights in HWIO layout (PyTorch OIHW -> transpose (2,3,1,0)).
    w1 = 0.2 * jax.random.normal(ks[1], (3, 3, Cin, Cmid), jnp.float32)
    cb1 = 0.1 * jax.random.normal(ks[2], (Cmid,), jnp.float32)
    w2 = 0.2 * jax.random.normal(ks[3], (3, 3, Cmid, Cout), jnp.float32)
    cb2 = 0.1 * jax.random.normal(ks[4], (Cout,), jnp.float32)

    # BatchNorm (eval-mode) parameters.
    g1 = 1.0 + 0.1 * jax.random.normal(ks[5], (Cmid,), jnp.float32)
    be1 = 0.1 * jax.random.normal(ks[6], (Cmid,), jnp.float32)
    m1 = 0.1 * jax.random.normal(ks[7], (Cmid,), jnp.float32)
    v1 = 0.5 + jnp.abs(jax.random.normal(ks[8], (Cmid,), jnp.float32))
    g2 = 1.0 + 0.1 * jax.random.normal(ks[9], (Cout,), jnp.float32)
    be2 = 0.1 * jax.random.normal(ks[10], (Cout,), jnp.float32)
    m2 = 0.1 * jax.random.normal(ks[11], (Cout,), jnp.float32)
    v2 = 0.5 + jnp.abs(jax.random.normal(ks[12], (Cout,), jnp.float32))

    s1, b1 = fold_bn(cb1, g1, be1, m1, v1)
    s2, b2 = fold_bn(cb2, g2, be2, m2, v2)

    out = jax.jit(resblock_pallas)(x, w1, s1, b1, w2, s2, b2)
    out = jax.block_until_ready(out)

    ref = resblock_reference(x, w1, s1, b1, w2, s2, b2)
    np.testing.assert_allclose(np.asarray(out), np.asarray(ref),
                               rtol=1e-2, atol=1e-2)
    print("KERNEL_OK")
</pallas_src>

<mosaic_0001>
module attributes {stable_mosaic.version = 11 : i64} {
  func.func @resblock_kernel(%arg0: i32, %arg1: memref<1x18x32x4xbf16, #tpu.memory_space<vmem>>, %arg2: memref<3x3x4x8xbf16, #tpu.memory_space<vmem>>, %arg3: memref<1x8xf32, #tpu.memory_space<vmem>>, %arg4: memref<1x8xf32, #tpu.memory_space<vmem>>, %arg5: memref<3x3x8x4xbf16, #tpu.memory_space<vmem>>, %arg6: memref<1x4xf32, #tpu.memory_space<vmem>>, %arg7: memref<1x4xf32, #tpu.memory_space<vmem>>, %arg8: memref<1x16x16x4xf32, #tpu.memory_space<vmem>>, %arg9: memref<18x32x8xbf16, #tpu.memory_space<vmem>>) attributes {dimension_semantics = [#tpu.dimension_semantics<parallel>], iteration_bounds = array<i64: 2>, scalar_prefetch = 0 : i64, scratch_operands = 1 : i64, tpu.core_type = #tpu.core_type<tc>, window_params = [{transform_indices = @transform_0, window_bounds = array<i64: 1, 18, 32, 4>}, {pipeline_mode = #tpu.pipeline_mode<synchronous>, transform_indices = @transform_1, window_bounds = array<i64: 3, 3, 4, 8>}, {pipeline_mode = #tpu.pipeline_mode<synchronous>, transform_indices = @transform_2, window_bounds = array<i64: 1, 8>}, {pipeline_mode = #tpu.pipeline_mode<synchronous>, transform_indices = @transform_3, window_bounds = array<i64: 1, 8>}, {pipeline_mode = #tpu.pipeline_mode<synchronous>, transform_indices = @transform_4, window_bounds = array<i64: 3, 3, 8, 4>}, {pipeline_mode = #tpu.pipeline_mode<synchronous>, transform_indices = @transform_5, window_bounds = array<i64: 1, 4>}, {pipeline_mode = #tpu.pipeline_mode<synchronous>, transform_indices = @transform_6, window_bounds = array<i64: 1, 4>}, {transform_indices = @transform_7, window_bounds = array<i64: 1, 16, 16, 4>}]} {
    %cst = arith.constant 0.000000e+00 : bf16
    %0 = vector.broadcast %cst : bf16 to vector<1x32x8xbf16>
    %cst_0 = arith.constant 0.000000e+00 : bf16
    %1 = vector.broadcast %cst_0 : bf16 to vector<16x1x8xbf16>
    %c0 = arith.constant 0 : index
    %c0_1 = arith.constant 0 : index
    %c0_2 = arith.constant 0 : index
    %2 = vector.load %arg9[%c0, %c0_1, %c0_2] : memref<18x32x8xbf16, #tpu.memory_space<vmem>>, vector<1x32x8xbf16>
    tpu.vector_store %arg9[%c0, %c0_1, %c0_2], %0 {strides = array<i32>} : memref<18x32x8xbf16, #tpu.memory_space<vmem>>, vector<1x32x8xbf16>,
    %c17 = arith.constant 17 : index
    %c0_3 = arith.constant 0 : index
    %c0_4 = arith.constant 0 : index
    %3 = vector.load %arg9[%c17, %c0_3, %c0_4] : memref<18x32x8xbf16, #tpu.memory_space<vmem>>, vector<1x32x8xbf16>
    tpu.vector_store %arg9[%c17, %c0_3, %c0_4], %0 {strides = array<i32>} : memref<18x32x8xbf16, #tpu.memory_space<vmem>>, vector<1x32x8xbf16>,
    %c1 = arith.constant 1 : index
    %c7 = arith.constant 7 : index
    %c0_5 = arith.constant 0 : index
    %4 = vector.load %arg9[%c1, %c7, %c0_5] : memref<18x32x8xbf16, #tpu.memory_space<vmem>>, vector<16x1x8xbf16>
    tpu.vector_store %arg9[%c1, %c7, %c0_5], %1 {strides = array<i32>} : memref<18x32x8xbf16, #tpu.memory_space<vmem>>, vector<16x1x8xbf16>,
    %c1_6 = arith.constant 1 : index
    %c24 = arith.constant 24 : index
    %c0_7 = arith.constant 0 : index
    %5 = vector.load %arg9[%c1_6, %c24, %c0_7] : memref<18x32x8xbf16, #tpu.memory_space<vmem>>, vector<16x1x8xbf16>
    tpu.vector_store %arg9[%c1_6, %c24, %c0_7], %1 {strides = array<i32>} : memref<18x32x8xbf16, #tpu.memory_space<vmem>>, vector<16x1x8xbf16>,
    %cst_8 = arith.constant 0.000000e+00 : f32
    %6 = vector.broadcast %cst_8 : f32 to vector<128x8xf32>
    %c0_9 = arith.constant 0 : index
    %c0_10 = arith.constant 0 : index
    %c7_11 = arith.constant 7 : index
    %c0_12 = arith.constant 0 : index
    %7 = vector.load %arg1[%c0_9, %c0_10, %c7_11, %c0_12] : memref<1x18x32x4xbf16, #tpu.memory_space<vmem>>, vector<1x8x16x4xbf16>
    %8 = vector.shape_cast %7 : vector<1x8x16x4xbf16> to vector<8x16x4xbf16>
    %9 = vector.shape_cast %8 : vector<8x16x4xbf16> to vector<128x4xbf16>
    %c0_13 = arith.constant 0 : index
    %c0_14 = arith.constant 0 : index
    %c0_15 = arith.constant 0 : index
    %c0_16 = arith.constant 0 : index
    %10 = vector.load %arg2[%c0_13, %c0_14, %c0_15, %c0_16] : memref<3x3x4x8xbf16, #tpu.memory_space<vmem>>, vector<1x1x4x8xbf16>
    %11 = vector.shape_cast %10 : vector<1x1x4x8xbf16> to vector<4x8xbf16>
    %cst_17 = arith.constant dense<0.000000e+00> : vector<128x8xf32>
    %12 = tpu.matmul %9, %11, %cst_17 {dimension_numbers = #tpu.dot_dimension_numbers<[1], [0], [0], [1], [0, 0, 1, 1], [], []>} : vector<128x4xbf16>, vector<4x8xbf16>, vector<128x8xf32> -> vector<128x8xf32>
    %13 = arith.addf %6, %12 : vector<128x8xf32>
    %c0_18 = arith.constant 0 : index
    %c0_19 = arith.constant 0 : index
    %c8 = arith.constant 8 : index
    %c0_20 = arith.constant 0 : index
    %14 = vector.load %arg1[%c0_18, %c0_19, %c8, %c0_20] : memref<1x18x32x4xbf16, #tpu.memory_space<vmem>>, vector<1x8x16x4xbf16>
    %15 = vector.shape_cast %14 : vector<1x8x16x4xbf16> to vector<8x16x4xbf16>
    %16 = vector.shape_cast %15 : vector<8x16x4xbf16> to vector<128x4xbf16>
    %c0_21 = arith.constant 0 : index
    %c1_22 = arith.constant 1 : index
    %c0_23 = arith.constant 0 : index
    %c0_24 = arith.constant 0 : index
    %17 = vector.load %arg2[%c0_21, %c1_22, %c0_23, %c0_24] : memref<3x3x4x8xbf16, #tpu.memory_space<vmem>>, vector<1x1x4x8xbf16>
    %18 = vector.shape_cast %17 : vector<1x1x4x8xbf16> to vector<4x8xbf16>
    %cst_25 = arith.constant dense<0.000000e+00> : vector<128x8xf32>
    %19 = tpu.matmul %16, %18, %cst_25 {dimension_numbers = #tpu.dot_dimension_numbers<[1], [0], [0], [1], [0, 0, 1, 1], [], []>} : vector<128x4xbf16>, vector<4x8xbf16>, vector<128x8xf32> -> vector<128x8xf32>
    %20 = arith.addf %13, %19 : vector<128x8xf32>
    %c0_26 = arith.constant 0 : index
    %c0_27 = arith.constant 0 : index
    %c9 = arith.constant 9 : index
    %c0_28 = arith.constant 0 : index
    %21 = vector.load %arg1[%c0_26, %c0_27, %c9, %c0_28] : memref<1x18x32x4xbf16, #tpu.memory_space<vmem>>, vector<1x8x16x4xbf16>
    %22 = vector.shape_cast %21 : vector<1x8x16x4xbf16> to vector<8x16x4xbf16>
    %23 = vector.shape_cast %22 : vector<8x16x4xbf16> to vector<128x4xbf16>
    %c0_29 = arith.constant 0 : index
    %c2 = arith.constant 2 : index
    %c0_30 = arith.constant 0 : index
    %c0_31 = arith.constant 0 : index
    %24 = vector.load %arg2[%c0_29, %c2, %c0_30, %c0_31] : memref<3x3x4x8xbf16, #tpu.memory_space<vmem>>, vector<1x1x4x8xbf16>
    %25 = vector.shape_cast %24 : vector<1x1x4x8xbf16> to vector<4x8xbf16>
    %cst_32 = arith.constant dense<0.000000e+00> : vector<128x8xf32>
    %26 = tpu.matmul %23, %25, %cst_32 {dimension_numbers = #tpu.dot_dimension_numbers<[1], [0], [0], [1], [0, 0, 1, 1], [], []>} : vector<128x4xbf16>, vector<4x8xbf16>, vector<128x8xf32> -> vector<128x8xf32>
    %27 = arith.addf %20, %26 : vector<128x8xf32>
    %c0_33 = arith.constant 0 : index
    %c1_34 = arith.constant 1 : index
    %c7_35 = arith.constant 7 : index
    %c0_36 = arith.constant 0 : index
    %28 = vector.load %arg1[%c0_33, %c1_34, %c7_35, %c0_36] : memref<1x18x32x4xbf16, #tpu.memory_space<vmem>>, vector<1x8x16x4xbf16>
    %29 = vector.shape_cast %28 : vector<1x8x16x4xbf16> to vector<8x16x4xbf16>
    %30 = vector.shape_cast %29 : vector<8x16x4xbf16> to vector<128x4xbf16>
    %c1_37 = arith.constant 1 : index
    %c0_38 = arith.constant 0 : index
    %c0_39 = arith.constant 0 : index
    %c0_40 = arith.constant 0 : index
    %31 = vector.load %arg2[%c1_37, %c0_38, %c0_39, %c0_40] : memref<3x3x4x8xbf16, #tpu.memory_space<vmem>>, vector<1x1x4x8xbf16>
    %32 = vector.shape_cast %31 : vector<1x1x4x8xbf16> to vector<4x8xbf16>
    %cst_41 = arith.constant dense<0.000000e+00> : vector<128x8xf32>
    %33 = tpu.matmul %30, %32, %cst_41 {dimension_numbers = #tpu.dot_dimension_numbers<[1], [0], [0], [1], [0, 0, 1, 1], [], []>} : vector<128x4xbf16>, vector<4x8xbf16>, vector<128x8xf32> -> vector<128x8xf32>
    %34 = arith.addf %27, %33 : vector<128x8xf32>
    %c0_42 = arith.constant 0 : index
    %c1_43 = arith.constant 1 : index
    %c8_44 = arith.constant 8 : index
    %c0_45 = arith.constant 0 : index
    %35 = vector.load %arg1[%c0_42, %c1_43, %c8_44, %c0_45] : memref<1x18x32x4xbf16, #tpu.memory_space<vmem>>, vector<1x8x16x4xbf16>
    %36 = vector.shape_cast %35 : vector<1x8x16x4xbf16> to vector<8x16x4xbf16>
    %37 = vector.shape_cast %36 : vector<8x16x4xbf16> to vector<128x4xbf16>
    %c1_46 = arith.constant 1 : index
    %c1_47 = arith.constant 1 : index
    %c0_48 = arith.constant 0 : index
    %c0_49 = arith.constant 0 : index
    %38 = vector.load %arg2[%c1_46, %c1_47, %c0_48, %c0_49] : memref<3x3x4x8xbf16, #tpu.memory_space<vmem>>, vector<1x1x4x8xbf16>
    %39 = vector.shape_cast %38 : vector<1x1x4x8xbf16> to vector<4x8xbf16>
    %cst_50 = arith.constant dense<0.000000e+00> : vector<128x8xf32>
    %40 = tpu.matmul %37, %39, %cst_50 {dimension_numbers = #tpu.dot_dimension_numbers<[1], [0], [0], [1], [0, 0, 1, 1], [], []>} : vector<128x4xbf16>, vector<4x8xbf16>, vector<128x8xf32> -> vector<128x8xf32>
    %41 = arith.addf %34, %40 : vector<128x8xf32>
    %c0_51 = arith.constant 0 : index
    %c1_52 = arith.constant 1 : index
    %c9_53 = arith.constant 9 : index
    %c0_54 = arith.constant 0 : index
    %42 = vector.load %arg1[%c0_51, %c1_52, %c9_53, %c0_54] : memref<1x18x32x4xbf16, #tpu.memory_space<vmem>>, vector<1x8x16x4xbf16>
    %43 = vector.shape_cast %42 : vector<1x8x16x4xbf16> to vector<8x16x4xbf16>
    %44 = vector.shape_cast %43 : vector<8x16x4xbf16> to vector<128x4xbf16>
    %c1_55 = arith.constant 1 : index
    %c2_56 = arith.constant 2 : index
    %c0_57 = arith.constant 0 : index
    %c0_58 = arith.constant 0 : index
    %45 = vector.load %arg2[%c1_55, %c2_56, %c0_57, %c0_58] : memref<3x3x4x8xbf16, #tpu.memory_space<vmem>>, vector<1x1x4x8xbf16>
    %46 = vector.shape_cast %45 : vector<1x1x4x8xbf16> to vector<4x8xbf16>
    %cst_59 = arith.constant dense<0.000000e+00> : vector<128x8xf32>
    %47 = tpu.matmul %44, %46, %cst_59 {dimension_numbers = #tpu.dot_dimension_numbers<[1], [0], [0], [1], [0, 0, 1, 1], [], []>} : vector<128x4xbf16>, vector<4x8xbf16>, vector<128x8xf32> -> vector<128x8xf32>
    %48 = arith.addf %41, %47 : vector<128x8xf32>
    %c0_60 = arith.constant 0 : index
    %c2_61 = arith.constant 2 : index
    %c7_62 = arith.constant 7 : index
    %c0_63 = arith.constant 0 : index
    %49 = vector.load %arg1[%c0_60, %c2_61, %c7_62, %c0_63] : memref<1x18x32x4xbf16, #tpu.memory_space<vmem>>, vector<1x8x16x4xbf16>
    %50 = vector.shape_cast %49 : vector<1x8x16x4xbf16> to vector<8x16x4xbf16>
    %51 = vector.shape_cast %50 : vector<8x16x4xbf16> to vector<128x4xbf16>
    %c2_64 = arith.constant 2 : index
    %c0_65 = arith.constant 0 : index
    %c0_66 = arith.constant 0 : index
    %c0_67 = arith.constant 0 : index
    %52 = vector.load %arg2[%c2_64, %c0_65, %c0_66, %c0_67] : memref<3x3x4x8xbf16, #tpu.memory_space<vmem>>, vector<1x1x4x8xbf16>
    %53 = vector.shape_cast %52 : vector<1x1x4x8xbf16> to vector<4x8xbf16>
    %cst_68 = arith.constant dense<0.000000e+00> : vector<128x8xf32>
    %54 = tpu.matmul %51, %53, %cst_68 {dimension_numbers = #tpu.dot_dimension_numbers<[1], [0], [0], [1], [0, 0, 1, 1], [], []>} : vector<128x4xbf16>, vector<4x8xbf16>, vector<128x8xf32> -> vector<128x8xf32>
    %55 = arith.addf %48, %54 : vector<128x8xf32>
    %c0_69 = arith.constant 0 : index
    %c2_70 = arith.constant 2 : index
    %c8_71 = arith.constant 8 : index
    %c0_72 = arith.constant 0 : index
    %56 = vector.load %arg1[%c0_69, %c2_70, %c8_71, %c0_72] : memref<1x18x32x4xbf16, #tpu.memory_space<vmem>>, vector<1x8x16x4xbf16>
    %57 = vector.shape_cast %56 : vector<1x8x16x4xbf16> to vector<8x16x4xbf16>
    %58 = vector.shape_cast %57 : vector<8x16x4xbf16> to vector<128x4xbf16>
    %c2_73 = arith.constant 2 : index
    %c1_74 = arith.constant 1 : index
    %c0_75 = arith.constant 0 : index
    %c0_76 = arith.constant 0 : index
    %59 = vector.load %arg2[%c2_73, %c1_74, %c0_75, %c0_76] : memref<3x3x4x8xbf16, #tpu.memory_space<vmem>>, vector<1x1x4x8xbf16>
    %60 = vector.shape_cast %59 : vector<1x1x4x8xbf16> to vector<4x8xbf16>
    %cst_77 = arith.constant dense<0.000000e+00> : vector<128x8xf32>
    %61 = tpu.matmul %58, %60, %cst_77 {dimension_numbers = #tpu.dot_dimension_numbers<[1], [0], [0], [1], [0, 0, 1, 1], [], []>} : vector<128x4xbf16>, vector<4x8xbf16>, vector<128x8xf32> -> vector<128x8xf32>
    %62 = arith.addf %55, %61 : vector<128x8xf32>
    %c0_78 = arith.constant 0 : index
    %c2_79 = arith.constant 2 : index
    %c9_80 = arith.constant 9 : index
    %c0_81 = arith.constant 0 : index
    %63 = vector.load %arg1[%c0_78, %c2_79, %c9_80, %c0_81] : memref<1x18x32x4xbf16, #tpu.memory_space<vmem>>, vector<1x8x16x4xbf16>
    %64 = vector.shape_cast %63 : vector<1x8x16x4xbf16> to vector<8x16x4xbf16>
    %65 = vector.shape_cast %64 : vector<8x16x4xbf16> to vector<128x4xbf16>
    %c2_82 = arith.constant 2 : index
    %c2_83 = arith.constant 2 : index
    %c0_84 = arith.constant 0 : index
    %c0_85 = arith.constant 0 : index
    %66 = vector.load %arg2[%c2_82, %c2_83, %c0_84, %c0_85] : memref<3x3x4x8xbf16, #tpu.memory_space<vmem>>, vector<1x1x4x8xbf16>
    %67 = vector.shape_cast %66 : vector<1x1x4x8xbf16> to vector<4x8xbf16>
    %cst_86 = arith.constant dense<0.000000e+00> : vector<128x8xf32>
    %68 = tpu.matmul %65, %67, %cst_86 {dimension_numbers = #tpu.dot_dimension_numbers<[1], [0], [0], [1], [0, 0, 1, 1], [], []>} : vector<128x4xbf16>, vector<4x8xbf16>, vector<128x8xf32> -> vector<128x8xf32>
    %69 = arith.addf %62, %68 : vector<128x8xf32>
    %c0_87 = arith.constant 0 : index
    %c0_88 = arith.constant 0 : index
    %70 = vector.load %arg3[%c0_87, %c0_88] : memref<1x8xf32, #tpu.memory_space<vmem>>, vector<1x8xf32>
    %71 = vector.shape_cast %70 : vector<1x8xf32> to vector<8xf32>
    %72 = vector.shape_cast %71 : vector<8xf32> to vector<1x8xf32>
    %73 = vector.broadcast %72 : vector<1x8xf32> to vector<128x8xf32>
    %74 = arith.mulf %69, %73 : vector<128x8xf32>
    %c0_89 = arith.constant 0 : index
    %c0_90 = arith.constant 0 : index
    %75 = vector.load %arg4[%c0_89, %c0_90] : memref<1x8xf32, #tpu.memory_space<vmem>>, vector<1x8xf32>
    %76 = vector.shape_cast %75 : vector<1x8xf32> to vector<8xf32>
    %77 = vector.shape_cast %76 : vector<8xf32> to vector<1x8xf32>
    %78 = vector.broadcast %77 : vector<1x8xf32> to vector<128x8xf32>
    %79 = arith.addf %74, %78 : vector<128x8xf32>
    %cst_91 = arith.constant 0.000000e+00 : f32
    %80 = vector.broadcast %cst_91 : f32 to vector<128x8xf32>
    %81 = arith.maximumf %79, %80 : vector<128x8xf32>
    %82 = vector.shape_cast %81 : vector<128x8xf32> to vector<8x16x8xf32>
    %83 = arith.truncf %82 : vector<8x16x8xf32> to vector<8x16x8xbf16>
    %c1_92 = arith.constant 1 : index
    %c8_93 = arith.constant 8 : index
    %c0_94 = arith.constant 0 : index
    %84 = vector.load %arg9[%c1_92, %c8_93, %c0_94] : memref<18x32x8xbf16, #tpu.memory_space<vmem>>, vector<8x16x8xbf16>
    tpu.vector_store %arg9[%c1_92, %c8_93, %c0_94], %83 {strides = array<i32>} : memref<18x32x8xbf16, #tpu.memory_space<vmem>>, vector<8x16x8xbf16>,
    %cst_95 = arith.constant 0.000000e+00 : f32
    %85 = vector.broadcast %cst_95 : f32 to vector<128x8xf32>
    %c0_96 = arith.constant 0 : index
    %c8_97 = arith.constant 8 : index
    %c7_98 = arith.constant 7 : index
    %c0_99 = arith.constant 0 : index
    %86 = vector.load %arg1[%c0_96, %c8_97, %c7_98, %c0_99] : memref<1x18x32x4xbf16, #tpu.memory_space<vmem>>, vector<1x8x16x4xbf16>
    %87 = vector.shape_cast %86 : vector<1x8x16x4xbf16> to vector<8x16x4xbf16>
    %88 = vector.shape_cast %87 : vector<8x16x4xbf16> to vector<128x4xbf16>
    %c0_100 = arith.constant 0 : index
    %c0_101 = arith.constant 0 : index
    %c0_102 = arith.constant 0 : index
    %c0_103 = arith.constant 0 : index
    %89 = vector.load %arg2[%c0_100, %c0_101, %c0_102, %c0_103] : memref<3x3x4x8xbf16, #tpu.memory_space<vmem>>, vector<1x1x4x8xbf16>
    %90 = vector.shape_cast %89 : vector<1x1x4x8xbf16> to vector<4x8xbf16>
    %cst_104 = arith.constant dense<0.000000e+00> : vector<128x8xf32>
    %91 = tpu.matmul %88, %90, %cst_104 {dimension_numbers = #tpu.dot_dimension_numbers<[1], [0], [0], [1], [0, 0, 1, 1], [], []>} : vector<128x4xbf16>, vector<4x8xbf16>, vector<128x8xf32> -> vector<128x8xf32>
    %92 = arith.addf %85, %91 : vector<128x8xf32>
    %c0_105 = arith.constant 0 : index
    %c8_106 = arith.constant 8 : index
    %c8_107 = arith.constant 8 : index
    %c0_108 = arith.constant 0 : index
    %93 = vector.load %arg1[%c0_105, %c8_106, %c8_107, %c0_108] : memref<1x18x32x4xbf16, #tpu.memory_space<vmem>>, vector<1x8x16x4xbf16>
    %94 = vector.shape_cast %93 : vector<1x8x16x4xbf16> to vector<8x16x4xbf16>
    %95 = vector.shape_cast %94 : vector<8x16x4xbf16> to vector<128x4xbf16>
    %c0_109 = arith.constant 0 : index
    %c1_110 = arith.constant 1 : index
    %c0_111 = arith.constant 0 : index
    %c0_112 = arith.constant 0 : index
    %96 = vector.load %arg2[%c0_109, %c1_110, %c0_111, %c0_112] : memref<3x3x4x8xbf16, #tpu.memory_space<vmem>>, vector<1x1x4x8xbf16>
    %97 = vector.shape_cast %96 : vector<1x1x4x8xbf16> to vector<4x8xbf16>
    %cst_113 = arith.constant dense<0.000000e+00> : vector<128x8xf32>
    %98 = tpu.matmul %95, %97, %cst_113 {dimension_numbers = #tpu.dot_dimension_numbers<[1], [0], [0], [1], [0, 0, 1, 1], [], []>} : vector<128x4xbf16>, vector<4x8xbf16>, vector<128x8xf32> -> vector<128x8xf32>
    %99 = arith.addf %92, %98 : vector<128x8xf32>
    %c0_114 = arith.constant 0 : index
    %c8_115 = arith.constant 8 : index
    %c9_116 = arith.constant 9 : index
    %c0_117 = arith.constant 0 : index
    %100 = vector.load %arg1[%c0_114, %c8_115, %c9_116, %c0_117] : memref<1x18x32x4xbf16, #tpu.memory_space<vmem>>, vector<1x8x16x4xbf16>
    %101 = vector.shape_cast %100 : vector<1x8x16x4xbf16> to vector<8x16x4xbf16>
    %102 = vector.shape_cast %101 : vector<8x16x4xbf16> to vector<128x4xbf16>
    %c0_118 = arith.constant 0 : index
    %c2_119 = arith.constant 2 : index
    %c0_120 = arith.constant 0 : index
    %c0_121 = arith.constant 0 : index
    %103 = vector.load %arg2[%c0_118, %c2_119, %c0_120, %c0_121] : memref<3x3x4x8xbf16, #tpu.memory_space<vmem>>, vector<1x1x4x8xbf16>
    %104 = vector.shape_cast %103 : vector<1x1x4x8xbf16> to vector<4x8xbf16>
    %cst_122 = arith.constant dense<0.000000e+00> : vector<128x8xf32>
    %105 = tpu.matmul %102, %104, %cst_122 {dimension_numbers = #tpu.dot_dimension_numbers<[1], [0], [0], [1], [0, 0, 1, 1], [], []>} : vector<128x4xbf16>, vector<4x8xbf16>, vector<128x8xf32> -> vector<128x8xf32>
    %106 = arith.addf %99, %105 : vector<128x8xf32>
    %c0_123 = arith.constant 0 : index
    %c9_124 = arith.constant 9 : index
    %c7_125 = arith.constant 7 : index
    %c0_126 = arith.constant 0 : index
    %107 = vector.load %arg1[%c0_123, %c9_124, %c7_125, %c0_126] : memref<1x18x32x4xbf16, #tpu.memory_space<vmem>>, vector<1x8x16x4xbf16>
    %108 = vector.shape_cast %107 : vector<1x8x16x4xbf16> to vector<8x16x4xbf16>
    %109 = vector.shape_cast %108 : vector<8x16x4xbf16> to vector<128x4xbf16>
    %c1_127 = arith.constant 1 : index
    %c0_128 = arith.constant 0 : index
    %c0_129 = arith.constant 0 : index
    %c0_130 = arith.constant 0 : index
    %110 = vector.load %arg2[%c1_127, %c0_128, %c0_129, %c0_130] : memref<3x3x4x8xbf16, #tpu.memory_space<vmem>>, vector<1x1x4x8xbf16>
    %111 = vector.shape_cast %110 : vector<1x1x4x8xbf16> to vector<4x8xbf16>
    %cst_131 = arith.constant dense<0.000000e+00> : vector<128x8xf32>
    %112 = tpu.matmul %109, %111, %cst_131 {dimension_numbers = #tpu.dot_dimension_numbers<[1], [0], [0], [1], [0, 0, 1, 1], [], []>} : vector<128x4xbf16>, vector<4x8xbf16>, vector<128x8xf32> -> vector<128x8xf32>
    %113 = arith.addf %106, %112 : vector<128x8xf32>
    %c0_132 = arith.constant 0 : index
    %c9_133 = arith.constant 9 : index
    %c8_134 = arith.constant 8 : index
    %c0_135 = arith.constant 0 : index
    %114 = vector.load %arg1[%c0_132, %c9_133, %c8_134, %c0_135] : memref<1x18x32x4xbf16, #tpu.memory_space<vmem>>, vector<1x8x16x4xbf16>
    %115 = vector.shape_cast %114 : vector<1x8x16x4xbf16> to vector<8x16x4xbf16>
    %116 = vector.shape_cast %115 : vector<8x16x4xbf16> to vector<128x4xbf16>
    %c1_136 = arith.constant 1 : index
    %c1_137 = arith.constant 1 : index
    %c0_138 = arith.constant 0 : index
    %c0_139 = arith.constant 0 : index
    %117 = vector.load %arg2[%c1_136, %c1_137, %c0_138, %c0_139] : memref<3x3x4x8xbf16, #tpu.memory_space<vmem>>, vector<1x1x4x8xbf16>
    %118 = vector.shape_cast %117 : vector<1x1x4x8xbf16> to vector<4x8xbf16>
    %cst_140 = arith.constant dense<0.000000e+00> : vector<128x8xf32>
    %119 = tpu.matmul %116, %118, %cst_140 {dimension_numbers = #tpu.dot_dimension_numbers<[1], [0], [0], [1], [0, 0, 1, 1], [], []>} : vector<128x4xbf16>, vector<4x8xbf16>, vector<128x8xf32> -> vector<128x8xf32>
    %120 = arith.addf %113, %119 : vector<128x8xf32>
    %c0_141 = arith.constant 0 : index
    %c9_142 = arith.constant 9 : index
    %c9_143 = arith.constant 9 : index
    %c0_144 = arith.constant 0 : index
    %121 = vector.load %arg1[%c0_141, %c9_142, %c9_143, %c0_144] : memref<1x18x32x4xbf16, #tpu.memory_space<vmem>>, vector<1x8x16x4xbf16>
    %122 = vector.shape_cast %121 : vector<1x8x16x4xbf16> to vector<8x16x4xbf16>
    %123 = vector.shape_cast %122 : vector<8x16x4xbf16> to vector<128x4xbf16>
    %c1_145 = arith.constant 1 : index
    %c2_146 = arith.constant 2 : index
    %c0_147 = arith.constant 0 : index
    %c0_148 = arith.constant 0 : index
    %124 = vector.load %arg2[%c1_145, %c2_146, %c0_147, %c0_148] : memref<3x3x4x8xbf16, #tpu.memory_space<vmem>>, vector<1x1x4x8xbf16>
    %125 = vector.shape_cast %124 : vector<1x1x4x8xbf16> to vector<4x8xbf16>
    %cst_149 = arith.constant dense<0.000000e+00> : vector<128x8xf32>
    %126 = tpu.matmul %123, %125, %cst_149 {dimension_numbers = #tpu.dot_dimension_numbers<[1], [0], [0], [1], [0, 0, 1, 1], [], []>} : vector<128x4xbf16>, vector<4x8xbf16>, vector<128x8xf32> -> vector<128x8xf32>
    %127 = arith.addf %120, %126 : vector<128x8xf32>
    %c0_150 = arith.constant 0 : index
    %c10 = arith.constant 10 : index
    %c7_151 = arith.constant 7 : index
    %c0_152 = arith.constant 0 : index
    %128 = vector.load %arg1[%c0_150, %c10, %c7_151, %c0_152] : memref<1x18x32x4xbf16, #tpu.memory_space<vmem>>, vector<1x8x16x4xbf16>
    %129 = vector.shape_cast %128 : vector<1x8x16x4xbf16> to vector<8x16x4xbf16>
    %130 = vector.shape_cast %129 : vector<8x16x4xbf16> to vector<128x4xbf16>
    %c2_153 = arith.constant 2 : index
    %c0_154 = arith.constant 0 : index
    %c0_155 = arith.constant 0 : index
    %c0_156 = arith.constant 0 : index
    %131 = vector.load %arg2[%c2_153, %c0_154, %c0_155, %c0_156] : memref<3x3x4x8xbf16, #tpu.memory_space<vmem>>, vector<1x1x4x8xbf16>
    %132 = vector.shape_cast %131 : vector<1x1x4x8xbf16> to vector<4x8xbf16>
    %cst_157 = arith.constant dense<0.000000e+00> : vector<128x8xf32>
    %133 = tpu.matmul %130, %132, %cst_157 {dimension_numbers = #tpu.dot_dimension_numbers<[1], [0], [0], [1], [0, 0, 1, 1], [], []>} : vector<128x4xbf16>, vector<4x8xbf16>, vector<128x8xf32> -> vector<128x8xf32>
    %134 = arith.addf %127, %133 : vector<128x8xf32>
    %c0_158 = arith.constant 0 : index
    %c10_159 = arith.constant 10 : index
    %c8_160 = arith.constant 8 : index
    %c0_161 = arith.constant 0 : index
    %135 = vector.load %arg1[%c0_158, %c10_159, %c8_160, %c0_161] : memref<1x18x32x4xbf16, #tpu.memory_space<vmem>>, vector<1x8x16x4xbf16>
    %136 = vector.shape_cast %135 : vector<1x8x16x4xbf16> to vector<8x16x4xbf16>
    %137 = vector.shape_cast %136 : vector<8x16x4xbf16> to vector<128x4xbf16>
    %c2_162 = arith.constant 2 : index
    %c1_163 = arith.constant 1 : index
    %c0_164 = arith.constant 0 : index
    %c0_165 = arith.constant 0 : index
    %138 = vector.load %arg2[%c2_162, %c1_163, %c0_164, %c0_165] : memref<3x3x4x8xbf16, #tpu.memory_space<vmem>>, vector<1x1x4x8xbf16>
    %139 = vector.shape_cast %138 : vector<1x1x4x8xbf16> to vector<4x8xbf16>
    %cst_166 = arith.constant dense<0.000000e+00> : vector<128x8xf32>
    %140 = tpu.matmul %137, %139, %cst_166 {dimension_numbers = #tpu.dot_dimension_numbers<[1], [0], [0], [1], [0, 0, 1, 1], [], []>} : vector<128x4xbf16>, vector<4x8xbf16>, vector<128x8xf32> -> vector<128x8xf32>
    %141 = arith.addf %134, %140 : vector<128x8xf32>
    %c0_167 = arith.constant 0 : index
    %c10_168 = arith.constant 10 : index
    %c9_169 = arith.constant 9 : index
    %c0_170 = arith.constant 0 : index
    %142 = vector.load %arg1[%c0_167, %c10_168, %c9_169, %c0_170] : memref<1x18x32x4xbf16, #tpu.memory_space<vmem>>, vector<1x8x16x4xbf16>
    %143 = vector.shape_cast %142 : vector<1x8x16x4xbf16> to vector<8x16x4xbf16>
    %144 = vector.shape_cast %143 : vector<8x16x4xbf16> to vector<128x4xbf16>
    %c2_171 = arith.constant 2 : index
    %c2_172 = arith.constant 2 : index
    %c0_173 = arith.constant 0 : index
    %c0_174 = arith.constant 0 : index
    %145 = vector.load %arg2[%c2_171, %c2_172, %c0_173, %c0_174] : memref<3x3x4x8xbf16, #tpu.memory_space<vmem>>, vector<1x1x4x8xbf16>
    %146 = vector.shape_cast %145 : vector<1x1x4x8xbf16> to vector<4x8xbf16>
    %cst_175 = arith.constant dense<0.000000e+00> : vector<128x8xf32>
    %147 = tpu.matmul %144, %146, %cst_175 {dimension_numbers = #tpu.dot_dimension_numbers<[1], [0], [0], [1], [0, 0, 1, 1], [], []>} : vector<128x4xbf16>, vector<4x8xbf16>, vector<128x8xf32> -> vector<128x8xf32>
    %148 = arith.addf %141, %147 : vector<128x8xf32>
    %c0_176 = arith.constant 0 : index
    %c0_177 = arith.constant 0 : index
    %149 = vector.load %arg3[%c0_176, %c0_177] : memref<1x8xf32, #tpu.memory_space<vmem>>, vector<1x8xf32>
    %150 = vector.shape_cast %149 : vector<1x8xf32> to vector<8xf32>
    %151 = vector.shape_cast %150 : vector<8xf32> to vector<1x8xf32>
    %152 = vector.broadcast %151 : vector<1x8xf32> to vector<128x8xf32>
    %153 = arith.mulf %148, %152 : vector<128x8xf32>
    %c0_178 = arith.constant 0 : index
    %c0_179 = arith.constant 0 : index
    %154 = vector.load %arg4[%c0_178, %c0_179] : memref<1x8xf32, #tpu.memory_space<vmem>>, vector<1x8xf32>
    %155 = vector.shape_cast %154 : vector<1x8xf32> to vector<8xf32>
    %156 = vector.shape_cast %155 : vector<8xf32> to vector<1x8xf32>
    %157 = vector.broadcast %156 : vector<1x8xf32> to vector<128x8xf32>
    %158 = arith.addf %153, %157 : vector<128x8xf32>
    %cst_180 = arith.constant 0.000000e+00 : f32
    %159 = vector.broadcast %cst_180 : f32 to vector<128x8xf32>
    %160 = arith.maximumf %158, %159 : vector<128x8xf32>
    %161 = vector.shape_cast %160 : vector<128x8xf32> to vector<8x16x8xf32>
    %162 = arith.truncf %161 : vector<8x16x8xf32> to vector<8x16x8xbf16>
    %c9_181 = arith.constant 9 : index
    %c8_182 = arith.constant 8 : index
    %c0_183 = arith.constant 0 : index
    %163 = vector.load %arg9[%c9_181, %c8_182, %c0_183] : memref<18x32x8xbf16, #tpu.memory_space<vmem>>, vector<8x16x8xbf16>
    tpu.vector_store %arg9[%c9_181, %c8_182, %c0_183], %162 {strides = array<i32>} : memref<18x32x8xbf16, #tpu.memory_space<vmem>>, vector<8x16x8xbf16>,
    %cst_184 = arith.constant 0.000000e+00 : f32
    %164 = vector.broadcast %cst_184 : f32 to vector<128x4xf32>
    %c0_185 = arith.constant 0 : index
    %c7_186 = arith.constant 7 : index
    %c0_187 = arith.constant 0 : index
    %165 = vector.load %arg9[%c0_185, %c7_186, %c0_187] : memref<18x32x8xbf16, #tpu.memory_space<vmem>>, vector<8x16x8xbf16>
    %166 = vector.shape_cast %165 : vector<8x16x8xbf16> to vector<128x8xbf16>
    %c0_188 = arith.constant 0 : index
    %c0_189 = arith.constant 0 : index
    %c0_190 = arith.constant 0 : index
    %c0_191 = arith.constant 0 : index
    %167 = vector.load %arg5[%c0_188, %c0_189, %c0_190, %c0_191] : memref<3x3x8x4xbf16, #tpu.memory_space<vmem>>, vector<1x1x8x4xbf16>
    %168 = vector.shape_cast %167 : vector<1x1x8x4xbf16> to vector<8x4xbf16>
    %cst_192 = arith.constant dense<0.000000e+00> : vector<128x4xf32>
    %169 = tpu.matmul %166, %168, %cst_192 {dimension_numbers = #tpu.dot_dimension_numbers<[1], [0], [0], [1], [0, 0, 1, 1], [], []>} : vector<128x8xbf16>, vector<8x4xbf16>, vector<128x4xf32> -> vector<128x4xf32>
    %170 = arith.addf %164, %169 : vector<128x4xf32>
    %c0_193 = arith.constant 0 : index
    %c8_194 = arith.constant 8 : index
    %c0_195 = arith.constant 0 : index
    %171 = vector.load %arg9[%c0_193, %c8_194, %c0_195] : memref<18x32x8xbf16, #tpu.memory_space<vmem>>, vector<8x16x8xbf16>
    %172 = vector.shape_cast %171 : vector<8x16x8xbf16> to vector<128x8xbf16>
    %c0_196 = arith.constant 0 : index
    %c1_197 = arith.constant 1 : index
    %c0_198 = arith.constant 0 : index
    %c0_199 = arith.constant 0 : index
    %173 = vector.load %arg5[%c0_196, %c1_197, %c0_198, %c0_199] : memref<3x3x8x4xbf16, #tpu.memory_space<vmem>>, vector<1x1x8x4xbf16>
    %174 = vector.shape_cast %173 : vector<1x1x8x4xbf16> to vector<8x4xbf16>
    %cst_200 = arith.constant dense<0.000000e+00> : vector<128x4xf32>
    %175 = tpu.matmul %172, %174, %cst_200 {dimension_numbers = #tpu.dot_dimension_numbers<[1], [0], [0], [1], [0, 0, 1, 1], [], []>} : vector<128x8xbf16>, vector<8x4xbf16>, vector<128x4xf32> -> vector<128x4xf32>
    %176 = arith.addf %170, %175 : vector<128x4xf32>
    %c0_201 = arith.constant 0 : index
    %c9_202 = arith.constant 9 : index
    %c0_203 = arith.constant 0 : index
    %177 = vector.load %arg9[%c0_201, %c9_202, %c0_203] : memref<18x32x8xbf16, #tpu.memory_space<vmem>>, vector<8x16x8xbf16>
    %178 = vector.shape_cast %177 : vector<8x16x8xbf16> to vector<128x8xbf16>
    %c0_204 = arith.constant 0 : index
    %c2_205 = arith.constant 2 : index
    %c0_206 = arith.constant 0 : index
    %c0_207 = arith.constant 0 : index
    %179 = vector.load %arg5[%c0_204, %c2_205, %c0_206, %c0_207] : memref<3x3x8x4xbf16, #tpu.memory_space<vmem>>, vector<1x1x8x4xbf16>
    %180 = vector.shape_cast %179 : vector<1x1x8x4xbf16> to vector<8x4xbf16>
    %cst_208 = arith.constant dense<0.000000e+00> : vector<128x4xf32>
    %181 = tpu.matmul %178, %180, %cst_208 {dimension_numbers = #tpu.dot_dimension_numbers<[1], [0], [0], [1], [0, 0, 1, 1], [], []>} : vector<128x8xbf16>, vector<8x4xbf16>, vector<128x4xf32> -> vector<128x4xf32>
    %182 = arith.addf %176, %181 : vector<128x4xf32>
    %c1_209 = arith.constant 1 : index
    %c7_210 = arith.constant 7 : index
    %c0_211 = arith.constant 0 : index
    %183 = vector.load %arg9[%c1_209, %c7_210, %c0_211] : memref<18x32x8xbf16, #tpu.memory_space<vmem>>, vector<8x16x8xbf16>
    %184 = vector.shape_cast %183 : vector<8x16x8xbf16> to vector<128x8xbf16>
    %c1_212 = arith.constant 1 : index
    %c0_213 = arith.constant 0 : index
    %c0_214 = arith.constant 0 : index
    %c0_215 = arith.constant 0 : index
    %185 = vector.load %arg5[%c1_212, %c0_213, %c0_214, %c0_215] : memref<3x3x8x4xbf16, #tpu.memory_space<vmem>>, vector<1x1x8x4xbf16>
    %186 = vector.shape_cast %185 : vector<1x1x8x4xbf16> to vector<8x4xbf16>
    %cst_216 = arith.constant dense<0.000000e+00> : vector<128x4xf32>
    %187 = tpu.matmul %184, %186, %cst_216 {dimension_numbers = #tpu.dot_dimension_numbers<[1], [0], [0], [1], [0, 0, 1, 1], [], []>} : vector<128x8xbf16>, vector<8x4xbf16>, vector<128x4xf32> -> vector<128x4xf32>
    %188 = arith.addf %182, %187 : vector<128x4xf32>
    %c1_217 = arith.constant 1 : index
    %c8_218 = arith.constant 8 : index
    %c0_219 = arith.constant 0 : index
    %189 = vector.load %arg9[%c1_217, %c8_218, %c0_219] : memref<18x32x8xbf16, #tpu.memory_space<vmem>>, vector<8x16x8xbf16>
    %190 = vector.shape_cast %189 : vector<8x16x8xbf16> to vector<128x8xbf16>
    %c1_220 = arith.constant 1 : index
    %c1_221 = arith.constant 1 : index
    %c0_222 = arith.constant 0 : index
    %c0_223 = arith.constant 0 : index
    %191 = vector.load %arg5[%c1_220, %c1_221, %c0_222, %c0_223] : memref<3x3x8x4xbf16, #tpu.memory_space<vmem>>, vector<1x1x8x4xbf16>
    %192 = vector.shape_cast %191 : vector<1x1x8x4xbf16> to vector<8x4xbf16>
    %cst_224 = arith.constant dense<0.000000e+00> : vector<128x4xf32>
    %193 = tpu.matmul %190, %192, %cst_224 {dimension_numbers = #tpu.dot_dimension_numbers<[1], [0], [0], [1], [0, 0, 1, 1], [], []>} : vector<128x8xbf16>, vector<8x4xbf16>, vector<128x4xf32> -> vector<128x4xf32>
    %194 = arith.addf %188, %193 : vector<128x4xf32>
    %c1_225 = arith.constant 1 : index
    %c9_226 = arith.constant 9 : index
    %c0_227 = arith.constant 0 : index
    %195 = vector.load %arg9[%c1_225, %c9_226, %c0_227] : memref<18x32x8xbf16, #tpu.memory_space<vmem>>, vector<8x16x8xbf16>
    %196 = vector.shape_cast %195 : vector<8x16x8xbf16> to vector<128x8xbf16>
    %c1_228 = arith.constant 1 : index
    %c2_229 = arith.constant 2 : index
    %c0_230 = arith.constant 0 : index
    %c0_231 = arith.constant 0 : index
    %197 = vector.load %arg5[%c1_228, %c2_229, %c0_230, %c0_231] : memref<3x3x8x4xbf16, #tpu.memory_space<vmem>>, vector<1x1x8x4xbf16>
    %198 = vector.shape_cast %197 : vector<1x1x8x4xbf16> to vector<8x4xbf16>
    %cst_232 = arith.constant dense<0.000000e+00> : vector<128x4xf32>
    %199 = tpu.matmul %196, %198, %cst_232 {dimension_numbers = #tpu.dot_dimension_numbers<[1], [0], [0], [1], [0, 0, 1, 1], [], []>} : vector<128x8xbf16>, vector<8x4xbf16>, vector<128x4xf32> -> vector<128x4xf32>
    %200 = arith.addf %194, %199 : vector<128x4xf32>
    %c2_233 = arith.constant 2 : index
    %c7_234 = arith.constant 7 : index
    %c0_235 = arith.constant 0 : index
    %201 = vector.load %arg9[%c2_233, %c7_234, %c0_235] : memref<18x32x8xbf16, #tpu.memory_space<vmem>>, vector<8x16x8xbf16>
    %202 = vector.shape_cast %201 : vector<8x16x8xbf16> to vector<128x8xbf16>
    %c2_236 = arith.constant 2 : index
    %c0_237 = arith.constant 0 : index
    %c0_238 = arith.constant 0 : index
    %c0_239 = arith.constant 0 : index
    %203 = vector.load %arg5[%c2_236, %c0_237, %c0_238, %c0_239] : memref<3x3x8x4xbf16, #tpu.memory_space<vmem>>, vector<1x1x8x4xbf16>
    %204 = vector.shape_cast %203 : vector<1x1x8x4xbf16> to vector<8x4xbf16>
    %cst_240 = arith.constant dense<0.000000e+00> : vector<128x4xf32>
    %205 = tpu.matmul %202, %204, %cst_240 {dimension_numbers = #tpu.dot_dimension_numbers<[1], [0], [0], [1], [0, 0, 1, 1], [], []>} : vector<128x8xbf16>, vector<8x4xbf16>, vector<128x4xf32> -> vector<128x4xf32>
    %206 = arith.addf %200, %205 : vector<128x4xf32>
    %c2_241 = arith.constant 2 : index
    %c8_242 = arith.constant 8 : index
    %c0_243 = arith.constant 0 : index
    %207 = vector.load %arg9[%c2_241, %c8_242, %c0_243] : memref<18x32x8xbf16, #tpu.memory_space<vmem>>, vector<8x16x8xbf16>
    %208 = vector.shape_cast %207 : vector<8x16x8xbf16> to vector<128x8xbf16>
    %c2_244 = arith.constant 2 : index
    %c1_245 = arith.constant 1 : index
    %c0_246 = arith.constant 0 : index
    %c0_247 = arith.constant 0 : index
    %209 = vector.load %arg5[%c2_244, %c1_245, %c0_246, %c0_247] : memref<3x3x8x4xbf16, #tpu.memory_space<vmem>>, vector<1x1x8x4xbf16>
    %210 = vector.shape_cast %209 : vector<1x1x8x4xbf16> to vector<8x4xbf16>
    %cst_248 = arith.constant dense<0.000000e+00> : vector<128x4xf32>
    %211 = tpu.matmul %208, %210, %cst_248 {dimension_numbers = #tpu.dot_dimension_numbers<[1], [0], [0], [1], [0, 0, 1, 1], [], []>} : vector<128x8xbf16>, vector<8x4xbf16>, vector<128x4xf32> -> vector<128x4xf32>
    %212 = arith.addf %206, %211 : vector<128x4xf32>
    %c2_249 = arith.constant 2 : index
    %c9_250 = arith.constant 9 : index
    %c0_251 = arith.constant 0 : index
    %213 = vector.load %arg9[%c2_249, %c9_250, %c0_251] : memref<18x32x8xbf16, #tpu.memory_space<vmem>>, vector<8x16x8xbf16>
    %214 = vector.shape_cast %213 : vector<8x16x8xbf16> to vector<128x8xbf16>
    %c2_252 = arith.constant 2 : index
    %c2_253 = arith.constant 2 : index
    %c0_254 = arith.constant 0 : index
    %c0_255 = arith.constant 0 : index
    %215 = vector.load %arg5[%c2_252, %c2_253, %c0_254, %c0_255] : memref<3x3x8x4xbf16, #tpu.memory_space<vmem>>, vector<1x1x8x4xbf16>
    %216 = vector.shape_cast %215 : vector<1x1x8x4xbf16> to vector<8x4xbf16>
    %cst_256 = arith.constant dense<0.000000e+00> : vector<128x4xf32>
    %217 = tpu.matmul %214, %216, %cst_256 {dimension_numbers = #tpu.dot_dimension_numbers<[1], [0], [0], [1], [0, 0, 1, 1], [], []>} : vector<128x8xbf16>, vector<8x4xbf16>, vector<128x4xf32> -> vector<128x4xf32>
    %218 = arith.addf %212, %217 : vector<128x4xf32>
    %c0_257 = arith.constant 0 : index
    %c0_258 = arith.constant 0 : index
    %219 = vector.load %arg6[%c0_257, %c0_258] : memref<1x4xf32, #tpu.memory_space<vmem>>, vector<1x4xf32>
    %220 = vector.shape_cast %219 : vector<1x4xf32> to vector<4xf32>
    %221 = vector.shape_cast %220 : vector<4xf32> to vector<1x4xf32>
    %222 = vector.broadcast %221 : vector<1x4xf32> to vector<128x4xf32>
    %223 = arith.mulf %218, %222 : vector<128x4xf32>
    %c0_259 = arith.constant 0 : index
    %c0_260 = arith.constant 0 : index
    %224 = vector.load %arg7[%c0_259, %c0_260] : memref<1x4xf32, #tpu.memory_space<vmem>>, vector<1x4xf32>
    %225 = vector.shape_cast %224 : vector<1x4xf32> to vector<4xf32>
    %226 = vector.shape_cast %225 : vector<4xf32> to vector<1x4xf32>
    %227 = vector.broadcast %226 : vector<1x4xf32> to vector<128x4xf32>
    %228 = arith.addf %223, %227 : vector<128x4xf32>
    %c0_261 = arith.constant 0 : index
    %c1_262 = arith.constant 1 : index
    %c8_263 = arith.constant 8 : index
    %c0_264 = arith.constant 0 : index
    %229 = vector.load %arg1[%c0_261, %c1_262, %c8_263, %c0_264] : memref<1x18x32x4xbf16, #tpu.memory_space<vmem>>, vector<1x8x16x4xbf16>
    %230 = vector.shape_cast %229 : vector<1x8x16x4xbf16> to vector<8x16x4xbf16>
    %231 = vector.shape_cast %230 : vector<8x16x4xbf16> to vector<128x4xbf16>
    %232 = arith.extf %231 : vector<128x4xbf16> to vector<128x4xf32>
    %233 = arith.addf %232, %228 : vector<128x4xf32>
    %cst_265 = arith.constant 0.000000e+00 : f32
    %234 = vector.broadcast %cst_265 : f32 to vector<128x4xf32>
    %235 = arith.maximumf %233, %234 : vector<128x4xf32>
    %236 = vector.shape_cast %235 : vector<128x4xf32> to vector<8x16x4xf32>
    %c0_266 = arith.constant 0 : index
    %c0_267 = arith.constant 0 : index
    %c0_268 = arith.constant 0 : index
    %c0_269 = arith.constant 0 : index
    %237 = vector.load %arg8[%c0_266, %c0_267, %c0_268, %c0_269] : memref<1x16x16x4xf32, #tpu.memory_space<vmem>>, vector<1x8x16x4xf32>
    %238 = vector.shape_cast %237 : vector<1x8x16x4xf32> to vector<8x16x4xf32>
    %239 = vector.shape_cast %236 : vector<8x16x4xf32> to vector<1x8x16x4xf32>
    tpu.vector_store %arg8[%c0_266, %c0_267, %c0_268, %c0_269], %239 {strides = array<i32>} : memref<1x16x16x4xf32, #tpu.memory_space<vmem>>, vector<1x8x16x4xf32>,
    %cst_270 = arith.constant 0.000000e+00 : f32
    %240 = vector.broadcast %cst_270 : f32 to vector<128x4xf32>
    %c8_271 = arith.constant 8 : index
    %c7_272 = arith.constant 7 : index
    %c0_273 = arith.constant 0 : index
    %241 = vector.load %arg9[%c8_271, %c7_272, %c0_273] : memref<18x32x8xbf16, #tpu.memory_space<vmem>>, vector<8x16x8xbf16>
    %242 = vector.shape_cast %241 : vector<8x16x8xbf16> to vector<128x8xbf16>
    %c0_274 = arith.constant 0 : index
    %c0_275 = arith.constant 0 : index
    %c0_276 = arith.constant 0 : index
    %c0_277 = arith.constant 0 : index
    %243 = vector.load %arg5[%c0_274, %c0_275, %c0_276, %c0_277] : memref<3x3x8x4xbf16, #tpu.memory_space<vmem>>, vector<1x1x8x4xbf16>
    %244 = vector.shape_cast %243 : vector<1x1x8x4xbf16> to vector<8x4xbf16>
    %cst_278 = arith.constant dense<0.000000e+00> : vector<128x4xf32>
    %245 = tpu.matmul %242, %244, %cst_278 {dimension_numbers = #tpu.dot_dimension_numbers<[1], [0], [0], [1], [0, 0, 1, 1], [], []>} : vector<128x8xbf16>, vector<8x4xbf16>, vector<128x4xf32> -> vector<128x4xf32>
    %246 = arith.addf %240, %245 : vector<128x4xf32>
    %c8_279 = arith.constant 8 : index
    %c8_280 = arith.constant 8 : index
    %c0_281 = arith.constant 0 : index
    %247 = vector.load %arg9[%c8_279, %c8_280, %c0_281] : memref<18x32x8xbf16, #tpu.memory_space<vmem>>, vector<8x16x8xbf16>
    %248 = vector.shape_cast %247 : vector<8x16x8xbf16> to vector<128x8xbf16>
    %c0_282 = arith.constant 0 : index
    %c1_283 = arith.constant 1 : index
    %c0_284 = arith.constant 0 : index
    %c0_285 = arith.constant 0 : index
    %249 = vector.load %arg5[%c0_282, %c1_283, %c0_284, %c0_285] : memref<3x3x8x4xbf16, #tpu.memory_space<vmem>>, vector<1x1x8x4xbf16>
    %250 = vector.shape_cast %249 : vector<1x1x8x4xbf16> to vector<8x4xbf16>
    %cst_286 = arith.constant dense<0.000000e+00> : vector<128x4xf32>
    %251 = tpu.matmul %248, %250, %cst_286 {dimension_numbers = #tpu.dot_dimension_numbers<[1], [0], [0], [1], [0, 0, 1, 1], [], []>} : vector<128x8xbf16>, vector<8x4xbf16>, vector<128x4xf32> -> vector<128x4xf32>
    %252 = arith.addf %246, %251 : vector<128x4xf32>
    %c8_287 = arith.constant 8 : index
    %c9_288 = arith.constant 9 : index
    %c0_289 = arith.constant 0 : index
    %253 = vector.load %arg9[%c8_287, %c9_288, %c0_289] : memref<18x32x8xbf16, #tpu.memory_space<vmem>>, vector<8x16x8xbf16>
    %254 = vector.shape_cast %253 : vector<8x16x8xbf16> to vector<128x8xbf16>
    %c0_290 = arith.constant 0 : index
    %c2_291 = arith.constant 2 : index
    %c0_292 = arith.constant 0 : index
    %c0_293 = arith.constant 0 : index
    %255 = vector.load %arg5[%c0_290, %c2_291, %c0_292, %c0_293] : memref<3x3x8x4xbf16, #tpu.memory_space<vmem>>, vector<1x1x8x4xbf16>
    %256 = vector.shape_cast %255 : vector<1x1x8x4xbf16> to vector<8x4xbf16>
    %cst_294 = arith.constant dense<0.000000e+00> : vector<128x4xf32>
    %257 = tpu.matmul %254, %256, %cst_294 {dimension_numbers = #tpu.dot_dimension_numbers<[1], [0], [0], [1], [0, 0, 1, 1], [], []>} : vector<128x8xbf16>, vector<8x4xbf16>, vector<128x4xf32> -> vector<128x4xf32>
    %258 = arith.addf %252, %257 : vector<128x4xf32>
    %c9_295 = arith.constant 9 : index
    %c7_296 = arith.constant 7 : index
    %c0_297 = arith.constant 0 : index
    %259 = vector.load %arg9[%c9_295, %c7_296, %c0_297] : memref<18x32x8xbf16, #tpu.memory_space<vmem>>, vector<8x16x8xbf16>
    %260 = vector.shape_cast %259 : vector<8x16x8xbf16> to vector<128x8xbf16>
    %c1_298 = arith.constant 1 : index
    %c0_299 = arith.constant 0 : index
    %c0_300 = arith.constant 0 : index
    %c0_301 = arith.constant 0 : index
    %261 = vector.load %arg5[%c1_298, %c0_299, %c0_300, %c0_301] : memref<3x3x8x4xbf16, #tpu.memory_space<vmem>>, vector<1x1x8x4xbf16>
    %262 = vector.shape_cast %261 : vector<1x1x8x4xbf16> to vector<8x4xbf16>
    %cst_302 = arith.constant dense<0.000000e+00> : vector<128x4xf32>
    %263 = tpu.matmul %260, %262, %cst_302 {dimension_numbers = #tpu.dot_dimension_numbers<[1], [0], [0], [1], [0, 0, 1, 1], [], []>} : vector<128x8xbf16>, vector<8x4xbf16>, vector<128x4xf32> -> vector<128x4xf32>
    %264 = arith.addf %258, %263 : vector<128x4xf32>
    %c9_303 = arith.constant 9 : index
    %c8_304 = arith.constant 8 : index
    %c0_305 = arith.constant 0 : index
    %265 = vector.load %arg9[%c9_303, %c8_304, %c0_305] : memref<18x32x8xbf16, #tpu.memory_space<vmem>>, vector<8x16x8xbf16>
    %266 = vector.shape_cast %265 : vector<8x16x8xbf16> to vector<128x8xbf16>
    %c1_306 = arith.constant 1 : index
    %c1_307 = arith.constant 1 : index
    %c0_308 = arith.constant 0 : index
    %c0_309 = arith.constant 0 : index
    %267 = vector.load %arg5[%c1_306, %c1_307, %c0_308, %c0_309] : memref<3x3x8x4xbf16, #tpu.memory_space<vmem>>, vector<1x1x8x4xbf16>
    %268 = vector.shape_cast %267 : vector<1x1x8x4xbf16> to vector<8x4xbf16>
    %cst_310 = arith.constant dense<0.000000e+00> : vector<128x4xf32>
    %269 = tpu.matmul %266, %268, %cst_310 {dimension_numbers = #tpu.dot_dimension_numbers<[1], [0], [0], [1], [0, 0, 1, 1], [], []>} : vector<128x8xbf16>, vector<8x4xbf16>, vector<128x4xf32> -> vector<128x4xf32>
    %270 = arith.addf %264, %269 : vector<128x4xf32>
    %c9_311 = arith.constant 9 : index
    %c9_312 = arith.constant 9 : index
    %c0_313 = arith.constant 0 : index
    %271 = vector.load %arg9[%c9_311, %c9_312, %c0_313] : memref<18x32x8xbf16, #tpu.memory_space<vmem>>, vector<8x16x8xbf16>
    %272 = vector.shape_cast %271 : vector<8x16x8xbf16> to vector<128x8xbf16>
    %c1_314 = arith.constant 1 : index
    %c2_315 = arith.constant 2 : index
    %c0_316 = arith.constant 0 : index
    %c0_317 = arith.constant 0 : index
    %273 = vector.load %arg5[%c1_314, %c2_315, %c0_316, %c0_317] : memref<3x3x8x4xbf16, #tpu.memory_space<vmem>>, vector<1x1x8x4xbf16>
    %274 = vector.shape_cast %273 : vector<1x1x8x4xbf16> to vector<8x4xbf16>
    %cst_318 = arith.constant dense<0.000000e+00> : vector<128x4xf32>
    %275 = tpu.matmul %272, %274, %cst_318 {dimension_numbers = #tpu.dot_dimension_numbers<[1], [0], [0], [1], [0, 0, 1, 1], [], []>} : vector<128x8xbf16>, vector<8x4xbf16>, vector<128x4xf32> -> vector<128x4xf32>
    %276 = arith.addf %270, %275 : vector<128x4xf32>
    %c10_319 = arith.constant 10 : index
    %c7_320 = arith.constant 7 : index
    %c0_321 = arith.constant 0 : index
    %277 = vector.load %arg9[%c10_319, %c7_320, %c0_321] : memref<18x32x8xbf16, #tpu.memory_space<vmem>>, vector<8x16x8xbf16>
    %278 = vector.shape_cast %277 : vector<8x16x8xbf16> to vector<128x8xbf16>
    %c2_322 = arith.constant 2 : index
    %c0_323 = arith.constant 0 : index
    %c0_324 = arith.constant 0 : index
    %c0_325 = arith.constant 0 : index
    %279 = vector.load %arg5[%c2_322, %c0_323, %c0_324, %c0_325] : memref<3x3x8x4xbf16, #tpu.memory_space<vmem>>, vector<1x1x8x4xbf16>
    %280 = vector.shape_cast %279 : vector<1x1x8x4xbf16> to vector<8x4xbf16>
    %cst_326 = arith.constant dense<0.000000e+00> : vector<128x4xf32>
    %281 = tpu.matmul %278, %280, %cst_326 {dimension_numbers = #tpu.dot_dimension_numbers<[1], [0], [0], [1], [0, 0, 1, 1], [], []>} : vector<128x8xbf16>, vector<8x4xbf16>, vector<128x4xf32> -> vector<128x4xf32>
    %282 = arith.addf %276, %281 : vector<128x4xf32>
    %c10_327 = arith.constant 10 : index
    %c8_328 = arith.constant 8 : index
    %c0_329 = arith.constant 0 : index
    %283 = vector.load %arg9[%c10_327, %c8_328, %c0_329] : memref<18x32x8xbf16, #tpu.memory_space<vmem>>, vector<8x16x8xbf16>
    %284 = vector.shape_cast %283 : vector<8x16x8xbf16> to vector<128x8xbf16>
    %c2_330 = arith.constant 2 : index
    %c1_331 = arith.constant 1 : index
    %c0_332 = arith.constant 0 : index
    %c0_333 = arith.constant 0 : index
    %285 = vector.load %arg5[%c2_330, %c1_331, %c0_332, %c0_333] : memref<3x3x8x4xbf16, #tpu.memory_space<vmem>>, vector<1x1x8x4xbf16>
    %286 = vector.shape_cast %285 : vector<1x1x8x4xbf16> to vector<8x4xbf16>
    %cst_334 = arith.constant dense<0.000000e+00> : vector<128x4xf32>
    %287 = tpu.matmul %284, %286, %cst_334 {dimension_numbers = #tpu.dot_dimension_numbers<[1], [0], [0], [1], [0, 0, 1, 1], [], []>} : vector<128x8xbf16>, vector<8x4xbf16>, vector<128x4xf32> -> vector<128x4xf32>
    %288 = arith.addf %282, %287 : vector<128x4xf32>
    %c10_335 = arith.constant 10 : index
    %c9_336 = arith.constant 9 : index
    %c0_337 = arith.constant 0 : index
    %289 = vector.load %arg9[%c10_335, %c9_336, %c0_337] : memref<18x32x8xbf16, #tpu.memory_space<vmem>>, vector<8x16x8xbf16>
    %290 = vector.shape_cast %289 : vector<8x16x8xbf16> to vector<128x8xbf16>
    %c2_338 = arith.constant 2 : index
    %c2_339 = arith.constant 2 : index
    %c0_340 = arith.constant 0 : index
    %c0_341 = arith.constant 0 : index
    %291 = vector.load %arg5[%c2_338, %c2_339, %c0_340, %c0_341] : memref<3x3x8x4xbf16, #tpu.memory_space<vmem>>, vector<1x1x8x4xbf16>
    %292 = vector.shape_cast %291 : vector<1x1x8x4xbf16> to vector<8x4xbf16>
    %cst_342 = arith.constant dense<0.000000e+00> : vector<128x4xf32>
    %293 = tpu.matmul %290, %292, %cst_342 {dimension_numbers = #tpu.dot_dimension_numbers<[1], [0], [0], [1], [0, 0, 1, 1], [], []>} : vector<128x8xbf16>, vector<8x4xbf16>, vector<128x4xf32> -> vector<128x4xf32>
    %294 = arith.addf %288, %293 : vector<128x4xf32>
    %c0_343 = arith.constant 0 : index
    %c0_344 = arith.constant 0 : index
    %295 = vector.load %arg6[%c0_343, %c0_344] : memref<1x4xf32, #tpu.memory_space<vmem>>, vector<1x4xf32>
    %296 = vector.shape_cast %295 : vector<1x4xf32> to vector<4xf32>
    %297 = vector.shape_cast %296 : vector<4xf32> to vector<1x4xf32>
    %298 = vector.broadcast %297 : vector<1x4xf32> to vector<128x4xf32>
    %299 = arith.mulf %294, %298 : vector<128x4xf32>
    %c0_345 = arith.constant 0 : index
    %c0_346 = arith.constant 0 : index
    %300 = vector.load %arg7[%c0_345, %c0_346] : memref<1x4xf32, #tpu.memory_space<vmem>>, vector<1x4xf32>
    %301 = vector.shape_cast %300 : vector<1x4xf32> to vector<4xf32>
    %302 = vector.shape_cast %301 : vector<4xf32> to vector<1x4xf32>
    %303 = vector.broadcast %302 : vector<1x4xf32> to vector<128x4xf32>
    %304 = arith.addf %299, %303 : vector<128x4xf32>
    %c0_347 = arith.constant 0 : index
    %c9_348 = arith.constant 9 : index
    %c8_349 = arith.constant 8 : index
    %c0_350 = arith.constant 0 : index
    %305 = vector.load %arg1[%c0_347, %c9_348, %c8_349, %c0_350] : memref<1x18x32x4xbf16, #tpu.memory_space<vmem>>, vector<1x8x16x4xbf16>
    %306 = vector.shape_cast %305 : vector<1x8x16x4xbf16> to vector<8x16x4xbf16>
    %307 = vector.shape_cast %306 : vector<8x16x4xbf16> to vector<128x4xbf16>
    %308 = arith.extf %307 : vector<128x4xbf16> to vector<128x4xf32>
    %309 = arith.addf %308, %304 : vector<128x4xf32>
    %cst_351 = arith.constant 0.000000e+00 : f32
    %310 = vector.broadcast %cst_351 : f32 to vector<128x4xf32>
    %311 = arith.maximumf %309, %310 : vector<128x4xf32>
    %312 = vector.shape_cast %311 : vector<128x4xf32> to vector<8x16x4xf32>
    %c0_352 = arith.constant 0 : index
    %c8_353 = arith.constant 8 : index
    %c0_354 = arith.constant 0 : index
    %c0_355 = arith.constant 0 : index
    %313 = vector.load %arg8[%c0_352, %c8_353, %c0_354, %c0_355] : memref<1x16x16x4xf32, #tpu.memory_space<vmem>>, vector<1x8x16x4xf32>
    %314 = vector.shape_cast %313 : vector<1x8x16x4xf32> to vector<8x16x4xf32>
    %315 = vector.shape_cast %312 : vector<8x16x4xf32> to vector<1x8x16x4xf32>
    tpu.vector_store %arg8[%c0_352, %c8_353, %c0_354, %c0_355], %315 {strides = array<i32>} : memref<1x16x16x4xf32, #tpu.memory_space<vmem>>, vector<1x8x16x4xf32>,
    return
  }
  func.func @transform_0(%arg0: i32) -> (i32, i32, i32, i32) {
    %c0_i32 = arith.constant 0 : i32
    %c0_i32_0 = arith.constant 0 : i32
    %c0_i32_1 = arith.constant 0 : i32
    %c0_i32_2 = arith.constant 0 : i32
    return %arg0, %c0_i32, %c0_i32_0, %c0_i32_1 : i32, i32, i32, i32
  }
  func.func @transform_1(%arg0: i32) -> (i32, i32, i32, i32) {
    %c0_i32 = arith.constant 0 : i32
    %c0_i32_0 = arith.constant 0 : i32
    %c0_i32_1 = arith.constant 0 : i32
    %c0_i32_2 = arith.constant 0 : i32
    %c0_i32_3 = arith.constant 0 : i32
    return %c0_i32, %c0_i32_0, %c0_i32_1, %c0_i32_2 : i32, i32, i32, i32
  }
  func.func @transform_2(%arg0: i32) -> (i32, i32) {
    %c0_i32 = arith.constant 0 : i32
    %c0_i32_0 = arith.constant 0 : i32
    %c0_i32_1 = arith.constant 0 : i32
    return %c0_i32, %c0_i32_0 : i32, i32
  }
  func.func @transform_3(%arg0: i32) -> (i32, i32) {
    %c0_i32 = arith.constant 0 : i32
    %c0_i32_0 = arith.constant 0 : i32
    %c0_i32_1 = arith.constant 0 : i32
    return %c0_i32, %c0_i32_0 : i32, i32
  }
  func.func @transform_4(%arg0: i32) -> (i32, i32, i32, i32) {
    %c0_i32 = arith.constant 0 : i32
    %c0_i32_0 = arith.constant 0 : i32
    %c0_i32_1 = arith.constant 0 : i32
    %c0_i32_2 = arith.constant 0 : i32
    %c0_i32_3 = arith.constant 0 : i32
    return %c0_i32, %c0_i32_0, %c0_i32_1, %c0_i32_2 : i32, i32, i32, i32
  }
  func.func @transform_5(%arg0: i32) -> (i32, i32) {
    %c0_i32 = arith.constant 0 : i32
    %c0_i32_0 = arith.constant 0 : i32
    %c0_i32_1 = arith.constant 0 : i32
    return %c0_i32, %c0_i32_0 : i32, i32
  }
  func.func @transform_6(%arg0: i32) -> (i32, i32) {
    %c0_i32 = arith.constant 0 : i32
    %c0_i32_0 = arith.constant 0 : i32
    %c0_i32_1 = arith.constant 0 : i32
    return %c0_i32, %c0_i32_0 : i32, i32
  }
  func.func @transform_7(%arg0: i32) -> (i32, i32, i32, i32) {
    %c0_i32 = arith.constant 0 : i32
    %c0_i32_0 = arith.constant 0 : i32
    %c0_i32_1 = arith.constant 0 : i32
    %c0_i32_2 = arith.constant 0 : i32
    return %arg0, %c0_i32, %c0_i32_0, %c0_i32_1 : i32, i32, i32, i32
  }
}

</mosaic_0001>

<llo_original>
// kernel: resblock_pallas.1
$region0: #{resblock_pallas.1}
  #allocation0 [shape = 'u32[]', space=smem, size = 0x4, offset = 0x4, fixed_abs, tag = 'smem constant byte address 0x4 - core index']
  #allocation1 [shape = 'u32[144,128]{1,0:T(1,128)}', space=vmem, size = 0x12000, scoped, tag = 'internal scratch']
  #allocation2 [shape = 'bf16[18,32,8]{2,1,0:T(16,128)(2,1)}', space=vmem, size = 0x24000, scoped, tag = 'scratch operand']
  %s0 = inlined_call_operand.hbm [shape: bf16[2,18,32,4], index: 0, kind: input, shape index: {}]
  %s1 = inlined_call_operand.hbm [shape: bf16[3,3,4,8], index: 1, kind: input, shape index: {}]
  %s2 = inlined_call_operand.hbm [shape: f32[1,8], index: 2, kind: input, shape index: {}]
  %s3 = inlined_call_operand.hbm [shape: f32[1,8], index: 3, kind: input, shape index: {}]
  %s4 = inlined_call_operand.hbm [shape: bf16[3,3,8,4], index: 4, kind: input, shape index: {}]
  %s5 = inlined_call_operand.hbm [shape: f32[1,4], index: 5, kind: input, shape index: {}]
  %s6 = inlined_call_operand.hbm [shape: f32[1,4], index: 6, kind: input, shape index: {}]
  %s7 = inlined_call_operand.hbm [shape: f32[2,16,16,4], index: 7, kind: output, shape index: {}]
  %s8 = sld [smem:[#allocation0]]
  $region89: #{resblock_pallas.1} parent=0
    _
  %s10 = ssub.s32 1, %s8
  %s11 = scalar_select 0, %s10, %s8
  $region1: #{resblock_pallas.1} parent=0
    #allocation3 [shape = 'u8[294912]{0}', space=vmem, size = 0x48000, scoped, tag = 'input window, operand 0']
    #allocation4 [shape = 's32[2]{0}', space=sflag, size = 0x8, scoped, tag = 'scoped memory for resblock_pallas.1']
    #allocation5 [shape = 's32[2]{0}', space=sflag, size = 0x8, scoped, tag = 'scoped memory for resblock_pallas.1']
    #allocation6 [shape = 'u8[9216]{0}', space=vmem, size = 0x2400, scoped, tag = 'input window, operand 1, single buffered']
    #allocation7 [shape = 's32[1]{0}', space=sflag, size = 0x4, scoped, tag = 'scoped memory for resblock_pallas.1']
    #allocation8 [shape = 'u8[512]{0}', space=vmem, size = 0x400, scoped, tag = 'input window, operand 2, single buffered']
    #allocation9 [shape = 'u8[512]{0}', space=vmem, size = 0x400, scoped, tag = 'input window, operand 3, single buffered']
    #allocation10 [shape = 's32[1]{0}', space=sflag, size = 0x4, scoped, tag = 'scoped memory for resblock_pallas.1']
    #allocation11 [shape = 'u8[18432]{0}', space=vmem, size = 0x4800, scoped, tag = 'input window, operand 4, single buffered']
    #allocation12 [shape = 'u8[512]{0}', space=vmem, size = 0x400, scoped, tag = 'input window, operand 5, single buffered']
    #allocation13 [shape = 's32[1]{0}', space=sflag, size = 0x4, scoped, tag = 'scoped memory for resblock_pallas.1']
    #allocation14 [shape = 'u8[512]{0}', space=vmem, size = 0x400, scoped, tag = 'input window, operand 6, single buffered']
    #allocation15 [shape = 'u8[262144]{0}', space=vmem, size = 0x40000, scoped, tag = 'output window, operand 0']
    %12 = vsyncpa [#allocation4], 0
    %s13 = scalar_lea.sflag [#allocation4], 1
    %14 = vsyncpa %s13, 0
    %15 = vsyncpa [#allocation7], 0
    %16 = vsyncpa [#allocation10], 0
    %17 = vsyncpa [#allocation13], 0
    %18 = vsyncpa [#allocation5], 0
    %s19 = scalar_lea.sflag [#allocation5], 1
    %20 = vsyncpa %s19, 0
    loop: start=0, step=1, limit=4
    $region2: #{resblock_pallas.1} parent=1 // loop_pre_header
      _
    $region3: #{resblock_pallas.1} parent=1 // loop_header
      %s22 = sphi 0, %s26
      %p23 = scmp.ge.s32.totalorder %s22, 4
      %s32 = sphi 0, %s34
      %s35 = sphi 0, %s32
      %s36 = sphi 0, %s35
      %s52 = sphi 0, %s36
      %s56 = sphi 0, %s56
      %s58 = sphi 0, %s56
      %s59 = sphi 0, %s58
      %s73 = sphi 0, %s59
      %s77 = sphi 0, %s77
      %s79 = sphi 0, %s77
      %s80 = sphi 0, %s79
      %s94 = sphi 0, %s80
      %s98 = sphi 0, %s98
      %s100 = sphi 0, %s98
      %s101 = sphi 0, %s100
      %s115 = sphi 0, %s101
      %s119 = sphi 0, %s119
      %s121 = sphi 0, %s119
      %s122 = sphi 0, %s121
      %s136 = sphi 0, %s122
      %s140 = sphi 0, %s140
      %s142 = sphi 0, %s140
      %s143 = sphi 0, %s142
      %s157 = sphi 0, %s143
      %s161 = sphi 0, %s161
      %s163 = sphi 0, %s161
      %s164 = sphi 0, %s163
      %s178 = sphi 0, %s164
      %s184 = sphi 0, %s186
      %s187 = sphi 0, %s184
      %s188 = sphi 0, %s187
      %s204 = sphi 0, %s188
    $region4: #{resblock_pallas.1} parent=1 // loop_header_branch
      %25 = sbr.rel (%p23) target = $region8
    $region5: #{resblock_pallas.1} parent=1 // loop_body
      %s27 = ssub.s32 %s22, 1
      %s28 = ssub.s32 %s22, 2
      %s29 = sadd.s32 %s22, 1
      %s30 = ssub.s32 %s22, %s29
      %p31 = scmp.eq.s32.totalorder %s30, 0
      %s33 = sadd.s32 %s32, 1
      %s34 = scalar_select %p31, %s32, %s33
      %p37 = pneg %p31
      %p38 = scmp.eq.s32.totalorder %s22, 1
      %p39 = por %p37, %p38
      %p40 = scmp.ne.s32.totalorder %s32, %s35
      %p41 = scmp.eq.s32.totalorder %s22, 0
      %p42 = por %p40, %p41
      %p43 = scmp.ne.s32.totalorder %s32, %s35
      %p44 = scmp.eq.s32.totalorder %s27, 1
      %p45 = por %p43, %p44
      %p46 = scmp.ne.s32.totalorder %s35, %s36
      %p47 = scmp.eq.s32.totalorder %s27, 0
      %p48 = por %p46, %p47
      %p49 = scmp.ne.s32.totalorder %s35, %s36
      %p50 = scmp.eq.s32.totalorder %s28, 1
      %p51 = por %p49, %p50
      %p53 = scmp.ne.s32.totalorder %s36, %s52
      %p54 = scmp.eq.s32.totalorder %s28, 0
      %p55 = por %p53, %p54
      %s57 = sadd.s32 %s56, 1
      %p60 = scmp.eq.s32.totalorder %s22, 1
      %p61 = scmp.ne.s32.totalorder %s56, %s58
      %p62 = scmp.eq.s32.totalorder %s22, 0
      %p63 = por %p61, %p62
      %p64 = scmp.ne.s32.totalorder %s56, %s58
      %p65 = scmp.eq.s32.totalorder %s27, 1
      %p66 = por %p64, %p65
      %p67 = scmp.ne.s32.totalorder %s58, %s59
      %p68 = scmp.eq.s32.totalorder %s27, 0
      %p69 = por %p67, %p68
      %p70 = scmp.ne.s32.totalorder %s58, %s59
      %p71 = scmp.eq.s32.totalorder %s28, 1
      %p72 = por %p70, %p71
      %p74 = scmp.ne.s32.totalorder %s59, %s73
      %p75 = scmp.eq.s32.totalorder %s28, 0
      %p76 = por %p74, %p75
      %s78 = sadd.s32 %s77, 1
      %p81 = scmp.eq.s32.totalorder %s22, 1
      %p82 = scmp.ne.s32.totalorder %s77, %s79
      %p83 = scmp.eq.s32.totalorder %s22, 0
      %p84 = por %p82, %p83
      %p85 = scmp.ne.s32.totalorder %s77, %s79
      %p86 = scmp.eq.s32.totalorder %s27, 1
      %p87 = por %p85, %p86
      %p88 = scmp.ne.s32.totalorder %s79, %s80
      %p89 = scmp.eq.s32.totalorder %s27, 0
      %p90 = por %p88, %p89
      %p91 = scmp.ne.s32.totalorder %s79, %s80
      %p92 = scmp.eq.s32.totalorder %s28, 1
      %p93 = por %p91, %p92
      %p95 = scmp.ne.s32.totalorder %s80, %s94
      %p96 = scmp.eq.s32.totalorder %s28, 0
      %p97 = por %p95, %p96
      %s99 = sadd.s32 %s98, 1
      %p102 = scmp.eq.s32.totalorder %s22, 1
      %p103 = scmp.ne.s32.totalorder %s98, %s100
      %p104 = scmp.eq.s32.totalorder %s22, 0
      %p105 = por %p103, %p104
      %p106 = scmp.ne.s32.totalorder %s98, %s100
      %p107 = scmp.eq.s32.totalorder %s27, 1
      %p108 = por %p106, %p107
      %p109 = scmp.ne.s32.totalorder %s100, %s101
      %p110 = scmp.eq.s32.totalorder %s27, 0
      %p111 = por %p109, %p110
      %p112 = scmp.ne.s32.totalorder %s100, %s101
      %p113 = scmp.eq.s32.totalorder %s28, 1
      %p114 = por %p112, %p113
      %p116 = scmp.ne.s32.totalorder %s101, %s115
      %p117 = scmp.eq.s32.totalorder %s28, 0
      %p118 = por %p116, %p117
      %s120 = sadd.s32 %s119, 1
      %p123 = scmp.eq.s32.totalorder %s22, 1
      %p124 = scmp.ne.s32.totalorder %s119, %s121
      %p125 = scmp.eq.s32.totalorder %s22, 0
      %p126 = por %p124, %p125
      %p127 = scmp.ne.s32.totalorder %s119, %s121
      %p128 = scmp.eq.s32.totalorder %s27, 1
      %p129 = por %p127, %p128
      %p130 = scmp.ne.s32.totalorder %s121, %s122
      %p131 = scmp.eq.s32.totalorder %s27, 0
      %p132 = por %p130, %p131
      %p133 = scmp.ne.s32.totalorder %s121, %s122
      %p134 = scmp.eq.s32.totalorder %s28, 1
      %p135 = por %p133, %p134
      %p137 = scmp.ne.s32.totalorder %s122, %s136
      %p138 = scmp.eq.s32.totalorder %s28, 0
      %p139 = por %p137, %p138
      %s141 = sadd.s32 %s140, 1
      %p144 = scmp.eq.s32.totalorder %s22, 1
      %p145 = scmp.ne.s32.totalorder %s140, %s142
      %p146 = scmp.eq.s32.totalorder %s22, 0
      %p147 = por %p145, %p146
      %p148 = scmp.ne.s32.totalorder %s140, %s142
      %p149 = scmp.eq.s32.totalorder %s27, 1
      %p150 = por %p148, %p149
      %p151 = scmp.ne.s32.totalorder %s142, %s143
      %p152 = scmp.eq.s32.totalorder %s27, 0
      %p153 = por %p151, %p152
      %p154 = scmp.ne.s32.totalorder %s142, %s143
      %p155 = scmp.eq.s32.totalorder %s28, 1
      %p156 = por %p154, %p155
      %p158 = scmp.ne.s32.totalorder %s143, %s157
      %p159 = scmp.eq.s32.totalorder %s28, 0
      %p160 = por %p158, %p159
      %s162 = sadd.s32 %s161, 1
      %p165 = scmp.eq.s32.totalorder %s22, 1
      %p166 = scmp.ne.s32.totalorder %s161, %s163
      %p167 = scmp.eq.s32.totalorder %s22, 0
      %p168 = por %p166, %p167
      %p169 = scmp.ne.s32.totalorder %s161, %s163
      %p170 = scmp.eq.s32.totalorder %s27, 1
      %p171 = por %p169, %p170
      %p172 = scmp.ne.s32.totalorder %s163, %s164
      %p173 = scmp.eq.s32.totalorder %s27, 0
      %p174 = por %p172, %p173
      %p175 = scmp.ne.s32.totalorder %s163, %s164
      %p176 = scmp.eq.s32.totalorder %s28, 1
      %p177 = por %p175, %p176
      %p179 = scmp.ne.s32.totalorder %s164, %s178
      %p180 = scmp.eq.s32.totalorder %s28, 0
      %p181 = por %p179, %p180
      %s182 = ssub.s32 %s22, %s29
      %p183 = scmp.eq.s32.totalorder %s182, 0
      %s185 = sadd.s32 %s184, 1
      %s186 = scalar_select %p183, %s184, %s185
      %p189 = pneg %p183
      %p190 = scmp.eq.s32.totalorder %s22, 1
      %p191 = por %p189, %p190
      %p192 = scmp.ne.s32.totalorder %s184, %s187
      %p193 = scmp.eq.s32.totalorder %s22, 0
      %p194 = por %p192, %p193
      %p195 = scmp.ne.s32.totalorder %s184, %s187
      %p196 = scmp.eq.s32.totalorder %s27, 1
      %p197 = por %p195, %p196
      %p198 = scmp.ne.s32.totalorder %s187, %s188
      %p199 = scmp.eq.s32.totalorder %s27, 0
      %p200 = por %p198, %p199
      %p201 = scmp.ne.s32.totalorder %s187, %s188
      %p202 = scmp.eq.s32.totalorder %s28, 1
      %p203 = por %p201, %p202
      %p205 = scmp.ne.s32.totalorder %s188, %s204
      %p206 = scmp.eq.s32.totalorder %s28, 0
      %p207 = por %p205, %p206
      %p208 = scmp.le.s32.totalorder 1, %s22
      %p209 = scmp.lt.s32.totalorder %s22, 3
      %p210 = pnand %p208, %p209
      %p211 = pneg %p210
      // Predicated region
      $region9: #{resblock_pallas.1} parent=5 // pred_check
        _
      $region10: #{resblock_pallas.1} parent=5 // pred_check_branch
        %213 = sbr.rel (%p210) target = $region12
      $region11: #{resblock_pallas.1} parent=5 // pred_region
        %s214 = ssub.s32 %s22, 1
        // Predicated region
        $region13: #{resblock_pallas.1} parent=11 // pred_check
          %p215 = pneg %p69
        $region14: #{resblock_pallas.1} parent=11 // pred_check_branch
          %217 = sbr.rel (%p215) target = $region16
        $region15: #{resblock_pallas.1} parent=11 // pred_region
          %s219 = ssub.s32 288, 288
          %220 = vsyncadd [#allocation7], %s219
          %s221 = sshll.u32 [#allocation6], 4
          %s222 = int_to_ptr.vmem [resolvable:$true] %s221
          %227 = dma.hbm_to_vmem [thread:$0]  %s1, 288, %s222, [#allocation7], 32, 32, 2
        $region16: #{resblock_pallas.1} parent=11 // pred_fallthru
          _
        // Predicated region
        $region17: #{resblock_pallas.1} parent=11 // pred_check
          %p228 = pneg %p90
        $region18: #{resblock_pallas.1} parent=11 // pred_check_branch
          %230 = sbr.rel (%p228) target = $region20
        $region19: #{resblock_pallas.1} parent=11 // pred_region
          %s232 = ssub.s32 16, 16
          %233 = vsyncadd [#allocation7], %s232
          %s235 = sshll.u32 [#allocation8], 4
          %s236 = int_to_ptr.vmem [resolvable:$true] %s235
          %238 = dma.hbm_to_vmem [thread:$0]  %s2, 16, %s236, [#allocation7]
        $region20: #{resblock_pallas.1} parent=11 // pred_fallthru
          _
        // Predicated region
        $region21: #{resblock_pallas.1} parent=11 // pred_check
          %p239 = pneg %p111
        $region22: #{resblock_pallas.1} parent=11 // pred_check_branch
          %241 = sbr.rel (%p239) target = $region24
        $region23: #{resblock_pallas.1} parent=11 // pred_region
          %s243 = ssub.s32 16, 16
          %244 = vsyncadd [#allocation10], %s243
          %s246 = sshll.u32 [#allocation9], 4
          %s247 = int_to_ptr.vmem [resolvable:$true] %s246
          %249 = dma.hbm_to_vmem [thread:$0]  %s3, 16, %s247, [#allocation10]
        $region24: #{resblock_pallas.1} parent=11 // pred_fallthru
          _
        // Predicated region
        $region25: #{resblock_pallas.1} parent=11 // pred_check
          %p250 = pneg %p132
        $region26: #{resblock_pallas.1} parent=11 // pred_check_branch
          %252 = sbr.rel (%p250) target = $region28
        $region27: #{resblock_pallas.1} parent=11 // pred_region
          %s254 = ssub.s32 576, 576
          %255 = vsyncadd [#allocation10], %s254
          %s256 = sshll.u32 [#allocation11], 4
          %s257 = int_to_ptr.vmem [resolvable:$true] %s256
          %262 = dma.hbm_to_vmem [thread:$0]  %s4, 576, %s257, [#allocation10], 64, 64, 4
        $region28: #{resblock_pallas.1} parent=11 // pred_fallthru
          _
        // Predicated region
        $region29: #{resblock_pallas.1} parent=11 // pred_check
          %p263 = pneg %p153
        $region30: #{resblock_pallas.1} parent=11 // pred_check_branch
          %265 = sbr.rel (%p263) target = $region32
        $region31: #{resblock_pallas.1} parent=11 // pred_region
          %s267 = ssub.s32 16, 16
          %268 = vsyncadd [#allocation13], %s267
          %s270 = sshll.u32 [#allocation12], 4
          %s271 = int_to_ptr.vmem [resolvable:$true] %s270
          %273 = dma.hbm_to_vmem [thread:$0]  %s5, 16, %s271, [#allocation13]
        $region32: #{resblock_pallas.1} parent=11 // pred_fallthru
          _
        // Predicated region
        $region33: #{resblock_pallas.1} parent=11 // pred_check
          %p274 = pneg %p174
        $region34: #{resblock_pallas.1} parent=11 // pred_check_branch
          %276 = sbr.rel (%p274) target = $region36
        $region35: #{resblock_pallas.1} parent=11 // pred_region
          %s278 = ssub.s32 16, 16
          %279 = vsyncadd [#allocation13], %s278
          %s281 = sshll.u32 [#allocation14], 4
          %s282 = int_to_ptr.vmem [resolvable:$true] %s281
          %284 = dma.hbm_to_vmem [thread:$0]  %s6, 16, %s282, [#allocation13]
        $region36: #{resblock_pallas.1} parent=11 // pred_fallthru
          _
      $region12: #{resblock_pallas.1} parent=5 // pred_fallthru
        _
      %p285 = scmp.lt.s32.totalorder %s22, 2
      // Predicated region
      $region37: #{resblock_pallas.1} parent=5 // pred_check
        %p286 = pneg %p285
      $region38: #{resblock_pallas.1} parent=5 // pred_check_branch
        %288 = sbr.rel (%p286) target = $region40
      $region39: #{resblock_pallas.1} parent=5 // pred_region
        // Predicated region
        $region41: #{resblock_pallas.1} parent=39 // pred_check
          %p289 = pneg %p42
        $region42: #{resblock_pallas.1} parent=39 // pred_check_branch
          %291 = sbr.rel (%p289) target = $region44
        $region43: #{resblock_pallas.1} parent=39 // pred_region
          %s292 = sand.u32 %s32, 1
          %s293 = scalar_lea.sflag [#allocation4], %s292
          %s294 = sand.u32 %s32, 1
          %s295 = smul.addr %s294, 288
          %s296 = scalar_lea.vmem [#allocation3], %s295
          %s298 = ssub.s32 4608, 4608
          %299 = vsyncadd %s293, %s298
          %s300 = smul.addr %s22, 72
          %s301 = smul.addr %s300, 64
          %s302 = scalar_lea.hbm %s0, %s301
          %s303 = sshll.u32 %s296, 4
          %s304 = int_to_ptr.vmem [resolvable:$true] %s303
          %309 = dma.hbm_to_vmem [thread:$0]  %s302, 4608, %s304, %s293, 64, 64, 4
        $region44: #{resblock_pallas.1} parent=39 // pred_fallthru
          _
      $region40: #{resblock_pallas.1} parent=5 // pred_fallthru
        _
      %p310 = scmp.le.s32.totalorder 1, %s22
      %p311 = scmp.lt.s32.totalorder %s22, 3
      %p312 = pnand %p310, %p311
      %p313 = pneg %p312
      // Predicated region
      $region45: #{resblock_pallas.1} parent=5 // pred_check
        _
      $region46: #{resblock_pallas.1} parent=5 // pred_check_branch
        %315 = sbr.rel (%p312) target = $region48
      $region47: #{resblock_pallas.1} parent=5 // pred_region
        %s316 = ssub.s32 %s22, 1
        %s317 = sand.u32 %s35, 1
        %s318 = scalar_lea.sflag [#allocation4], %s317
        %s319 = sand.u32 %s35, 1
        %s320 = smul.addr %s319, 288
        %s321 = scalar_lea.vmem [#allocation3], %s320
        // Predicated region
        $region49: #{resblock_pallas.1} parent=47 // pred_check
          %p322 = pneg %p48
        $region50: #{resblock_pallas.1} parent=47 // pred_check_branch
          %324 = sbr.rel (%p322) target = $region52
        $region51: #{resblock_pallas.1} parent=47 // pred_region
          %325 = dma.done %s318, 4608
        $region52: #{resblock_pallas.1} parent=47 // pred_fallthru
          _
        // Predicated region
        $region53: #{resblock_pallas.1} parent=47 // pred_check
          %p326 = pneg %p69
        $region54: #{resblock_pallas.1} parent=47 // pred_check_branch
          %328 = sbr.rel (%p326) target = $region56
        $region55: #{resblock_pallas.1} parent=47 // pred_region
          %329 = dma.done [#allocation7], 288
        $region56: #{resblock_pallas.1} parent=47 // pred_fallthru
          _
        // Predicated region
        $region57: #{resblock_pallas.1} parent=47 // pred_check
          %p330 = pneg %p90
        $region58: #{resblock_pallas.1} parent=47 // pred_check_branch
          %332 = sbr.rel (%p330) target = $region60
        $region59: #{resblock_pallas.1} parent=47 // pred_region
          %333 = dma.done [#allocation7], 16
        $region60: #{resblock_pallas.1} parent=47 // pred_fallthru
          _
        // Predicated region
        $region61: #{resblock_pallas.1} parent=47 // pred_check
          %p334 = pneg %p111
        $region62: #{resblock_pallas.1} parent=47 // pred_check_branch
          %336 = sbr.rel (%p334) target = $region64
        $region63: #{resblock_pallas.1} parent=47 // pred_region
          %337 = dma.done [#allocation10], 16
        $region64: #{resblock_pallas.1} parent=47 // pred_fallthru
          _
        // Predicated region
        $region65: #{resblock_pallas.1} parent=47 // pred_check
          %p338 = pneg %p132
        $region66: #{resblock_pallas.1} parent=47 // pred_check_branch
          %340 = sbr.rel (%p338) target = $region68
        $region67: #{resblock_pallas.1} parent=47 // pred_region
          %341 = dma.done [#allocation10], 576
        $region68: #{resblock_pallas.1} parent=47 // pred_fallthru
          _
        // Predicated region
        $region69: #{resblock_pallas.1} parent=47 // pred_check
          %p342 = pneg %p153
        $region70: #{resblock_pallas.1} parent=47 // pred_check_branch
          %344 = sbr.rel (%p342) target = $region72
        $region71: #{resblock_pallas.1} parent=47 // pred_region
          %345 = dma.done [#allocation13], 16
        $region72: #{resblock_pallas.1} parent=47 // pred_fallthru
          _
        // Predicated region
        $region73: #{resblock_pallas.1} parent=47 // pred_check
          %p346 = pneg %p174
        $region74: #{resblock_pallas.1} parent=47 // pred_check_branch
          %348 = sbr.rel (%p346) target = $region76
        $region75: #{resblock_pallas.1} parent=47 // pred_region
          %349 = dma.done [#allocation13], 16
        $region76: #{resblock_pallas.1} parent=47 // pred_fallthru
          _
        %s350 = sand.u32 %s35, 1
        %s351 = scalar_lea.sflag [#allocation4], %s350
        %s352 = sand.u32 %s35, 1
        %s353 = smul.addr %s352, 288
        %s354 = scalar_lea.vmem [#allocation3], %s353
        %p355 = pneg %p48
        %p356 = pneg %p45
        %p357 = pneg %p69
        %p358 = pneg %p66
        %p359 = pneg %p90
        %p360 = pneg %p87
        %p361 = pneg %p111
        %p362 = pneg %p108
        %p363 = pneg %p132
        %p364 = pneg %p129
        %p365 = pneg %p153
        %p366 = pneg %p150
        %p367 = pneg %p174
        %p368 = pneg %p171
        %p369 = pneg %p200
        %p370 = pneg %p197
        %s371 = sand.u32 %s187, 1
        %s372 = scalar_lea.sflag [#allocation5], %s371
        %s373 = sand.u32 %s187, 1
        %s374 = smul.addr %s373, 256
        %s375 = scalar_lea.vmem [#allocation15], %s374
        %vm377 = vcmask 64512
        %378 = vst.msk [vmem:[#allocation2] sm:$0xff] %vm377, 0
        %379 = vst.msk [vmem:[#allocation2 + $0x8] sm:$0xff] %vm377, 0
        %s380 = scalar_lea.vmem [#allocation2], 272
        %381 = vst.msk [vmem:[%s380] sm:$0xff] %vm377, 0
        %382 = vst.msk [vmem:[%s380 + $0x8] sm:$0xff] %vm377, 0
        %s383 = scalar_lea.vmem [#allocation2], 16
        %vm384 = vcmask 60419
        %vm385 = vsmask.f32 7950
        %vm386 = vmand %vm384, %vm385
        %v387 = vld [vmem:[%s383] sm:$0x8]
        %v388 = vsel %vm386, 0, %v387
        %389 = vst [vmem:[%s383] sm:$0x8] %v388
        %v390 = vld [vmem:[%s383 + $0x10] sm:$0x8]
        %v391 = vsel %vm386, 0, %v390
        %392 = vst [vmem:[%s383 + $0x10] sm:$0x8] %v391
        %v393 = vld [vmem:[%s383 + $0x20] sm:$0x8]
        %v394 = vsel %vm386, 0, %v393
        %395 = vst [vmem:[%s383 + $0x20] sm:$0x8] %v394
        %v396 = vld [vmem:[%s383 + $0x30] sm:$0x8]
        %v397 = vsel %vm386, 0, %v396
        %398 = vst [vmem:[%s383 + $0x30] sm:$0x8] %v397
        %v399 = vld [vmem:[%s383 + $0x40] sm:$0x8]
        %v400 = vsel %vm386, 0, %v399
        %401 = vst [vmem:[%s383 + $0x40] sm:$0x8] %v400
        %v402 = vld [vmem:[%s383 + $0x50] sm:$0x8]
        %v403 = vsel %vm386, 0, %v402
        %404 = vst [vmem:[%s383 + $0x50] sm:$0x8] %v403
        %v405 = vld [vmem:[%s383 + $0x60] sm:$0x8]
        %v406 = vsel %vm386, 0, %v405
        %407 = vst [vmem:[%s383 + $0x60] sm:$0x8] %v406
        %v408 = vld [vmem:[%s383 + $0x70] sm:$0x8]
        %v409 = vsel %vm386, 0, %v408
        %410 = vst [vmem:[%s383 + $0x70] sm:$0x8] %v409
        %v411 = vld [vmem:[%s383 + $0x80] sm:$0x8]
        %v412 = vsel %vm386, 0, %v411
        %413 = vst [vmem:[%s383 + $0x80] sm:$0x8] %v412
        %v414 = vld [vmem:[%s383 + $0x90] sm:$0x8]
        %v415 = vsel %vm386, 0, %v414
        %416 = vst [vmem:[%s383 + $0x90] sm:$0x8] %v415
        %v417 = vld [vmem:[%s383 + $0xa0] sm:$0x8]
        %v418 = vsel %vm386, 0, %v417
        %419 = vst [vmem:[%s383 + $0xa0] sm:$0x8] %v418
        %v420 = vld [vmem:[%s383 + $0xb0] sm:$0x8]
        %v421 = vsel %vm386, 0, %v420
        %422 = vst [vmem:[%s383 + $0xb0] sm:$0x8] %v421
        %v423 = vld [vmem:[%s383 + $0xc0] sm:$0x8]
        %v424 = vsel %vm386, 0, %v423
        %425 = vst [vmem:[%s383 + $0xc0] sm:$0x8] %v424
        %v426 = vld [vmem:[%s383 + $0xd0] sm:$0x8]
        %v427 = vsel %vm386, 0, %v426
        %428 = vst [vmem:[%s383 + $0xd0] sm:$0x8] %v427
        %v429 = vld [vmem:[%s383 + $0xe0] sm:$0x8]
        %v430 = vsel %vm386, 0, %v429
        %431 = vst [vmem:[%s383 + $0xe0] sm:$0x8] %v430
        %v432 = vld [vmem:[%s383 + $0xf0] sm:$0x8]
        %v433 = vsel %vm386, 0, %v432
        %434 = vst [vmem:[%s383 + $0xf0] sm:$0x8] %v433
        %vm435 = vcmask 61444
        %vm436 = vsmask.f32 4352
        %vm437 = vmand %vm435, %vm436
        %v438 = vld [vmem:[%s383 + $0x8] sm:$0x10]
        %v439 = vsel %vm437, 0, %v438
        %440 = vst [vmem:[%s383 + $0x8] sm:$0x10] %v439
        %v441 = vld [vmem:[%s383 + $0x18] sm:$0x10]
        %v442 = vsel %vm437, 0, %v441
        %443 = vst [vmem:[%s383 + $0x18] sm:$0x10] %v442
        %v444 = vld [vmem:[%s383 + $0x28] sm:$0x10]
        %v445 = vsel %vm437, 0, %v444
        %446 = vst [vmem:[%s383 + $0x28] sm:$0x10] %v445
        %v447 = vld [vmem:[%s383 + $0x38] sm:$0x10]
        %v448 = vsel %vm437, 0, %v447
        %449 = vst [vmem:[%s383 + $0x38] sm:$0x10] %v448
        %v450 = vld [vmem:[%s383 + $0x48] sm:$0x10]
        %v451 = vsel %vm437, 0, %v450
        %452 = vst [vmem:[%s383 + $0x48] sm:$0x10] %v451
        %v453 = vld [vmem:[%s383 + $0x58] sm:$0x10]
        %v454 = vsel %vm437, 0, %v453
        %455 = vst [vmem:[%s383 + $0x58] sm:$0x10] %v454
        %v456 = vld [vmem:[%s383 + $0x68] sm:$0x10]
        %v457 = vsel %vm437, 0, %v456
        %458 = vst [vmem:[%s383 + $0x68] sm:$0x10] %v457
        %v459 = vld [vmem:[%s383 + $0x78] sm:$0x10]
        %v460 = vsel %vm437, 0, %v459
        %461 = vst [vmem:[%s383 + $0x78] sm:$0x10] %v460
        %v462 = vld [vmem:[%s383 + $0x88] sm:$0x10]
        %v463 = vsel %vm437, 0, %v462
        %464 = vst [vmem:[%s383 + $0x88] sm:$0x10] %v463
        %v465 = vld [vmem:[%s383 + $0x98] sm:$0x10]
        %v466 = vsel %vm437, 0, %v465
        %467 = vst [vmem:[%s383 + $0x98] sm:$0x10] %v466
        %v468 = vld [vmem:[%s383 + $0xa8] sm:$0x10]
        %v469 = vsel %vm437, 0, %v468
        %470 = vst [vmem:[%s383 + $0xa8] sm:$0x10] %v469
        %v471 = vld [vmem:[%s383 + $0xb8] sm:$0x10]
        %v472 = vsel %vm437, 0, %v471
        %473 = vst [vmem:[%s383 + $0xb8] sm:$0x10] %v472
        %v474 = vld [vmem:[%s383 + $0xc8] sm:$0x10]
        %v475 = vsel %vm437, 0, %v474
        %476 = vst [vmem:[%s383 + $0xc8] sm:$0x10] %v475
        %v477 = vld [vmem:[%s383 + $0xd8] sm:$0x10]
        %v478 = vsel %vm437, 0, %v477
        %479 = vst [vmem:[%s383 + $0xd8] sm:$0x10] %v478
        %v480 = vld [vmem:[%s383 + $0xe8] sm:$0x10]
        %v481 = vsel %vm437, 0, %v480
        %482 = vst [vmem:[%s383 + $0xe8] sm:$0x10] %v481
        %v483 = vld [vmem:[%s383 + $0xf8] sm:$0x10]
        %v484 = vsel %vm437, 0, %v483
        %485 = vst [vmem:[%s383 + $0xf8] sm:$0x10] %v484
        %v486 = vld [vmem:[%s321] sm:$0x8]
        %v487 = vld [vmem:[%s321 + $0x4] sm:$0xf]
        %v488 = vld [vmem:[%s321 + $0x8] sm:$0xf]
        %v489 = vld [vmem:[%s321 + $0x10] sm:$0x8]
        %v490 = vld [vmem:[%s321 + $0x14] sm:$0xf]
        %v491 = vld [vmem:[%s321 + $0x18] sm:$0xf]
        %v492 = vld [vmem:[%s321 + $0x20] sm:$0x8]
        %v493 = vld [vmem:[%s321 + $0x24] sm:$0xf]
        %v494 = vld [vmem:[%s321 + $0x28] sm:$0xf]
        %v495 = vld [vmem:[%s321 + $0x30] sm:$0x8]
        %v496 = vld [vmem:[%s321 + $0x34] sm:$0xf]
        %v497 = vld [vmem:[%s321 + $0x38] sm:$0xf]
        %v498 = vld [vmem:[%s321 + $0x40] sm:$0x8]
        %v499 = vld [vmem:[%s321 + $0x44] sm:$0xf]
        %v500 = vld [vmem:[%s321 + $0x48] sm:$0xf]
        %v501 = vld [vmem:[%s321 + $0x50] sm:$0x8]
        %v502 = vld [vmem:[%s321 + $0x54] sm:$0xf]
        %v503 = vld [vmem:[%s321 + $0x58] sm:$0xf]
        %v504 = vld [vmem:[%s321 + $0x60] sm:$0x8]
        %v505 = vld [vmem:[%s321 + $0x64] sm:$0xf]
        %v506 = vld [vmem:[%s321 + $0x68] sm:$0xf]
        %v507 = vld [vmem:[%s321 + $0x70] sm:$0x8]
        %v508 = vld [vmem:[%s321 + $0x74] sm:$0xf]
        %v509 = vld [vmem:[%s321 + $0x78] sm:$0xf]
        %vm510 = vsmask.f32 256
        %vm511 = vsmask.f32 4368
        %vm512 = vmor %vm510, %vm511
        %v514 = vshrl.u32 %v486, 16
        %v516 = vrot.slane %v514, 7
        %v517 = vrot.slane %v516, 4
        %v519 = vshrl.u32 %v487, 16
        %v521 = vrot.slane %v519, 7
        %v522 = vshll.u32 %v487, 16
        %v524 = vor.u32 %v521, %v522
        %v525 = vsel %vm512, %v517, %v524
        %v526 = vrot.slane %v521, 4
        %v528 = vshrl.u32 %v488, 16
        %v530 = vrot.slane %v528, 7
        %v531 = vshll.u32 %v488, 16
        %v533 = vor.u32 %v530, %v531
        %v534 = vsel %vm512, %v526, %v533
        %v536 = vshrl.u32 %v489, 16
        %v538 = vrot.slane %v536, 7
        %v539 = vrot.slane %v538, 4
        %v541 = vshrl.u32 %v490, 16
        %v543 = vrot.slane %v541, 7
        %v544 = vshll.u32 %v490, 16
        %v546 = vor.u32 %v543, %v544
        %v547 = vsel %vm512, %v539, %v546
        %v548 = vrot.slane %v543, 4
        %v550 = vshrl.u32 %v491, 16
        %v552 = vrot.slane %v550, 7
        %v553 = vshll.u32 %v491, 16
        %v555 = vor.u32 %v552, %v553
        %v556 = vsel %vm512, %v548, %v555
        %v558 = vshrl.u32 %v492, 16
        %v560 = vrot.slane %v558, 7
        %v561 = vrot.slane %v560, 4
        %v563 = vshrl.u32 %v493, 16
        %v565 = vrot.slane %v563, 7
        %v566 = vshll.u32 %v493, 16
        %v568 = vor.u32 %v565, %v566
        %v569 = vsel %vm512, %v561, %v568
        %v570 = vrot.slane %v565, 4
        %v572 = vshrl.u32 %v494, 16
        %v574 = vrot.slane %v572, 7
        %v575 = vshll.u32 %v494, 16
        %v577 = vor.u32 %v574, %v575
        %v578 = vsel %vm512, %v570, %v577
        %v580 = vshrl.u32 %v495, 16
        %v582 = vrot.slane %v580, 7
        %v583 = vrot.slane %v582, 4
        %v585 = vshrl.u32 %v496, 16
        %v587 = vrot.slane %v585, 7
        %v588 = vshll.u32 %v496, 16
        %v590 = vor.u32 %v587, %v588
        %v591 = vsel %vm512, %v583, %v590
        %v592 = vrot.slane %v587, 4
        %v594 = vshrl.u32 %v497, 16
        %v596 = vrot.slane %v594, 7
        %v597 = vshll.u32 %v497, 16
        %v599 = vor.u32 %v596, %v597
        %v600 = vsel %vm512, %v592, %v599
        %v602 = vshrl.u32 %v498, 16
        %v604 = vrot.slane %v602, 7
        %v605 = vrot.slane %v604, 4
        %v607 = vshrl.u32 %v499, 16
        %v609 = vrot.slane %v607, 7
        %v610 = vshll.u32 %v499, 16
        %v612 = vor.u32 %v609, %v610
        %v613 = vsel %vm512, %v605, %v612
        %v614 = vrot.slane %v609, 4
        %v616 = vshrl.u32 %v500, 16
        %v618 = vrot.slane %v616, 7
        %v619 = vshll.u32 %v500, 16
        %v621 = vor.u32 %v618, %v619
        %v622 = vsel %vm512, %v614, %v621
        %v624 = vshrl.u32 %v501, 16
        %v626 = vrot.slane %v624, 7
        %v627 = vrot.slane %v626, 4
        %v629 = vshrl.u32 %v502, 16
        %v631 = vrot.slane %v629, 7
        %v632 = vshll.u32 %v502, 16
        %v634 = vor.u32 %v631, %v632
        %v635 = vsel %vm512, %v627, %v634
        %v636 = vrot.slane %v631, 4
        %v638 = vshrl.u32 %v503, 16
        %v640 = vrot.slane %v638, 7
        %v641 = vshll.u32 %v503, 16
        %v643 = vor.u32 %v640, %v641
        %v644 = vsel %vm512, %v636, %v643
        %v646 = vshrl.u32 %v504, 16
        %v648 = vrot.slane %v646, 7
        %v649 = vrot.slane %v648, 4
        %v651 = vshrl.u32 %v505, 16
        %v653 = vrot.slane %v651, 7
        %v654 = vshll.u32 %v505, 16
        %v656 = vor.u32 %v653, %v654
        %v657 = vsel %vm512, %v649, %v656
        %v658 = vrot.slane %v653, 4
        %v660 = vshrl.u32 %v506, 16
        %v662 = vrot.slane %v660, 7
        %v663 = vshll.u32 %v506, 16
        %v665 = vor.u32 %v662, %v663
        %v666 = vsel %vm512, %v658, %v665
        %v668 = vshrl.u32 %v507, 16
        %v670 = vrot.slane %v668, 7
        %v671 = vrot.slane %v670, 4
        %v673 = vshrl.u32 %v508, 16
        %v675 = vrot.slane %v673, 7
        %v676 = vshll.u32 %v508, 16
        %v678 = vor.u32 %v675, %v676
        %v679 = vsel %vm512, %v671, %v678
        %v680 = vrot.slane %v675, 4
        %v682 = vshrl.u32 %v509, 16
        %v684 = vrot.slane %v682, 7
        %v685 = vshll.u32 %v509, 16
        %v687 = vor.u32 %v684, %v685
        %v688 = vsel %vm512, %v680, %v687
        %v689 = vld [vmem:[#allocation6] sm:$0x3]
        %s690 = scalar_lea.vmem [#allocation6], 2
        %v691 = vld [vmem:[%s690] sm:$0x3]
        %v708 = vunpack.c.l.b16 %v487
        %v709 = vunpack.c.l.b16 %v488
        %v710 = vunpack.c.l.b16 %v490
        %v711 = vunpack.c.l.b16 %v491
        %v712 = vunpack.c.l.b16 %v493
        %v713 = vunpack.c.l.b16 %v494
        %v714 = vunpack.c.l.b16 %v496
        %v715 = vunpack.c.l.b16 %v497
        %v716 = vunpack.c.l.b16 %v499
        %v717 = vunpack.c.l.b16 %v500
        %v718 = vunpack.c.l.b16 %v502
        %v719 = vunpack.c.l.b16 %v503
        %v720 = vunpack.c.l.b16 %v505
        %v721 = vunpack.c.l.b16 %v506
        %v722 = vunpack.c.l.b16 %v508
        %v723 = vunpack.c.l.b16 %v509
        %v724 = vpack.c.b16 %v709, %v708
        %v725 = vpack.c.b16 %v711, %v710
        %v726 = vpack.c.b16 %v713, %v712
        %v727 = vpack.c.b16 %v715, %v714
        %v728 = vpack.c.b16 %v717, %v716
        %v729 = vpack.c.b16 %v719, %v718
        %v730 = vpack.c.b16 %v721, %v720
        %v731 = vpack.c.b16 %v723, %v722
        %vm732 = vcmask 31744
        %v734 = vsel %vm732, %v724, 0
        %v737 = vsel %vm732, %v725, 0
        %v740 = vsel %vm732, %v726, 0
        %v743 = vsel %vm732, %v727, 0
        %v746 = vsel %vm732, %v728, 0
        %v749 = vsel %vm732, %v729, 0
        %v752 = vsel %vm732, %v730, 0
        %v755 = vsel %vm732, %v731, 0
        %vm757 = vcmask 1041408
        %v759 = vsel %vm757, %v691, 0
        %761 = vmatprep.subr.bf16.mxu0 0
        %762 = vmatpush1.bf16.msra.mxu0 %v759
        %763 = vmatprep.subr.bf16.mxu0 0
        %764 = vmatpush1.bf16.msra.mxu0 0
        %765 = vmatprep.subr.bf16.mxu0 0
        %766 = vmatpush1.bf16.msra.mxu0 0
        %767 = vmatprep.subr.bf16.mxu0 0
        %768 = vmatpush1.bf16.msra.mxu0 0
        %769 = vmatprep.subr.bf16.mxu0 0
        %770 = vmatpush1.bf16.msra.mxu0 0
        %771 = vmatprep.subr.bf16.mxu0 0
        %772 = vmatpush1.bf16.msra.mxu0 0
        %773 = vmatprep.subr.bf16.mxu0 0
        %774 = vmatpush1.bf16.msra.mxu0 0
        %775 = vmatprep.subr.bf16.mxu0 0
        %776 = vmatpush1.bf16.msra.mxu0 0
        %777 = vmatprep.subr.bf16.mxu0 0
        %778 = vmatpush1.bf16.msra.mxu0 0
        %779 = vmatprep.subr.bf16.mxu0 0
        %780 = vmatpush1.bf16.msra.mxu0 0
        %781 = vmatprep.subr.bf16.mxu0 0
        %782 = vmatpush1.bf16.msra.mxu0 0
        %783 = vmatprep.subr.bf16.mxu0 0
        %784 = vmatpush1.bf16.msra.mxu0 0
        %785 = vmatprep.subr.bf16.mxu0 0
        %786 = vmatpush1.bf16.msra.mxu0 0
        %787 = vmatprep.subr.bf16.mxu0 0
        %788 = vmatpush1.bf16.msra.mxu0 0
        %789 = vmatprep.subr.bf16.mxu0 0
        %790 = vmatpush1.bf16.msra.mxu0 0
        %791 = vmatprep.subr.bf16.mxu0 0
        %792 = vmatpush1.bf16.msra.mxu0 0
        %793 = vmatprep.mubr.bf16.mxu0 0
        %794 = vmatmul.mubr.bf16.gmra.mrb[0].mxu0 %v734
        %v795 = vpop.f32.mrb[0].mxu0
        %v796 = vadd.f32 0.0, %v795
        %v797 = vpop.f32.mrb[0].mxu0
        %v798 = vpop.f32.mrb[0].mxu0
        %v799 = vadd.f32 0.0, %v798
        %v800 = vpop.f32.mrb[0].mxu0
        %801 = vmatprep.mubr.bf16.mxu0 0
        %802 = vmatmul.mubr.bf16.gmra.mrb[0].mxu0 %v737
        %v803 = vpop.f32.mrb[0].mxu0
        %v804 = vadd.f32 0.0, %v803
        %v805 = vpop.f32.mrb[0].mxu0
        %v806 = vpop.f32.mrb[0].mxu0
        %v807 = vadd.f32 0.0, %v806
        %v808 = vpop.f32.mrb[0].mxu0
        %809 = vmatprep.mubr.bf16.mxu0 0
        %810 = vmatmul.mubr.bf16.gmra.mrb[0].mxu0 %v740
        %v811 = vpop.f32.mrb[0].mxu0
        %v812 = vadd.f32 0.0, %v811
        %v813 = vpop.f32.mrb[0].mxu0
        %v814 = vpop.f32.mrb[0].mxu0
        %v815 = vadd.f32 0.0, %v814
        %v816 = vpop.f32.mrb[0].mxu0
        %817 = vmatprep.mubr.bf16.mxu0 0
        %818 = vmatmul.mubr.bf16.gmra.mrb[0].mxu0 %v743
        %v819 = vpop.f32.mrb[0].mxu0
        %v820 = vadd.f32 0.0, %v819
        %v821 = vpop.f32.mrb[0].mxu0
        %v822 = vpop.f32.mrb[0].mxu0
        %v823 = vadd.f32 0.0, %v822
        %v824 = vpop.f32.mrb[0].mxu0
        %825 = vmatprep.mubr.bf16.mxu0 0
        %826 = vmatmul.mubr.bf16.gmra.mrb[0].mxu0 %v746
        %v827 = vpop.f32.mrb[0].mxu0
        %v828 = vadd.f32 0.0, %v827
        %v829 = vpop.f32.mrb[0].mxu0
        %v830 = vpop.f32.mrb[0].mxu0
        %v831 = vadd.f32 0.0, %v830
        %v832 = vpop.f32.mrb[0].mxu0
        %833 = vmatprep.mubr.bf16.mxu0 0
        %834 = vmatmul.mubr.bf16.gmra.mrb[0].mxu0 %v749
        %v835 = vpop.f32.mrb[0].mxu0
        %v836 = vadd.f32 0.0, %v835
        %v837 = vpop.f32.mrb[0].mxu0
        %v838 = vpop.f32.mrb[0].mxu0
        %v839 = vadd.f32 0.0, %v838
        %v840 = vpop.f32.mrb[0].mxu0
        %841 = vmatprep.mubr.bf16.mxu0 0
        %842 = vmatmul.mubr.bf16.gmra.mrb[0].mxu0 %v752
        %v843 = vpop.f32.mrb[0].mxu0
        %v844 = vadd.f32 0.0, %v843
        %v845 = vpop.f32.mrb[0].mxu0
        %v846 = vpop.f32.mrb[0].mxu0
        %v847 = vadd.f32 0.0, %v846
        %v848 = vpop.f32.mrb[0].mxu0
        %849 = vmatprep.mubr.bf16.mxu0 0
        %850 = vmatmul.mubr.bf16.gmra.mrb[0].mxu0 %v755
        %v851 = vpop.f32.mrb[0].mxu0
        %v852 = vadd.f32 0.0, %v851
        %v853 = vpop.f32.mrb[0].mxu0
        %v854 = vpop.f32.mrb[0].mxu0
        %v855 = vadd.f32 0.0, %v854
        %v856 = vpop.f32.mrb[0].mxu0
        %857 = vdwg.mxu0
        %v858 = vunpack.c.l.b16 %v525
        %v859 = vunpack.c.l.b16 %v534
        %v860 = vunpack.c.l.b16 %v547
        %v861 = vunpack.c.l.b16 %v556
        %v862 = vunpack.c.l.b16 %v569
        %v863 = vunpack.c.l.b16 %v578
        %v864 = vunpack.c.l.b16 %v591
        %v865 = vunpack.c.l.b16 %v600
        %v866 = vunpack.c.l.b16 %v613
        %v867 = vunpack.c.l.b16 %v622
        %v868 = vunpack.c.l.b16 %v635
        %v869 = vunpack.c.l.b16 %v644
        %v870 = vunpack.c.l.b16 %v657
        %v871 = vunpack.c.l.b16 %v666
        %v872 = vunpack.c.l.b16 %v679
        %v873 = vunpack.c.l.b16 %v688
        %v874 = vpack.c.b16 %v859, %v858
        %v875 = vpack.c.b16 %v861, %v860
        %v876 = vpack.c.b16 %v863, %v862
        %v877 = vpack.c.b16 %v865, %v864
        %v878 = vpack.c.b16 %v867, %v866
        %v879 = vpack.c.b16 %v869, %v868
        %v880 = vpack.c.b16 %v871, %v870
        %v881 = vpack.c.b16 %v873, %v872
        %v883 = vsel %vm732, %v874, 0
        %v886 = vsel %vm732, %v875, 0
        %v889 = vsel %vm732, %v876, 0
        %v892 = vsel %vm732, %v877, 0
        %v895 = vsel %vm732, %v878, 0
        %v898 = vsel %vm732, %v879, 0
        %v901 = vsel %vm732, %v880, 0
        %v904 = vsel %vm732, %v881, 0
        %v907 = vsel %vm757, %v689, 0
        %909 = vmatprep.subr.bf16.mxu0 0
        %910 = vmatpush1.bf16.msra.mxu0 %v907
        %911 = vmatprep.subr.bf16.mxu0 0
        %912 = vmatpush1.bf16.msra.mxu0 0
        %913 = vmatprep.subr.bf16.mxu0 0
        %914 = vmatpush1.bf16.msra.mxu0 0
        %915 = vmatprep.subr.bf16.mxu0 0
        %916 = vmatpush1.bf16.msra.mxu0 0
        %917 = vmatprep.subr.bf16.mxu0 0
        %918 = vmatpush1.bf16.msra.mxu0 0
        %919 = vmatprep.subr.bf16.mxu0 0
        %920 = vmatpush1.bf16.msra.mxu0 0
        %921 = vmatprep.subr.bf16.mxu0 0
        %922 = vmatpush1.bf16.msra.mxu0 0
        %923 = vmatprep.subr.bf16.mxu0 0
        %924 = vmatpush1.bf16.msra.mxu0 0
        %925 = vmatprep.subr.bf16.mxu0 0
        %926 = vmatpush1.bf16.msra.mxu0 0
        %927 = vmatprep.subr.bf16.mxu0 0
        %928 = vmatpush1.bf16.msra.mxu0 0
        %929 = vmatprep.subr.bf16.mxu0 0
        %930 = vmatpush1.bf16.msra.mxu0 0
        %931 = vmatprep.subr.bf16.mxu0 0
        %932 = vmatpush1.bf16.msra.mxu0 0
        %933 = vmatprep.subr.bf16.mxu0 0
        %934 = vmatpush1.bf16.msra.mxu0 0
        %935 = vmatprep.subr.bf16.mxu0 0
        %936 = vmatpush1.bf16.msra.mxu0 0
        %937 = vmatprep.subr.bf16.mxu0 0
        %938 = vmatpush1.bf16.msra.mxu0 0
        %939 = vmatprep.subr.bf16.mxu0 0
        %940 = vmatpush1.bf16.msra.mxu0 0
        %941 = vmatprep.mubr.bf16.mxu0 0
        %942 = vmatmul.mubr.bf16.gmra.mrb[0].mxu0 %v883
        %v943 = vpop.f32.mrb[0].mxu0
        %v944 = vadd.f32 %v796, %v943
        %v945 = vpop.f32.mrb[0].mxu0
        %v946 = vpop.f32.mrb[0].mxu0
        %v947 = vadd.f32 %v799, %v946
        %v948 = vpop.f32.mrb[0].mxu0
        %949 = vmatprep.mubr.bf16.mxu0 0
        %950 = vmatmul.mubr.bf16.gmra.mrb[0].mxu0 %v886
        %v951 = vpop.f32.mrb[0].mxu0
        %v952 = vadd.f32 %v804, %v951
        %v953 = vpop.f32.mrb[0].mxu0
        %v954 = vpop.f32.mrb[0].mxu0
        %v955 = vadd.f32 %v807, %v954
        %v956 = vpop.f32.mrb[0].mxu0
        %957 = vmatprep.mubr.bf16.mxu0 0
        %958 = vmatmul.mubr.bf16.gmra.mrb[0].mxu0 %v889
        %v959 = vpop.f32.mrb[0].mxu0
        %v960 = vadd.f32 %v812, %v959
        %v961 = vpop.f32.mrb[0].mxu0
        %v962 = vpop.f32.mrb[0].mxu0
        %v963 = vadd.f32 %v815, %v962
        %v964 = vpop.f32.mrb[0].mxu0
        %965 = vmatprep.mubr.bf16.mxu0 0
        %966 = vmatmul.mubr.bf16.gmra.mrb[0].mxu0 %v892
        %v967 = vpop.f32.mrb[0].mxu0
        %v968 = vadd.f32 %v820, %v967
        %v969 = vpop.f32.mrb[0].mxu0
        %v970 = vpop.f32.mrb[0].mxu0
        %v971 = vadd.f32 %v823, %v970
        %v972 = vpop.f32.mrb[0].mxu0
        %973 = vmatprep.mubr.bf16.mxu0 0
        %974 = vmatmul.mubr.bf16.gmra.mrb[0].mxu0 %v895
        %v975 = vpop.f32.mrb[0].mxu0
        %v976 = vadd.f32 %v828, %v975
        %v977 = vpop.f32.mrb[0].mxu0
        %v978 = vpop.f32.mrb[0].mxu0
        %v979 = vadd.f32 %v831, %v978
        %v980 = vpop.f32.mrb[0].mxu0
        %981 = vmatprep.mubr.bf16.mxu0 0
        %982 = vmatmul.mubr.bf16.gmra.mrb[0].mxu0 %v898
        %v983 = vpop.f32.mrb[0].mxu0
        %v984 = vadd.f32 %v836, %v983
        %v985 = vpop.f32.mrb[0].mxu0
        %v986 = vpop.f32.mrb[0].mxu0
        %v987 = vadd.f32 %v839, %v986
        %v988 = vpop.f32.mrb[0].mxu0
        %989 = vmatprep.mubr.bf16.mxu0 0
        %990 = vmatmul.mubr.bf16.gmra.mrb[0].mxu0 %v901
        %v991 = vpop.f32.mrb[0].mxu0
        %v992 = vadd.f32 %v844, %v991
        %v993 = vpop.f32.mrb[0].mxu0
        %v994 = vpop.f32.mrb[0].mxu0
        %v995 = vadd.f32 %v847, %v994
        %v996 = vpop.f32.mrb[0].mxu0
        %997 = vmatprep.mubr.bf16.mxu0 0
        %998 = vmatmul.mubr.bf16.gmra.mrb[0].mxu0 %v904
        %v999 = vpop.f32.mrb[0].mxu0
        %v1000 = vadd.f32 %v852, %v999
        %v1001 = vpop.f32.mrb[0].mxu0
        %v1002 = vpop.f32.mrb[0].mxu0
        %v1003 = vadd.f32 %v855, %v1002
        %v1004 = vpop.f32.mrb[0].mxu0
        %1005 = vdwg.mxu0
        %v1006 = vld [vmem:[%s321 + $0x4] sm:$0xf]
        %v1007 = vld [vmem:[%s321 + $0x8] sm:$0xf]
        %v1008 = vld [vmem:[%s321 + $0xc] sm:$0x1]
        %v1009 = vld [vmem:[%s321 + $0x14] sm:$0xf]
        %v1010 = vld [vmem:[%s321 + $0x18] sm:$0xf]
        %v1011 = vld [vmem:[%s321 + $0x1c] sm:$0x1]
        %v1012 = vld [vmem:[%s321 + $0x24] sm:$0xf]
        %v1013 = vld [vmem:[%s321 + $0x28] sm:$0xf]
        %v1014 = vld [vmem:[%s321 + $0x2c] sm:$0x1]
        %v1015 = vld [vmem:[%s321 + $0x34] sm:$0xf]
        %v1016 = vld [vmem:[%s321 + $0x38] sm:$0xf]
        %v1017 = vld [vmem:[%s321 + $0x3c] sm:$0x1]
        %v1018 = vld [vmem:[%s321 + $0x44] sm:$0xf]
        %v1019 = vld [vmem:[%s321 + $0x48] sm:$0xf]
        %v1020 = vld [vmem:[%s321 + $0x4c] sm:$0x1]
        %v1021 = vld [vmem:[%s321 + $0x54] sm:$0xf]
        %v1022 = vld [vmem:[%s321 + $0x58] sm:$0xf]
        %v1023 = vld [vmem:[%s321 + $0x5c] sm:$0x1]
        %v1024 = vld [vmem:[%s321 + $0x64] sm:$0xf]
        %v1025 = vld [vmem:[%s321 + $0x68] sm:$0xf]
        %v1026 = vld [vmem:[%s321 + $0x6c] sm:$0x1]
        %v1027 = vld [vmem:[%s321 + $0x74] sm:$0xf]
        %v1028 = vld [vmem:[%s321 + $0x78] sm:$0xf]
        %v1029 = vld [vmem:[%s321 + $0x7c] sm:$0x1]
        %vm1030 = vsmask.f32 3328
        %vm1031 = vsmask.f32 7440
        %vm1032 = vmor %vm1030, %vm1031
        %v1034 = vshrl.u32 %v1006, 16
        %v1036 = vrot.slane %v1034, 4
        %v1037 = vshll.u32 %v1006, 16
        %v1039 = vrot.slane %v1037, 5
        %v1040 = vor.u32 %v1036, %v1039
        %v1041 = vrot.slane %v1040, 4
        %v1043 = vshll.u32 %v1007, 16
        %v1045 = vrot.slane %v1043, 5
        %v1046 = vsel %vm1032, %v1041, %v1045
        %v1047 = vshrl.u32 %v1007, 16
        %v1049 = vrot.slane %v1047, 4
        %v1050 = vor.u32 %v1049, %v1045
        %v1051 = vrot.slane %v1050, 4
        %v1053 = vshll.u32 %v1008, 16
        %v1055 = vrot.slane %v1053, 5
        %v1056 = vsel %vm1032, %v1051, %v1055
        %v1058 = vshrl.u32 %v1009, 16
        %v1060 = vrot.slane %v1058, 4
        %v1061 = vshll.u32 %v1009, 16
        %v1063 = vrot.slane %v1061, 5
        %v1064 = vor.u32 %v1060, %v1063
        %v1065 = vrot.slane %v1064, 4
        %v1067 = vshll.u32 %v1010, 16
        %v1069 = vrot.slane %v1067, 5
        %v1070 = vsel %vm1032, %v1065, %v1069
        %v1071 = vshrl.u32 %v1010, 16
        %v1073 = vrot.slane %v1071, 4
        %v1074 = vor.u32 %v1073, %v1069
        %v1075 = vrot.slane %v1074, 4
        %v1077 = vshll.u32 %v1011, 16
        %v1079 = vrot.slane %v1077, 5
        %v1080 = vsel %vm1032, %v1075, %v1079
        %v1082 = vshrl.u32 %v1012, 16
        %v1084 = vrot.slane %v1082, 4
        %v1085 = vshll.u32 %v1012, 16
        %v1087 = vrot.slane %v1085, 5
        %v1088 = vor.u32 %v1084, %v1087
        %v1089 = vrot.slane %v1088, 4
        %v1091 = vshll.u32 %v1013, 16
        %v1093 = vrot.slane %v1091, 5
        %v1094 = vsel %vm1032, %v1089, %v1093
        %v1095 = vshrl.u32 %v1013, 16
        %v1097 = vrot.slane %v1095, 4
        %v1098 = vor.u32 %v1097, %v1093
        %v1099 = vrot.slane %v1098, 4
        %v1101 = vshll.u32 %v1014, 16
        %v1103 = vrot.slane %v1101, 5
        %v1104 = vsel %vm1032, %v1099, %v1103
        %v1106 = vshrl.u32 %v1015, 16
        %v1108 = vrot.slane %v1106, 4
        %v1109 = vshll.u32 %v1015, 16
        %v1111 = vrot.slane %v1109, 5
        %v1112 = vor.u32 %v1108, %v1111
        %v1113 = vrot.slane %v1112, 4
        %v1115 = vshll.u32 %v1016, 16
        %v1117 = vrot.slane %v1115, 5
        %v1118 = vsel %vm1032, %v1113, %v1117
        %v1119 = vshrl.u32 %v1016, 16
        %v1121 = vrot.slane %v1119, 4
        %v1122 = vor.u32 %v1121, %v1117
        %v1123 = vrot.slane %v1122, 4
        %v1125 = vshll.u32 %v1017, 16
        %v1127 = vrot.slane %v1125, 5
        %v1128 = vsel %vm1032, %v1123, %v1127
        %v1130 = vshrl.u32 %v1018, 16
        %v1132 = vrot.slane %v1130, 4
        %v1133 = vshll.u32 %v1018, 16
        %v1135 = vrot.slane %v1133, 5
        %v1136 = vor.u32 %v1132, %v1135
        %v1137 = vrot.slane %v1136, 4
        %v1139 = vshll.u32 %v1019, 16
        %v1141 = vrot.slane %v1139, 5
        %v1142 = vsel %vm1032, %v1137, %v1141
        %v1143 = vshrl.u32 %v1019, 16
        %v1145 = vrot.slane %v1143, 4
        %v1146 = vor.u32 %v1145, %v1141
        %v1147 = vrot.slane %v1146, 4
        %v1149 = vshll.u32 %v1020, 16
        %v1151 = vrot.slane %v1149, 5
        %v1152 = vsel %vm1032, %v1147, %v1151
        %v1154 = vshrl.u32 %v1021, 16
        %v1156 = vrot.slane %v1154, 4
        %v1157 = vshll.u32 %v1021, 16
        %v1159 = vrot.slane %v1157, 5
        %v1160 = vor.u32 %v1156, %v1159
        %v1161 = vrot.slane %v1160, 4
        %v1163 = vshll.u32 %v1022, 16
        %v1165 = vrot.slane %v1163, 5
        %v1166 = vsel %vm1032, %v1161, %v1165
        %v1167 = vshrl.u32 %v1022, 16
        %v1169 = vrot.slane %v1167, 4
        %v1170 = vor.u32 %v1169, %v1165
        %v1171 = vrot.slane %v1170, 4
        %v1173 = vshll.u32 %v1023, 16
        %v1175 = vrot.slane %v1173, 5
        %v1176 = vsel %vm1032, %v1171, %v1175
        %v1178 = vshrl.u32 %v1024, 16
        %v1180 = vrot.slane %v1178, 4
        %v1181 = vshll.u32 %v1024, 16
        %v1183 = vrot.slane %v1181, 5
        %v1184 = vor.u32 %v1180, %v1183
        %v1185 = vrot.slane %v1184, 4
        %v1187 = vshll.u32 %v1025, 16
        %v1189 = vrot.slane %v1187, 5
        %v1190 = vsel %vm1032, %v1185, %v1189
        %v1191 = vshrl.u32 %v1025, 16
        %v1193 = vrot.slane %v1191, 4
        %v1194 = vor.u32 %v1193, %v1189
        %v1195 = vrot.slane %v1194, 4
        %v1197 = vshll.u32 %v1026, 16
        %v1199 = vrot.slane %v1197, 5
        %v1200 = vsel %vm1032, %v1195, %v1199
        %v1202 = vshrl.u32 %v1027, 16
        %v1204 = vrot.slane %v1202, 4
        %v1205 = vshll.u32 %v1027, 16
        %v1207 = vrot.slane %v1205, 5
        %v1208 = vor.u32 %v1204, %v1207
        %v1209 = vrot.slane %v1208, 4
        %v1211 = vshll.u32 %v1028, 16
        %v1213 = vrot.slane %v1211, 5
        %v1214 = vsel %vm1032, %v1209, %v1213
        %v1215 = vshrl.u32 %v1028, 16
        %v1217 = vrot.slane %v1215, 4
        %v1218 = vor.u32 %v1217, %v1213
        %v1219 = vrot.slane %v1218, 4
        %v1221 = vshll.u32 %v1029, 16
        %v1223 = vrot.slane %v1221, 5
        %v1224 = vsel %vm1032, %v1219, %v1223
        %s1225 = scalar_lea.vmem [#allocation6], 4
        %v1226 = vld [vmem:[%s1225] sm:$0x3]
        %v1227 = vunpack.c.l.b16 %v1046
        %v1228 = vunpack.c.l.b16 %v1056
        %v1229 = vunpack.c.l.b16 %v1070
        %v1230 = vunpack.c.l.b16 %v1080
        %v1231 = vunpack.c.l.b16 %v1094
        %v1232 = vunpack.c.l.b16 %v1104
        %v1233 = vunpack.c.l.b16 %v1118
        %v1234 = vunpack.c.l.b16 %v1128
        %v1235 = vunpack.c.l.b16 %v1142
        %v1236 = vunpack.c.l.b16 %v1152
        %v1237 = vunpack.c.l.b16 %v1166
        %v1238 = vunpack.c.l.b16 %v1176
        %v1239 = vunpack.c.l.b16 %v1190
        %v1240 = vunpack.c.l.b16 %v1200
        %v1241 = vunpack.c.l.b16 %v1214
        %v1242 = vunpack.c.l.b16 %v1224
        %v1243 = vpack.c.b16 %v1228, %v1227
        %v1244 = vpack.c.b16 %v1230, %v1229
        %v1245 = vpack.c.b16 %v1232, %v1231
        %v1246 = vpack.c.b16 %v1234, %v1233
        %v1247 = vpack.c.b16 %v1236, %v1235
        %v1248 = vpack.c.b16 %v1238, %v1237
        %v1249 = vpack.c.b16 %v1240, %v1239
        %v1250 = vpack.c.b16 %v1242, %v1241
        %v1252 = vsel %vm732, %v1243, 0
        %v1255 = vsel %vm732, %v1244, 0
        %v1258 = vsel %vm732, %v1245, 0
        %v1261 = vsel %vm732, %v1246, 0
        %v1264 = vsel %vm732, %v1247, 0
        %v1267 = vsel %vm732, %v1248, 0
        %v1270 = vsel %vm732, %v1249, 0
        %v1273 = vsel %vm732, %v1250, 0
        %v1276 = vsel %vm757, %v1226, 0
        %1278 = vmatprep.subr.bf16.mxu0 0
        %1279 = vmatpush1.bf16.msra.mxu0 %v1276
        %1280 = vmatprep.subr.bf16.mxu0 0
        %1281 = vmatpush1.bf16.msra.mxu0 0
        %1282 = vmatprep.subr.bf16.mxu0 0
        %1283 = vmatpush1.bf16.msra.mxu0 0
        %1284 = vmatprep.subr.bf16.mxu0 0
        %1285 = vmatpush1.bf16.msra.mxu0 0
        %1286 = vmatprep.subr.bf16.mxu0 0
        %1287 = vmatpush1.bf16.msra.mxu0 0
        %1288 = vmatprep.subr.bf16.mxu0 0
        %1289 = vmatpush1.bf16.msra.mxu0 0
        %1290 = vmatprep.subr.bf16.mxu0 0
        %1291 = vmatpush1.bf16.msra.mxu0 0
        %1292 = vmatprep.subr.bf16.mxu0 0
        %1293 = vmatpush1.bf16.msra.mxu0 0
        %1294 = vmatprep.subr.bf16.mxu0 0
        %1295 = vmatpush1.bf16.msra.mxu0 0
        %1296 = vmatprep.subr.bf16.mxu0 0
        %1297 = vmatpush1.bf16.msra.mxu0 0
        %1298 = vmatprep.subr.bf16.mxu0 0
        %1299 = vmatpush1.bf16.msra.mxu0 0
        %1300 = vmatprep.subr.bf16.mxu0 0
        %1301 = vmatpush1.bf16.msra.mxu0 0
        %1302 = vmatprep.subr.bf16.mxu0 0
        %1303 = vmatpush1.bf16.msra.mxu0 0
        %1304 = vmatprep.subr.bf16.mxu0 0
        %1305 = vmatpush1.bf16.msra.mxu0 0
        %1306 = vmatprep.subr.bf16.mxu0 0
        %1307 = vmatpush1.bf16.msra.mxu0 0
        %1308 = vmatprep.subr.bf16.mxu0 0
        %1309 = vmatpush1.bf16.msra.mxu0 0
        %1310 = vmatprep.mubr.bf16.mxu0 0
        %1311 = vmatmul.mubr.bf16.gmra.mrb[0].mxu0 %v1252
        %v1312 = vpop.f32.mrb[0].mxu0
        %v1313 = vadd.f32 0.0, %v1312
        %v1314 = vpop.f32.mrb[0].mxu0
        %v1315 = vpop.f32.mrb[0].mxu0
        %v1316 = vadd.f32 0.0, %v1315
        %v1317 = vpop.f32.mrb[0].mxu0
        %1318 = vmatprep.mubr.bf16.mxu0 0
        %1319 = vmatmul.mubr.bf16.gmra.mrb[0].mxu0 %v1255
        %v1320 = vpop.f32.mrb[0].mxu0
        %v1321 = vadd.f32 0.0, %v1320
        %v1322 = vpop.f32.mrb[0].mxu0
        %v1323 = vpop.f32.mrb[0].mxu0
        %v1324 = vadd.f32 0.0, %v1323
        %v1325 = vpop.f32.mrb[0].mxu0
        %1326 = vmatprep.mubr.bf16.mxu0 0
        %1327 = vmatmul.mubr.bf16.gmra.mrb[0].mxu0 %v1258
        %v1328 = vpop.f32.mrb[0].mxu0
        %v1329 = vadd.f32 0.0, %v1328
        %v1330 = vpop.f32.mrb[0].mxu0
        %v1331 = vpop.f32.mrb[0].mxu0
        %v1332 = vadd.f32 0.0, %v1331
        %v1333 = vpop.f32.mrb[0].mxu0
        %1334 = vmatprep.mubr.bf16.mxu0 0
        %1335 = vmatmul.mubr.bf16.gmra.mrb[0].mxu0 %v1261
        %v1336 = vpop.f32.mrb[0].mxu0
        %v1337 = vadd.f32 0.0, %v1336
        %v1338 = vpop.f32.mrb[0].mxu0
        %v1339 = vpop.f32.mrb[0].mxu0
        %v1340 = vadd.f32 0.0, %v1339
        %v1341 = vpop.f32.mrb[0].mxu0
        %1342 = vmatprep.mubr.bf16.mxu0 0
        %1343 = vmatmul.mubr.bf16.gmra.mrb[0].mxu0 %v1264
        %v1344 = vpop.f32.mrb[0].mxu0
        %v1345 = vadd.f32 0.0, %v1344
        %v1346 = vpop.f32.mrb[0].mxu0
        %v1347 = vpop.f32.mrb[0].mxu0
        %v1348 = vadd.f32 0.0, %v1347
        %v1349 = vpop.f32.mrb[0].mxu0
        %1350 = vmatprep.mubr.bf16.mxu0 0
        %1351 = vmatmul.mubr.bf16.gmra.mrb[0].mxu0 %v1267
        %v1352 = vpop.f32.mrb[0].mxu0
        %v1353 = vadd.f32 0.0, %v1352
        %v1354 = vpop.f32.mrb[0].mxu0
        %v1355 = vpop.f32.mrb[0].mxu0
        %v1356 = vadd.f32 0.0, %v1355
        %v1357 = vpop.f32.mrb[0].mxu0
        %1358 = vmatprep.mubr.bf16.mxu0 0
        %1359 = vmatmul.mubr.bf16.gmra.mrb[0].mxu0 %v1270
        %v1360 = vpop.f32.mrb[0].mxu0
        %v1361 = vadd.f32 0.0, %v1360
        %v1362 = vpop.f32.mrb[0].mxu0
        %v1363 = vpop.f32.mrb[0].mxu0
        %v1364 = vadd.f32 0.0, %v1363
        %v1365 = vpop.f32.mrb[0].mxu0
        %1366 = vmatprep.mubr.bf16.mxu0 0
        %1367 = vmatmul.mubr.bf16.gmra.mrb[0].mxu0 %v1273
        %v1368 = vpop.f32.mrb[0].mxu0
        %v1369 = vadd.f32 0.0, %v1368
        %v1370 = vpop.f32.mrb[0].mxu0
        %v1371 = vpop.f32.mrb[0].mxu0
        %v1372 = vadd.f32 0.0, %v1371
        %v1373 = vpop.f32.mrb[0].mxu0
        %1374 = vdwg.mxu0
        %v1375 = vadd.f32 %v944, %v1313
        %v1376 = vadd.f32 %v947, %v1316
        %v1377 = vadd.f32 %v952, %v1321
        %v1378 = vadd.f32 %v955, %v1324
        %v1379 = vadd.f32 %v960, %v1329
        %v1380 = vadd.f32 %v963, %v1332
        %v1381 = vadd.f32 %v968, %v1337
        %v1382 = vadd.f32 %v971, %v1340
        %v1383 = vadd.f32 %v976, %v1345
        %v1384 = vadd.f32 %v979, %v1348
        %v1385 = vadd.f32 %v984, %v1353
        %v1386 = vadd.f32 %v987, %v1356
        %v1387 = vadd.f32 %v992, %v1361
        %v1388 = vadd.f32 %v995, %v1364
        %v1389 = vadd.f32 %v1000, %v1369
        %v1390 = vadd.f32 %v1003, %v1372
        %s1391 = scalar_lea.vmem %s321, 16 [#allocation3]
        %v1392 = vld [vmem:[%s1391] sm:$0x8]
        %v1393 = vld [vmem:[%s1391 + $0x4] sm:$0xf]
        %v1394 = vld [vmem:[%s1391 + $0x8] sm:$0xf]
        %v1395 = vld [vmem:[%s1391 + $0x10] sm:$0x8]
        %v1396 = vld [vmem:[%s1391 + $0x14] sm:$0xf]
        %v1397 = vld [vmem:[%s1391 + $0x18] sm:$0xf]
        %v1398 = vld [vmem:[%s1391 + $0x20] sm:$0x8]
        %v1399 = vld [vmem:[%s1391 + $0x24] sm:$0xf]
        %v1400 = vld [vmem:[%s1391 + $0x28] sm:$0xf]
        %v1401 = vld [vmem:[%s1391 + $0x30] sm:$0x8]
        %v1402 = vld [vmem:[%s1391 + $0x34] sm:$0xf]
        %v1403 = vld [vmem:[%s1391 + $0x38] sm:$0xf]
        %v1404 = vld [vmem:[%s1391 + $0x40] sm:$0x8]
        %v1405 = vld [vmem:[%s1391 + $0x44] sm:$0xf]
        %v1406 = vld [vmem:[%s1391 + $0x48] sm:$0xf]
        %v1407 = vld [vmem:[%s1391 + $0x50] sm:$0x8]
        %v1408 = vld [vmem:[%s1391 + $0x54] sm:$0xf]
        %v1409 = vld [vmem:[%s1391 + $0x58] sm:$0xf]
        %v1410 = vld [vmem:[%s1391 + $0x60] sm:$0x8]
        %v1411 = vld [vmem:[%s1391 + $0x64] sm:$0xf]
        %v1412 = vld [vmem:[%s1391 + $0x68] sm:$0xf]
        %v1413 = vld [vmem:[%s1391 + $0x70] sm:$0x8]
        %v1414 = vld [vmem:[%s1391 + $0x74] sm:$0xf]
        %v1415 = vld [vmem:[%s1391 + $0x78] sm:$0xf]
        %v1417 = vshrl.u32 %v1392, 16
        %v1419 = vrot.slane %v1417, 7
        %v1420 = vrot.slane %v1419, 4
        %v1422 = vshrl.u32 %v1393, 16
        %v1424 = vrot.slane %v1422, 7
        %v1425 = vshll.u32 %v1393, 16
        %v1427 = vor.u32 %v1424, %v1425
        %v1428 = vsel %vm512, %v1420, %v1427
        %v1429 = vrot.slane %v1424, 4
        %v1431 = vshrl.u32 %v1394, 16
        %v1433 = vrot.slane %v1431, 7
        %v1434 = vshll.u32 %v1394, 16
        %v1436 = vor.u32 %v1433, %v1434
        %v1437 = vsel %vm512, %v1429, %v1436
        %v1439 = vshrl.u32 %v1395, 16
        %v1441 = vrot.slane %v1439, 7
        %v1442 = vrot.slane %v1441, 4
        %v1444 = vshrl.u32 %v1396, 16
        %v1446 = vrot.slane %v1444, 7
        %v1447 = vshll.u32 %v1396, 16
        %v1449 = vor.u32 %v1446, %v1447
        %v1450 = vsel %vm512, %v1442, %v1449
        %v1451 = vrot.slane %v1446, 4
        %v1453 = vshrl.u32 %v1397, 16
        %v1455 = vrot.slane %v1453, 7
        %v1456 = vshll.u32 %v1397, 16
        %v1458 = vor.u32 %v1455, %v1456
        %v1459 = vsel %vm512, %v1451, %v1458
        %v1461 = vshrl.u32 %v1398, 16
        %v1463 = vrot.slane %v1461, 7
        %v1464 = vrot.slane %v1463, 4
        %v1466 = vshrl.u32 %v1399, 16
        %v1468 = vrot.slane %v1466, 7
        %v1469 = vshll.u32 %v1399, 16
        %v1471 = vor.u32 %v1468, %v1469
        %v1472 = vsel %vm512, %v1464, %v1471
        %v1473 = vrot.slane %v1468, 4
        %v1475 = vshrl.u32 %v1400, 16
        %v1477 = vrot.slane %v1475, 7
        %v1478 = vshll.u32 %v1400, 16
        %v1480 = vor.u32 %v1477, %v1478
        %v1481 = vsel %vm512, %v1473, %v1480
        %v1483 = vshrl.u32 %v1401, 16
        %v1485 = vrot.slane %v1483, 7
        %v1486 = vrot.slane %v1485, 4
        %v1488 = vshrl.u32 %v1402, 16
        %v1490 = vrot.slane %v1488, 7
        %v1491 = vshll.u32 %v1402, 16
        %v1493 = vor.u32 %v1490, %v1491
        %v1494 = vsel %vm512, %v1486, %v1493
        %v1495 = vrot.slane %v1490, 4
        %v1497 = vshrl.u32 %v1403, 16
        %v1499 = vrot.slane %v1497, 7
        %v1500 = vshll.u32 %v1403, 16
        %v1502 = vor.u32 %v1499, %v1500
        %v1503 = vsel %vm512, %v1495, %v1502
        %v1505 = vshrl.u32 %v1404, 16
        %v1507 = vrot.slane %v1505, 7
        %v1508 = vrot.slane %v1507, 4
        %v1510 = vshrl.u32 %v1405, 16
        %v1512 = vrot.slane %v1510, 7
        %v1513 = vshll.u32 %v1405, 16
        %v1515 = vor.u32 %v1512, %v1513
        %v1516 = vsel %vm512, %v1508, %v1515
        %v1517 = vrot.slane %v1512, 4
        %v1519 = vshrl.u32 %v1406, 16
        %v1521 = vrot.slane %v1519, 7
        %v1522 = vshll.u32 %v1406, 16
        %v1524 = vor.u32 %v1521, %v1522
        %v1525 = vsel %vm512, %v1517, %v1524
        %v1527 = vshrl.u32 %v1407, 16
        %v1529 = vrot.slane %v1527, 7
        %v1530 = vrot.slane %v1529, 4
        %v1532 = vshrl.u32 %v1408, 16
        %v1534 = vrot.slane %v1532, 7
        %v1535 = vshll.u32 %v1408, 16
        %v1537 = vor.u32 %v1534, %v1535
        %v1538 = vsel %vm512, %v1530, %v1537
        %v1539 = vrot.slane %v1534, 4
        %v1541 = vshrl.u32 %v1409, 16
        %v1543 = vrot.slane %v1541, 7
        %v1544 = vshll.u32 %v1409, 16
        %v1546 = vor.u32 %v1543, %v1544
        %v1547 = vsel %vm512, %v1539, %v1546
        %v1549 = vshrl.u32 %v1410, 16
        %v1551 = vrot.slane %v1549, 7
        %v1552 = vrot.slane %v1551, 4
        %v1554 = vshrl.u32 %v1411, 16
        %v1556 = vrot.slane %v1554, 7
        %v1557 = vshll.u32 %v1411, 16
        %v1559 = vor.u32 %v1556, %v1557
        %v1560 = vsel %vm512, %v1552, %v1559
        %v1561 = vrot.slane %v1556, 4
        %v1563 = vshrl.u32 %v1412, 16
        %v1565 = vrot.slane %v1563, 7
        %v1566 = vshll.u32 %v1412, 16
        %v1568 = vor.u32 %v1565, %v1566
        %v1569 = vsel %vm512, %v1561, %v1568
        %v1571 = vshrl.u32 %v1413, 16
        %v1573 = vrot.slane %v1571, 7
        %v1574 = vrot.slane %v1573, 4
        %v1576 = vshrl.u32 %v1414, 16
        %v1578 = vrot.slane %v1576, 7
        %v1579 = vshll.u32 %v1414, 16
        %v1581 = vor.u32 %v1578, %v1579
        %v1582 = vsel %vm512, %v1574, %v1581
        %v1583 = vrot.slane %v1578, 4
        %v1585 = vshrl.u32 %v1415, 16
        %v1587 = vrot.slane %v1585, 7
        %v1588 = vshll.u32 %v1415, 16
        %v1590 = vor.u32 %v1587, %v1588
        %v1591 = vsel %vm512, %v1583, %v1590
        %s1592 = scalar_lea.vmem [#allocation6], 6
        %v1593 = vld [vmem:[%s1592] sm:$0x3]
        %v1594 = vunpack.c.l.b16 %v1428
        %v1595 = vunpack.c.l.b16 %v1437
        %v1596 = vunpack.c.l.b16 %v1450
        %v1597 = vunpack.c.l.b16 %v1459
        %v1598 = vunpack.c.l.b16 %v1472
        %v1599 = vunpack.c.l.b16 %v1481
        %v1600 = vunpack.c.l.b16 %v1494
        %v1601 = vunpack.c.l.b16 %v1503
        %v1602 = vunpack.c.l.b16 %v1516
        %v1603 = vunpack.c.l.b16 %v1525
        %v1604 = vunpack.c.l.b16 %v1538
        %v1605 = vunpack.c.l.b16 %v1547
        %v1606 = vunpack.c.l.b16 %v1560
        %v1607 = vunpack.c.l.b16 %v1569
        %v1608 = vunpack.c.l.b16 %v1582
        %v1609 = vunpack.c.l.b16 %v1591
        %v1610 = vpack.c.b16 %v1595, %v1594
        %v1611 = vpack.c.b16 %v1597, %v1596
        %v1612 = vpack.c.b16 %v1599, %v1598
        %v1613 = vpack.c.b16 %v1601, %v1600
        %v1614 = vpack.c.b16 %v1603, %v1602
        %v1615 = vpack.c.b16 %v1605, %v1604
        %v1616 = vpack.c.b16 %v1607, %v1606
        %v1617 = vpack.c.b16 %v1609, %v1608
        %v1619 = vsel %vm732, %v1610, 0
        %v1622 = vsel %vm732, %v1611, 0
        %v1625 = vsel %vm732, %v1612, 0
        %v1628 = vsel %vm732, %v1613, 0
        %v1631 = vsel %vm732, %v1614, 0
        %v1634 = vsel %vm732, %v1615, 0
        %v1637 = vsel %vm732, %v1616, 0
        %v1640 = vsel %vm732, %v1617, 0
        %v1643 = vsel %vm757, %v1593, 0
        %1645 = vmatprep.subr.bf16.mxu0 0
        %1646 = vmatpush1.bf16.msra.mxu0 %v1643
        %1647 = vmatprep.subr.bf16.mxu0 0
        %1648 = vmatpush1.bf16.msra.mxu0 0
        %1649 = vmatprep.subr.bf16.mxu0 0
        %1650 = vmatpush1.bf16.msra.mxu0 0
        %1651 = vmatprep.subr.bf16.mxu0 0
        %1652 = vmatpush1.bf16.msra.mxu0 0
        %1653 = vmatprep.subr.bf16.mxu0 0
        %1654 = vmatpush1.bf16.msra.mxu0 0
        %1655 = vmatprep.subr.bf16.mxu0 0
        %1656 = vmatpush1.bf16.msra.mxu0 0
        %1657 = vmatprep.subr.bf16.mxu0 0
        %1658 = vmatpush1.bf16.msra.mxu0 0
        %1659 = vmatprep.subr.bf16.mxu0 0
        %1660 = vmatpush1.bf16.msra.mxu0 0
        %1661 = vmatprep.subr.bf16.mxu0 0
        %1662 = vmatpush1.bf16.msra.mxu0 0
        %1663 = vmatprep.subr.bf16.mxu0 0
        %1664 = vmatpush1.bf16.msra.mxu0 0
        %1665 = vmatprep.subr.bf16.mxu0 0
        %1666 = vmatpush1.bf16.msra.mxu0 0
        %1667 = vmatprep.subr.bf16.mxu0 0
        %1668 = vmatpush1.bf16.msra.mxu0 0
        %1669 = vmatprep.subr.bf16.mxu0 0
        %1670 = vmatpush1.bf16.msra.mxu0 0
        %1671 = vmatprep.subr.bf16.mxu0 0
        %1672 = vmatpush1.bf16.msra.mxu0 0
        %1673 = vmatprep.subr.bf16.mxu0 0
        %1674 = vmatpush1.bf16.msra.mxu0 0
        %1675 = vmatprep.subr.bf16.mxu0 0
        %1676 = vmatpush1.bf16.msra.mxu0 0
        %1677 = vmatprep.mubr.bf16.mxu0 0
        %1678 = vmatmul.mubr.bf16.gmra.mrb[0].mxu0 %v1619
        %v1679 = vpop.f32.mrb[0].mxu0
        %v1680 = vadd.f32 0.0, %v1679
        %v1681 = vpop.f32.mrb[0].mxu0
        %v1682 = vpop.f32.mrb[0].mxu0
        %v1683 = vadd.f32 0.0, %v1682
        %v1684 = vpop.f32.mrb[0].mxu0
        %1685 = vmatprep.mubr.bf16.mxu0 0
        %1686 = vmatmul.mubr.bf16.gmra.mrb[0].mxu0 %v1622
        %v1687 = vpop.f32.mrb[0].mxu0
        %v1688 = vadd.f32 0.0, %v1687
        %v1689 = vpop.f32.mrb[0].mxu0
        %v1690 = vpop.f32.mrb[0].mxu0
        %v1691 = vadd.f32 0.0, %v1690
        %v1692 = vpop.f32.mrb[0].mxu0
        %1693 = vmatprep.mubr.bf16.mxu0 0
        %1694 = vmatmul.mubr.bf16.gmra.mrb[0].mxu0 %v1625
        %v1695 = vpop.f32.mrb[0].mxu0
        %v1696 = vadd.f32 0.0, %v1695
        %v1697 = vpop.f32.mrb[0].mxu0
        %v1698 = vpop.f32.mrb[0].mxu0
        %v1699 = vadd.f32 0.0, %v1698
        %v1700 = vpop.f32.mrb[0].mxu0
        %1701 = vmatprep.mubr.bf16.mxu0 0
        %1702 = vmatmul.mubr.bf16.gmra.mrb[0].mxu0 %v1628
        %v1703 = vpop.f32.mrb[0].mxu0
        %v1704 = vadd.f32 0.0, %v1703
        %v1705 = vpop.f32.mrb[0].mxu0
        %v1706 = vpop.f32.mrb[0].mxu0
        %v1707 = vadd.f32 0.0, %v1706
        %v1708 = vpop.f32.mrb[0].mxu0
        %1709 = vmatprep.mubr.bf16.mxu0 0
        %1710 = vmatmul.mubr.bf16.gmra.mrb[0].mxu0 %v1631
        %v1711 = vpop.f32.mrb[0].mxu0
        %v1712 = vadd.f32 0.0, %v1711
        %v1713 = vpop.f32.mrb[0].mxu0
        %v1714 = vpop.f32.mrb[0].mxu0
        %v1715 = vadd.f32 0.0, %v1714
        %v1716 = vpop.f32.mrb[0].mxu0
        %1717 = vmatprep.mubr.bf16.mxu0 0
        %1718 = vmatmul.mubr.bf16.gmra.mrb[0].mxu0 %v1634
        %v1719 = vpop.f32.mrb[0].mxu0
        %v1720 = vadd.f32 0.0, %v1719
        %v1721 = vpop.f32.mrb[0].mxu0
        %v1722 = vpop.f32.mrb[0].mxu0
        %v1723 = vadd.f32 0.0, %v1722
        %v1724 = vpop.f32.mrb[0].mxu0
        %1725 = vmatprep.mubr.bf16.mxu0 0
        %1726 = vmatmul.mubr.bf16.gmra.mrb[0].mxu0 %v1637
        %v1727 = vpop.f32.mrb[0].mxu0
        %v1728 = vadd.f32 0.0, %v1727
        %v1729 = vpop.f32.mrb[0].mxu0
        %v1730 = vpop.f32.mrb[0].mxu0
        %v1731 = vadd.f32 0.0, %v1730
        %v1732 = vpop.f32.mrb[0].mxu0
        %1733 = vmatprep.mubr.bf16.mxu0 0
        %1734 = vmatmul.mubr.bf16.gmra.mrb[0].mxu0 %v1640
        %v1735 = vpop.f32.mrb[0].mxu0
        %v1736 = vadd.f32 0.0, %v1735
        %v1737 = vpop.f32.mrb[0].mxu0
        %v1738 = vpop.f32.mrb[0].mxu0
        %v1739 = vadd.f32 0.0, %v1738
        %v1740 = vpop.f32.mrb[0].mxu0
        %1741 = vdwg.mxu0
        %v1742 = vadd.f32 %v1375, %v1680
        %v1743 = vadd.f32 %v1376, %v1683
        %v1744 = vadd.f32 %v1377, %v1688
        %v1745 = vadd.f32 %v1378, %v1691
        %v1746 = vadd.f32 %v1379, %v1696
        %v1747 = vadd.f32 %v1380, %v1699
        %v1748 = vadd.f32 %v1381, %v1704
        %v1749 = vadd.f32 %v1382, %v1707
        %v1750 = vadd.f32 %v1383, %v1712
        %v1751 = vadd.f32 %v1384, %v1715
        %v1752 = vadd.f32 %v1385, %v1720
        %v1753 = vadd.f32 %v1386, %v1723
        %v1754 = vadd.f32 %v1387, %v1728
        %v1755 = vadd.f32 %v1388, %v1731
        %v1756 = vadd.f32 %v1389, %v1736
        %v1757 = vadd.f32 %v1390, %v1739
        %s1758 = scalar_lea.vmem [#allocation6], 8
        %v1759 = vld [vmem:[%s1758] sm:$0x3]
        %v1776 = vunpack.c.l.b16 %v1393
        %v1777 = vunpack.c.l.b16 %v1394
        %v1778 = vunpack.c.l.b16 %v1396
        %v1779 = vunpack.c.l.b16 %v1397
        %v1780 = vunpack.c.l.b16 %v1399
        %v1781 = vunpack.c.l.b16 %v1400
        %v1782 = vunpack.c.l.b16 %v1402
        %v1783 = vunpack.c.l.b16 %v1403
        %v1784 = vunpack.c.l.b16 %v1405
        %v1785 = vunpack.c.l.b16 %v1406
        %v1786 = vunpack.c.l.b16 %v1408
        %v1787 = vunpack.c.l.b16 %v1409
        %v1788 = vunpack.c.l.b16 %v1411
        %v1789 = vunpack.c.l.b16 %v1412
        %v1790 = vunpack.c.l.b16 %v1414
        %v1791 = vunpack.c.l.b16 %v1415
        %v1792 = vpack.c.b16 %v1777, %v1776
        %v1793 = vpack.c.b16 %v1779, %v1778
        %v1794 = vpack.c.b16 %v1781, %v1780
        %v1795 = vpack.c.b16 %v1783, %v1782
        %v1796 = vpack.c.b16 %v1785, %v1784
        %v1797 = vpack.c.b16 %v1787, %v1786
        %v1798 = vpack.c.b16 %v1789, %v1788
        %v1799 = vpack.c.b16 %v1791, %v1790
        %v1801 = vsel %vm732, %v1792, 0
        %v1804 = vsel %vm732, %v1793, 0
        %v1807 = vsel %vm732, %v1794, 0
        %v1810 = vsel %vm732, %v1795, 0
        %v1813 = vsel %vm732, %v1796, 0
        %v1816 = vsel %vm732, %v1797, 0
        %v1819 = vsel %vm732, %v1798, 0
        %v1822 = vsel %vm732, %v1799, 0
        %v1825 = vsel %vm757, %v1759, 0
        %1827 = vmatprep.subr.bf16.mxu0 0
        %1828 = vmatpush1.bf16.msra.mxu0 %v1825
        %1829 = vmatprep.subr.bf16.mxu0 0
        %1830 = vmatpush1.bf16.msra.mxu0 0
        %1831 = vmatprep.subr.bf16.mxu0 0
        %1832 = vmatpush1.bf16.msra.mxu0 0
        %1833 = vmatprep.subr.bf16.mxu0 0
        %1834 = vmatpush1.bf16.msra.mxu0 0
        %1835 = vmatprep.subr.bf16.mxu0 0
        %1836 = vmatpush1.bf16.msra.mxu0 0
        %1837 = vmatprep.subr.bf16.mxu0 0
        %1838 = vmatpush1.bf16.msra.mxu0 0
        %1839 = vmatprep.subr.bf16.mxu0 0
        %1840 = vmatpush1.bf16.msra.mxu0 0
        %1841 = vmatprep.subr.bf16.mxu0 0
        %1842 = vmatpush1.bf16.msra.mxu0 0
        %1843 = vmatprep.subr.bf16.mxu0 0
        %1844 = vmatpush1.bf16.msra.mxu0 0
        %1845 = vmatprep.subr.bf16.mxu0 0
        %1846 = vmatpush1.bf16.msra.mxu0 0
        %1847 = vmatprep.subr.bf16.mxu0 0
        %1848 = vmatpush1.bf16.msra.mxu0 0
        %1849 = vmatprep.subr.bf16.mxu0 0
        %1850 = vmatpush1.bf16.msra.mxu0 0
        %1851 = vmatprep.subr.bf16.mxu0 0
        %1852 = vmatpush1.bf16.msra.mxu0 0
        %1853 = vmatprep.subr.bf16.mxu0 0
        %1854 = vmatpush1.bf16.msra.mxu0 0
        %1855 = vmatprep.subr.bf16.mxu0 0
        %1856 = vmatpush1.bf16.msra.mxu0 0
        %1857 = vmatprep.subr.bf16.mxu0 0
        %1858 = vmatpush1.bf16.msra.mxu0 0
        %1859 = vmatprep.mubr.bf16.mxu0 0
        %1860 = vmatmul.mubr.bf16.gmra.mrb[0].mxu0 %v1801
        %v1861 = vpop.f32.mrb[0].mxu0
        %v1862 = vadd.f32 0.0, %v1861
        %v1863 = vpop.f32.mrb[0].mxu0
        %v1864 = vpop.f32.mrb[0].mxu0
        %v1865 = vadd.f32 0.0, %v1864
        %v1866 = vpop.f32.mrb[0].mxu0
        %1867 = vmatprep.mubr.bf16.mxu0 0
        %1868 = vmatmul.mubr.bf16.gmra.mrb[0].mxu0 %v1804
        %v1869 = vpop.f32.mrb[0].mxu0
        %v1870 = vadd.f32 0.0, %v1869
        %v1871 = vpop.f32.mrb[0].mxu0
        %v1872 = vpop.f32.mrb[0].mxu0
        %v1873 = vadd.f32 0.0, %v1872
        %v1874 = vpop.f32.mrb[0].mxu0
        %1875 = vmatprep.mubr.bf16.mxu0 0
        %1876 = vmatmul.mubr.bf16.gmra.mrb[0].mxu0 %v1807
        %v1877 = vpop.f32.mrb[0].mxu0
        %v1878 = vadd.f32 0.0, %v1877
        %v1879 = vpop.f32.mrb[0].mxu0
        %v1880 = vpop.f32.mrb[0].mxu0
        %v1881 = vadd.f32 0.0, %v1880
        %v1882 = vpop.f32.mrb[0].mxu0
        %1883 = vmatprep.mubr.bf16.mxu0 0
        %1884 = vmatmul.mubr.bf16.gmra.mrb[0].mxu0 %v1810
        %v1885 = vpop.f32.mrb[0].mxu0
        %v1886 = vadd.f32 0.0, %v1885
        %v1887 = vpop.f32.mrb[0].mxu0
        %v1888 = vpop.f32.mrb[0].mxu0
        %v1889 = vadd.f32 0.0, %v1888
        %v1890 = vpop.f32.mrb[0].mxu0
        %1891 = vmatprep.mubr.bf16.mxu0 0
        %1892 = vmatmul.mubr.bf16.gmra.mrb[0].mxu0 %v1813
        %v1893 = vpop.f32.mrb[0].mxu0
        %v1894 = vadd.f32 0.0, %v1893
        %v1895 = vpop.f32.mrb[0].mxu0
        %v1896 = vpop.f32.mrb[0].mxu0
        %v1897 = vadd.f32 0.0, %v1896
        %v1898 = vpop.f32.mrb[0].mxu0
        %1899 = vmatprep.mubr.bf16.mxu0 0
        %1900 = vmatmul.mubr.bf16.gmra.mrb[0].mxu0 %v1816
        %v1901 = vpop.f32.mrb[0].mxu0
        %v1902 = vadd.f32 0.0, %v1901
        %v1903 = vpop.f32.mrb[0].mxu0
        %v1904 = vpop.f32.mrb[0].mxu0
        %v1905 = vadd.f32 0.0, %v1904
        %v1906 = vpop.f32.mrb[0].mxu0
        %1907 = vmatprep.mubr.bf16.mxu0 0
        %1908 = vmatmul.mubr.bf16.gmra.mrb[0].mxu0 %v1819
        %v1909 = vpop.f32.mrb[0].mxu0
        %v1910 = vadd.f32 0.0, %v1909
        %v1911 = vpop.f32.mrb[0].mxu0
        %v1912 = vpop.f32.mrb[0].mxu0
        %v1913 = vadd.f32 0.0, %v1912
        %v1914 = vpop.f32.mrb[0].mxu0
        %1915 = vmatprep.mubr.bf16.mxu0 0
        %1916 = vmatmul.mubr.bf16.gmra.mrb[0].mxu0 %v1822
        %v1917 = vpop.f32.mrb[0].mxu0
        %v1918 = vadd.f32 0.0, %v1917
        %v1919 = vpop.f32.mrb[0].mxu0
        %v1920 = vpop.f32.mrb[0].mxu0
        %v1921 = vadd.f32 0.0, %v1920
        %v1922 = vpop.f32.mrb[0].mxu0
        %1923 = vdwg.mxu0
        %v1924 = vadd.f32 %v1742, %v1862
        %v1925 = vadd.f32 %v1743, %v1865
        %v1926 = vadd.f32 %v1744, %v1870
        %v1927 = vadd.f32 %v1745, %v1873
        %v1928 = vadd.f32 %v1746, %v1878
        %v1929 = vadd.f32 %v1747, %v1881
        %v1930 = vadd.f32 %v1748, %v1886
        %v1931 = vadd.f32 %v1749, %v1889
        %v1932 = vadd.f32 %v1750, %v1894
        %v1933 = vadd.f32 %v1751, %v1897
        %v1934 = vadd.f32 %v1752, %v1902
        %v1935 = vadd.f32 %v1753, %v1905
        %v1936 = vadd.f32 %v1754, %v1910
        %v1937 = vadd.f32 %v1755, %v1913
        %v1938 = vadd.f32 %v1756, %v1918
        %v1939 = vadd.f32 %v1757, %v1921
        %v1940 = vld [vmem:[%s1391 + $0x4] sm:$0xf]
        %v1941 = vld [vmem:[%s1391 + $0x8] sm:$0xf]
        %v1942 = vld [vmem:[%s1391 + $0xc] sm:$0x1]
        %v1943 = vld [vmem:[%s1391 + $0x14] sm:$0xf]
        %v1944 = vld [vmem:[%s1391 + $0x18] sm:$0xf]
        %v1945 = vld [vmem:[%s1391 + $0x1c] sm:$0x1]
        %v1946 = vld [vmem:[%s1391 + $0x24] sm:$0xf]
        %v1947 = vld [vmem:[%s1391 + $0x28] sm:$0xf]
        %v1948 = vld [vmem:[%s1391 + $0x2c] sm:$0x1]
        %v1949 = vld [vmem:[%s1391 + $0x34] sm:$0xf]
        %v1950 = vld [vmem:[%s1391 + $0x38] sm:$0xf]
        %v1951 = vld [vmem:[%s1391 + $0x3c] sm:$0x1]
        %v1952 = vld [vmem:[%s1391 + $0x44] sm:$0xf]
        %v1953 = vld [vmem:[%s1391 + $0x48] sm:$0xf]
        %v1954 = vld [vmem:[%s1391 + $0x4c] sm:$0x1]
        %v1955 = vld [vmem:[%s1391 + $0x54] sm:$0xf]
        %v1956 = vld [vmem:[%s1391 + $0x58] sm:$0xf]
        %v1957 = vld [vmem:[%s1391 + $0x5c] sm:$0x1]
        %v1958 = vld [vmem:[%s1391 + $0x64] sm:$0xf]
        %v1959 = vld [vmem:[%s1391 + $0x68] sm:$0xf]
        %v1960 = vld [vmem:[%s1391 + $0x6c] sm:$0x1]
        %v1961 = vld [vmem:[%s1391 + $0x74] sm:$0xf]
        %v1962 = vld [vmem:[%s1391 + $0x78] sm:$0xf]
        %v1963 = vld [vmem:[%s1391 + $0x7c] sm:$0x1]
        %v1965 = vshrl.u32 %v1940, 16
        %v1967 = vrot.slane %v1965, 4
        %v1968 = vshll.u32 %v1940, 16
        %v1970 = vrot.slane %v1968, 5
        %v1971 = vor.u32 %v1967, %v1970
        %v1972 = vrot.slane %v1971, 4
        %v1974 = vshll.u32 %v1941, 16
        %v1976 = vrot.slane %v1974, 5
        %v1977 = vsel %vm1032, %v1972, %v1976
        %v1978 = vshrl.u32 %v1941, 16
        %v1980 = vrot.slane %v1978, 4
        %v1981 = vor.u32 %v1980, %v1976
        %v1982 = vrot.slane %v1981, 4
        %v1984 = vshll.u32 %v1942, 16
        %v1986 = vrot.slane %v1984, 5
        %v1987 = vsel %vm1032, %v1982, %v1986
        %v1989 = vshrl.u32 %v1943, 16
        %v1991 = vrot.slane %v1989, 4
        %v1992 = vshll.u32 %v1943, 16
        %v1994 = vrot.slane %v1992, 5
        %v1995 = vor.u32 %v1991, %v1994
        %v1996 = vrot.slane %v1995, 4
        %v1998 = vshll.u32 %v1944, 16
        %v2000 = vrot.slane %v1998, 5
        %v2001 = vsel %vm1032, %v1996, %v2000
        %v2002 = vshrl.u32 %v1944, 16
        %v2004 = vrot.slane %v2002, 4
        %v2005 = vor.u32 %v2004, %v2000
        %v2006 = vrot.slane %v2005, 4
        %v2008 = vshll.u32 %v1945, 16
        %v2010 = vrot.slane %v2008, 5
        %v2011 = vsel %vm1032, %v2006, %v2010
        %v2013 = vshrl.u32 %v1946, 16
        %v2015 = vrot.slane %v2013, 4
        %v2016 = vshll.u32 %v1946, 16
        %v2018 = vrot.slane %v2016, 5
        %v2019 = vor.u32 %v2015, %v2018
        %v2020 = vrot.slane %v2019, 4
        %v2022 = vshll.u32 %v1947, 16
        %v2024 = vrot.slane %v2022, 5
        %v2025 = vsel %vm1032, %v2020, %v2024
        %v2026 = vshrl.u32 %v1947, 16
        %v2028 = vrot.slane %v2026, 4
        %v2029 = vor.u32 %v2028, %v2024
        %v2030 = vrot.slane %v2029, 4
        %v2032 = vshll.u32 %v1948, 16
        %v2034 = vrot.slane %v2032, 5
        %v2035 = vsel %vm1032, %v2030, %v2034
        %v2037 = vshrl.u32 %v1949, 16
        %v2039 = vrot.slane %v2037, 4
        %v2040 = vshll.u32 %v1949, 16
        %v2042 = vrot.slane %v2040, 5
        %v2043 = vor.u32 %v2039, %v2042
        %v2044 = vrot.slane %v2043, 4
        %v2046 = vshll.u32 %v1950, 16
        %v2048 = vrot.slane %v2046, 5
        %v2049 = vsel %vm1032, %v2044, %v2048
        %v2050 = vshrl.u32 %v1950, 16
        %v2052 = vrot.slane %v2050, 4
        %v2053 = vor.u32 %v2052, %v2048
        %v2054 = vrot.slane %v2053, 4
        %v2056 = vshll.u32 %v1951, 16
        %v2058 = vrot.slane %v2056, 5
        %v2059 = vsel %vm1032, %v2054, %v2058
        %v2061 = vshrl.u32 %v1952, 16
        %v2063 = vrot.slane %v2061, 4
        %v2064 = vshll.u32 %v1952, 16
        %v2066 = vrot.slane %v2064, 5
        %v2067 = vor.u32 %v2063, %v2066
        %v2068 = vrot.slane %v2067, 4
        %v2070 = vshll.u32 %v1953, 16
        %v2072 = vrot.slane %v2070, 5
        %v2073 = vsel %vm1032, %v2068, %v2072
        %v2074 = vshrl.u32 %v1953, 16
        %v2076 = vrot.slane %v2074, 4
        %v2077 = vor.u32 %v2076, %v2072
        %v2078 = vrot.slane %v2077, 4
        %v2080 = vshll.u32 %v1954, 16
        %v2082 = vrot.slane %v2080, 5
        %v2083 = vsel %vm1032, %v2078, %v2082
        %v2085 = vshrl.u32 %v1955, 16
        %v2087 = vrot.slane %v2085, 4
        %v2088 = vshll.u32 %v1955, 16
        %v2090 = vrot.slane %v2088, 5
        %v2091 = vor.u32 %v2087, %v2090
        %v2092 = vrot.slane %v2091, 4
        %v2094 = vshll.u32 %v1956, 16
        %v2096 = vrot.slane %v2094, 5
        %v2097 = vsel %vm1032, %v2092, %v2096
        %v2098 = vshrl.u32 %v1956, 16
        %v2100 = vrot.slane %v2098, 4
        %v2101 = vor.u32 %v2100, %v2096
        %v2102 = vrot.slane %v2101, 4
        %v2104 = vshll.u32 %v1957, 16
        %v2106 = vrot.slane %v2104, 5
        %v2107 = vsel %vm1032, %v2102, %v2106
        %v2109 = vshrl.u32 %v1958, 16
        %v2111 = vrot.slane %v2109, 4
        %v2112 = vshll.u32 %v1958, 16
        %v2114 = vrot.slane %v2112, 5
        %v2115 = vor.u32 %v2111, %v2114
        %v2116 = vrot.slane %v2115, 4
        %v2118 = vshll.u32 %v1959, 16
        %v2120 = vrot.slane %v2118, 5
        %v2121 = vsel %vm1032, %v2116, %v2120
        %v2122 = vshrl.u32 %v1959, 16
        %v2124 = vrot.slane %v2122, 4
        %v2125 = vor.u32 %v2124, %v2120
        %v2126 = vrot.slane %v2125, 4
        %v2128 = vshll.u32 %v1960, 16
        %v2130 = vrot.slane %v2128, 5
        %v2131 = vsel %vm1032, %v2126, %v2130
        %v2133 = vshrl.u32 %v1961, 16
        %v2135 = vrot.slane %v2133, 4
        %v2136 = vshll.u32 %v1961, 16
        %v2138 = vrot.slane %v2136, 5
        %v2139 = vor.u32 %v2135, %v2138
        %v2140 = vrot.slane %v2139, 4
        %v2142 = vshll.u32 %v1962, 16
        %v2144 = vrot.slane %v2142, 5
        %v2145 = vsel %vm1032, %v2140, %v2144
        %v2146 = vshrl.u32 %v1962, 16
        %v2148 = vrot.slane %v2146, 4
        %v2149 = vor.u32 %v2148, %v2144
        %v2150 = vrot.slane %v2149, 4
        %v2152 = vshll.u32 %v1963, 16
        %v2154 = vrot.slane %v2152, 5
        %v2155 = vsel %vm1032, %v2150, %v2154
        %s2156 = scalar_lea.vmem [#allocation6], 10
        %v2157 = vld [vmem:[%s2156] sm:$0x3]
        %v2158 = vunpack.c.l.b16 %v1977
        %v2159 = vunpack.c.l.b16 %v1987
        %v2160 = vunpack.c.l.b16 %v2001
        %v2161 = vunpack.c.l.b16 %v2011
        %v2162 = vunpack.c.l.b16 %v2025
        %v2163 = vunpack.c.l.b16 %v2035
        %v2164 = vunpack.c.l.b16 %v2049
        %v2165 = vunpack.c.l.b16 %v2059
        %v2166 = vunpack.c.l.b16 %v2073
        %v2167 = vunpack.c.l.b16 %v2083
        %v2168 = vunpack.c.l.b16 %v2097
        %v2169 = vunpack.c.l.b16 %v2107
        %v2170 = vunpack.c.l.b16 %v2121
        %v2171 = vunpack.c.l.b16 %v2131
        %v2172 = vunpack.c.l.b16 %v2145
        %v2173 = vunpack.c.l.b16 %v2155
        %v2174 = vpack.c.b16 %v2159, %v2158
        %v2175 = vpack.c.b16 %v2161, %v2160
        %v2176 = vpack.c.b16 %v2163, %v2162
        %v2177 = vpack.c.b16 %v2165, %v2164
        %v2178 = vpack.c.b16 %v2167, %v2166
        %v2179 = vpack.c.b16 %v2169, %v2168
        %v2180 = vpack.c.b16 %v2171, %v2170
        %v2181 = vpack.c.b16 %v2173, %v2172
        %v2183 = vsel %vm732, %v2174, 0
        %v2186 = vsel %vm732, %v2175, 0
        %v2189 = vsel %vm732, %v2176, 0
        %v2192 = vsel %vm732, %v2177, 0
        %v2195 = vsel %vm732, %v2178, 0
        %v2198 = vsel %vm732, %v2179, 0
        %v2201 = vsel %vm732, %v2180, 0
        %v2204 = vsel %vm732, %v2181, 0
        %v2207 = vsel %vm757, %v2157, 0
        %2209 = vmatprep.subr.bf16.mxu0 0
        %2210 = vmatpush1.bf16.msra.mxu0 %v2207
        %2211 = vmatprep.subr.bf16.mxu0 0
        %2212 = vmatpush1.bf16.msra.mxu0 0
        %2213 = vmatprep.subr.bf16.mxu0 0
        %2214 = vmatpush1.bf16.msra.mxu0 0
        %2215 = vmatprep.subr.bf16.mxu0 0
        %2216 = vmatpush1.bf16.msra.mxu0 0
        %2217 = vmatprep.subr.bf16.mxu0 0
        %2218 = vmatpush1.bf16.msra.mxu0 0
        %2219 = vmatprep.subr.bf16.mxu0 0
        %2220 = vmatpush1.bf16.msra.mxu0 0
        %2221 = vmatprep.subr.bf16.mxu0 0
        %2222 = vmatpush1.bf16.msra.mxu0 0
        %2223 = vmatprep.subr.bf16.mxu0 0
        %2224 = vmatpush1.bf16.msra.mxu0 0
        %2225 = vmatprep.subr.bf16.mxu0 0
        %2226 = vmatpush1.bf16.msra.mxu0 0
        %2227 = vmatprep.subr.bf16.mxu0 0
        %2228 = vmatpush1.bf16.msra.mxu0 0
        %2229 = vmatprep.subr.bf16.mxu0 0
        %2230 = vmatpush1.bf16.msra.mxu0 0
        %2231 = vmatprep.subr.bf16.mxu0 0
        %2232 = vmatpush1.bf16.msra.mxu0 0
        %2233 = vmatprep.subr.bf16.mxu0 0
        %2234 = vmatpush1.bf16.msra.mxu0 0
        %2235 = vmatprep.subr.bf16.mxu0 0
        %2236 = vmatpush1.bf16.msra.mxu0 0
        %2237 = vmatprep.subr.bf16.mxu0 0
        %2238 = vmatpush1.bf16.msra.mxu0 0
        %2239 = vmatprep.subr.bf16.mxu0 0
        %2240 = vmatpush1.bf16.msra.mxu0 0
        %2241 = vmatprep.mubr.bf16.mxu0 0
        %2242 = vmatmul.mubr.bf16.gmra.mrb[0].mxu0 %v2183
        %v2243 = vpop.f32.mrb[0].mxu0
        %v2244 = vadd.f32 0.0, %v2243
        %v2245 = vpop.f32.mrb[0].mxu0
        %v2246 = vpop.f32.mrb[0].mxu0
        %v2247 = vadd.f32 0.0, %v2246
        %v2248 = vpop.f32.mrb[0].mxu0
        %2249 = vmatprep.mubr.bf16.mxu0 0
        %2250 = vmatmul.mubr.bf16.gmra.mrb[0].mxu0 %v2186
        %v2251 = vpop.f32.mrb[0].mxu0
        %v2252 = vadd.f32 0.0, %v2251
        %v2253 = vpop.f32.mrb[0].mxu0
        %v2254 = vpop.f32.mrb[0].mxu0
        %v2255 = vadd.f32 0.0, %v2254
        %v2256 = vpop.f32.mrb[0].mxu0
        %2257 = vmatprep.mubr.bf16.mxu0 0
        %2258 = vmatmul.mubr.bf16.gmra.mrb[0].mxu0 %v2189
        %v2259 = vpop.f32.mrb[0].mxu0
        %v2260 = vadd.f32 0.0, %v2259
        %v2261 = vpop.f32.mrb[0].mxu0
        %v2262 = vpop.f32.mrb[0].mxu0
        %v2263 = vadd.f32 0.0, %v2262
        %v2264 = vpop.f32.mrb[0].mxu0
        %2265 = vmatprep.mubr.bf16.mxu0 0
        %2266 = vmatmul.mubr.bf16.gmra.mrb[0].mxu0 %v2192
        %v2267 = vpop.f32.mrb[0].mxu0
        %v2268 = vadd.f32 0.0, %v2267
        %v2269 = vpop.f32.mrb[0].mxu0
        %v2270 = vpop.f32.mrb[0].mxu0
        %v2271 = vadd.f32 0.0, %v2270
        %v2272 = vpop.f32.mrb[0].mxu0
        %2273 = vmatprep.mubr.bf16.mxu0 0
        %2274 = vmatmul.mubr.bf16.gmra.mrb[0].mxu0 %v2195
        %v2275 = vpop.f32.mrb[0].mxu0
        %v2276 = vadd.f32 0.0, %v2275
        %v2277 = vpop.f32.mrb[0].mxu0
        %v2278 = vpop.f32.mrb[0].mxu0
        %v2279 = vadd.f32 0.0, %v2278
        %v2280 = vpop.f32.mrb[0].mxu0
        %2281 = vmatprep.mubr.bf16.mxu0 0
        %2282 = vmatmul.mubr.bf16.gmra.mrb[0].mxu0 %v2198
        %v2283 = vpop.f32.mrb[0].mxu0
        %v2284 = vadd.f32 0.0, %v2283
        %v2285 = vpop.f32.mrb[0].mxu0
        %v2286 = vpop.f32.mrb[0].mxu0
        %v2287 = vadd.f32 0.0, %v2286
        %v2288 = vpop.f32.mrb[0].mxu0
        %2289 = vmatprep.mubr.bf16.mxu0 0
        %2290 = vmatmul.mubr.bf16.gmra.mrb[0].mxu0 %v2201
        %v2291 = vpop.f32.mrb[0].mxu0
        %v2292 = vadd.f32 0.0, %v2291
        %v2293 = vpop.f32.mrb[0].mxu0
        %v2294 = vpop.f32.mrb[0].mxu0
        %v2295 = vadd.f32 0.0, %v2294
        %v2296 = vpop.f32.mrb[0].mxu0
        %2297 = vmatprep.mubr.bf16.mxu0 0
        %2298 = vmatmul.mubr.bf16.gmra.mrb[0].mxu0 %v2204
        %v2299 = vpop.f32.mrb[0].mxu0
        %v2300 = vadd.f32 0.0, %v2299
        %v2301 = vpop.f32.mrb[0].mxu0
        %v2302 = vpop.f32.mrb[0].mxu0
        %v2303 = vadd.f32 0.0, %v2302
        %v2304 = vpop.f32.mrb[0].mxu0
        %2305 = vdwg.mxu0
        %v2306 = vadd.f32 %v1924, %v2244
        %v2307 = vadd.f32 %v1925, %v2247
        %v2308 = vadd.f32 %v1926, %v2252
        %v2309 = vadd.f32 %v1927, %v2255
        %v2310 = vadd.f32 %v1928, %v2260
        %v2311 = vadd.f32 %v1929, %v2263
        %v2312 = vadd.f32 %v1930, %v2268
        %v2313 = vadd.f32 %v1931, %v2271
        %v2314 = vadd.f32 %v1932, %v2276
        %v2315 = vadd.f32 %v1933, %v2279
        %v2316 = vadd.f32 %v1934, %v2284
        %v2317 = vadd.f32 %v1935, %v2287
        %v2318 = vadd.f32 %v1936, %v2292
        %v2319 = vadd.f32 %v1937, %v2295
        %v2320 = vadd.f32 %v1938, %v2300
        %v2321 = vadd.f32 %v1939, %v2303
        %s2322 = scalar_lea.vmem %s321, 32 [#allocation3]
        %v2323 = vld [vmem:[%s2322] sm:$0x8]
        %v2324 = vld [vmem:[%s2322 + $0x4] sm:$0xf]
        %v2325 = vld [vmem:[%s2322 + $0x8] sm:$0xf]
        %v2326 = vld [vmem:[%s2322 + $0x10] sm:$0x8]
        %v2327 = vld [vmem:[%s2322 + $0x14] sm:$0xf]
        %v2328 = vld [vmem:[%s2322 + $0x18] sm:$0xf]
        %v2329 = vld [vmem:[%s2322 + $0x20] sm:$0x8]
        %v2330 = vld [vmem:[%s2322 + $0x24] sm:$0xf]
        %v2331 = vld [vmem:[%s2322 + $0x28] sm:$0xf]
        %v2332 = vld [vmem:[%s2322 + $0x30] sm:$0x8]
        %v2333 = vld [vmem:[%s2322 + $0x34] sm:$0xf]
        %v2334 = vld [vmem:[%s2322 + $0x38] sm:$0xf]
        %v2335 = vld [vmem:[%s2322 + $0x40] sm:$0x8]
        %v2336 = vld [vmem:[%s2322 + $0x44] sm:$0xf]
        %v2337 = vld [vmem:[%s2322 + $0x48] sm:$0xf]
        %v2338 = vld [vmem:[%s2322 + $0x50] sm:$0x8]
        %v2339 = vld [vmem:[%s2322 + $0x54] sm:$0xf]
        %v2340 = vld [vmem:[%s2322 + $0x58] sm:$0xf]
        %v2341 = vld [vmem:[%s2322 + $0x60] sm:$0x8]
        %v2342 = vld [vmem:[%s2322 + $0x64] sm:$0xf]
        %v2343 = vld [vmem:[%s2322 + $0x68] sm:$0xf]
        %v2344 = vld [vmem:[%s2322 + $0x70] sm:$0x8]
        %v2345 = vld [vmem:[%s2322 + $0x74] sm:$0xf]
        %v2346 = vld [vmem:[%s2322 + $0x78] sm:$0xf]
        %v2348 = vshrl.u32 %v2323, 16
        %v2350 = vrot.slane %v2348, 7
        %v2351 = vrot.slane %v2350, 4
        %v2353 = vshrl.u32 %v2324, 16
        %v2355 = vrot.slane %v2353, 7
        %v2356 = vshll.u32 %v2324, 16
        %v2358 = vor.u32 %v2355, %v2356
        %v2359 = vsel %vm512, %v2351, %v2358
        %v2360 = vrot.slane %v2355, 4
        %v2362 = vshrl.u32 %v2325, 16
        %v2364 = vrot.slane %v2362, 7
        %v2365 = vshll.u32 %v2325, 16
        %v2367 = vor.u32 %v2364, %v2365
        %v2368 = vsel %vm512, %v2360, %v2367
        %v2370 = vshrl.u32 %v2326, 16
        %v2372 = vrot.slane %v2370, 7
        %v2373 = vrot.slane %v2372, 4
        %v2375 = vshrl.u32 %v2327, 16
        %v2377 = vrot.slane %v2375, 7
        %v2378 = vshll.u32 %v2327, 16
        %v2380 = vor.u32 %v2377, %v2378
        %v2381 = vsel %vm512, %v2373, %v2380
        %v2382 = vrot.slane %v2377, 4
        %v2384 = vshrl.u32 %v2328, 16
        %v2386 = vrot.slane %v2384, 7
        %v2387 = vshll.u32 %v2328, 16
        %v2389 = vor.u32 %v2386, %v2387
        %v2390 = vsel %vm512, %v2382, %v2389
        %v2392 = vshrl.u32 %v2329, 16
        %v2394 = vrot.slane %v2392, 7
        %v2395 = vrot.slane %v2394, 4
        %v2397 = vshrl.u32 %v2330, 16
        %v2399 = vrot.slane %v2397, 7
        %v2400 = vshll.u32 %v2330, 16
        %v2402 = vor.u32 %v2399, %v2400
        %v2403 = vsel %vm512, %v2395, %v2402
        %v2404 = vrot.slane %v2399, 4
        %v2406 = vshrl.u32 %v2331, 16
        %v2408 = vrot.slane %v2406, 7
        %v2409 = vshll.u32 %v2331, 16
        %v2411 = vor.u32 %v2408, %v2409
        %v2412 = vsel %vm512, %v2404, %v2411
        %v2414 = vshrl.u32 %v2332, 16
        %v2416 = vrot.slane %v2414, 7
        %v2417 = vrot.slane %v2416, 4
        %v2419 = vshrl.u32 %v2333, 16
        %v2421 = vrot.slane %v2419, 7
        %v2422 = vshll.u32 %v2333, 16
        %v2424 = vor.u32 %v2421, %v2422
        %v2425 = vsel %vm512, %v2417, %v2424
        %v2426 = vrot.slane %v2421, 4
        %v2428 = vshrl.u32 %v2334, 16
        %v2430 = vrot.slane %v2428, 7
        %v2431 = vshll.u32 %v2334, 16
        %v2433 = vor.u32 %v2430, %v2431
        %v2434 = vsel %vm512, %v2426, %v2433
        %v2436 = vshrl.u32 %v2335, 16
        %v2438 = vrot.slane %v2436, 7
        %v2439 = vrot.slane %v2438, 4
        %v2441 = vshrl.u32 %v2336, 16
        %v2443 = vrot.slane %v2441, 7
        %v2444 = vshll.u32 %v2336, 16
        %v2446 = vor.u32 %v2443, %v2444
        %v2447 = vsel %vm512, %v2439, %v2446
        %v2448 = vrot.slane %v2443, 4
        %v2450 = vshrl.u32 %v2337, 16
        %v2452 = vrot.slane %v2450, 7
        %v2453 = vshll.u32 %v2337, 16
        %v2455 = vor.u32 %v2452, %v2453
        %v2456 = vsel %vm512, %v2448, %v2455
        %v2458 = vshrl.u32 %v2338, 16
        %v2460 = vrot.slane %v2458, 7
        %v2461 = vrot.slane %v2460, 4
        %v2463 = vshrl.u32 %v2339, 16
        %v2465 = vrot.slane %v2463, 7
        %v2466 = vshll.u32 %v2339, 16
        %v2468 = vor.u32 %v2465, %v2466
        %v2469 = vsel %vm512, %v2461, %v2468
        %v2470 = vrot.slane %v2465, 4
        %v2472 = vshrl.u32 %v2340, 16
        %v2474 = vrot.slane %v2472, 7
        %v2475 = vshll.u32 %v2340, 16
        %v2477 = vor.u32 %v2474, %v2475
        %v2478 = vsel %vm512, %v2470, %v2477
        %v2480 = vshrl.u32 %v2341, 16
        %v2482 = vrot.slane %v2480, 7
        %v2483 = vrot.slane %v2482, 4
        %v2485 = vshrl.u32 %v2342, 16
        %v2487 = vrot.slane %v2485, 7
        %v2488 = vshll.u32 %v2342, 16
        %v2490 = vor.u32 %v2487, %v2488
        %v2491 = vsel %vm512, %v2483, %v2490
        %v2492 = vrot.slane %v2487, 4
        %v2494 = vshrl.u32 %v2343, 16
        %v2496 = vrot.slane %v2494, 7
        %v2497 = vshll.u32 %v2343, 16
        %v2499 = vor.u32 %v2496, %v2497
        %v2500 = vsel %vm512, %v2492, %v2499
        %v2502 = vshrl.u32 %v2344, 16
        %v2504 = vrot.slane %v2502, 7
        %v2505 = vrot.slane %v2504, 4
        %v2507 = vshrl.u32 %v2345, 16
        %v2509 = vrot.slane %v2507, 7
        %v2510 = vshll.u32 %v2345, 16
        %v2512 = vor.u32 %v2509, %v2510
        %v2513 = vsel %vm512, %v2505, %v2512
        %v2514 = vrot.slane %v2509, 4
        %v2516 = vshrl.u32 %v2346, 16
        %v2518 = vrot.slane %v2516, 7
        %v2519 = vshll.u32 %v2346, 16
        %v2521 = vor.u32 %v2518, %v2519
        %v2522 = vsel %vm512, %v2514, %v2521
        %s2523 = scalar_lea.vmem [#allocation6], 12
        %v2524 = vld [vmem:[%s2523] sm:$0x3]
        %v2525 = vunpack.c.l.b16 %v2359
        %v2526 = vunpack.c.l.b16 %v2368
        %v2527 = vunpack.c.l.b16 %v2381
        %v2528 = vunpack.c.l.b16 %v2390
        %v2529 = vunpack.c.l.b16 %v2403
        %v2530 = vunpack.c.l.b16 %v2412
        %v2531 = vunpack.c.l.b16 %v2425
        %v2532 = vunpack.c.l.b16 %v2434
        %v2533 = vunpack.c.l.b16 %v2447
        %v2534 = vunpack.c.l.b16 %v2456
        %v2535 = vunpack.c.l.b16 %v2469
        %v2536 = vunpack.c.l.b16 %v2478
        %v2537 = vunpack.c.l.b16 %v2491
        %v2538 = vunpack.c.l.b16 %v2500
        %v2539 = vunpack.c.l.b16 %v2513
        %v2540 = vunpack.c.l.b16 %v2522
        %v2541 = vpack.c.b16 %v2526, %v2525
        %v2542 = vpack.c.b16 %v2528, %v2527
        %v2543 = vpack.c.b16 %v2530, %v2529
        %v2544 = vpack.c.b16 %v2532, %v2531
        %v2545 = vpack.c.b16 %v2534, %v2533
        %v2546 = vpack.c.b16 %v2536, %v2535
        %v2547 = vpack.c.b16 %v2538, %v2537
        %v2548 = vpack.c.b16 %v2540, %v2539
        %v2550 = vsel %vm732, %v2541, 0
        %v2553 = vsel %vm732, %v2542, 0
        %v2556 = vsel %vm732, %v2543, 0
        %v2559 = vsel %vm732, %v2544, 0
        %v2562 = vsel %vm732, %v2545, 0
        %v2565 = vsel %vm732, %v2546, 0
        %v2568 = vsel %vm732, %v2547, 0
        %v2571 = vsel %vm732, %v2548, 0
        %v2574 = vsel %vm757, %v2524, 0
        %2576 = vmatprep.subr.bf16.mxu0 0
        %2577 = vmatpush1.bf16.msra.mxu0 %v2574
        %2578 = vmatprep.subr.bf16.mxu0 0
        %2579 = vmatpush1.bf16.msra.mxu0 0
        %2580 = vmatprep.subr.bf16.mxu0 0
        %2581 = vmatpush1.bf16.msra.mxu0 0
        %2582 = vmatprep.subr.bf16.mxu0 0
        %2583 = vmatpush1.bf16.msra.mxu0 0
        %2584 = vmatprep.subr.bf16.mxu0 0
        %2585 = vmatpush1.bf16.msra.mxu0 0
        %2586 = vmatprep.subr.bf16.mxu0 0
        %2587 = vmatpush1.bf16.msra.mxu0 0
        %2588 = vmatprep.subr.bf16.mxu0 0
        %2589 = vmatpush1.bf16.msra.mxu0 0
        %2590 = vmatprep.subr.bf16.mxu0 0
        %2591 = vmatpush1.bf16.msra.mxu0 0
        %2592 = vmatprep.subr.bf16.mxu0 0
        %2593 = vmatpush1.bf16.msra.mxu0 0
        %2594 = vmatprep.subr.bf16.mxu0 0
        %2595 = vmatpush1.bf16.msra.mxu0 0
        %2596 = vmatprep.subr.bf16.mxu0 0
        %2597 = vmatpush1.bf16.msra.mxu0 0
        %2598 = vmatprep.subr.bf16.mxu0 0
        %2599 = vmatpush1.bf16.msra.mxu0 0
        %2600 = vmatprep.subr.bf16.mxu0 0
        %2601 = vmatpush1.bf16.msra.mxu0 0
        %2602 = vmatprep.subr.bf16.mxu0 0
        %2603 = vmatpush1.bf16.msra.mxu0 0
        %2604 = vmatprep.subr.bf16.mxu0 0
        %2605 = vmatpush1.bf16.msra.mxu0 0
        %2606 = vmatprep.subr.bf16.mxu0 0
        %2607 = vmatpush1.bf16.msra.mxu0 0
        %2608 = vmatprep.mubr.bf16.mxu0 0
        %2609 = vmatmul.mubr.bf16.gmra.mrb[0].mxu0 %v2550
        %v2610 = vpop.f32.mrb[0].mxu0
        %v2611 = vadd.f32 0.0, %v2610
        %v2612 = vpop.f32.mrb[0].mxu0
        %v2613 = vpop.f32.mrb[0].mxu0
        %v2614 = vadd.f32 0.0, %v2613
        %v2615 = vpop.f32.mrb[0].mxu0
        %2616 = vmatprep.mubr.bf16.mxu0 0
        %2617 = vmatmul.mubr.bf16.gmra.mrb[0].mxu0 %v2553
        %v2618 = vpop.f32.mrb[0].mxu0
        %v2619 = vadd.f32 0.0, %v2618
        %v2620 = vpop.f32.mrb[0].mxu0
        %v2621 = vpop.f32.mrb[0].mxu0
        %v2622 = vadd.f32 0.0, %v2621
        %v2623 = vpop.f32.mrb[0].mxu0
        %2624 = vmatprep.mubr.bf16.mxu0 0
        %2625 = vmatmul.mubr.bf16.gmra.mrb[0].mxu0 %v2556
        %v2626 = vpop.f32.mrb[0].mxu0
        %v2627 = vadd.f32 0.0, %v2626
        %v2628 = vpop.f32.mrb[0].mxu0
        %v2629 = vpop.f32.mrb[0].mxu0
        %v2630 = vadd.f32 0.0, %v2629
        %v2631 = vpop.f32.mrb[0].mxu0
        %2632 = vmatprep.mubr.bf16.mxu0 0
        %2633 = vmatmul.mubr.bf16.gmra.mrb[0].mxu0 %v2559
        %v2634 = vpop.f32.mrb[0].mxu0
        %v2635 = vadd.f32 0.0, %v2634
        %v2636 = vpop.f32.mrb[0].mxu0
        %v2637 = vpop.f32.mrb[0].mxu0
        %v2638 = vadd.f32 0.0, %v2637
        %v2639 = vpop.f32.mrb[0].mxu0
        %2640 = vmatprep.mubr.bf16.mxu0 0
        %2641 = vmatmul.mubr.bf16.gmra.mrb[0].mxu0 %v2562
        %v2642 = vpop.f32.mrb[0].mxu0
        %v2643 = vadd.f32 0.0, %v2642
        %v2644 = vpop.f32.mrb[0].mxu0
        %v2645 = vpop.f32.mrb[0].mxu0
        %v2646 = vadd.f32 0.0, %v2645
        %v2647 = vpop.f32.mrb[0].mxu0
        %2648 = vmatprep.mubr.bf16.mxu0 0
        %2649 = vmatmul.mubr.bf16.gmra.mrb[0].mxu0 %v2565
        %v2650 = vpop.f32.mrb[0].mxu0
        %v2651 = vadd.f32 0.0, %v2650
        %v2652 = vpop.f32.mrb[0].mxu0
        %v2653 = vpop.f32.mrb[0].mxu0
        %v2654 = vadd.f32 0.0, %v2653
        %v2655 = vpop.f32.mrb[0].mxu0
        %2656 = vmatprep.mubr.bf16.mxu0 0
        %2657 = vmatmul.mubr.bf16.gmra.mrb[0].mxu0 %v2568
        %v2658 = vpop.f32.mrb[0].mxu0
        %v2659 = vadd.f32 0.0, %v2658
        %v2660 = vpop.f32.mrb[0].mxu0
        %v2661 = vpop.f32.mrb[0].mxu0
        %v2662 = vadd.f32 0.0, %v2661
        %v2663 = vpop.f32.mrb[0].mxu0
        %2664 = vmatprep.mubr.bf16.mxu0 0
        %2665 = vmatmul.mubr.bf16.gmra.mrb[0].mxu0 %v2571
        %v2666 = vpop.f32.mrb[0].mxu0
        %v2667 = vadd.f32 0.0, %v2666
        %v2668 = vpop.f32.mrb[0].mxu0
        %v2669 = vpop.f32.mrb[0].mxu0
        %v2670 = vadd.f32 0.0, %v2669
        %v2671 = vpop.f32.mrb[0].mxu0
        %2672 = vdwg.mxu0
        %v2673 = vadd.f32 %v2306, %v2611
        %v2674 = vadd.f32 %v2307, %v2614
        %v2675 = vadd.f32 %v2308, %v2619
        %v2676 = vadd.f32 %v2309, %v2622
        %v2677 = vadd.f32 %v2310, %v2627
        %v2678 = vadd.f32 %v2311, %v2630
        %v2679 = vadd.f32 %v2312, %v2635
        %v2680 = vadd.f32 %v2313, %v2638
        %v2681 = vadd.f32 %v2314, %v2643
        %v2682 = vadd.f32 %v2315, %v2646
        %v2683 = vadd.f32 %v2316, %v2651
        %v2684 = vadd.f32 %v2317, %v2654
        %v2685 = vadd.f32 %v2318, %v2659
        %v2686 = vadd.f32 %v2319, %v2662
        %v2687 = vadd.f32 %v2320, %v2667
        %v2688 = vadd.f32 %v2321, %v2670
        %s2689 = scalar_lea.vmem [#allocation6], 14
        %v2690 = vld [vmem:[%s2689] sm:$0x3]
        %v2707 = vunpack.c.l.b16 %v2324
        %v2708 = vunpack.c.l.b16 %v2325
        %v2709 = vunpack.c.l.b16 %v2327
        %v2710 = vunpack.c.l.b16 %v2328
        %v2711 = vunpack.c.l.b16 %v2330
        %v2712 = vunpack.c.l.b16 %v2331
        %v2713 = vunpack.c.l.b16 %v2333
        %v2714 = vunpack.c.l.b16 %v2334
        %v2715 = vunpack.c.l.b16 %v2336
        %v2716 = vunpack.c.l.b16 %v2337
        %v2717 = vunpack.c.l.b16 %v2339
        %v2718 = vunpack.c.l.b16 %v2340
        %v2719 = vunpack.c.l.b16 %v2342
        %v2720 = vunpack.c.l.b16 %v2343
        %v2721 = vunpack.c.l.b16 %v2345
        %v2722 = vunpack.c.l.b16 %v2346
        %v2723 = vpack.c.b16 %v2708, %v2707
        %v2724 = vpack.c.b16 %v2710, %v2709
        %v2725 = vpack.c.b16 %v2712, %v2711
        %v2726 = vpack.c.b16 %v2714, %v2713
        %v2727 = vpack.c.b16 %v2716, %v2715
        %v2728 = vpack.c.b16 %v2718, %v2717
        %v2729 = vpack.c.b16 %v2720, %v2719
        %v2730 = vpack.c.b16 %v2722, %v2721
        %v2732 = vsel %vm732, %v2723, 0
        %v2735 = vsel %vm732, %v2724, 0
        %v2738 = vsel %vm732, %v2725, 0
        %v2741 = vsel %vm732, %v2726, 0
        %v2744 = vsel %vm732, %v2727, 0
        %v2747 = vsel %vm732, %v2728, 0
        %v2750 = vsel %vm732, %v2729, 0
        %v2753 = vsel %vm732, %v2730, 0
        %v2756 = vsel %vm757, %v2690, 0
        %2758 = vmatprep.subr.bf16.mxu0 0
        %2759 = vmatpush1.bf16.msra.mxu0 %v2756
        %2760 = vmatprep.subr.bf16.mxu0 0
        %2761 = vmatpush1.bf16.msra.mxu0 0
        %2762 = vmatprep.subr.bf16.mxu0 0
        %2763 = vmatpush1.bf16.msra.mxu0 0
        %2764 = vmatprep.subr.bf16.mxu0 0
        %2765 = vmatpush1.bf16.msra.mxu0 0
        %2766 = vmatprep.subr.bf16.mxu0 0
        %2767 = vmatpush1.bf16.msra.mxu0 0
        %2768 = vmatprep.subr.bf16.mxu0 0
        %2769 = vmatpush1.bf16.msra.mxu0 0
        %2770 = vmatprep.subr.bf16.mxu0 0
        %2771 = vmatpush1.bf16.msra.mxu0 0
        %2772 = vmatprep.subr.bf16.mxu0 0
        %2773 = vmatpush1.bf16.msra.mxu0 0
        %2774 = vmatprep.subr.bf16.mxu0 0
        %2775 = vmatpush1.bf16.msra.mxu0 0
        %2776 = vmatprep.subr.bf16.mxu0 0
        %2777 = vmatpush1.bf16.msra.mxu0 0
        %2778 = vmatprep.subr.bf16.mxu0 0
        %2779 = vmatpush1.bf16.msra.mxu0 0
        %2780 = vmatprep.subr.bf16.mxu0 0
        %2781 = vmatpush1.bf16.msra.mxu0 0
        %2782 = vmatprep.subr.bf16.mxu0 0
        %2783 = vmatpush1.bf16.msra.mxu0 0
        %2784 = vmatprep.subr.bf16.mxu0 0
        %2785 = vmatpush1.bf16.msra.mxu0 0
        %2786 = vmatprep.subr.bf16.mxu0 0
        %2787 = vmatpush1.bf16.msra.mxu0 0
        %2788 = vmatprep.subr.bf16.mxu0 0
        %2789 = vmatpush1.bf16.msra.mxu0 0
        %2790 = vmatprep.mubr.bf16.mxu0 0
        %2791 = vmatmul.mubr.bf16.gmra.mrb[0].mxu0 %v2732
        %v2792 = vpop.f32.mrb[0].mxu0
        %v2793 = vadd.f32 0.0, %v2792
        %v2794 = vpop.f32.mrb[0].mxu0
        %v2795 = vpop.f32.mrb[0].mxu0
        %v2796 = vadd.f32 0.0, %v2795
        %v2797 = vpop.f32.mrb[0].mxu0
        %2798 = vmatprep.mubr.bf16.mxu0 0
        %2799 = vmatmul.mubr.bf16.gmra.mrb[0].mxu0 %v2735
        %v2800 = vpop.f32.mrb[0].mxu0
        %v2801 = vadd.f32 0.0, %v2800
        %v2802 = vpop.f32.mrb[0].mxu0
        %v2803 = vpop.f32.mrb[0].mxu0
        %v2804 = vadd.f32 0.0, %v2803
        %v2805 = vpop.f32.mrb[0].mxu0
        %2806 = vmatprep.mubr.bf16.mxu0 0
        %2807 = vmatmul.mubr.bf16.gmra.mrb[0].mxu0 %v2738
        %v2808 = vpop.f32.mrb[0].mxu0
        %v2809 = vadd.f32 0.0, %v2808
        %v2810 = vpop.f32.mrb[0].mxu0
        %v2811 = vpop.f32.mrb[0].mxu0
        %v2812 = vadd.f32 0.0, %v2811
        %v2813 = vpop.f32.mrb[0].mxu0
        %2814 = vmatprep.mubr.bf16.mxu0 0
        %2815 = vmatmul.mubr.bf16.gmra.mrb[0].mxu0 %v2741
        %v2816 = vpop.f32.mrb[0].mxu0
        %v2817 = vadd.f32 0.0, %v2816
        %v2818 = vpop.f32.mrb[0].mxu0
        %v2819 = vpop.f32.mrb[0].mxu0
        %v2820 = vadd.f32 0.0, %v2819
        %v2821 = vpop.f32.mrb[0].mxu0
        %2822 = vmatprep.mubr.bf16.mxu0 0
        %2823 = vmatmul.mubr.bf16.gmra.mrb[0].mxu0 %v2744
        %v2824 = vpop.f32.mrb[0].mxu0
        %v2825 = vadd.f32 0.0, %v2824
        %v2826 = vpop.f32.mrb[0].mxu0
        %v2827 = vpop.f32.mrb[0].mxu0
        %v2828 = vadd.f32 0.0, %v2827
        %v2829 = vpop.f32.mrb[0].mxu0
        %2830 = vmatprep.mubr.bf16.mxu0 0
        %2831 = vmatmul.mubr.bf16.gmra.mrb[0].mxu0 %v2747
        %v2832 = vpop.f32.mrb[0].mxu0
        %v2833 = vadd.f32 0.0, %v2832
        %v2834 = vpop.f32.mrb[0].mxu0
        %v2835 = vpop.f32.mrb[0].mxu0
        %v2836 = vadd.f32 0.0, %v2835
        %v2837 = vpop.f32.mrb[0].mxu0
        %2838 = vmatprep.mubr.bf16.mxu0 0
        %2839 = vmatmul.mubr.bf16.gmra.mrb[0].mxu0 %v2750
        %v2840 = vpop.f32.mrb[0].mxu0
        %v2841 = vadd.f32 0.0, %v2840
        %v2842 = vpop.f32.mrb[0].mxu0
        %v2843 = vpop.f32.mrb[0].mxu0
        %v2844 = vadd.f32 0.0, %v2843
        %v2845 = vpop.f32.mrb[0].mxu0
        %2846 = vmatprep.mubr.bf16.mxu0 0
        %2847 = vmatmul.mubr.bf16.gmra.mrb[0].mxu0 %v2753
        %v2848 = vpop.f32.mrb[0].mxu0
        %v2849 = vadd.f32 0.0, %v2848
        %v2850 = vpop.f32.mrb[0].mxu0
        %v2851 = vpop.f32.mrb[0].mxu0
        %v2852 = vadd.f32 0.0, %v2851
        %v2853 = vpop.f32.mrb[0].mxu0
        %2854 = vdwg.mxu0
        %v2855 = vadd.f32 %v2673, %v2793
        %v2856 = vadd.f32 %v2674, %v2796
        %v2857 = vadd.f32 %v2675, %v2801
        %v2858 = vadd.f32 %v2676, %v2804
        %v2859 = vadd.f32 %v2677, %v2809
        %v2860 = vadd.f32 %v2678, %v2812
        %v2861 = vadd.f32 %v2679, %v2817
        %v2862 = vadd.f32 %v2680, %v2820
        %v2863 = vadd.f32 %v2681, %v2825
        %v2864 = vadd.f32 %v2682, %v2828
        %v2865 = vadd.f32 %v2683, %v2833
        %v2866 = vadd.f32 %v2684, %v2836
        %v2867 = vadd.f32 %v2685, %v2841
        %v2868 = vadd.f32 %v2686, %v2844
        %v2869 = vadd.f32 %v2687, %v2849
        %v2870 = vadd.f32 %v2688, %v2852
        %v2871 = vld [vmem:[%s2322 + $0x4] sm:$0xf]
        %v2872 = vld [vmem:[%s2322 + $0x8] sm:$0xf]
        %v2873 = vld [vmem:[%s2322 + $0xc] sm:$0x1]
        %v2874 = vld [vmem:[%s2322 + $0x14] sm:$0xf]
        %v2875 = vld [vmem:[%s2322 + $0x18] sm:$0xf]
        %v2876 = vld [vmem:[%s2322 + $0x1c] sm:$0x1]
        %v2877 = vld [vmem:[%s2322 + $0x24] sm:$0xf]
        %v2878 = vld [vmem:[%s2322 + $0x28] sm:$0xf]
        %v2879 = vld [vmem:[%s2322 + $0x2c] sm:$0x1]
        %v2880 = vld [vmem:[%s2322 + $0x34] sm:$0xf]
        %v2881 = vld [vmem:[%s2322 + $0x38] sm:$0xf]
        %v2882 = vld [vmem:[%s2322 + $0x3c] sm:$0x1]
        %v2883 = vld [vmem:[%s2322 + $0x44] sm:$0xf]
        %v2884 = vld [vmem:[%s2322 + $0x48] sm:$0xf]
        %v2885 = vld [vmem:[%s2322 + $0x4c] sm:$0x1]
        %v2886 = vld [vmem:[%s2322 + $0x54] sm:$0xf]
        %v2887 = vld [vmem:[%s2322 + $0x58] sm:$0xf]
        %v2888 = vld [vmem:[%s2322 + $0x5c] sm:$0x1]
        %v2889 = vld [vmem:[%s2322 + $0x64] sm:$0xf]
        %v2890 = vld [vmem:[%s2322 + $0x68] sm:$0xf]
        %v2891 = vld [vmem:[%s2322 + $0x6c] sm:$0x1]
        %v2892 = vld [vmem:[%s2322 + $0x74] sm:$0xf]
        %v2893 = vld [vmem:[%s2322 + $0x78] sm:$0xf]
        %v2894 = vld [vmem:[%s2322 + $0x7c] sm:$0x1]
        %v2896 = vshrl.u32 %v2871, 16
        %v2898 = vrot.slane %v2896, 4
        %v2899 = vshll.u32 %v2871, 16
        %v2901 = vrot.slane %v2899, 5
        %v2902 = vor.u32 %v2898, %v2901
        %v2903 = vrot.slane %v2902, 4
        %v2905 = vshll.u32 %v2872, 16
        %v2907 = vrot.slane %v2905, 5
        %v2908 = vsel %vm1032, %v2903, %v2907
        %v2909 = vshrl.u32 %v2872, 16
        %v2911 = vrot.slane %v2909, 4
        %v2912 = vor.u32 %v2911, %v2907
        %v2913 = vrot.slane %v2912, 4
        %v2915 = vshll.u32 %v2873, 16
        %v2917 = vrot.slane %v2915, 5
        %v2918 = vsel %vm1032, %v2913, %v2917
        %v2920 = vshrl.u32 %v2874, 16
        %v2922 = vrot.slane %v2920, 4
        %v2923 = vshll.u32 %v2874, 16
        %v2925 = vrot.slane %v2923, 5
        %v2926 = vor.u32 %v2922, %v2925
        %v2927 = vrot.slane %v2926, 4
        %v2929 = vshll.u32 %v2875, 16
        %v2931 = vrot.slane %v2929, 5
        %v2932 = vsel %vm1032, %v2927, %v2931
        %v2933 = vshrl.u32 %v2875, 16
        %v2935 = vrot.slane %v2933, 4
        %v2936 = vor.u32 %v2935, %v2931
        %v2937 = vrot.slane %v2936, 4
        %v2939 = vshll.u32 %v2876, 16
        %v2941 = vrot.slane %v2939, 5
        %v2942 = vsel %vm1032, %v2937, %v2941
        %v2944 = vshrl.u32 %v2877, 16
        %v2946 = vrot.slane %v2944, 4
        %v2947 = vshll.u32 %v2877, 16
        %v2949 = vrot.slane %v2947, 5
        %v2950 = vor.u32 %v2946, %v2949
        %v2951 = vrot.slane %v2950, 4
        %v2953 = vshll.u32 %v2878, 16
        %v2955 = vrot.slane %v2953, 5
        %v2956 = vsel %vm1032, %v2951, %v2955
        %v2957 = vshrl.u32 %v2878, 16
        %v2959 = vrot.slane %v2957, 4
        %v2960 = vor.u32 %v2959, %v2955
        %v2961 = vrot.slane %v2960, 4
        %v2963 = vshll.u32 %v2879, 16
        %v2965 = vrot.slane %v2963, 5
        %v2966 = vsel %vm1032, %v2961, %v2965
        %v2968 = vshrl.u32 %v2880, 16
        %v2970 = vrot.slane %v2968, 4
        %v2971 = vshll.u32 %v2880, 16
        %v2973 = vrot.slane %v2971, 5
        %v2974 = vor.u32 %v2970, %v2973
        %v2975 = vrot.slane %v2974, 4
        %v2977 = vshll.u32 %v2881, 16
        %v2979 = vrot.slane %v2977, 5
        %v2980 = vsel %vm1032, %v2975, %v2979
        %v2981 = vshrl.u32 %v2881, 16
        %v2983 = vrot.slane %v2981, 4
        %v2984 = vor.u32 %v2983, %v2979
        %v2985 = vrot.slane %v2984, 4
        %v2987 = vshll.u32 %v2882, 16
        %v2989 = vrot.slane %v2987, 5
        %v2990 = vsel %vm1032, %v2985, %v2989
        %v2992 = vshrl.u32 %v2883, 16
        %v2994 = vrot.slane %v2992, 4
        %v2995 = vshll.u32 %v2883, 16
        %v2997 = vrot.slane %v2995, 5
        %v2998 = vor.u32 %v2994, %v2997
        %v2999 = vrot.slane %v2998, 4
        %v3001 = vshll.u32 %v2884, 16
        %v3003 = vrot.slane %v3001, 5
        %v3004 = vsel %vm1032, %v2999, %v3003
        %v3005 = vshrl.u32 %v2884, 16
        %v3007 = vrot.slane %v3005, 4
        %v3008 = vor.u32 %v3007, %v3003
        %v3009 = vrot.slane %v3008, 4
        %v3011 = vshll.u32 %v2885, 16
        %v3013 = vrot.slane %v3011, 5
        %v3014 = vsel %vm1032, %v3009, %v3013
        %v3016 = vshrl.u32 %v2886, 16
        %v3018 = vrot.slane %v3016, 4
        %v3019 = vshll.u32 %v2886, 16
        %v3021 = vrot.slane %v3019, 5
        %v3022 = vor.u32 %v3018, %v3021
        %v3023 = vrot.slane %v3022, 4
        %v3025 = vshll.u32 %v2887, 16
        %v3027 = vrot.slane %v3025, 5
        %v3028 = vsel %vm1032, %v3023, %v3027
        %v3029 = vshrl.u32 %v2887, 16
        %v3031 = vrot.slane %v3029, 4
        %v3032 = vor.u32 %v3031, %v3027
        %v3033 = vrot.slane %v3032, 4
        %v3035 = vshll.u32 %v2888, 16
        %v3037 = vrot.slane %v3035, 5
        %v3038 = vsel %vm1032, %v3033, %v3037
        %v3040 = vshrl.u32 %v2889, 16
        %v3042 = vrot.slane %v3040, 4
        %v3043 = vshll.u32 %v2889, 16
        %v3045 = vrot.slane %v3043, 5
        %v3046 = vor.u32 %v3042, %v3045
        %v3047 = vrot.slane %v3046, 4
        %v3049 = vshll.u32 %v2890, 16
        %v3051 = vrot.slane %v3049, 5
        %v3052 = vsel %vm1032, %v3047, %v3051
        %v3053 = vshrl.u32 %v2890, 16
        %v3055 = vrot.slane %v3053, 4
        %v3056 = vor.u32 %v3055, %v3051
        %v3057 = vrot.slane %v3056, 4
        %v3059 = vshll.u32 %v2891, 16
        %v3061 = vrot.slane %v3059, 5
        %v3062 = vsel %vm1032, %v3057, %v3061
        %v3064 = vshrl.u32 %v2892, 16
        %v3066 = vrot.slane %v3064, 4
        %v3067 = vshll.u32 %v2892, 16
        %v3069 = vrot.slane %v3067, 5
        %v3070 = vor.u32 %v3066, %v3069
        %v3071 = vrot.slane %v3070, 4
        %v3073 = vshll.u32 %v2893, 16
        %v3075 = vrot.slane %v3073, 5
        %v3076 = vsel %vm1032, %v3071, %v3075
        %v3077 = vshrl.u32 %v2893, 16
        %v3079 = vrot.slane %v3077, 4
        %v3080 = vor.u32 %v3079, %v3075
        %v3081 = vrot.slane %v3080, 4
        %v3083 = vshll.u32 %v2894, 16
        %v3085 = vrot.slane %v3083, 5
        %v3086 = vsel %vm1032, %v3081, %v3085
        %s3087 = scalar_lea.vmem [#allocation6], 16
        %v3088 = vld [vmem:[%s3087] sm:$0x3]
        %v3089 = vunpack.c.l.b16 %v2908
        %v3090 = vunpack.c.l.b16 %v2918
        %v3091 = vunpack.c.l.b16 %v2932
        %v3092 = vunpack.c.l.b16 %v2942
        %v3093 = vunpack.c.l.b16 %v2956
        %v3094 = vunpack.c.l.b16 %v2966
        %v3095 = vunpack.c.l.b16 %v2980
        %v3096 = vunpack.c.l.b16 %v2990
        %v3097 = vunpack.c.l.b16 %v3004
        %v3098 = vunpack.c.l.b16 %v3014
        %v3099 = vunpack.c.l.b16 %v3028
        %v3100 = vunpack.c.l.b16 %v3038
        %v3101 = vunpack.c.l.b16 %v3052
        %v3102 = vunpack.c.l.b16 %v3062
        %v3103 = vunpack.c.l.b16 %v3076
        %v3104 = vunpack.c.l.b16 %v3086
        %v3105 = vpack.c.b16 %v3090, %v3089
        %v3106 = vpack.c.b16 %v3092, %v3091
        %v3107 = vpack.c.b16 %v3094, %v3093
        %v3108 = vpack.c.b16 %v3096, %v3095
        %v3109 = vpack.c.b16 %v3098, %v3097
        %v3110 = vpack.c.b16 %v3100, %v3099
        %v3111 = vpack.c.b16 %v3102, %v3101
        %v3112 = vpack.c.b16 %v3104, %v3103
        %v3114 = vsel %vm732, %v3105, 0
        %v3117 = vsel %vm732, %v3106, 0
        %v3120 = vsel %vm732, %v3107, 0
        %v3123 = vsel %vm732, %v3108, 0
        %v3126 = vsel %vm732, %v3109, 0
        %v3129 = vsel %vm732, %v3110, 0
        %v3132 = vsel %vm732, %v3111, 0
        %v3135 = vsel %vm732, %v3112, 0
        %v3138 = vsel %vm757, %v3088, 0
        %3140 = vmatprep.subr.bf16.mxu0 0
        %3141 = vmatpush1.bf16.msra.mxu0 %v3138
        %3142 = vmatprep.subr.bf16.mxu0 0
        %3143 = vmatpush1.bf16.msra.mxu0 0
        %3144 = vmatprep.subr.bf16.mxu0 0
        %3145 = vmatpush1.bf16.msra.mxu0 0
        %3146 = vmatprep.subr.bf16.mxu0 0
        %3147 = vmatpush1.bf16.msra.mxu0 0
        %3148 = vmatprep.subr.bf16.mxu0 0
        %3149 = vmatpush1.bf16.msra.mxu0 0
        %3150 = vmatprep.subr.bf16.mxu0 0
        %3151 = vmatpush1.bf16.msra.mxu0 0
        %3152 = vmatprep.subr.bf16.mxu0 0
        %3153 = vmatpush1.bf16.msra.mxu0 0
        %3154 = vmatprep.subr.bf16.mxu0 0
        %3155 = vmatpush1.bf16.msra.mxu0 0
        %3156 = vmatprep.subr.bf16.mxu0 0
        %3157 = vmatpush1.bf16.msra.mxu0 0
        %3158 = vmatprep.subr.bf16.mxu0 0
        %3159 = vmatpush1.bf16.msra.mxu0 0
        %3160 = vmatprep.subr.bf16.mxu0 0
        %3161 = vmatpush1.bf16.msra.mxu0 0
        %3162 = vmatprep.subr.bf16.mxu0 0
        %3163 = vmatpush1.bf16.msra.mxu0 0
        %3164 = vmatprep.subr.bf16.mxu0 0
        %3165 = vmatpush1.bf16.msra.mxu0 0
        %3166 = vmatprep.subr.bf16.mxu0 0
        %3167 = vmatpush1.bf16.msra.mxu0 0
        %3168 = vmatprep.subr.bf16.mxu0 0
        %3169 = vmatpush1.bf16.msra.mxu0 0
        %3170 = vmatprep.subr.bf16.mxu0 0
        %3171 = vmatpush1.bf16.msra.mxu0 0
        %3172 = vmatprep.mubr.bf16.mxu0 0
        %3173 = vmatmul.mubr.bf16.gmra.mrb[0].mxu0 %v3114
        %v3174 = vpop.f32.mrb[0].mxu0
        %v3175 = vadd.f32 0.0, %v3174
        %v3176 = vpop.f32.mrb[0].mxu0
        %v3177 = vpop.f32.mrb[0].mxu0
        %v3178 = vadd.f32 0.0, %v3177
        %v3179 = vpop.f32.mrb[0].mxu0
        %3180 = vmatprep.mubr.bf16.mxu0 0
        %3181 = vmatmul.mubr.bf16.gmra.mrb[0].mxu0 %v3117
        %v3182 = vpop.f32.mrb[0].mxu0
        %v3183 = vadd.f32 0.0, %v3182
        %v3184 = vpop.f32.mrb[0].mxu0
        %v3185 = vpop.f32.mrb[0].mxu0
        %v3186 = vadd.f32 0.0, %v3185
        %v3187 = vpop.f32.mrb[0].mxu0
        %3188 = vmatprep.mubr.bf16.mxu0 0
        %3189 = vmatmul.mubr.bf16.gmra.mrb[0].mxu0 %v3120
        %v3190 = vpop.f32.mrb[0].mxu0
        %v3191 = vadd.f32 0.0, %v3190
        %v3192 = vpop.f32.mrb[0].mxu0
        %v3193 = vpop.f32.mrb[0].mxu0
        %v3194 = vadd.f32 0.0, %v3193
        %v3195 = vpop.f32.mrb[0].mxu0
        %3196 = vmatprep.mubr.bf16.mxu0 0
        %3197 = vmatmul.mubr.bf16.gmra.mrb[0].mxu0 %v3123
        %v3198 = vpop.f32.mrb[0].mxu0
        %v3199 = vadd.f32 0.0, %v3198
        %v3200 = vpop.f32.mrb[0].mxu0
        %v3201 = vpop.f32.mrb[0].mxu0
        %v3202 = vadd.f32 0.0, %v3201
        %v3203 = vpop.f32.mrb[0].mxu0
        %3204 = vmatprep.mubr.bf16.mxu0 0
        %3205 = vmatmul.mubr.bf16.gmra.mrb[0].mxu0 %v3126
        %v3206 = vpop.f32.mrb[0].mxu0
        %v3207 = vadd.f32 0.0, %v3206
        %v3208 = vpop.f32.mrb[0].mxu0
        %v3209 = vpop.f32.mrb[0].mxu0
        %v3210 = vadd.f32 0.0, %v3209
        %v3211 = vpop.f32.mrb[0].mxu0
        %3212 = vmatprep.mubr.bf16.mxu0 0
        %3213 = vmatmul.mubr.bf16.gmra.mrb[0].mxu0 %v3129
        %v3214 = vpop.f32.mrb[0].mxu0
        %v3215 = vadd.f32 0.0, %v3214
        %v3216 = vpop.f32.mrb[0].mxu0
        %v3217 = vpop.f32.mrb[0].mxu0
        %v3218 = vadd.f32 0.0, %v3217
        %v3219 = vpop.f32.mrb[0].mxu0
        %3220 = vmatprep.mubr.bf16.mxu0 0
        %3221 = vmatmul.mubr.bf16.gmra.mrb[0].mxu0 %v3132
        %v3222 = vpop.f32.mrb[0].mxu0
        %v3223 = vadd.f32 0.0, %v3222
        %v3224 = vpop.f32.mrb[0].mxu0
        %v3225 = vpop.f32.mrb[0].mxu0
        %v3226 = vadd.f32 0.0, %v3225
        %v3227 = vpop.f32.mrb[0].mxu0
        %3228 = vmatprep.mubr.bf16.mxu0 0
        %3229 = vmatmul.mubr.bf16.gmra.mrb[0].mxu0 %v3135
        %v3230 = vpop.f32.mrb[0].mxu0
        %v3231 = vadd.f32 0.0, %v3230
        %v3232 = vpop.f32.mrb[0].mxu0
        %v3233 = vpop.f32.mrb[0].mxu0
        %v3234 = vadd.f32 0.0, %v3233
        %v3235 = vpop.f32.mrb[0].mxu0
        %3236 = vdwg.mxu0
        %v3237 = vadd.f32 %v2855, %v3175
        %v3238 = vadd.f32 %v2856, %v3178
        %v3239 = vadd.f32 %v2857, %v3183
        %v3240 = vadd.f32 %v2858, %v3186
        %v3241 = vadd.f32 %v2859, %v3191
        %v3242 = vadd.f32 %v2860, %v3194
        %v3243 = vadd.f32 %v2861, %v3199
        %v3244 = vadd.f32 %v2862, %v3202
        %v3245 = vadd.f32 %v2863, %v3207
        %v3246 = vadd.f32 %v2864, %v3210
        %v3247 = vadd.f32 %v2865, %v3215
        %v3248 = vadd.f32 %v2866, %v3218
        %v3249 = vadd.f32 %v2867, %v3223
        %v3250 = vadd.f32 %v2868, %v3226
        %v3251 = vadd.f32 %v2869, %v3231
        %v3252 = vadd.f32 %v2870, %v3234
        %v3253 = vld [vmem:[#allocation8] sm:$0x1]
        %v3255 = vlaneseq
        %v3256 = vshrl.u32 %v3255, 7
        %v3257 = vsub.s32 0, %v3256
        %v3258 = vrot.slane %v3253, %v3257
        %v3260 = vmul.f32 %v3237, %v3258
        %v3261 = vmul.f32 %v3238, %v3258
        %v3262 = vmul.f32 %v3239, %v3258
        %v3263 = vmul.f32 %v3240, %v3258
        %v3264 = vmul.f32 %v3241, %v3258
        %v3265 = vmul.f32 %v3242, %v3258
        %v3266 = vmul.f32 %v3243, %v3258
        %v3267 = vmul.f32 %v3244, %v3258
        %v3268 = vmul.f32 %v3245, %v3258
        %v3269 = vmul.f32 %v3246, %v3258
        %v3270 = vmul.f32 %v3247, %v3258
        %v3271 = vmul.f32 %v3248, %v3258
        %v3272 = vmul.f32 %v3249, %v3258
        %v3273 = vmul.f32 %v3250, %v3258
        %v3274 = vmul.f32 %v3251, %v3258
        %v3275 = vmul.f32 %v3252, %v3258
        %v3276 = vld [vmem:[#allocation9] sm:$0x1]
        %v3278 = vlaneseq
        %v3279 = vshrl.u32 %v3278, 7
        %v3280 = vsub.s32 0, %v3279
        %v3281 = vrot.slane %v3276, %v3280
        %v3283 = vadd.f32 %v3260, %v3281
        %v3284 = vadd.f32 %v3261, %v3281
        %v3285 = vadd.f32 %v3262, %v3281
        %v3286 = vadd.f32 %v3263, %v3281
        %v3287 = vadd.f32 %v3264, %v3281
        %v3288 = vadd.f32 %v3265, %v3281
        %v3289 = vadd.f32 %v3266, %v3281
        %v3290 = vadd.f32 %v3267, %v3281
        %v3291 = vadd.f32 %v3268, %v3281
        %v3292 = vadd.f32 %v3269, %v3281
        %v3293 = vadd.f32 %v3270, %v3281
        %v3294 = vadd.f32 %v3271, %v3281
        %v3295 = vadd.f32 %v3272, %v3281
        %v3296 = vadd.f32 %v3273, %v3281
        %v3297 = vadd.f32 %v3274, %v3281
        %v3298 = vadd.f32 %v3275, %v3281
        %v3299 = vmax.f32 %v3283, 0.0
        %v3300 = vmax.f32 %v3284, 0.0
        %v3301 = vmax.f32 %v3285, 0.0
        %v3302 = vmax.f32 %v3286, 0.0
        %v3303 = vmax.f32 %v3287, 0.0
        %v3304 = vmax.f32 %v3288, 0.0
        %v3305 = vmax.f32 %v3289, 0.0
        %v3306 = vmax.f32 %v3290, 0.0
        %v3307 = vmax.f32 %v3291, 0.0
        %v3308 = vmax.f32 %v3292, 0.0
        %v3309 = vmax.f32 %v3293, 0.0
        %v3310 = vmax.f32 %v3294, 0.0
        %v3311 = vmax.f32 %v3295, 0.0
        %v3312 = vmax.f32 %v3296, 0.0
        %v3313 = vmax.f32 %v3297, 0.0
        %v3314 = vmax.f32 %v3298, 0.0
        %v3315 = vpack.c.bf16 %v3300, %v3299
        %v3316 = vpack.c.bf16 %v3302, %v3301
        %v3317 = vpack.c.bf16 %v3304, %v3303
        %v3318 = vpack.c.bf16 %v3306, %v3305
        %v3319 = vpack.c.bf16 %v3308, %v3307
        %v3320 = vpack.c.bf16 %v3310, %v3309
        %v3321 = vpack.c.bf16 %v3312, %v3311
        %v3322 = vpack.c.bf16 %v3314, %v3313
        %v3331 = vrot.slane %v3315, 4
        %v3332 = vrot.slane %v3316, 4
        %v3333 = vrot.slane %v3317, 4
        %v3334 = vrot.slane %v3318, 4
        %v3335 = vrot.slane %v3319, 4
        %v3336 = vrot.slane %v3320, 4
        %v3337 = vrot.slane %v3321, 4
        %v3338 = vrot.slane %v3322, 4
        %vm3347 = vcmask 64516
        %3348 = vst.msk [vmem:[%s383] sm:$0xf0] %vm3347, %v3331
        %vm3349 = vcmask 60416
        %3350 = vst.msk [vmem:[%s383 + $0x8] sm:$0xf] %vm3349, %v3331
        %3351 = vst.msk [vmem:[%s383 + $0x10] sm:$0xf0] %vm3347, %v3332
        %3352 = vst.msk [vmem:[%s383 + $0x18] sm:$0xf] %vm3349, %v3332
        %3353 = vst.msk [vmem:[%s383 + $0x20] sm:$0xf0] %vm3347, %v3333
        %3354 = vst.msk [vmem:[%s383 + $0x28] sm:$0xf] %vm3349, %v3333
        %3355 = vst.msk [vmem:[%s383 + $0x30] sm:$0xf0] %vm3347, %v3334
        %3356 = vst.msk [vmem:[%s383 + $0x38] sm:$0xf] %vm3349, %v3334
        %3357 = vst.msk [vmem:[%s383 + $0x40] sm:$0xf0] %vm3347, %v3335
        %3358 = vst.msk [vmem:[%s383 + $0x48] sm:$0xf] %vm3349, %v3335
        %3359 = vst.msk [vmem:[%s383 + $0x50] sm:$0xf0] %vm3347, %v3336
        %3360 = vst.msk [vmem:[%s383 + $0x58] sm:$0xf] %vm3349, %v3336
        %3361 = vst.msk [vmem:[%s383 + $0x60] sm:$0xf0] %vm3347, %v3337
        %3362 = vst.msk [vmem:[%s383 + $0x68] sm:$0xf] %vm3349, %v3337
        %3363 = vst.msk [vmem:[%s383 + $0x70] sm:$0xf0] %vm3347, %v3338
        %3364 = vst.msk [vmem:[%s383 + $0x78] sm:$0xf] %vm3349, %v3338
        %s3365 = scalar_lea.vmem %s321, 128 [#allocation3]
        %v3366 = vld [vmem:[%s3365] sm:$0x8]
        %v3367 = vld [vmem:[%s3365 + $0x4] sm:$0xf]
        %v3368 = vld [vmem:[%s3365 + $0x8] sm:$0xf]
        %v3369 = vld [vmem:[%s3365 + $0x10] sm:$0x8]
        %v3370 = vld [vmem:[%s3365 + $0x14] sm:$0xf]
        %v3371 = vld [vmem:[%s3365 + $0x18] sm:$0xf]
        %v3372 = vld [vmem:[%s3365 + $0x20] sm:$0x8]
        %v3373 = vld [vmem:[%s3365 + $0x24] sm:$0xf]
        %v3374 = vld [vmem:[%s3365 + $0x28] sm:$0xf]
        %v3375 = vld [vmem:[%s3365 + $0x30] sm:$0x8]
        %v3376 = vld [vmem:[%s3365 + $0x34] sm:$0xf]
        %v3377 = vld [vmem:[%s3365 + $0x38] sm:$0xf]
        %v3378 = vld [vmem:[%s3365 + $0x40] sm:$0x8]
        %v3379 = vld [vmem:[%s3365 + $0x44] sm:$0xf]
        %v3380 = vld [vmem:[%s3365 + $0x48] sm:$0xf]
        %v3381 = vld [vmem:[%s3365 + $0x50] sm:$0x8]
        %v3382 = vld [vmem:[%s3365 + $0x54] sm:$0xf]
        %v3383 = vld [vmem:[%s3365 + $0x58] sm:$0xf]
        %v3384 = vld [vmem:[%s3365 + $0x60] sm:$0x8]
        %v3385 = vld [vmem:[%s3365 + $0x64] sm:$0xf]
        %v3386 = vld [vmem:[%s3365 + $0x68] sm:$0xf]
        %v3387 = vld [vmem:[%s3365 + $0x70] sm:$0x8]
        %v3388 = vld [vmem:[%s3365 + $0x74] sm:$0xf]
        %v3389 = vld [vmem:[%s3365 + $0x78] sm:$0xf]
        %v3391 = vshrl.u32 %v3366, 16
        %v3393 = vrot.slane %v3391, 7
        %v3394 = vrot.slane %v3393, 4
        %v3396 = vshrl.u32 %v3367, 16
        %v3398 = vrot.slane %v3396, 7
        %v3399 = vshll.u32 %v3367, 16
        %v3401 = vor.u32 %v3398, %v3399
        %v3402 = vsel %vm512, %v3394, %v3401
        %v3403 = vrot.slane %v3398, 4
        %v3405 = vshrl.u32 %v3368, 16
        %v3407 = vrot.slane %v3405, 7
        %v3408 = vshll.u32 %v3368, 16
        %v3410 = vor.u32 %v3407, %v3408
        %v3411 = vsel %vm512, %v3403, %v3410
        %v3413 = vshrl.u32 %v3369, 16
        %v3415 = vrot.slane %v3413, 7
        %v3416 = vrot.slane %v3415, 4
        %v3418 = vshrl.u32 %v3370, 16
        %v3420 = vrot.slane %v3418, 7
        %v3421 = vshll.u32 %v3370, 16
        %v3423 = vor.u32 %v3420, %v3421
        %v3424 = vsel %vm512, %v3416, %v3423
        %v3425 = vrot.slane %v3420, 4
        %v3427 = vshrl.u32 %v3371, 16
        %v3429 = vrot.slane %v3427, 7
        %v3430 = vshll.u32 %v3371, 16
        %v3432 = vor.u32 %v3429, %v3430
        %v3433 = vsel %vm512, %v3425, %v3432
        %v3435 = vshrl.u32 %v3372, 16
        %v3437 = vrot.slane %v3435, 7
        %v3438 = vrot.slane %v3437, 4
        %v3440 = vshrl.u32 %v3373, 16
        %v3442 = vrot.slane %v3440, 7
        %v3443 = vshll.u32 %v3373, 16
        %v3445 = vor.u32 %v3442, %v3443
        %v3446 = vsel %vm512, %v3438, %v3445
        %v3447 = vrot.slane %v3442, 4
        %v3449 = vshrl.u32 %v3374, 16
        %v3451 = vrot.slane %v3449, 7
        %v3452 = vshll.u32 %v3374, 16
        %v3454 = vor.u32 %v3451, %v3452
        %v3455 = vsel %vm512, %v3447, %v3454
        %v3457 = vshrl.u32 %v3375, 16
        %v3459 = vrot.slane %v3457, 7
        %v3460 = vrot.slane %v3459, 4
        %v3462 = vshrl.u32 %v3376, 16
        %v3464 = vrot.slane %v3462, 7
        %v3465 = vshll.u32 %v3376, 16
        %v3467 = vor.u32 %v3464, %v3465
        %v3468 = vsel %vm512, %v3460, %v3467
        %v3469 = vrot.slane %v3464, 4
        %v3471 = vshrl.u32 %v3377, 16
        %v3473 = vrot.slane %v3471, 7
        %v3474 = vshll.u32 %v3377, 16
        %v3476 = vor.u32 %v3473, %v3474
        %v3477 = vsel %vm512, %v3469, %v3476
        %v3479 = vshrl.u32 %v3378, 16
        %v3481 = vrot.slane %v3479, 7
        %v3482 = vrot.slane %v3481, 4
        %v3484 = vshrl.u32 %v3379, 16
        %v3486 = vrot.slane %v3484, 7
        %v3487 = vshll.u32 %v3379, 16
        %v3489 = vor.u32 %v3486, %v3487
        %v3490 = vsel %vm512, %v3482, %v3489
        %v3491 = vrot.slane %v3486, 4
        %v3493 = vshrl.u32 %v3380, 16
        %v3495 = vrot.slane %v3493, 7
        %v3496 = vshll.u32 %v3380, 16
        %v3498 = vor.u32 %v3495, %v3496
        %v3499 = vsel %vm512, %v3491, %v3498
        %v3501 = vshrl.u32 %v3381, 16
        %v3503 = vrot.slane %v3501, 7
        %v3504 = vrot.slane %v3503, 4
        %v3506 = vshrl.u32 %v3382, 16
        %v3508 = vrot.slane %v3506, 7
        %v3509 = vshll.u32 %v3382, 16
        %v3511 = vor.u32 %v3508, %v3509
        %v3512 = vsel %vm512, %v3504, %v3511
        %v3513 = vrot.slane %v3508, 4
        %v3515 = vshrl.u32 %v3383, 16
        %v3517 = vrot.slane %v3515, 7
        %v3518 = vshll.u32 %v3383, 16
        %v3520 = vor.u32 %v3517, %v3518
        %v3521 = vsel %vm512, %v3513, %v3520
        %v3523 = vshrl.u32 %v3384, 16
        %v3525 = vrot.slane %v3523, 7
        %v3526 = vrot.slane %v3525, 4
        %v3528 = vshrl.u32 %v3385, 16
        %v3530 = vrot.slane %v3528, 7
        %v3531 = vshll.u32 %v3385, 16
        %v3533 = vor.u32 %v3530, %v3531
        %v3534 = vsel %vm512, %v3526, %v3533
        %v3535 = vrot.slane %v3530, 4
        %v3537 = vshrl.u32 %v3386, 16
        %v3539 = vrot.slane %v3537, 7
        %v3540 = vshll.u32 %v3386, 16
        %v3542 = vor.u32 %v3539, %v3540
        %v3543 = vsel %vm512, %v3535, %v3542
        %v3545 = vshrl.u32 %v3387, 16
        %v3547 = vrot.slane %v3545, 7
        %v3548 = vrot.slane %v3547, 4
        %v3550 = vshrl.u32 %v3388, 16
        %v3552 = vrot.slane %v3550, 7
        %v3553 = vshll.u32 %v3388, 16
        %v3555 = vor.u32 %v3552, %v3553
        %v3556 = vsel %vm512, %v3548, %v3555
        %v3557 = vrot.slane %v3552, 4
        %v3559 = vshrl.u32 %v3389, 16
        %v3561 = vrot.slane %v3559, 7
        %v3562 = vshll.u32 %v3389, 16
        %v3564 = vor.u32 %v3561, %v3562
        %v3565 = vsel %vm512, %v3557, %v3564
        %v3566 = vld [vmem:[#allocation6] sm:$0x3]
        %v3567 = vld [vmem:[%s690] sm:$0x3]
        %v3584 = vunpack.c.l.b16 %v3367
        %v3585 = vunpack.c.l.b16 %v3368
        %v3586 = vunpack.c.l.b16 %v3370
        %v3587 = vunpack.c.l.b16 %v3371
        %v3588 = vunpack.c.l.b16 %v3373
        %v3589 = vunpack.c.l.b16 %v3374
        %v3590 = vunpack.c.l.b16 %v3376
        %v3591 = vunpack.c.l.b16 %v3377
        %v3592 = vunpack.c.l.b16 %v3379
        %v3593 = vunpack.c.l.b16 %v3380
        %v3594 = vunpack.c.l.b16 %v3382
        %v3595 = vunpack.c.l.b16 %v3383
        %v3596 = vunpack.c.l.b16 %v3385
        %v3597 = vunpack.c.l.b16 %v3386
        %v3598 = vunpack.c.l.b16 %v3388
        %v3599 = vunpack.c.l.b16 %v3389
        %v3600 = vpack.c.b16 %v3585, %v3584
        %v3601 = vpack.c.b16 %v3587, %v3586
        %v3602 = vpack.c.b16 %v3589, %v3588
        %v3603 = vpack.c.b16 %v3591, %v3590
        %v3604 = vpack.c.b16 %v3593, %v3592
        %v3605 = vpack.c.b16 %v3595, %v3594
        %v3606 = vpack.c.b16 %v3597, %v3596
        %v3607 = vpack.c.b16 %v3599, %v3598
        %v3609 = vsel %vm732, %v3600, 0
        %v3612 = vsel %vm732, %v3601, 0
        %v3615 = vsel %vm732, %v3602, 0
        %v3618 = vsel %vm732, %v3603, 0
        %v3621 = vsel %vm732, %v3604, 0
        %v3624 = vsel %vm732, %v3605, 0
        %v3627 = vsel %vm732, %v3606, 0
        %v3630 = vsel %vm732, %v3607, 0
        %v3633 = vsel %vm757, %v3567, 0
        %3635 = vmatprep.subr.bf16.mxu0 0
        %3636 = vmatpush1.bf16.msra.mxu0 %v3633
        %3637 = vmatprep.subr.bf16.mxu0 0
        %3638 = vmatpush1.bf16.msra.mxu0 0
        %3639 = vmatprep.subr.bf16.mxu0 0
        %3640 = vmatpush1.bf16.msra.mxu0 0
        %3641 = vmatprep.subr.bf16.mxu0 0
        %3642 = vmatpush1.bf16.msra.mxu0 0
        %3643 = vmatprep.subr.bf16.mxu0 0
        %3644 = vmatpush1.bf16.msra.mxu0 0
        %3645 = vmatprep.subr.bf16.mxu0 0
        %3646 = vmatpush1.bf16.msra.mxu0 0
        %3647 = vmatprep.subr.bf16.mxu0 0
        %3648 = vmatpush1.bf16.msra.mxu0 0
        %3649 = vmatprep.subr.bf16.mxu0 0
        %3650 = vmatpush1.bf16.msra.mxu0 0
        %3651 = vmatprep.subr.bf16.mxu0 0
        %3652 = vmatpush1.bf16.msra.mxu0 0
        %3653 = vmatprep.subr.bf16.mxu0 0
        %3654 = vmatpush1.bf16.msra.mxu0 0
        %3655 = vmatprep.subr.bf16.mxu0 0
        %3656 = vmatpush1.bf16.msra.mxu0 0
        %3657 = vmatprep.subr.bf16.mxu0 0
        %3658 = vmatpush1.bf16.msra.mxu0 0
        %3659 = vmatprep.subr.bf16.mxu0 0
        %3660 = vmatpush1.bf16.msra.mxu0 0
        %3661 = vmatprep.subr.bf16.mxu0 0
        %3662 = vmatpush1.bf16.msra.mxu0 0
        %3663 = vmatprep.subr.bf16.mxu0 0
        %3664 = vmatpush1.bf16.msra.mxu0 0
        %3665 = vmatprep.subr.bf16.mxu0 0
        %3666 = vmatpush1.bf16.msra.mxu0 0
        %3667 = vmatprep.mubr.bf16.mxu0 0
        %3668 = vmatmul.mubr.bf16.gmra.mrb[0].mxu0 %v3609
        %v3669 = vpop.f32.mrb[0].mxu0
        %v3670 = vadd.f32 0.0, %v3669
        %v3671 = vpop.f32.mrb[0].mxu0
        %v3672 = vpop.f32.mrb[0].mxu0
        %v3673 = vadd.f32 0.0, %v3672
        %v3674 = vpop.f32.mrb[0].mxu0
        %3675 = vmatprep.mubr.bf16.mxu0 0
        %3676 = vmatmul.mubr.bf16.gmra.mrb[0].mxu0 %v3612
        %v3677 = vpop.f32.mrb[0].mxu0
        %v3678 = vadd.f32 0.0, %v3677
        %v3679 = vpop.f32.mrb[0].mxu0
        %v3680 = vpop.f32.mrb[0].mxu0
        %v3681 = vadd.f32 0.0, %v3680
        %v3682 = vpop.f32.mrb[0].mxu0
        %3683 = vmatprep.mubr.bf16.mxu0 0
        %3684 = vmatmul.mubr.bf16.gmra.mrb[0].mxu0 %v3615
        %v3685 = vpop.f32.mrb[0].mxu0
        %v3686 = vadd.f32 0.0, %v3685
        %v3687 = vpop.f32.mrb[0].mxu0
        %v3688 = vpop.f32.mrb[0].mxu0
        %v3689 = vadd.f32 0.0, %v3688
        %v3690 = vpop.f32.mrb[0].mxu0
        %3691 = vmatprep.mubr.bf16.mxu0 0
        %3692 = vmatmul.mubr.bf16.gmra.mrb[0].mxu0 %v3618
        %v3693 = vpop.f32.mrb[0].mxu0
        %v3694 = vadd.f32 0.0, %v3693
        %v3695 = vpop.f32.mrb[0].mxu0
        %v3696 = vpop.f32.mrb[0].mxu0
        %v3697 = vadd.f32 0.0, %v3696
        %v3698 = vpop.f32.mrb[0].mxu0
        %3699 = vmatprep.mubr.bf16.mxu0 0
        %3700 = vmatmul.mubr.bf16.gmra.mrb[0].mxu0 %v3621
        %v3701 = vpop.f32.mrb[0].mxu0
        %v3702 = vadd.f32 0.0, %v3701
        %v3703 = vpop.f32.mrb[0].mxu0
        %v3704 = vpop.f32.mrb[0].mxu0
        %v3705 = vadd.f32 0.0, %v3704
        %v3706 = vpop.f32.mrb[0].mxu0
        %3707 = vmatprep.mubr.bf16.mxu0 0
        %3708 = vmatmul.mubr.bf16.gmra.mrb[0].mxu0 %v3624
        %v3709 = vpop.f32.mrb[0].mxu0
        %v3710 = vadd.f32 0.0, %v3709
        %v3711 = vpop.f32.mrb[0].mxu0
        %v3712 = vpop.f32.mrb[0].mxu0
        %v3713 = vadd.f32 0.0, %v3712
        %v3714 = vpop.f32.mrb[0].mxu0
        %3715 = vmatprep.mubr.bf16.mxu0 0
        %3716 = vmatmul.mubr.bf16.gmra.mrb[0].mxu0 %v3627
        %v3717 = vpop.f32.mrb[0].mxu0
        %v3718 = vadd.f32 0.0, %v3717
        %v3719 = vpop.f32.mrb[0].mxu0
        %v3720 = vpop.f32.mrb[0].mxu0
        %v3721 = vadd.f32 0.0, %v3720
        %v3722 = vpop.f32.mrb[0].mxu0
        %3723 = vmatprep.mubr.bf16.mxu0 0
        %3724 = vmatmul.mubr.bf16.gmra.mrb[0].mxu0 %v3630
        %v3725 = vpop.f32.mrb[0].mxu0
        %v3726 = vadd.f32 0.0, %v3725
        %v3727 = vpop.f32.mrb[0].mxu0
        %v3728 = vpop.f32.mrb[0].mxu0
        %v3729 = vadd.f32 0.0, %v3728
        %v3730 = vpop.f32.mrb[0].mxu0
        %3731 = vdwg.mxu0
        %v3732 = vunpack.c.l.b16 %v3402
        %v3733 = vunpack.c.l.b16 %v3411
        %v3734 = vunpack.c.l.b16 %v3424
        %v3735 = vunpack.c.l.b16 %v3433
        %v3736 = vunpack.c.l.b16 %v3446
        %v3737 = vunpack.c.l.b16 %v3455
        %v3738 = vunpack.c.l.b16 %v3468
        %v3739 = vunpack.c.l.b16 %v3477
        %v3740 = vunpack.c.l.b16 %v3490
        %v3741 = vunpack.c.l.b16 %v3499
        %v3742 = vunpack.c.l.b16 %v3512
        %v3743 = vunpack.c.l.b16 %v3521
        %v3744 = vunpack.c.l.b16 %v3534
        %v3745 = vunpack.c.l.b16 %v3543
        %v3746 = vunpack.c.l.b16 %v3556
        %v3747 = vunpack.c.l.b16 %v3565
        %v3748 = vpack.c.b16 %v3733, %v3732
        %v3749 = vpack.c.b16 %v3735, %v3734
        %v3750 = vpack.c.b16 %v3737, %v3736
        %v3751 = vpack.c.b16 %v3739, %v3738
        %v3752 = vpack.c.b16 %v3741, %v3740
        %v3753 = vpack.c.b16 %v3743, %v3742
        %v3754 = vpack.c.b16 %v3745, %v3744
        %v3755 = vpack.c.b16 %v3747, %v3746
        %v3757 = vsel %vm732, %v3748, 0
        %v3760 = vsel %vm732, %v3749, 0
        %v3763 = vsel %vm732, %v3750, 0
        %v3766 = vsel %vm732, %v3751, 0
        %v3769 = vsel %vm732, %v3752, 0
        %v3772 = vsel %vm732, %v3753, 0
        %v3775 = vsel %vm732, %v3754, 0
        %v3778 = vsel %vm732, %v3755, 0
        %v3781 = vsel %vm757, %v3566, 0
        %3783 = vmatprep.subr.bf16.mxu0 0
        %3784 = vmatpush1.bf16.msra.mxu0 %v3781
        %3785 = vmatprep.subr.bf16.mxu0 0
        %3786 = vmatpush1.bf16.msra.mxu0 0
        %3787 = vmatprep.subr.bf16.mxu0 0
        %3788 = vmatpush1.bf16.msra.mxu0 0
        %3789 = vmatprep.subr.bf16.mxu0 0
        %3790 = vmatpush1.bf16.msra.mxu0 0
        %3791 = vmatprep.subr.bf16.mxu0 0
        %3792 = vmatpush1.bf16.msra.mxu0 0
        %3793 = vmatprep.subr.bf16.mxu0 0
        %3794 = vmatpush1.bf16.msra.mxu0 0
        %3795 = vmatprep.subr.bf16.mxu0 0
        %3796 = vmatpush1.bf16.msra.mxu0 0
        %3797 = vmatprep.subr.bf16.mxu0 0
        %3798 = vmatpush1.bf16.msra.mxu0 0
        %3799 = vmatprep.subr.bf16.mxu0 0
        %3800 = vmatpush1.bf16.msra.mxu0 0
        %3801 = vmatprep.subr.bf16.mxu0 0
        %3802 = vmatpush1.bf16.msra.mxu0 0
        %3803 = vmatprep.subr.bf16.mxu0 0
        %3804 = vmatpush1.bf16.msra.mxu0 0
        %3805 = vmatprep.subr.bf16.mxu0 0
        %3806 = vmatpush1.bf16.msra.mxu0 0
        %3807 = vmatprep.subr.bf16.mxu0 0
        %3808 = vmatpush1.bf16.msra.mxu0 0
        %3809 = vmatprep.subr.bf16.mxu0 0
        %3810 = vmatpush1.bf16.msra.mxu0 0
        %3811 = vmatprep.subr.bf16.mxu0 0
        %3812 = vmatpush1.bf16.msra.mxu0 0
        %3813 = vmatprep.subr.bf16.mxu0 0
        %3814 = vmatpush1.bf16.msra.mxu0 0
        %3815 = vmatprep.mubr.bf16.mxu0 0
        %3816 = vmatmul.mubr.bf16.gmra.mrb[0].mxu0 %v3757
        %v3817 = vpop.f32.mrb[0].mxu0
        %v3818 = vadd.f32 %v3670, %v3817
        %v3819 = vpop.f32.mrb[0].mxu0
        %v3820 = vpop.f32.mrb[0].mxu0
        %v3821 = vadd.f32 %v3673, %v3820
        %v3822 = vpop.f32.mrb[0].mxu0
        %3823 = vmatprep.mubr.bf16.mxu0 0
        %3824 = vmatmul.mubr.bf16.gmra.mrb[0].mxu0 %v3760
        %v3825 = vpop.f32.mrb[0].mxu0
        %v3826 = vadd.f32 %v3678, %v3825
        %v3827 = vpop.f32.mrb[0].mxu0
        %v3828 = vpop.f32.mrb[0].mxu0
        %v3829 = vadd.f32 %v3681, %v3828
        %v3830 = vpop.f32.mrb[0].mxu0
        %3831 = vmatprep.mubr.bf16.mxu0 0
        %3832 = vmatmul.mubr.bf16.gmra.mrb[0].mxu0 %v3763
        %v3833 = vpop.f32.mrb[0].mxu0
        %v3834 = vadd.f32 %v3686, %v3833
        %v3835 = vpop.f32.mrb[0].mxu0
        %v3836 = vpop.f32.mrb[0].mxu0
        %v3837 = vadd.f32 %v3689, %v3836
        %v3838 = vpop.f32.mrb[0].mxu0
        %3839 = vmatprep.mubr.bf16.mxu0 0
        %3840 = vmatmul.mubr.bf16.gmra.mrb[0].mxu0 %v3766
        %v3841 = vpop.f32.mrb[0].mxu0
        %v3842 = vadd.f32 %v3694, %v3841
        %v3843 = vpop.f32.mrb[0].mxu0
        %v3844 = vpop.f32.mrb[0].mxu0
        %v3845 = vadd.f32 %v3697, %v3844
        %v3846 = vpop.f32.mrb[0].mxu0
        %3847 = vmatprep.mubr.bf16.mxu0 0
        %3848 = vmatmul.mubr.bf16.gmra.mrb[0].mxu0 %v3769
        %v3849 = vpop.f32.mrb[0].mxu0
        %v3850 = vadd.f32 %v3702, %v3849
        %v3851 = vpop.f32.mrb[0].mxu0
        %v3852 = vpop.f32.mrb[0].mxu0
        %v3853 = vadd.f32 %v3705, %v3852
        %v3854 = vpop.f32.mrb[0].mxu0
        %3855 = vmatprep.mubr.bf16.mxu0 0
        %3856 = vmatmul.mubr.bf16.gmra.mrb[0].mxu0 %v3772
        %v3857 = vpop.f32.mrb[0].mxu0
        %v3858 = vadd.f32 %v3710, %v3857
        %v3859 = vpop.f32.mrb[0].mxu0
        %v3860 = vpop.f32.mrb[0].mxu0
        %v3861 = vadd.f32 %v3713, %v3860
        %v3862 = vpop.f32.mrb[0].mxu0
        %3863 = vmatprep.mubr.bf16.mxu0 0
        %3864 = vmatmul.mubr.bf16.gmra.mrb[0].mxu0 %v3775
        %v3865 = vpop.f32.mrb[0].mxu0
        %v3866 = vadd.f32 %v3718, %v3865
        %v3867 = vpop.f32.mrb[0].mxu0
        %v3868 = vpop.f32.mrb[0].mxu0
        %v3869 = vadd.f32 %v3721, %v3868
        %v3870 = vpop.f32.mrb[0].mxu0
        %3871 = vmatprep.mubr.bf16.mxu0 0
        %3872 = vmatmul.mubr.bf16.gmra.mrb[0].mxu0 %v3778
        %v3873 = vpop.f32.mrb[0].mxu0
        %v3874 = vadd.f32 %v3726, %v3873
        %v3875 = vpop.f32.mrb[0].mxu0
        %v3876 = vpop.f32.mrb[0].mxu0
        %v3877 = vadd.f32 %v3729, %v3876
        %v3878 = vpop.f32.mrb[0].mxu0
        %3879 = vdwg.mxu0
        %v3880 = vld [vmem:[%s3365 + $0x4] sm:$0xf]
        %v3881 = vld [vmem:[%s3365 + $0x8] sm:$0xf]
        %v3882 = vld [vmem:[%s3365 + $0xc] sm:$0x1]
        %v3883 = vld [vmem:[%s3365 + $0x14] sm:$0xf]
        %v3884 = vld [vmem:[%s3365 + $0x18] sm:$0xf]
        %v3885 = vld [vmem:[%s3365 + $0x1c] sm:$0x1]
        %v3886 = vld [vmem:[%s3365 + $0x24] sm:$0xf]
        %v3887 = vld [vmem:[%s3365 + $0x28] sm:$0xf]
        %v3888 = vld [vmem:[%s3365 + $0x2c] sm:$0x1]
        %v3889 = vld [vmem:[%s3365 + $0x34] sm:$0xf]
        %v3890 = vld [vmem:[%s3365 + $0x38] sm:$0xf]
        %v3891 = vld [vmem:[%s3365 + $0x3c] sm:$0x1]
        %v3892 = vld [vmem:[%s3365 + $0x44] sm:$0xf]
        %v3893 = vld [vmem:[%s3365 + $0x48] sm:$0xf]
        %v3894 = vld [vmem:[%s3365 + $0x4c] sm:$0x1]
        %v3895 = vld [vmem:[%s3365 + $0x54] sm:$0xf]
        %v3896 = vld [vmem:[%s3365 + $0x58] sm:$0xf]
        %v3897 = vld [vmem:[%s3365 + $0x5c] sm:$0x1]
        %v3898 = vld [vmem:[%s3365 + $0x64] sm:$0xf]
        %v3899 = vld [vmem:[%s3365 + $0x68] sm:$0xf]
        %v3900 = vld [vmem:[%s3365 + $0x6c] sm:$0x1]
        %v3901 = vld [vmem:[%s3365 + $0x74] sm:$0xf]
        %v3902 = vld [vmem:[%s3365 + $0x78] sm:$0xf]
        %v3903 = vld [vmem:[%s3365 + $0x7c] sm:$0x1]
        %v3905 = vshrl.u32 %v3880, 16
        %v3907 = vrot.slane %v3905, 4
        %v3908 = vshll.u32 %v3880, 16
        %v3910 = vrot.slane %v3908, 5
        %v3911 = vor.u32 %v3907, %v3910
        %v3912 = vrot.slane %v3911, 4
        %v3914 = vshll.u32 %v3881, 16
        %v3916 = vrot.slane %v3914, 5
        %v3917 = vsel %vm1032, %v3912, %v3916
        %v3918 = vshrl.u32 %v3881, 16
        %v3920 = vrot.slane %v3918, 4
        %v3921 = vor.u32 %v3920, %v3916
        %v3922 = vrot.slane %v3921, 4
        %v3924 = vshll.u32 %v3882, 16
        %v3926 = vrot.slane %v3924, 5
        %v3927 = vsel %vm1032, %v3922, %v3926
        %v3929 = vshrl.u32 %v3883, 16
        %v3931 = vrot.slane %v3929, 4
        %v3932 = vshll.u32 %v3883, 16
        %v3934 = vrot.slane %v3932, 5
        %v3935 = vor.u32 %v3931, %v3934
        %v3936 = vrot.slane %v3935, 4
        %v3938 = vshll.u32 %v3884, 16
        %v3940 = vrot.slane %v3938, 5
        %v3941 = vsel %vm1032, %v3936, %v3940
        %v3942 = vshrl.u32 %v3884, 16
        %v3944 = vrot.slane %v3942, 4
        %v3945 = vor.u32 %v3944, %v3940
        %v3946 = vrot.slane %v3945, 4
        %v3948 = vshll.u32 %v3885, 16
        %v3950 = vrot.slane %v3948, 5
        %v3951 = vsel %vm1032, %v3946, %v3950
        %v3953 = vshrl.u32 %v3886, 16
        %v3955 = vrot.slane %v3953, 4
        %v3956 = vshll.u32 %v3886, 16
        %v3958 = vrot.slane %v3956, 5
        %v3959 = vor.u32 %v3955, %v3958
        %v3960 = vrot.slane %v3959, 4
        %v3962 = vshll.u32 %v3887, 16
        %v3964 = vrot.slane %v3962, 5
        %v3965 = vsel %vm1032, %v3960, %v3964
        %v3966 = vshrl.u32 %v3887, 16
        %v3968 = vrot.slane %v3966, 4
        %v3969 = vor.u32 %v3968, %v3964
        %v3970 = vrot.slane %v3969, 4
        %v3972 = vshll.u32 %v3888, 16
        %v3974 = vrot.slane %v3972, 5
        %v3975 = vsel %vm1032, %v3970, %v3974
        %v3977 = vshrl.u32 %v3889, 16
        %v3979 = vrot.slane %v3977, 4
        %v3980 = vshll.u32 %v3889, 16
        %v3982 = vrot.slane %v3980, 5
        %v3983 = vor.u32 %v3979, %v3982
        %v3984 = vrot.slane %v3983, 4
        %v3986 = vshll.u32 %v3890, 16
        %v3988 = vrot.slane %v3986, 5
        %v3989 = vsel %vm1032, %v3984, %v3988
        %v3990 = vshrl.u32 %v3890, 16
        %v3992 = vrot.slane %v3990, 4
        %v3993 = vor.u32 %v3992, %v3988
        %v3994 = vrot.slane %v3993, 4
        %v3996 = vshll.u32 %v3891, 16
        %v3998 = vrot.slane %v3996, 5
        %v3999 = vsel %vm1032, %v3994, %v3998
        %v4001 = vshrl.u32 %v3892, 16
        %v4003 = vrot.slane %v4001, 4
        %v4004 = vshll.u32 %v3892, 16
        %v4006 = vrot.slane %v4004, 5
        %v4007 = vor.u32 %v4003, %v4006
        %v4008 = vrot.slane %v4007, 4
        %v4010 = vshll.u32 %v3893, 16
        %v4012 = vrot.slane %v4010, 5
        %v4013 = vsel %vm1032, %v4008, %v4012
        %v4014 = vshrl.u32 %v3893, 16
        %v4016 = vrot.slane %v4014, 4
        %v4017 = vor.u32 %v4016, %v4012
        %v4018 = vrot.slane %v4017, 4
        %v4020 = vshll.u32 %v3894, 16
        %v4022 = vrot.slane %v4020, 5
        %v4023 = vsel %vm1032, %v4018, %v4022
        %v4025 = vshrl.u32 %v3895, 16
        %v4027 = vrot.slane %v4025, 4
        %v4028 = vshll.u32 %v3895, 16
        %v4030 = vrot.slane %v4028, 5
        %v4031 = vor.u32 %v4027, %v4030
        %v4032 = vrot.slane %v4031, 4
        %v4034 = vshll.u32 %v3896, 16
        %v4036 = vrot.slane %v4034, 5
        %v4037 = vsel %vm1032, %v4032, %v4036
        %v4038 = vshrl.u32 %v3896, 16
        %v4040 = vrot.slane %v4038, 4
        %v4041 = vor.u32 %v4040, %v4036
        %v4042 = vrot.slane %v4041, 4
        %v4044 = vshll.u32 %v3897, 16
        %v4046 = vrot.slane %v4044, 5
        %v4047 = vsel %vm1032, %v4042, %v4046
        %v4049 = vshrl.u32 %v3898, 16
        %v4051 = vrot.slane %v4049, 4
        %v4052 = vshll.u32 %v3898, 16
        %v4054 = vrot.slane %v4052, 5
        %v4055 = vor.u32 %v4051, %v4054
        %v4056 = vrot.slane %v4055, 4
        %v4058 = vshll.u32 %v3899, 16
        %v4060 = vrot.slane %v4058, 5
        %v4061 = vsel %vm1032, %v4056, %v4060
        %v4062 = vshrl.u32 %v3899, 16
        %v4064 = vrot.slane %v4062, 4
        %v4065 = vor.u32 %v4064, %v4060
        %v4066 = vrot.slane %v4065, 4
        %v4068 = vshll.u32 %v3900, 16
        %v4070 = vrot.slane %v4068, 5
        %v4071 = vsel %vm1032, %v4066, %v4070
        %v4073 = vshrl.u32 %v3901, 16
        %v4075 = vrot.slane %v4073, 4
        %v4076 = vshll.u32 %v3901, 16
        %v4078 = vrot.slane %v4076, 5
        %v4079 = vor.u32 %v4075, %v4078
        %v4080 = vrot.slane %v4079, 4
        %v4082 = vshll.u32 %v3902, 16
        %v4084 = vrot.slane %v4082, 5
        %v4085 = vsel %vm1032, %v4080, %v4084
        %v4086 = vshrl.u32 %v3902, 16
        %v4088 = vrot.slane %v4086, 4
        %v4089 = vor.u32 %v4088, %v4084
        %v4090 = vrot.slane %v4089, 4
        %v4092 = vshll.u32 %v3903, 16
        %v4094 = vrot.slane %v4092, 5
        %v4095 = vsel %vm1032, %v4090, %v4094
        %v4096 = vld [vmem:[%s1225] sm:$0x3]
        %v4097 = vunpack.c.l.b16 %v3917
        %v4098 = vunpack.c.l.b16 %v3927
        %v4099 = vunpack.c.l.b16 %v3941
        %v4100 = vunpack.c.l.b16 %v3951
        %v4101 = vunpack.c.l.b16 %v3965
        %v4102 = vunpack.c.l.b16 %v3975
        %v4103 = vunpack.c.l.b16 %v3989
        %v4104 = vunpack.c.l.b16 %v3999
        %v4105 = vunpack.c.l.b16 %v4013
        %v4106 = vunpack.c.l.b16 %v4023
        %v4107 = vunpack.c.l.b16 %v4037
        %v4108 = vunpack.c.l.b16 %v4047
        %v4109 = vunpack.c.l.b16 %v4061
        %v4110 = vunpack.c.l.b16 %v4071
        %v4111 = vunpack.c.l.b16 %v4085
        %v4112 = vunpack.c.l.b16 %v4095
        %v4113 = vpack.c.b16 %v4098, %v4097
        %v4114 = vpack.c.b16 %v4100, %v4099
        %v4115 = vpack.c.b16 %v4102, %v4101
        %v4116 = vpack.c.b16 %v4104, %v4103
        %v4117 = vpack.c.b16 %v4106, %v4105
        %v4118 = vpack.c.b16 %v4108, %v4107
        %v4119 = vpack.c.b16 %v4110, %v4109
        %v4120 = vpack.c.b16 %v4112, %v4111
        %v4122 = vsel %vm732, %v4113, 0
        %v4125 = vsel %vm732, %v4114, 0
        %v4128 = vsel %vm732, %v4115, 0
        %v4131 = vsel %vm732, %v4116, 0
        %v4134 = vsel %vm732, %v4117, 0
        %v4137 = vsel %vm732, %v4118, 0
        %v4140 = vsel %vm732, %v4119, 0
        %v4143 = vsel %vm732, %v4120, 0
        %v4146 = vsel %vm757, %v4096, 0
        %4148 = vmatprep.subr.bf16.mxu0 0
        %4149 = vmatpush1.bf16.msra.mxu0 %v4146
        %4150 = vmatprep.subr.bf16.mxu0 0
        %4151 = vmatpush1.bf16.msra.mxu0 0
        %4152 = vmatprep.subr.bf16.mxu0 0
        %4153 = vmatpush1.bf16.msra.mxu0 0
        %4154 = vmatprep.subr.bf16.mxu0 0
        %4155 = vmatpush1.bf16.msra.mxu0 0
        %4156 = vmatprep.subr.bf16.mxu0 0
        %4157 = vmatpush1.bf16.msra.mxu0 0
        %4158 = vmatprep.subr.bf16.mxu0 0
        %4159 = vmatpush1.bf16.msra.mxu0 0
        %4160 = vmatprep.subr.bf16.mxu0 0
        %4161 = vmatpush1.bf16.msra.mxu0 0
        %4162 = vmatprep.subr.bf16.mxu0 0
        %4163 = vmatpush1.bf16.msra.mxu0 0
        %4164 = vmatprep.subr.bf16.mxu0 0
        %4165 = vmatpush1.bf16.msra.mxu0 0
        %4166 = vmatprep.subr.bf16.mxu0 0
        %4167 = vmatpush1.bf16.msra.mxu0 0
        %4168 = vmatprep.subr.bf16.mxu0 0
        %4169 = vmatpush1.bf16.msra.mxu0 0
        %4170 = vmatprep.subr.bf16.mxu0 0
        %4171 = vmatpush1.bf16.msra.mxu0 0
        %4172 = vmatprep.subr.bf16.mxu0 0
        %4173 = vmatpush1.bf16.msra.mxu0 0
        %4174 = vmatprep.subr.bf16.mxu0 0
        %4175 = vmatpush1.bf16.msra.mxu0 0
        %4176 = vmatprep.subr.bf16.mxu0 0
        %4177 = vmatpush1.bf16.msra.mxu0 0
        %4178 = vmatprep.subr.bf16.mxu0 0
        %4179 = vmatpush1.bf16.msra.mxu0 0
        %4180 = vmatprep.mubr.bf16.mxu0 0
        %4181 = vmatmul.mubr.bf16.gmra.mrb[0].mxu0 %v4122
        %v4182 = vpop.f32.mrb[0].mxu0
        %v4183 = vadd.f32 0.0, %v4182
        %v4184 = vpop.f32.mrb[0].mxu0
        %v4185 = vpop.f32.mrb[0].mxu0
        %v4186 = vadd.f32 0.0, %v4185
        %v4187 = vpop.f32.mrb[0].mxu0
        %4188 = vmatprep.mubr.bf16.mxu0 0
        %4189 = vmatmul.mubr.bf16.gmra.mrb[0].mxu0 %v4125
        %v4190 = vpop.f32.mrb[0].mxu0
        %v4191 = vadd.f32 0.0, %v4190
        %v4192 = vpop.f32.mrb[0].mxu0
        %v4193 = vpop.f32.mrb[0].mxu0
        %v4194 = vadd.f32 0.0, %v4193
        %v4195 = vpop.f32.mrb[0].mxu0
        %4196 = vmatprep.mubr.bf16.mxu0 0
        %4197 = vmatmul.mubr.bf16.gmra.mrb[0].mxu0 %v4128
        %v4198 = vpop.f32.mrb[0].mxu0
        %v4199 = vadd.f32 0.0, %v4198
        %v4200 = vpop.f32.mrb[0].mxu0
        %v4201 = vpop.f32.mrb[0].mxu0
        %v4202 = vadd.f32 0.0, %v4201
        %v4203 = vpop.f32.mrb[0].mxu0
        %4204 = vmatprep.mubr.bf16.mxu0 0
        %4205 = vmatmul.mubr.bf16.gmra.mrb[0].mxu0 %v4131
        %v4206 = vpop.f32.mrb[0].mxu0
        %v4207 = vadd.f32 0.0, %v4206
        %v4208 = vpop.f32.mrb[0].mxu0
        %v4209 = vpop.f32.mrb[0].mxu0
        %v4210 = vadd.f32 0.0, %v4209
        %v4211 = vpop.f32.mrb[0].mxu0
        %4212 = vmatprep.mubr.bf16.mxu0 0
        %4213 = vmatmul.mubr.bf16.gmra.mrb[0].mxu0 %v4134
        %v4214 = vpop.f32.mrb[0].mxu0
        %v4215 = vadd.f32 0.0, %v4214
        %v4216 = vpop.f32.mrb[0].mxu0
        %v4217 = vpop.f32.mrb[0].mxu0
        %v4218 = vadd.f32 0.0, %v4217
        %v4219 = vpop.f32.mrb[0].mxu0
        %4220 = vmatprep.mubr.bf16.mxu0 0
        %4221 = vmatmul.mubr.bf16.gmra.mrb[0].mxu0 %v4137
        %v4222 = vpop.f32.mrb[0].mxu0
        %v4223 = vadd.f32 0.0, %v4222
        %v4224 = vpop.f32.mrb[0].mxu0
        %v4225 = vpop.f32.mrb[0].mxu0
        %v4226 = vadd.f32 0.0, %v4225
        %v4227 = vpop.f32.mrb[0].mxu0
        %4228 = vmatprep.mubr.bf16.mxu0 0
        %4229 = vmatmul.mubr.bf16.gmra.mrb[0].mxu0 %v4140
        %v4230 = vpop.f32.mrb[0].mxu0
        %v4231 = vadd.f32 0.0, %v4230
        %v4232 = vpop.f32.mrb[0].mxu0
        %v4233 = vpop.f32.mrb[0].mxu0
        %v4234 = vadd.f32 0.0, %v4233
        %v4235 = vpop.f32.mrb[0].mxu0
        %4236 = vmatprep.mubr.bf16.mxu0 0
        %4237 = vmatmul.mubr.bf16.gmra.mrb[0].mxu0 %v4143
        %v4238 = vpop.f32.mrb[0].mxu0
        %v4239 = vadd.f32 0.0, %v4238
        %v4240 = vpop.f32.mrb[0].mxu0
        %v4241 = vpop.f32.mrb[0].mxu0
        %v4242 = vadd.f32 0.0, %v4241
        %v4243 = vpop.f32.mrb[0].mxu0
        %4244 = vdwg.mxu0
        %v4245 = vadd.f32 %v3818, %v4183
        %v4246 = vadd.f32 %v3821, %v4186
        %v4247 = vadd.f32 %v3826, %v4191
        %v4248 = vadd.f32 %v3829, %v4194
        %v4249 = vadd.f32 %v3834, %v4199
        %v4250 = vadd.f32 %v3837, %v4202
        %v4251 = vadd.f32 %v3842, %v4207
        %v4252 = vadd.f32 %v3845, %v4210
        %v4253 = vadd.f32 %v3850, %v4215
        %v4254 = vadd.f32 %v3853, %v4218
        %v4255 = vadd.f32 %v3858, %v4223
        %v4256 = vadd.f32 %v3861, %v4226
        %v4257 = vadd.f32 %v3866, %v4231
        %v4258 = vadd.f32 %v3869, %v4234
        %v4259 = vadd.f32 %v3874, %v4239
        %v4260 = vadd.f32 %v3877, %v4242
        %s4261 = scalar_lea.vmem %s321, 144 [#allocation3]
        %v4262 = vld [vmem:[%s4261] sm:$0x8]
        %v4263 = vld [vmem:[%s4261 + $0x4] sm:$0xf]
        %v4264 = vld [vmem:[%s4261 + $0x8] sm:$0xf]
        %v4265 = vld [vmem:[%s4261 + $0x10] sm:$0x8]
        %v4266 = vld [vmem:[%s4261 + $0x14] sm:$0xf]
        %v4267 = vld [vmem:[%s4261 + $0x18] sm:$0xf]
        %v4268 = vld [vmem:[%s4261 + $0x20] sm:$0x8]
        %v4269 = vld [vmem:[%s4261 + $0x24] sm:$0xf]
        %v4270 = vld [vmem:[%s4261 + $0x28] sm:$0xf]
        %v4271 = vld [vmem:[%s4261 + $0x30] sm:$0x8]
        %v4272 = vld [vmem:[%s4261 + $0x34] sm:$0xf]
        %v4273 = vld [vmem:[%s4261 + $0x38] sm:$0xf]
        %v4274 = vld [vmem:[%s4261 + $0x40] sm:$0x8]
        %v4275 = vld [vmem:[%s4261 + $0x44] sm:$0xf]
        %v4276 = vld [vmem:[%s4261 + $0x48] sm:$0xf]
        %v4277 = vld [vmem:[%s4261 + $0x50] sm:$0x8]
        %v4278 = vld [vmem:[%s4261 + $0x54] sm:$0xf]
        %v4279 = vld [vmem:[%s4261 + $0x58] sm:$0xf]
        %v4280 = vld [vmem:[%s4261 + $0x60] sm:$0x8]
        %v4281 = vld [vmem:[%s4261 + $0x64] sm:$0xf]
        %v4282 = vld [vmem:[%s4261 + $0x68] sm:$0xf]
        %v4283 = vld [vmem:[%s4261 + $0x70] sm:$0x8]
        %v4284 = vld [vmem:[%s4261 + $0x74] sm:$0xf]
        %v4285 = vld [vmem:[%s4261 + $0x78] sm:$0xf]
        %v4287 = vshrl.u32 %v4262, 16
        %v4289 = vrot.slane %v4287, 7
        %v4290 = vrot.slane %v4289, 4
        %v4292 = vshrl.u32 %v4263, 16
        %v4294 = vrot.slane %v4292, 7
        %v4295 = vshll.u32 %v4263, 16
        %v4297 = vor.u32 %v4294, %v4295
        %v4298 = vsel %vm512, %v4290, %v4297
        %v4299 = vrot.slane %v4294, 4
        %v4301 = vshrl.u32 %v4264, 16
        %v4303 = vrot.slane %v4301, 7
        %v4304 = vshll.u32 %v4264, 16
        %v4306 = vor.u32 %v4303, %v4304
        %v4307 = vsel %vm512, %v4299, %v4306
        %v4309 = vshrl.u32 %v4265, 16
        %v4311 = vrot.slane %v4309, 7
        %v4312 = vrot.slane %v4311, 4
        %v4314 = vshrl.u32 %v4266, 16
        %v4316 = vrot.slane %v4314, 7
        %v4317 = vshll.u32 %v4266, 16
        %v4319 = vor.u32 %v4316, %v4317
        %v4320 = vsel %vm512, %v4312, %v4319
        %v4321 = vrot.slane %v4316, 4
        %v4323 = vshrl.u32 %v4267, 16
        %v4325 = vrot.slane %v4323, 7
        %v4326 = vshll.u32 %v4267, 16
        %v4328 = vor.u32 %v4325, %v4326
        %v4329 = vsel %vm512, %v4321, %v4328
        %v4331 = vshrl.u32 %v4268, 16
        %v4333 = vrot.slane %v4331, 7
        %v4334 = vrot.slane %v4333, 4
        %v4336 = vshrl.u32 %v4269, 16
        %v4338 = vrot.slane %v4336, 7
        %v4339 = vshll.u32 %v4269, 16
        %v4341 = vor.u32 %v4338, %v4339
        %v4342 = vsel %vm512, %v4334, %v4341
        %v4343 = vrot.slane %v4338, 4
        %v4345 = vshrl.u32 %v4270, 16
        %v4347 = vrot.slane %v4345, 7
        %v4348 = vshll.u32 %v4270, 16
        %v4350 = vor.u32 %v4347, %v4348
        %v4351 = vsel %vm512, %v4343, %v4350
        %v4353 = vshrl.u32 %v4271, 16
        %v4355 = vrot.slane %v4353, 7
        %v4356 = vrot.slane %v4355, 4
        %v4358 = vshrl.u32 %v4272, 16
        %v4360 = vrot.slane %v4358, 7
        %v4361 = vshll.u32 %v4272, 16
        %v4363 = vor.u32 %v4360, %v4361
        %v4364 = vsel %vm512, %v4356, %v4363
        %v4365 = vrot.slane %v4360, 4
        %v4367 = vshrl.u32 %v4273, 16
        %v4369 = vrot.slane %v4367, 7
        %v4370 = vshll.u32 %v4273, 16
        %v4372 = vor.u32 %v4369, %v4370
        %v4373 = vsel %vm512, %v4365, %v4372
        %v4375 = vshrl.u32 %v4274, 16
        %v4377 = vrot.slane %v4375, 7
        %v4378 = vrot.slane %v4377, 4
        %v4380 = vshrl.u32 %v4275, 16
        %v4382 = vrot.slane %v4380, 7
        %v4383 = vshll.u32 %v4275, 16
        %v4385 = vor.u32 %v4382, %v4383
        %v4386 = vsel %vm512, %v4378, %v4385
        %v4387 = vrot.slane %v4382, 4
        %v4389 = vshrl.u32 %v4276, 16
        %v4391 = vrot.slane %v4389, 7
        %v4392 = vshll.u32 %v4276, 16
        %v4394 = vor.u32 %v4391, %v4392
        %v4395 = vsel %vm512, %v4387, %v4394
        %v4397 = vshrl.u32 %v4277, 16
        %v4399 = vrot.slane %v4397, 7
        %v4400 = vrot.slane %v4399, 4
        %v4402 = vshrl.u32 %v4278, 16
        %v4404 = vrot.slane %v4402, 7
        %v4405 = vshll.u32 %v4278, 16
        %v4407 = vor.u32 %v4404, %v4405
        %v4408 = vsel %vm512, %v4400, %v4407
        %v4409 = vrot.slane %v4404, 4
        %v4411 = vshrl.u32 %v4279, 16
        %v4413 = vrot.slane %v4411, 7
        %v4414 = vshll.u32 %v4279, 16
        %v4416 = vor.u32 %v4413, %v4414
        %v4417 = vsel %vm512, %v4409, %v4416
        %v4419 = vshrl.u32 %v4280, 16
        %v4421 = vrot.slane %v4419, 7
        %v4422 = vrot.slane %v4421, 4
        %v4424 = vshrl.u32 %v4281, 16
        %v4426 = vrot.slane %v4424, 7
        %v4427 = vshll.u32 %v4281, 16
        %v4429 = vor.u32 %v4426, %v4427
        %v4430 = vsel %vm512, %v4422, %v4429
        %v4431 = vrot.slane %v4426, 4
        %v4433 = vshrl.u32 %v4282, 16
        %v4435 = vrot.slane %v4433, 7
        %v4436 = vshll.u32 %v4282, 16
        %v4438 = vor.u32 %v4435, %v4436
        %v4439 = vsel %vm512, %v4431, %v4438
        %v4441 = vshrl.u32 %v4283, 16
        %v4443 = vrot.slane %v4441, 7
        %v4444 = vrot.slane %v4443, 4
        %v4446 = vshrl.u32 %v4284, 16
        %v4448 = vrot.slane %v4446, 7
        %v4449 = vshll.u32 %v4284, 16
        %v4451 = vor.u32 %v4448, %v4449
        %v4452 = vsel %vm512, %v4444, %v4451
        %v4453 = vrot.slane %v4448, 4
        %v4455 = vshrl.u32 %v4285, 16
        %v4457 = vrot.slane %v4455, 7
        %v4458 = vshll.u32 %v4285, 16
        %v4460 = vor.u32 %v4457, %v4458
        %v4461 = vsel %vm512, %v4453, %v4460
        %v4462 = vld [vmem:[%s1592] sm:$0x3]
        %v4463 = vunpack.c.l.b16 %v4298
        %v4464 = vunpack.c.l.b16 %v4307
        %v4465 = vunpack.c.l.b16 %v4320
        %v4466 = vunpack.c.l.b16 %v4329
        %v4467 = vunpack.c.l.b16 %v4342
        %v4468 = vunpack.c.l.b16 %v4351
        %v4469 = vunpack.c.l.b16 %v4364
        %v4470 = vunpack.c.l.b16 %v4373
        %v4471 = vunpack.c.l.b16 %v4386
        %v4472 = vunpack.c.l.b16 %v4395
        %v4473 = vunpack.c.l.b16 %v4408
        %v4474 = vunpack.c.l.b16 %v4417
        %v4475 = vunpack.c.l.b16 %v4430
        %v4476 = vunpack.c.l.b16 %v4439
        %v4477 = vunpack.c.l.b16 %v4452
        %v4478 = vunpack.c.l.b16 %v4461
        %v4479 = vpack.c.b16 %v4464, %v4463
        %v4480 = vpack.c.b16 %v4466, %v4465
        %v4481 = vpack.c.b16 %v4468, %v4467
        %v4482 = vpack.c.b16 %v4470, %v4469
        %v4483 = vpack.c.b16 %v4472, %v4471
        %v4484 = vpack.c.b16 %v4474, %v4473
        %v4485 = vpack.c.b16 %v4476, %v4475
        %v4486 = vpack.c.b16 %v4478, %v4477
        %v4488 = vsel %vm732, %v4479, 0
        %v4491 = vsel %vm732, %v4480, 0
        %v4494 = vsel %vm732, %v4481, 0
        %v4497 = vsel %vm732, %v4482, 0
        %v4500 = vsel %vm732, %v4483, 0
        %v4503 = vsel %vm732, %v4484, 0
        %v4506 = vsel %vm732, %v4485, 0
        %v4509 = vsel %vm732, %v4486, 0
        %v4512 = vsel %vm757, %v4462, 0
        %4514 = vmatprep.subr.bf16.mxu0 0
        %4515 = vmatpush1.bf16.msra.mxu0 %v4512
        %4516 = vmatprep.subr.bf16.mxu0 0
        %4517 = vmatpush1.bf16.msra.mxu0 0
        %4518 = vmatprep.subr.bf16.mxu0 0
        %4519 = vmatpush1.bf16.msra.mxu0 0
        %4520 = vmatprep.subr.bf16.mxu0 0
        %4521 = vmatpush1.bf16.msra.mxu0 0
        %4522 = vmatprep.subr.bf16.mxu0 0
        %4523 = vmatpush1.bf16.msra.mxu0 0
        %4524 = vmatprep.subr.bf16.mxu0 0
        %4525 = vmatpush1.bf16.msra.mxu0 0
        %4526 = vmatprep.subr.bf16.mxu0 0
        %4527 = vmatpush1.bf16.msra.mxu0 0
        %4528 = vmatprep.subr.bf16.mxu0 0
        %4529 = vmatpush1.bf16.msra.mxu0 0
        %4530 = vmatprep.subr.bf16.mxu0 0
        %4531 = vmatpush1.bf16.msra.mxu0 0
        %4532 = vmatprep.subr.bf16.mxu0 0
        %4533 = vmatpush1.bf16.msra.mxu0 0
        %4534 = vmatprep.subr.bf16.mxu0 0
        %4535 = vmatpush1.bf16.msra.mxu0 0
        %4536 = vmatprep.subr.bf16.mxu0 0
        %4537 = vmatpush1.bf16.msra.mxu0 0
        %4538 = vmatprep.subr.bf16.mxu0 0
        %4539 = vmatpush1.bf16.msra.mxu0 0
        %4540 = vmatprep.subr.bf16.mxu0 0
        %4541 = vmatpush1.bf16.msra.mxu0 0
        %4542 = vmatprep.subr.bf16.mxu0 0
        %4543 = vmatpush1.bf16.msra.mxu0 0
        %4544 = vmatprep.subr.bf16.mxu0 0
        %4545 = vmatpush1.bf16.msra.mxu0 0
        %4546 = vmatprep.mubr.bf16.mxu0 0
        %4547 = vmatmul.mubr.bf16.gmra.mrb[0].mxu0 %v4488
        %v4548 = vpop.f32.mrb[0].mxu0
        %v4549 = vadd.f32 0.0, %v4548
        %v4550 = vpop.f32.mrb[0].mxu0
        %v4551 = vpop.f32.mrb[0].mxu0
        %v4552 = vadd.f32 0.0, %v4551
        %v4553 = vpop.f32.mrb[0].mxu0
        %4554 = vmatprep.mubr.bf16.mxu0 0
        %4555 = vmatmul.mubr.bf16.gmra.mrb[0].mxu0 %v4491
        %v4556 = vpop.f32.mrb[0].mxu0
        %v4557 = vadd.f32 0.0, %v4556
        %v4558 = vpop.f32.mrb[0].mxu0
        %v4559 = vpop.f32.mrb[0].mxu0
        %v4560 = vadd.f32 0.0, %v4559
        %v4561 = vpop.f32.mrb[0].mxu0
        %4562 = vmatprep.mubr.bf16.mxu0 0
        %4563 = vmatmul.mubr.bf16.gmra.mrb[0].mxu0 %v4494
        %v4564 = vpop.f32.mrb[0].mxu0
        %v4565 = vadd.f32 0.0, %v4564
        %v4566 = vpop.f32.mrb[0].mxu0
        %v4567 = vpop.f32.mrb[0].mxu0
        %v4568 = vadd.f32 0.0, %v4567
        %v4569 = vpop.f32.mrb[0].mxu0
        %4570 = vmatprep.mubr.bf16.mxu0 0
        %4571 = vmatmul.mubr.bf16.gmra.mrb[0].mxu0 %v4497
        %v4572 = vpop.f32.mrb[0].mxu0
        %v4573 = vadd.f32 0.0, %v4572
        %v4574 = vpop.f32.mrb[0].mxu0
        %v4575 = vpop.f32.mrb[0].mxu0
        %v4576 = vadd.f32 0.0, %v4575
        %v4577 = vpop.f32.mrb[0].mxu0
        %4578 = vmatprep.mubr.bf16.mxu0 0
        %4579 = vmatmul.mubr.bf16.gmra.mrb[0].mxu0 %v4500
        %v4580 = vpop.f32.mrb[0].mxu0
        %v4581 = vadd.f32 0.0, %v4580
        %v4582 = vpop.f32.mrb[0].mxu0
        %v4583 = vpop.f32.mrb[0].mxu0
        %v4584 = vadd.f32 0.0, %v4583
        %v4585 = vpop.f32.mrb[0].mxu0
        %4586 = vmatprep.mubr.bf16.mxu0 0
        %4587 = vmatmul.mubr.bf16.gmra.mrb[0].mxu0 %v4503
        %v4588 = vpop.f32.mrb[0].mxu0
        %v4589 = vadd.f32 0.0, %v4588
        %v4590 = vpop.f32.mrb[0].mxu0
        %v4591 = vpop.f32.mrb[0].mxu0
        %v4592 = vadd.f32 0.0, %v4591
        %v4593 = vpop.f32.mrb[0].mxu0
        %4594 = vmatprep.mubr.bf16.mxu0 0
        %4595 = vmatmul.mubr.bf16.gmra.mrb[0].mxu0 %v4506
        %v4596 = vpop.f32.mrb[0].mxu0
        %v4597 = vadd.f32 0.0, %v4596
        %v4598 = vpop.f32.mrb[0].mxu0
        %v4599 = vpop.f32.mrb[0].mxu0
        %v4600 = vadd.f32 0.0, %v4599
        %v4601 = vpop.f32.mrb[0].mxu0
        %4602 = vmatprep.mubr.bf16.mxu0 0
        %4603 = vmatmul.mubr.bf16.gmra.mrb[0].mxu0 %v4509
        %v4604 = vpop.f32.mrb[0].mxu0
        %v4605 = vadd.f32 0.0, %v4604
        %v4606 = vpop.f32.mrb[0].mxu0
        %v4607 = vpop.f32.mrb[0].mxu0
        %v4608 = vadd.f32 0.0, %v4607
        %v4609 = vpop.f32.mrb[0].mxu0
        %4610 = vdwg.mxu0
        %v4611 = vadd.f32 %v4245, %v4549
        %v4612 = vadd.f32 %v4246, %v4552
        %v4613 = vadd.f32 %v4247, %v4557
        %v4614 = vadd.f32 %v4248, %v4560
        %v4615 = vadd.f32 %v4249, %v4565
        %v4616 = vadd.f32 %v4250, %v4568
        %v4617 = vadd.f32 %v4251, %v4573
        %v4618 = vadd.f32 %v4252, %v4576
        %v4619 = vadd.f32 %v4253, %v4581
        %v4620 = vadd.f32 %v4254, %v4584
        %v4621 = vadd.f32 %v4255, %v4589
        %v4622 = vadd.f32 %v4256, %v4592
        %v4623 = vadd.f32 %v4257, %v4597
        %v4624 = vadd.f32 %v4258, %v4600
        %v4625 = vadd.f32 %v4259, %v4605
        %v4626 = vadd.f32 %v4260, %v4608
        %v4627 = vld [vmem:[%s1758] sm:$0x3]
        %v4644 = vunpack.c.l.b16 %v4263
        %v4645 = vunpack.c.l.b16 %v4264
        %v4646 = vunpack.c.l.b16 %v4266
        %v4647 = vunpack.c.l.b16 %v4267
        %v4648 = vunpack.c.l.b16 %v4269
        %v4649 = vunpack.c.l.b16 %v4270
        %v4650 = vunpack.c.l.b16 %v4272
        %v4651 = vunpack.c.l.b16 %v4273
        %v4652 = vunpack.c.l.b16 %v4275
        %v4653 = vunpack.c.l.b16 %v4276
        %v4654 = vunpack.c.l.b16 %v4278
        %v4655 = vunpack.c.l.b16 %v4279
        %v4656 = vunpack.c.l.b16 %v4281
        %v4657 = vunpack.c.l.b16 %v4282
        %v4658 = vunpack.c.l.b16 %v4284
        %v4659 = vunpack.c.l.b16 %v4285
        %v4660 = vpack.c.b16 %v4645, %v4644
        %v4661 = vpack.c.b16 %v4647, %v4646
        %v4662 = vpack.c.b16 %v4649, %v4648
        %v4663 = vpack.c.b16 %v4651, %v4650
        %v4664 = vpack.c.b16 %v4653, %v4652
        %v4665 = vpack.c.b16 %v4655, %v4654
        %v4666 = vpack.c.b16 %v4657, %v4656
        %v4667 = vpack.c.b16 %v4659, %v4658
        %v4669 = vsel %vm732, %v4660, 0
        %v4672 = vsel %vm732, %v4661, 0
        %v4675 = vsel %vm732, %v4662, 0
        %v4678 = vsel %vm732, %v4663, 0
        %v4681 = vsel %vm732, %v4664, 0
        %v4684 = vsel %vm732, %v4665, 0
        %v4687 = vsel %vm732, %v4666, 0
        %v4690 = vsel %vm732, %v4667, 0
        %v4693 = vsel %vm757, %v4627, 0
        %4695 = vmatprep.subr.bf16.mxu0 0
        %4696 = vmatpush1.bf16.msra.mxu0 %v4693
        %4697 = vmatprep.subr.bf16.mxu0 0
        %4698 = vmatpush1.bf16.msra.mxu0 0
        %4699 = vmatprep.subr.bf16.mxu0 0
        %4700 = vmatpush1.bf16.msra.mxu0 0
        %4701 = vmatprep.subr.bf16.mxu0 0
        %4702 = vmatpush1.bf16.msra.mxu0 0
        %4703 = vmatprep.subr.bf16.mxu0 0
        %4704 = vmatpush1.bf16.msra.mxu0 0
        %4705 = vmatprep.subr.bf16.mxu0 0
        %4706 = vmatpush1.bf16.msra.mxu0 0
        %4707 = vmatprep.subr.bf16.mxu0 0
        %4708 = vmatpush1.bf16.msra.mxu0 0
        %4709 = vmatprep.subr.bf16.mxu0 0
        %4710 = vmatpush1.bf16.msra.mxu0 0
        %4711 = vmatprep.subr.bf16.mxu0 0
        %4712 = vmatpush1.bf16.msra.mxu0 0
        %4713 = vmatprep.subr.bf16.mxu0 0
        %4714 = vmatpush1.bf16.msra.mxu0 0
        %4715 = vmatprep.subr.bf16.mxu0 0
        %4716 = vmatpush1.bf16.msra.mxu0 0
        %4717 = vmatprep.subr.bf16.mxu0 0
        %4718 = vmatpush1.bf16.msra.mxu0 0
        %4719 = vmatprep.subr.bf16.mxu0 0
        %4720 = vmatpush1.bf16.msra.mxu0 0
        %4721 = vmatprep.subr.bf16.mxu0 0
        %4722 = vmatpush1.bf16.msra.mxu0 0
        %4723 = vmatprep.subr.bf16.mxu0 0
        %4724 = vmatpush1.bf16.msra.mxu0 0
        %4725 = vmatprep.subr.bf16.mxu0 0
        %4726 = vmatpush1.bf16.msra.mxu0 0
        %4727 = vmatprep.mubr.bf16.mxu0 0
        %4728 = vmatmul.mubr.bf16.gmra.mrb[0].mxu0 %v4669
        %v4729 = vpop.f32.mrb[0].mxu0
        %v4730 = vadd.f32 0.0, %v4729
        %v4731 = vpop.f32.mrb[0].mxu0
        %v4732 = vpop.f32.mrb[0].mxu0
        %v4733 = vadd.f32 0.0, %v4732
        %v4734 = vpop.f32.mrb[0].mxu0
        %4735 = vmatprep.mubr.bf16.mxu0 0
        %4736 = vmatmul.mubr.bf16.gmra.mrb[0].mxu0 %v4672
        %v4737 = vpop.f32.mrb[0].mxu0
        %v4738 = vadd.f32 0.0, %v4737
        %v4739 = vpop.f32.mrb[0].mxu0
        %v4740 = vpop.f32.mrb[0].mxu0
        %v4741 = vadd.f32 0.0, %v4740
        %v4742 = vpop.f32.mrb[0].mxu0
        %4743 = vmatprep.mubr.bf16.mxu0 0
        %4744 = vmatmul.mubr.bf16.gmra.mrb[0].mxu0 %v4675
        %v4745 = vpop.f32.mrb[0].mxu0
        %v4746 = vadd.f32 0.0, %v4745
        %v4747 = vpop.f32.mrb[0].mxu0
        %v4748 = vpop.f32.mrb[0].mxu0
        %v4749 = vadd.f32 0.0, %v4748
        %v4750 = vpop.f32.mrb[0].mxu0
        %4751 = vmatprep.mubr.bf16.mxu0 0
        %4752 = vmatmul.mubr.bf16.gmra.mrb[0].mxu0 %v4678
        %v4753 = vpop.f32.mrb[0].mxu0
        %v4754 = vadd.f32 0.0, %v4753
        %v4755 = vpop.f32.mrb[0].mxu0
        %v4756 = vpop.f32.mrb[0].mxu0
        %v4757 = vadd.f32 0.0, %v4756
        %v4758 = vpop.f32.mrb[0].mxu0
        %4759 = vmatprep.mubr.bf16.mxu0 0
        %4760 = vmatmul.mubr.bf16.gmra.mrb[0].mxu0 %v4681
        %v4761 = vpop.f32.mrb[0].mxu0
        %v4762 = vadd.f32 0.0, %v4761
        %v4763 = vpop.f32.mrb[0].mxu0
        %v4764 = vpop.f32.mrb[0].mxu0
        %v4765 = vadd.f32 0.0, %v4764
        %v4766 = vpop.f32.mrb[0].mxu0
        %4767 = vmatprep.mubr.bf16.mxu0 0
        %4768 = vmatmul.mubr.bf16.gmra.mrb[0].mxu0 %v4684
        %v4769 = vpop.f32.mrb[0].mxu0
        %v4770 = vadd.f32 0.0, %v4769
        %v4771 = vpop.f32.mrb[0].mxu0
        %v4772 = vpop.f32.mrb[0].mxu0
        %v4773 = vadd.f32 0.0, %v4772
        %v4774 = vpop.f32.mrb[0].mxu0
        %4775 = vmatprep.mubr.bf16.mxu0 0
        %4776 = vmatmul.mubr.bf16.gmra.mrb[0].mxu0 %v4687
        %v4777 = vpop.f32.mrb[0].mxu0
        %v4778 = vadd.f32 0.0, %v4777
        %v4779 = vpop.f32.mrb[0].mxu0
        %v4780 = vpop.f32.mrb[0].mxu0
        %v4781 = vadd.f32 0.0, %v4780
        %v4782 = vpop.f32.mrb[0].mxu0
        %4783 = vmatprep.mubr.bf16.mxu0 0
        %4784 = vmatmul.mubr.bf16.gmra.mrb[0].mxu0 %v4690
        %v4785 = vpop.f32.mrb[0].mxu0
        %v4786 = vadd.f32 0.0, %v4785
        %v4787 = vpop.f32.mrb[0].mxu0
        %v4788 = vpop.f32.mrb[0].mxu0
        %v4789 = vadd.f32 0.0, %v4788
        %v4790 = vpop.f32.mrb[0].mxu0
        %4791 = vdwg.mxu0
        %v4792 = vadd.f32 %v4611, %v4730
        %v4793 = vadd.f32 %v4612, %v4733
        %v4794 = vadd.f32 %v4613, %v4738
        %v4795 = vadd.f32 %v4614, %v4741
        %v4796 = vadd.f32 %v4615, %v4746
        %v4797 = vadd.f32 %v4616, %v4749
        %v4798 = vadd.f32 %v4617, %v4754
        %v4799 = vadd.f32 %v4618, %v4757
        %v4800 = vadd.f32 %v4619, %v4762
        %v4801 = vadd.f32 %v4620, %v4765
        %v4802 = vadd.f32 %v4621, %v4770
        %v4803 = vadd.f32 %v4622, %v4773
        %v4804 = vadd.f32 %v4623, %v4778
        %v4805 = vadd.f32 %v4624, %v4781
        %v4806 = vadd.f32 %v4625, %v4786
        %v4807 = vadd.f32 %v4626, %v4789
        %v4808 = vld [vmem:[%s4261 + $0x4] sm:$0xf]
        %v4809 = vld [vmem:[%s4261 + $0x8] sm:$0xf]
        %v4810 = vld [vmem:[%s4261 + $0xc] sm:$0x1]
        %v4811 = vld [vmem:[%s4261 + $0x14] sm:$0xf]
        %v4812 = vld [vmem:[%s4261 + $0x18] sm:$0xf]
        %v4813 = vld [vmem:[%s4261 + $0x1c] sm:$0x1]
        %v4814 = vld [vmem:[%s4261 + $0x24] sm:$0xf]
        %v4815 = vld [vmem:[%s4261 + $0x28] sm:$0xf]
        %v4816 = vld [vmem:[%s4261 + $0x2c] sm:$0x1]
        %v4817 = vld [vmem:[%s4261 + $0x34] sm:$0xf]
        %v4818 = vld [vmem:[%s4261 + $0x38] sm:$0xf]
        %v4819 = vld [vmem:[%s4261 + $0x3c] sm:$0x1]
        %v4820 = vld [vmem:[%s4261 + $0x44] sm:$0xf]
        %v4821 = vld [vmem:[%s4261 + $0x48] sm:$0xf]
        %v4822 = vld [vmem:[%s4261 + $0x4c] sm:$0x1]
        %v4823 = vld [vmem:[%s4261 + $0x54] sm:$0xf]
        %v4824 = vld [vmem:[%s4261 + $0x58] sm:$0xf]
        %v4825 = vld [vmem:[%s4261 + $0x5c] sm:$0x1]
        %v4826 = vld [vmem:[%s4261 + $0x64] sm:$0xf]
        %v4827 = vld [vmem:[%s4261 + $0x68] sm:$0xf]
        %v4828 = vld [vmem:[%s4261 + $0x6c] sm:$0x1]
        %v4829 = vld [vmem:[%s4261 + $0x74] sm:$0xf]
        %v4830 = vld [vmem:[%s4261 + $0x78] sm:$0xf]
        %v4831 = vld [vmem:[%s4261 + $0x7c] sm:$0x1]
        %v4833 = vshrl.u32 %v4808, 16
        %v4835 = vrot.slane %v4833, 4
        %v4836 = vshll.u32 %v4808, 16
        %v4838 = vrot.slane %v4836, 5
        %v4839 = vor.u32 %v4835, %v4838
        %v4840 = vrot.slane %v4839, 4
        %v4842 = vshll.u32 %v4809, 16
        %v4844 = vrot.slane %v4842, 5
        %v4845 = vsel %vm1032, %v4840, %v4844
        %v4846 = vshrl.u32 %v4809, 16
        %v4848 = vrot.slane %v4846, 4
        %v4849 = vor.u32 %v4848, %v4844
        %v4850 = vrot.slane %v4849, 4
        %v4852 = vshll.u32 %v4810, 16
        %v4854 = vrot.slane %v4852, 5
        %v4855 = vsel %vm1032, %v4850, %v4854
        %v4857 = vshrl.u32 %v4811, 16
        %v4859 = vrot.slane %v4857, 4
        %v4860 = vshll.u32 %v4811, 16
        %v4862 = vrot.slane %v4860, 5
        %v4863 = vor.u32 %v4859, %v4862
        %v4864 = vrot.slane %v4863, 4
        %v4866 = vshll.u32 %v4812, 16
        %v4868 = vrot.slane %v4866, 5
        %v4869 = vsel %vm1032, %v4864, %v4868
        %v4870 = vshrl.u32 %v4812, 16
        %v4872 = vrot.slane %v4870, 4
        %v4873 = vor.u32 %v4872, %v4868
        %v4874 = vrot.slane %v4873, 4
        %v4876 = vshll.u32 %v4813, 16
        %v4878 = vrot.slane %v4876, 5
        %v4879 = vsel %vm1032, %v4874, %v4878
        %v4881 = vshrl.u32 %v4814, 16
        %v4883 = vrot.slane %v4881, 4
        %v4884 = vshll.u32 %v4814, 16
        %v4886 = vrot.slane %v4884, 5
        %v4887 = vor.u32 %v4883, %v4886
        %v4888 = vrot.slane %v4887, 4
        %v4890 = vshll.u32 %v4815, 16
        %v4892 = vrot.slane %v4890, 5
        %v4893 = vsel %vm1032, %v4888, %v4892
        %v4894 = vshrl.u32 %v4815, 16
        %v4896 = vrot.slane %v4894, 4
        %v4897 = vor.u32 %v4896, %v4892
        %v4898 = vrot.slane %v4897, 4
        %v4900 = vshll.u32 %v4816, 16
        %v4902 = vrot.slane %v4900, 5
        %v4903 = vsel %vm1032, %v4898, %v4902
        %v4905 = vshrl.u32 %v4817, 16
        %v4907 = vrot.slane %v4905, 4
        %v4908 = vshll.u32 %v4817, 16
        %v4910 = vrot.slane %v4908, 5
        %v4911 = vor.u32 %v4907, %v4910
        %v4912 = vrot.slane %v4911, 4
        %v4914 = vshll.u32 %v4818, 16
        %v4916 = vrot.slane %v4914, 5
        %v4917 = vsel %vm1032, %v4912, %v4916
        %v4918 = vshrl.u32 %v4818, 16
        %v4920 = vrot.slane %v4918, 4
        %v4921 = vor.u32 %v4920, %v4916
        %v4922 = vrot.slane %v4921, 4
        %v4924 = vshll.u32 %v4819, 16
        %v4926 = vrot.slane %v4924, 5
        %v4927 = vsel %vm1032, %v4922, %v4926
        %v4929 = vshrl.u32 %v4820, 16
        %v4931 = vrot.slane %v4929, 4
        %v4932 = vshll.u32 %v4820, 16
        %v4934 = vrot.slane %v4932, 5
        %v4935 = vor.u32 %v4931, %v4934
        %v4936 = vrot.slane %v4935, 4
        %v4938 = vshll.u32 %v4821, 16
        %v4940 = vrot.slane %v4938, 5
        %v4941 = vsel %vm1032, %v4936, %v4940
        %v4942 = vshrl.u32 %v4821, 16
        %v4944 = vrot.slane %v4942, 4
        %v4945 = vor.u32 %v4944, %v4940
        %v4946 = vrot.slane %v4945, 4
        %v4948 = vshll.u32 %v4822, 16
        %v4950 = vrot.slane %v4948, 5
        %v4951 = vsel %vm1032, %v4946, %v4950
        %v4953 = vshrl.u32 %v4823, 16
        %v4955 = vrot.slane %v4953, 4
        %v4956 = vshll.u32 %v4823, 16
        %v4958 = vrot.slane %v4956, 5
        %v4959 = vor.u32 %v4955, %v4958
        %v4960 = vrot.slane %v4959, 4
        %v4962 = vshll.u32 %v4824, 16
        %v4964 = vrot.slane %v4962, 5
        %v4965 = vsel %vm1032, %v4960, %v4964
        %v4966 = vshrl.u32 %v4824, 16
        %v4968 = vrot.slane %v4966, 4
        %v4969 = vor.u32 %v4968, %v4964
        %v4970 = vrot.slane %v4969, 4
        %v4972 = vshll.u32 %v4825, 16
        %v4974 = vrot.slane %v4972, 5
        %v4975 = vsel %vm1032, %v4970, %v4974
        %v4977 = vshrl.u32 %v4826, 16
        %v4979 = vrot.slane %v4977, 4
        %v4980 = vshll.u32 %v4826, 16
        %v4982 = vrot.slane %v4980, 5
        %v4983 = vor.u32 %v4979, %v4982
        %v4984 = vrot.slane %v4983, 4
        %v4986 = vshll.u32 %v4827, 16
        %v4988 = vrot.slane %v4986, 5
        %v4989 = vsel %vm1032, %v4984, %v4988
        %v4990 = vshrl.u32 %v4827, 16
        %v4992 = vrot.slane %v4990, 4
        %v4993 = vor.u32 %v4992, %v4988
        %v4994 = vrot.slane %v4993, 4
        %v4996 = vshll.u32 %v4828, 16
        %v4998 = vrot.slane %v4996, 5
        %v4999 = vsel %vm1032, %v4994, %v4998
        %v5001 = vshrl.u32 %v4829, 16
        %v5003 = vrot.slane %v5001, 4
        %v5004 = vshll.u32 %v4829, 16
        %v5006 = vrot.slane %v5004, 5
        %v5007 = vor.u32 %v5003, %v5006
        %v5008 = vrot.slane %v5007, 4
        %v5010 = vshll.u32 %v4830, 16
        %v5012 = vrot.slane %v5010, 5
        %v5013 = vsel %vm1032, %v5008, %v5012
        %v5014 = vshrl.u32 %v4830, 16
        %v5016 = vrot.slane %v5014, 4
        %v5017 = vor.u32 %v5016, %v5012
        %v5018 = vrot.slane %v5017, 4
        %v5020 = vshll.u32 %v4831, 16
        %v5022 = vrot.slane %v5020, 5
        %v5023 = vsel %vm1032, %v5018, %v5022
        %v5024 = vld [vmem:[%s2156] sm:$0x3]
        %v5025 = vunpack.c.l.b16 %v4845
        %v5026 = vunpack.c.l.b16 %v4855
        %v5027 = vunpack.c.l.b16 %v4869
        %v5028 = vunpack.c.l.b16 %v4879
        %v5029 = vunpack.c.l.b16 %v4893
        %v5030 = vunpack.c.l.b16 %v4903
        %v5031 = vunpack.c.l.b16 %v4917
        %v5032 = vunpack.c.l.b16 %v4927
        %v5033 = vunpack.c.l.b16 %v4941
        %v5034 = vunpack.c.l.b16 %v4951
        %v5035 = vunpack.c.l.b16 %v4965
        %v5036 = vunpack.c.l.b16 %v4975
        %v5037 = vunpack.c.l.b16 %v4989
        %v5038 = vunpack.c.l.b16 %v4999
        %v5039 = vunpack.c.l.b16 %v5013
        %v5040 = vunpack.c.l.b16 %v5023
        %v5041 = vpack.c.b16 %v5026, %v5025
        %v5042 = vpack.c.b16 %v5028, %v5027
        %v5043 = vpack.c.b16 %v5030, %v5029
        %v5044 = vpack.c.b16 %v5032, %v5031
        %v5045 = vpack.c.b16 %v5034, %v5033
        %v5046 = vpack.c.b16 %v5036, %v5035
        %v5047 = vpack.c.b16 %v5038, %v5037
        %v5048 = vpack.c.b16 %v5040, %v5039
        %v5050 = vsel %vm732, %v5041, 0
        %v5053 = vsel %vm732, %v5042, 0
        %v5056 = vsel %vm732, %v5043, 0
        %v5059 = vsel %vm732, %v5044, 0
        %v5062 = vsel %vm732, %v5045, 0
        %v5065 = vsel %vm732, %v5046, 0
        %v5068 = vsel %vm732, %v5047, 0
        %v5071 = vsel %vm732, %v5048, 0
        %v5074 = vsel %vm757, %v5024, 0
        %5076 = vmatprep.subr.bf16.mxu0 0
        %5077 = vmatpush1.bf16.msra.mxu0 %v5074
        %5078 = vmatprep.subr.bf16.mxu0 0
        %5079 = vmatpush1.bf16.msra.mxu0 0
        %5080 = vmatprep.subr.bf16.mxu0 0
        %5081 = vmatpush1.bf16.msra.mxu0 0
        %5082 = vmatprep.subr.bf16.mxu0 0
        %5083 = vmatpush1.bf16.msra.mxu0 0
        %5084 = vmatprep.subr.bf16.mxu0 0
        %5085 = vmatpush1.bf16.msra.mxu0 0
        %5086 = vmatprep.subr.bf16.mxu0 0
        %5087 = vmatpush1.bf16.msra.mxu0 0
        %5088 = vmatprep.subr.bf16.mxu0 0
        %5089 = vmatpush1.bf16.msra.mxu0 0
        %5090 = vmatprep.subr.bf16.mxu0 0
        %5091 = vmatpush1.bf16.msra.mxu0 0
        %5092 = vmatprep.subr.bf16.mxu0 0
        %5093 = vmatpush1.bf16.msra.mxu0 0
        %5094 = vmatprep.subr.bf16.mxu0 0
        %5095 = vmatpush1.bf16.msra.mxu0 0
        %5096 = vmatprep.subr.bf16.mxu0 0
        %5097 = vmatpush1.bf16.msra.mxu0 0
        %5098 = vmatprep.subr.bf16.mxu0 0
        %5099 = vmatpush1.bf16.msra.mxu0 0
        %5100 = vmatprep.subr.bf16.mxu0 0
        %5101 = vmatpush1.bf16.msra.mxu0 0
        %5102 = vmatprep.subr.bf16.mxu0 0
        %5103 = vmatpush1.bf16.msra.mxu0 0
        %5104 = vmatprep.subr.bf16.mxu0 0
        %5105 = vmatpush1.bf16.msra.mxu0 0
        %5106 = vmatprep.subr.bf16.mxu0 0
        %5107 = vmatpush1.bf16.msra.mxu0 0
        %5108 = vmatprep.mubr.bf16.mxu0 0
        %5109 = vmatmul.mubr.bf16.gmra.mrb[0].mxu0 %v5050
        %v5110 = vpop.f32.mrb[0].mxu0
        %v5111 = vadd.f32 0.0, %v5110
        %v5112 = vpop.f32.mrb[0].mxu0
        %v5113 = vpop.f32.mrb[0].mxu0
        %v5114 = vadd.f32 0.0, %v5113
        %v5115 = vpop.f32.mrb[0].mxu0
        %5116 = vmatprep.mubr.bf16.mxu0 0
        %5117 = vmatmul.mubr.bf16.gmra.mrb[0].mxu0 %v5053
        %v5118 = vpop.f32.mrb[0].mxu0
        %v5119 = vadd.f32 0.0, %v5118
        %v5120 = vpop.f32.mrb[0].mxu0
        %v5121 = vpop.f32.mrb[0].mxu0
        %v5122 = vadd.f32 0.0, %v5121
        %v5123 = vpop.f32.mrb[0].mxu0
        %5124 = vmatprep.mubr.bf16.mxu0 0
        %5125 = vmatmul.mubr.bf16.gmra.mrb[0].mxu0 %v5056
        %v5126 = vpop.f32.mrb[0].mxu0
        %v5127 = vadd.f32 0.0, %v5126
        %v5128 = vpop.f32.mrb[0].mxu0
        %v5129 = vpop.f32.mrb[0].mxu0
        %v5130 = vadd.f32 0.0, %v5129
        %v5131 = vpop.f32.mrb[0].mxu0
        %5132 = vmatprep.mubr.bf16.mxu0 0
        %5133 = vmatmul.mubr.bf16.gmra.mrb[0].mxu0 %v5059
        %v5134 = vpop.f32.mrb[0].mxu0
        %v5135 = vadd.f32 0.0, %v5134
        %v5136 = vpop.f32.mrb[0].mxu0
        %v5137 = vpop.f32.mrb[0].mxu0
        %v5138 = vadd.f32 0.0, %v5137
        %v5139 = vpop.f32.mrb[0].mxu0
        %5140 = vmatprep.mubr.bf16.mxu0 0
        %5141 = vmatmul.mubr.bf16.gmra.mrb[0].mxu0 %v5062
        %v5142 = vpop.f32.mrb[0].mxu0
        %v5143 = vadd.f32 0.0, %v5142
        %v5144 = vpop.f32.mrb[0].mxu0
        %v5145 = vpop.f32.mrb[0].mxu0
        %v5146 = vadd.f32 0.0, %v5145
        %v5147 = vpop.f32.mrb[0].mxu0
        %5148 = vmatprep.mubr.bf16.mxu0 0
        %5149 = vmatmul.mubr.bf16.gmra.mrb[0].mxu0 %v5065
        %v5150 = vpop.f32.mrb[0].mxu0
        %v5151 = vadd.f32 0.0, %v5150
        %v5152 = vpop.f32.mrb[0].mxu0
        %v5153 = vpop.f32.mrb[0].mxu0
        %v5154 = vadd.f32 0.0, %v5153
        %v5155 = vpop.f32.mrb[0].mxu0
        %5156 = vmatprep.mubr.bf16.mxu0 0
        %5157 = vmatmul.mubr.bf16.gmra.mrb[0].mxu0 %v5068
        %v5158 = vpop.f32.mrb[0].mxu0
        %v5159 = vadd.f32 0.0, %v5158
        %v5160 = vpop.f32.mrb[0].mxu0
        %v5161 = vpop.f32.mrb[0].mxu0
        %v5162 = vadd.f32 0.0, %v5161
        %v5163 = vpop.f32.mrb[0].mxu0
        %5164 = vmatprep.mubr.bf16.mxu0 0
        %5165 = vmatmul.mubr.bf16.gmra.mrb[0].mxu0 %v5071
        %v5166 = vpop.f32.mrb[0].mxu0
        %v5167 = vadd.f32 0.0, %v5166
        %v5168 = vpop.f32.mrb[0].mxu0
        %v5169 = vpop.f32.mrb[0].mxu0
        %v5170 = vadd.f32 0.0, %v5169
        %v5171 = vpop.f32.mrb[0].mxu0
        %5172 = vdwg.mxu0
        %v5173 = vadd.f32 %v4792, %v5111
        %v5174 = vadd.f32 %v4793, %v5114
        %v5175 = vadd.f32 %v4794, %v5119
        %v5176 = vadd.f32 %v4795, %v5122
        %v5177 = vadd.f32 %v4796, %v5127
        %v5178 = vadd.f32 %v4797, %v5130
        %v5179 = vadd.f32 %v4798, %v5135
        %v5180 = vadd.f32 %v4799, %v5138
        %v5181 = vadd.f32 %v4800, %v5143
        %v5182 = vadd.f32 %v4801, %v5146
        %v5183 = vadd.f32 %v4802, %v5151
        %v5184 = vadd.f32 %v4803, %v5154
        %v5185 = vadd.f32 %v4804, %v5159
        %v5186 = vadd.f32 %v4805, %v5162
        %v5187 = vadd.f32 %v4806, %v5167
        %v5188 = vadd.f32 %v4807, %v5170
        %s5189 = scalar_lea.vmem %s321, 160 [#allocation3]
        %v5190 = vld [vmem:[%s5189] sm:$0x8]
        %v5191 = vld [vmem:[%s5189 + $0x4] sm:$0xf]
        %v5192 = vld [vmem:[%s5189 + $0x8] sm:$0xf]
        %v5193 = vld [vmem:[%s5189 + $0x10] sm:$0x8]
        %v5194 = vld [vmem:[%s5189 + $0x14] sm:$0xf]
        %v5195 = vld [vmem:[%s5189 + $0x18] sm:$0xf]
        %v5196 = vld [vmem:[%s5189 + $0x20] sm:$0x8]
        %v5197 = vld [vmem:[%s5189 + $0x24] sm:$0xf]
        %v5198 = vld [vmem:[%s5189 + $0x28] sm:$0xf]
        %v5199 = vld [vmem:[%s5189 + $0x30] sm:$0x8]
        %v5200 = vld [vmem:[%s5189 + $0x34] sm:$0xf]
        %v5201 = vld [vmem:[%s5189 + $0x38] sm:$0xf]
        %v5202 = vld [vmem:[%s5189 + $0x40] sm:$0x8]
        %v5203 = vld [vmem:[%s5189 + $0x44] sm:$0xf]
        %v5204 = vld [vmem:[%s5189 + $0x48] sm:$0xf]
        %v5205 = vld [vmem:[%s5189 + $0x50] sm:$0x8]
        %v5206 = vld [vmem:[%s5189 + $0x54] sm:$0xf]
        %v5207 = vld [vmem:[%s5189 + $0x58] sm:$0xf]
        %v5208 = vld [vmem:[%s5189 + $0x60] sm:$0x8]
        %v5209 = vld [vmem:[%s5189 + $0x64] sm:$0xf]
        %v5210 = vld [vmem:[%s5189 + $0x68] sm:$0xf]
        %v5211 = vld [vmem:[%s5189 + $0x70] sm:$0x8]
        %v5212 = vld [vmem:[%s5189 + $0x74] sm:$0xf]
        %v5213 = vld [vmem:[%s5189 + $0x78] sm:$0xf]
        %v5215 = vshrl.u32 %v5190, 16
        %v5217 = vrot.slane %v5215, 7
        %v5218 = vrot.slane %v5217, 4
        %v5220 = vshrl.u32 %v5191, 16
        %v5222 = vrot.slane %v5220, 7
        %v5223 = vshll.u32 %v5191, 16
        %v5225 = vor.u32 %v5222, %v5223
        %v5226 = vsel %vm512, %v5218, %v5225
        %v5227 = vrot.slane %v5222, 4
        %v5229 = vshrl.u32 %v5192, 16
        %v5231 = vrot.slane %v5229, 7
        %v5232 = vshll.u32 %v5192, 16
        %v5234 = vor.u32 %v5231, %v5232
        %v5235 = vsel %vm512, %v5227, %v5234
        %v5237 = vshrl.u32 %v5193, 16
        %v5239 = vrot.slane %v5237, 7
        %v5240 = vrot.slane %v5239, 4
        %v5242 = vshrl.u32 %v5194, 16
        %v5244 = vrot.slane %v5242, 7
        %v5245 = vshll.u32 %v5194, 16
        %v5247 = vor.u32 %v5244, %v5245
        %v5248 = vsel %vm512, %v5240, %v5247
        %v5249 = vrot.slane %v5244, 4
        %v5251 = vshrl.u32 %v5195, 16
        %v5253 = vrot.slane %v5251, 7
        %v5254 = vshll.u32 %v5195, 16
        %v5256 = vor.u32 %v5253, %v5254
        %v5257 = vsel %vm512, %v5249, %v5256
        %v5259 = vshrl.u32 %v5196, 16
        %v5261 = vrot.slane %v5259, 7
        %v5262 = vrot.slane %v5261, 4
        %v5264 = vshrl.u32 %v5197, 16
        %v5266 = vrot.slane %v5264, 7
        %v5267 = vshll.u32 %v5197, 16
        %v5269 = vor.u32 %v5266, %v5267
        %v5270 = vsel %vm512, %v5262, %v5269
        %v5271 = vrot.slane %v5266, 4
        %v5273 = vshrl.u32 %v5198, 16
        %v5275 = vrot.slane %v5273, 7
        %v5276 = vshll.u32 %v5198, 16
        %v5278 = vor.u32 %v5275, %v5276
        %v5279 = vsel %vm512, %v5271, %v5278
        %v5281 = vshrl.u32 %v5199, 16
        %v5283 = vrot.slane %v5281, 7
        %v5284 = vrot.slane %v5283, 4
        %v5286 = vshrl.u32 %v5200, 16
        %v5288 = vrot.slane %v5286, 7
        %v5289 = vshll.u32 %v5200, 16
        %v5291 = vor.u32 %v5288, %v5289
        %v5292 = vsel %vm512, %v5284, %v5291
        %v5293 = vrot.slane %v5288, 4
        %v5295 = vshrl.u32 %v5201, 16
        %v5297 = vrot.slane %v5295, 7
        %v5298 = vshll.u32 %v5201, 16
        %v5300 = vor.u32 %v5297, %v5298
        %v5301 = vsel %vm512, %v5293, %v5300
        %v5303 = vshrl.u32 %v5202, 16
        %v5305 = vrot.slane %v5303, 7
        %v5306 = vrot.slane %v5305, 4
        %v5308 = vshrl.u32 %v5203, 16
        %v5310 = vrot.slane %v5308, 7
        %v5311 = vshll.u32 %v5203, 16
        %v5313 = vor.u32 %v5310, %v5311
        %v5314 = vsel %vm512, %v5306, %v5313
        %v5315 = vrot.slane %v5310, 4
        %v5317 = vshrl.u32 %v5204, 16
        %v5319 = vrot.slane %v5317, 7
        %v5320 = vshll.u32 %v5204, 16
        %v5322 = vor.u32 %v5319, %v5320
        %v5323 = vsel %vm512, %v5315, %v5322
        %v5325 = vshrl.u32 %v5205, 16
        %v5327 = vrot.slane %v5325, 7
        %v5328 = vrot.slane %v5327, 4
        %v5330 = vshrl.u32 %v5206, 16
        %v5332 = vrot.slane %v5330, 7
        %v5333 = vshll.u32 %v5206, 16
        %v5335 = vor.u32 %v5332, %v5333
        %v5336 = vsel %vm512, %v5328, %v5335
        %v5337 = vrot.slane %v5332, 4
        %v5339 = vshrl.u32 %v5207, 16
        %v5341 = vrot.slane %v5339, 7
        %v5342 = vshll.u32 %v5207, 16
        %v5344 = vor.u32 %v5341, %v5342
        %v5345 = vsel %vm512, %v5337, %v5344
        %v5347 = vshrl.u32 %v5208, 16
        %v5349 = vrot.slane %v5347, 7
        %v5350 = vrot.slane %v5349, 4
        %v5352 = vshrl.u32 %v5209, 16
        %v5354 = vrot.slane %v5352, 7
        %v5355 = vshll.u32 %v5209, 16
        %v5357 = vor.u32 %v5354, %v5355
        %v5358 = vsel %vm512, %v5350, %v5357
        %v5359 = vrot.slane %v5354, 4
        %v5361 = vshrl.u32 %v5210, 16
        %v5363 = vrot.slane %v5361, 7
        %v5364 = vshll.u32 %v5210, 16
        %v5366 = vor.u32 %v5363, %v5364
        %v5367 = vsel %vm512, %v5359, %v5366
        %v5369 = vshrl.u32 %v5211, 16
        %v5371 = vrot.slane %v5369, 7
        %v5372 = vrot.slane %v5371, 4
        %v5374 = vshrl.u32 %v5212, 16
        %v5376 = vrot.slane %v5374, 7
        %v5377 = vshll.u32 %v5212, 16
        %v5379 = vor.u32 %v5376, %v5377
        %v5380 = vsel %vm512, %v5372, %v5379
        %v5381 = vrot.slane %v5376, 4
        %v5383 = vshrl.u32 %v5213, 16
        %v5385 = vrot.slane %v5383, 7
        %v5386 = vshll.u32 %v5213, 16
        %v5388 = vor.u32 %v5385, %v5386
        %v5389 = vsel %vm512, %v5381, %v5388
        %v5390 = vld [vmem:[%s2523] sm:$0x3]
        %v5391 = vunpack.c.l.b16 %v5226
        %v5392 = vunpack.c.l.b16 %v5235
        %v5393 = vunpack.c.l.b16 %v5248
        %v5394 = vunpack.c.l.b16 %v5257
        %v5395 = vunpack.c.l.b16 %v5270
        %v5396 = vunpack.c.l.b16 %v5279
        %v5397 = vunpack.c.l.b16 %v5292
        %v5398 = vunpack.c.l.b16 %v5301
        %v5399 = vunpack.c.l.b16 %v5314
        %v5400 = vunpack.c.l.b16 %v5323
        %v5401 = vunpack.c.l.b16 %v5336
        %v5402 = vunpack.c.l.b16 %v5345
        %v5403 = vunpack.c.l.b16 %v5358
        %v5404 = vunpack.c.l.b16 %v5367
        %v5405 = vunpack.c.l.b16 %v5380
        %v5406 = vunpack.c.l.b16 %v5389
        %v5407 = vpack.c.b16 %v5392, %v5391
        %v5408 = vpack.c.b16 %v5394, %v5393
        %v5409 = vpack.c.b16 %v5396, %v5395
        %v5410 = vpack.c.b16 %v5398, %v5397
        %v5411 = vpack.c.b16 %v5400, %v5399
        %v5412 = vpack.c.b16 %v5402, %v5401
        %v5413 = vpack.c.b16 %v5404, %v5403
        %v5414 = vpack.c.b16 %v5406, %v5405
        %v5416 = vsel %vm732, %v5407, 0
        %v5419 = vsel %vm732, %v5408, 0
        %v5422 = vsel %vm732, %v5409, 0
        %v5425 = vsel %vm732, %v5410, 0
        %v5428 = vsel %vm732, %v5411, 0
        %v5431 = vsel %vm732, %v5412, 0
        %v5434 = vsel %vm732, %v5413, 0
        %v5437 = vsel %vm732, %v5414, 0
        %v5440 = vsel %vm757, %v5390, 0
        %5442 = vmatprep.subr.bf16.mxu0 0
        %5443 = vmatpush1.bf16.msra.mxu0 %v5440
        %5444 = vmatprep.subr.bf16.mxu0 0
        %5445 = vmatpush1.bf16.msra.mxu0 0
        %5446 = vmatprep.subr.bf16.mxu0 0
        %5447 = vmatpush1.bf16.msra.mxu0 0
        %5448 = vmatprep.subr.bf16.mxu0 0
        %5449 = vmatpush1.bf16.msra.mxu0 0
        %5450 = vmatprep.subr.bf16.mxu0 0
        %5451 = vmatpush1.bf16.msra.mxu0 0
        %5452 = vmatprep.subr.bf16.mxu0 0
        %5453 = vmatpush1.bf16.msra.mxu0 0
        %5454 = vmatprep.subr.bf16.mxu0 0
        %5455 = vmatpush1.bf16.msra.mxu0 0
        %5456 = vmatprep.subr.bf16.mxu0 0
        %5457 = vmatpush1.bf16.msra.mxu0 0
        %5458 = vmatprep.subr.bf16.mxu0 0
        %5459 = vmatpush1.bf16.msra.mxu0 0
        %5460 = vmatprep.subr.bf16.mxu0 0
        %5461 = vmatpush1.bf16.msra.mxu0 0
        %5462 = vmatprep.subr.bf16.mxu0 0
        %5463 = vmatpush1.bf16.msra.mxu0 0
        %5464 = vmatprep.subr.bf16.mxu0 0
        %5465 = vmatpush1.bf16.msra.mxu0 0
        %5466 = vmatprep.subr.bf16.mxu0 0
        %5467 = vmatpush1.bf16.msra.mxu0 0
        %5468 = vmatprep.subr.bf16.mxu0 0
        %5469 = vmatpush1.bf16.msra.mxu0 0
        %5470 = vmatprep.subr.bf16.mxu0 0
        %5471 = vmatpush1.bf16.msra.mxu0 0
        %5472 = vmatprep.subr.bf16.mxu0 0
        %5473 = vmatpush1.bf16.msra.mxu0 0
        %5474 = vmatprep.mubr.bf16.mxu0 0
        %5475 = vmatmul.mubr.bf16.gmra.mrb[0].mxu0 %v5416
        %v5476 = vpop.f32.mrb[0].mxu0
        %v5477 = vadd.f32 0.0, %v5476
        %v5478 = vpop.f32.mrb[0].mxu0
        %v5479 = vpop.f32.mrb[0].mxu0
        %v5480 = vadd.f32 0.0, %v5479
        %v5481 = vpop.f32.mrb[0].mxu0
        %5482 = vmatprep.mubr.bf16.mxu0 0
        %5483 = vmatmul.mubr.bf16.gmra.mrb[0].mxu0 %v5419
        %v5484 = vpop.f32.mrb[0].mxu0
        %v5485 = vadd.f32 0.0, %v5484
        %v5486 = vpop.f32.mrb[0].mxu0
        %v5487 = vpop.f32.mrb[0].mxu0
        %v5488 = vadd.f32 0.0, %v5487
        %v5489 = vpop.f32.mrb[0].mxu0
        %5490 = vmatprep.mubr.bf16.mxu0 0
        %5491 = vmatmul.mubr.bf16.gmra.mrb[0].mxu0 %v5422
        %v5492 = vpop.f32.mrb[0].mxu0
        %v5493 = vadd.f32 0.0, %v5492
        %v5494 = vpop.f32.mrb[0].mxu0
        %v5495 = vpop.f32.mrb[0].mxu0
        %v5496 = vadd.f32 0.0, %v5495
        %v5497 = vpop.f32.mrb[0].mxu0
        %5498 = vmatprep.mubr.bf16.mxu0 0
        %5499 = vmatmul.mubr.bf16.gmra.mrb[0].mxu0 %v5425
        %v5500 = vpop.f32.mrb[0].mxu0
        %v5501 = vadd.f32 0.0, %v5500
        %v5502 = vpop.f32.mrb[0].mxu0
        %v5503 = vpop.f32.mrb[0].mxu0
        %v5504 = vadd.f32 0.0, %v5503
        %v5505 = vpop.f32.mrb[0].mxu0
        %5506 = vmatprep.mubr.bf16.mxu0 0
        %5507 = vmatmul.mubr.bf16.gmra.mrb[0].mxu0 %v5428
        %v5508 = vpop.f32.mrb[0].mxu0
        %v5509 = vadd.f32 0.0, %v5508
        %v5510 = vpop.f32.mrb[0].mxu0
        %v5511 = vpop.f32.mrb[0].mxu0
        %v5512 = vadd.f32 0.0, %v5511
        %v5513 = vpop.f32.mrb[0].mxu0
        %5514 = vmatprep.mubr.bf16.mxu0 0
        %5515 = vmatmul.mubr.bf16.gmra.mrb[0].mxu0 %v5431
        %v5516 = vpop.f32.mrb[0].mxu0
        %v5517 = vadd.f32 0.0, %v5516
        %v5518 = vpop.f32.mrb[0].mxu0
        %v5519 = vpop.f32.mrb[0].mxu0
        %v5520 = vadd.f32 0.0, %v5519
        %v5521 = vpop.f32.mrb[0].mxu0
        %5522 = vmatprep.mubr.bf16.mxu0 0
        %5523 = vmatmul.mubr.bf16.gmra.mrb[0].mxu0 %v5434
        %v5524 = vpop.f32.mrb[0].mxu0
        %v5525 = vadd.f32 0.0, %v5524
        %v5526 = vpop.f32.mrb[0].mxu0
        %v5527 = vpop.f32.mrb[0].mxu0
        %v5528 = vadd.f32 0.0, %v5527
        %v5529 = vpop.f32.mrb[0].mxu0
        %5530 = vmatprep.mubr.bf16.mxu0 0
        %5531 = vmatmul.mubr.bf16.gmra.mrb[0].mxu0 %v5437
        %v5532 = vpop.f32.mrb[0].mxu0
        %v5533 = vadd.f32 0.0, %v5532
        %v5534 = vpop.f32.mrb[0].mxu0
        %v5535 = vpop.f32.mrb[0].mxu0
        %v5536 = vadd.f32 0.0, %v5535
        %v5537 = vpop.f32.mrb[0].mxu0
        %5538 = vdwg.mxu0
        %v5539 = vadd.f32 %v5173, %v5477
        %v5540 = vadd.f32 %v5174, %v5480
        %v5541 = vadd.f32 %v5175, %v5485
        %v5542 = vadd.f32 %v5176, %v5488
        %v5543 = vadd.f32 %v5177, %v5493
        %v5544 = vadd.f32 %v5178, %v5496
        %v5545 = vadd.f32 %v5179, %v5501
        %v5546 = vadd.f32 %v5180, %v5504
        %v5547 = vadd.f32 %v5181, %v5509
        %v5548 = vadd.f32 %v5182, %v5512
        %v5549 = vadd.f32 %v5183, %v5517
        %v5550 = vadd.f32 %v5184, %v5520
        %v5551 = vadd.f32 %v5185, %v5525
        %v5552 = vadd.f32 %v5186, %v5528
        %v5553 = vadd.f32 %v5187, %v5533
        %v5554 = vadd.f32 %v5188, %v5536
        %v5555 = vld [vmem:[%s2689] sm:$0x3]
        %v5572 = vunpack.c.l.b16 %v5191
        %v5573 = vunpack.c.l.b16 %v5192
        %v5574 = vunpack.c.l.b16 %v5194
        %v5575 = vunpack.c.l.b16 %v5195
        %v5576 = vunpack.c.l.b16 %v5197
        %v5577 = vunpack.c.l.b16 %v5198
        %v5578 = vunpack.c.l.b16 %v5200
        %v5579 = vunpack.c.l.b16 %v5201
        %v5580 = vunpack.c.l.b16 %v5203
        %v5581 = vunpack.c.l.b16 %v5204
        %v5582 = vunpack.c.l.b16 %v5206
        %v5583 = vunpack.c.l.b16 %v5207
        %v5584 = vunpack.c.l.b16 %v5209
        %v5585 = vunpack.c.l.b16 %v5210
        %v5586 = vunpack.c.l.b16 %v5212
        %v5587 = vunpack.c.l.b16 %v5213
        %v5588 = vpack.c.b16 %v5573, %v5572
        %v5589 = vpack.c.b16 %v5575, %v5574
        %v5590 = vpack.c.b16 %v5577, %v5576
        %v5591 = vpack.c.b16 %v5579, %v5578
        %v5592 = vpack.c.b16 %v5581, %v5580
        %v5593 = vpack.c.b16 %v5583, %v5582
        %v5594 = vpack.c.b16 %v5585, %v5584
        %v5595 = vpack.c.b16 %v5587, %v5586
        %v5597 = vsel %vm732, %v5588, 0
        %v5600 = vsel %vm732, %v5589, 0
        %v5603 = vsel %vm732, %v5590, 0
        %v5606 = vsel %vm732, %v5591, 0
        %v5609 = vsel %vm732, %v5592, 0
        %v5612 = vsel %vm732, %v5593, 0
        %v5615 = vsel %vm732, %v5594, 0
        %v5618 = vsel %vm732, %v5595, 0
        %v5621 = vsel %vm757, %v5555, 0
        %5623 = vmatprep.subr.bf16.mxu0 0
        %5624 = vmatpush1.bf16.msra.mxu0 %v5621
        %5625 = vmatprep.subr.bf16.mxu0 0
        %5626 = vmatpush1.bf16.msra.mxu0 0
        %5627 = vmatprep.subr.bf16.mxu0 0
        %5628 = vmatpush1.bf16.msra.mxu0 0
        %5629 = vmatprep.subr.bf16.mxu0 0
        %5630 = vmatpush1.bf16.msra.mxu0 0
        %5631 = vmatprep.subr.bf16.mxu0 0
        %5632 = vmatpush1.bf16.msra.mxu0 0
        %5633 = vmatprep.subr.bf16.mxu0 0
        %5634 = vmatpush1.bf16.msra.mxu0 0
        %5635 = vmatprep.subr.bf16.mxu0 0
        %5636 = vmatpush1.bf16.msra.mxu0 0
        %5637 = vmatprep.subr.bf16.mxu0 0
        %5638 = vmatpush1.bf16.msra.mxu0 0
        %5639 = vmatprep.subr.bf16.mxu0 0
        %5640 = vmatpush1.bf16.msra.mxu0 0
        %5641 = vmatprep.subr.bf16.mxu0 0
        %5642 = vmatpush1.bf16.msra.mxu0 0
        %5643 = vmatprep.subr.bf16.mxu0 0
        %5644 = vmatpush1.bf16.msra.mxu0 0
        %5645 = vmatprep.subr.bf16.mxu0 0
        %5646 = vmatpush1.bf16.msra.mxu0 0
        %5647 = vmatprep.subr.bf16.mxu0 0
        %5648 = vmatpush1.bf16.msra.mxu0 0
        %5649 = vmatprep.subr.bf16.mxu0 0
        %5650 = vmatpush1.bf16.msra.mxu0 0
        %5651 = vmatprep.subr.bf16.mxu0 0
        %5652 = vmatpush1.bf16.msra.mxu0 0
        %5653 = vmatprep.subr.bf16.mxu0 0
        %5654 = vmatpush1.bf16.msra.mxu0 0
        %5655 = vmatprep.mubr.bf16.mxu0 0
        %5656 = vmatmul.mubr.bf16.gmra.mrb[0].mxu0 %v5597
        %v5657 = vpop.f32.mrb[0].mxu0
        %v5658 = vadd.f32 0.0, %v5657
        %v5659 = vpop.f32.mrb[0].mxu0
        %v5660 = vpop.f32.mrb[0].mxu0
        %v5661 = vadd.f32 0.0, %v5660
        %v5662 = vpop.f32.mrb[0].mxu0
        %5663 = vmatprep.mubr.bf16.mxu0 0
        %5664 = vmatmul.mubr.bf16.gmra.mrb[0].mxu0 %v5600
        %v5665 = vpop.f32.mrb[0].mxu0
        %v5666 = vadd.f32 0.0, %v5665
        %v5667 = vpop.f32.mrb[0].mxu0
        %v5668 = vpop.f32.mrb[0].mxu0
        %v5669 = vadd.f32 0.0, %v5668
        %v5670 = vpop.f32.mrb[0].mxu0
        %5671 = vmatprep.mubr.bf16.mxu0 0
        %5672 = vmatmul.mubr.bf16.gmra.mrb[0].mxu0 %v5603
        %v5673 = vpop.f32.mrb[0].mxu0
        %v5674 = vadd.f32 0.0, %v5673
        %v5675 = vpop.f32.mrb[0].mxu0
        %v5676 = vpop.f32.mrb[0].mxu0
        %v5677 = vadd.f32 0.0, %v5676
        %v5678 = vpop.f32.mrb[0].mxu0
        %5679 = vmatprep.mubr.bf16.mxu0 0
        %5680 = vmatmul.mubr.bf16.gmra.mrb[0].mxu0 %v5606
        %v5681 = vpop.f32.mrb[0].mxu0
        %v5682 = vadd.f32 0.0, %v5681
        %v5683 = vpop.f32.mrb[0].mxu0
        %v5684 = vpop.f32.mrb[0].mxu0
        %v5685 = vadd.f32 0.0, %v5684
        %v5686 = vpop.f32.mrb[0].mxu0
        %5687 = vmatprep.mubr.bf16.mxu0 0
        %5688 = vmatmul.mubr.bf16.gmra.mrb[0].mxu0 %v5609
        %v5689 = vpop.f32.mrb[0].mxu0
        %v5690 = vadd.f32 0.0, %v5689
        %v5691 = vpop.f32.mrb[0].mxu0
        %v5692 = vpop.f32.mrb[0].mxu0
        %v5693 = vadd.f32 0.0, %v5692
        %v5694 = vpop.f32.mrb[0].mxu0
        %5695 = vmatprep.mubr.bf16.mxu0 0
        %5696 = vmatmul.mubr.bf16.gmra.mrb[0].mxu0 %v5612
        %v5697 = vpop.f32.mrb[0].mxu0
        %v5698 = vadd.f32 0.0, %v5697
        %v5699 = vpop.f32.mrb[0].mxu0
        %v5700 = vpop.f32.mrb[0].mxu0
        %v5701 = vadd.f32 0.0, %v5700
        %v5702 = vpop.f32.mrb[0].mxu0
        %5703 = vmatprep.mubr.bf16.mxu0 0
        %5704 = vmatmul.mubr.bf16.gmra.mrb[0].mxu0 %v5615
        %v5705 = vpop.f32.mrb[0].mxu0
        %v5706 = vadd.f32 0.0, %v5705
        %v5707 = vpop.f32.mrb[0].mxu0
        %v5708 = vpop.f32.mrb[0].mxu0
        %v5709 = vadd.f32 0.0, %v5708
        %v5710 = vpop.f32.mrb[0].mxu0
        %5711 = vmatprep.mubr.bf16.mxu0 0
        %5712 = vmatmul.mubr.bf16.gmra.mrb[0].mxu0 %v5618
        %v5713 = vpop.f32.mrb[0].mxu0
        %v5714 = vadd.f32 0.0, %v5713
        %v5715 = vpop.f32.mrb[0].mxu0
        %v5716 = vpop.f32.mrb[0].mxu0
        %v5717 = vadd.f32 0.0, %v5716
        %v5718 = vpop.f32.mrb[0].mxu0
        %5719 = vdwg.mxu0
        %v5720 = vadd.f32 %v5539, %v5658
        %v5721 = vadd.f32 %v5540, %v5661
        %v5722 = vadd.f32 %v5541, %v5666
        %v5723 = vadd.f32 %v5542, %v5669
        %v5724 = vadd.f32 %v5543, %v5674
        %v5725 = vadd.f32 %v5544, %v5677
        %v5726 = vadd.f32 %v5545, %v5682
        %v5727 = vadd.f32 %v5546, %v5685
        %v5728 = vadd.f32 %v5547, %v5690
        %v5729 = vadd.f32 %v5548, %v5693
        %v5730 = vadd.f32 %v5549, %v5698
        %v5731 = vadd.f32 %v5550, %v5701
        %v5732 = vadd.f32 %v5551, %v5706
        %v5733 = vadd.f32 %v5552, %v5709
        %v5734 = vadd.f32 %v5553, %v5714
        %v5735 = vadd.f32 %v5554, %v5717
        %v5736 = vld [vmem:[%s5189 + $0x4] sm:$0xf]
        %v5737 = vld [vmem:[%s5189 + $0x8] sm:$0xf]
        %v5738 = vld [vmem:[%s5189 + $0xc] sm:$0x1]
        %v5739 = vld [vmem:[%s5189 + $0x14] sm:$0xf]
        %v5740 = vld [vmem:[%s5189 + $0x18] sm:$0xf]
        %v5741 = vld [vmem:[%s5189 + $0x1c] sm:$0x1]
        %v5742 = vld [vmem:[%s5189 + $0x24] sm:$0xf]
        %v5743 = vld [vmem:[%s5189 + $0x28] sm:$0xf]
        %v5744 = vld [vmem:[%s5189 + $0x2c] sm:$0x1]
        %v5745 = vld [vmem:[%s5189 + $0x34] sm:$0xf]
        %v5746 = vld [vmem:[%s5189 + $0x38] sm:$0xf]
        %v5747 = vld [vmem:[%s5189 + $0x3c] sm:$0x1]
        %v5748 = vld [vmem:[%s5189 + $0x44] sm:$0xf]
        %v5749 = vld [vmem:[%s5189 + $0x48] sm:$0xf]
        %v5750 = vld [vmem:[%s5189 + $0x4c] sm:$0x1]
        %v5751 = vld [vmem:[%s5189 + $0x54] sm:$0xf]
        %v5752 = vld [vmem:[%s5189 + $0x58] sm:$0xf]
        %v5753 = vld [vmem:[%s5189 + $0x5c] sm:$0x1]
        %v5754 = vld [vmem:[%s5189 + $0x64] sm:$0xf]
        %v5755 = vld [vmem:[%s5189 + $0x68] sm:$0xf]
        %v5756 = vld [vmem:[%s5189 + $0x6c] sm:$0x1]
        %v5757 = vld [vmem:[%s5189 + $0x74] sm:$0xf]
        %v5758 = vld [vmem:[%s5189 + $0x78] sm:$0xf]
        %v5759 = vld [vmem:[%s5189 + $0x7c] sm:$0x1]
        %v5761 = vshrl.u32 %v5736, 16
        %v5763 = vrot.slane %v5761, 4
        %v5764 = vshll.u32 %v5736, 16
        %v5766 = vrot.slane %v5764, 5
        %v5767 = vor.u32 %v5763, %v5766
        %v5768 = vrot.slane %v5767, 4
        %v5770 = vshll.u32 %v5737, 16
        %v5772 = vrot.slane %v5770, 5
        %v5773 = vsel %vm1032, %v5768, %v5772
        %v5774 = vshrl.u32 %v5737, 16
        %v5776 = vrot.slane %v5774, 4
        %v5777 = vor.u32 %v5776, %v5772
        %v5778 = vrot.slane %v5777, 4
        %v5780 = vshll.u32 %v5738, 16
        %v5782 = vrot.slane %v5780, 5
        %v5783 = vsel %vm1032, %v5778, %v5782
        %v5785 = vshrl.u32 %v5739, 16
        %v5787 = vrot.slane %v5785, 4
        %v5788 = vshll.u32 %v5739, 16
        %v5790 = vrot.slane %v5788, 5
        %v5791 = vor.u32 %v5787, %v5790
        %v5792 = vrot.slane %v5791, 4
        %v5794 = vshll.u32 %v5740, 16
        %v5796 = vrot.slane %v5794, 5
        %v5797 = vsel %vm1032, %v5792, %v5796
        %v5798 = vshrl.u32 %v5740, 16
        %v5800 = vrot.slane %v5798, 4
        %v5801 = vor.u32 %v5800, %v5796
        %v5802 = vrot.slane %v5801, 4
        %v5804 = vshll.u32 %v5741, 16
        %v5806 = vrot.slane %v5804, 5
        %v5807 = vsel %vm1032, %v5802, %v5806
        %v5809 = vshrl.u32 %v5742, 16
        %v5811 = vrot.slane %v5809, 4
        %v5812 = vshll.u32 %v5742, 16
        %v5814 = vrot.slane %v5812, 5
        %v5815 = vor.u32 %v5811, %v5814
        %v5816 = vrot.slane %v5815, 4
        %v5818 = vshll.u32 %v5743, 16
        %v5820 = vrot.slane %v5818, 5
        %v5821 = vsel %vm1032, %v5816, %v5820
        %v5822 = vshrl.u32 %v5743, 16
        %v5824 = vrot.slane %v5822, 4
        %v5825 = vor.u32 %v5824, %v5820
        %v5826 = vrot.slane %v5825, 4
        %v5828 = vshll.u32 %v5744, 16
        %v5830 = vrot.slane %v5828, 5
        %v5831 = vsel %vm1032, %v5826, %v5830
        %v5833 = vshrl.u32 %v5745, 16
        %v5835 = vrot.slane %v5833, 4
        %v5836 = vshll.u32 %v5745, 16
        %v5838 = vrot.slane %v5836, 5
        %v5839 = vor.u32 %v5835, %v5838
        %v5840 = vrot.slane %v5839, 4
        %v5842 = vshll.u32 %v5746, 16
        %v5844 = vrot.slane %v5842, 5
        %v5845 = vsel %vm1032, %v5840, %v5844
        %v5846 = vshrl.u32 %v5746, 16
        %v5848 = vrot.slane %v5846, 4
        %v5849 = vor.u32 %v5848, %v5844
        %v5850 = vrot.slane %v5849, 4
        %v5852 = vshll.u32 %v5747, 16
        %v5854 = vrot.slane %v5852, 5
        %v5855 = vsel %vm1032, %v5850, %v5854
        %v5857 = vshrl.u32 %v5748, 16
        %v5859 = vrot.slane %v5857, 4
        %v5860 = vshll.u32 %v5748, 16
        %v5862 = vrot.slane %v5860, 5
        %v5863 = vor.u32 %v5859, %v5862
        %v5864 = vrot.slane %v5863, 4
        %v5866 = vshll.u32 %v5749, 16
        %v5868 = vrot.slane %v5866, 5
        %v5869 = vsel %vm1032, %v5864, %v5868
        %v5870 = vshrl.u32 %v5749, 16
        %v5872 = vrot.slane %v5870, 4
        %v5873 = vor.u32 %v5872, %v5868
        %v5874 = vrot.slane %v5873, 4
        %v5876 = vshll.u32 %v5750, 16
        %v5878 = vrot.slane %v5876, 5
        %v5879 = vsel %vm1032, %v5874, %v5878
        %v5881 = vshrl.u32 %v5751, 16
        %v5883 = vrot.slane %v5881, 4
        %v5884 = vshll.u32 %v5751, 16
        %v5886 = vrot.slane %v5884, 5
        %v5887 = vor.u32 %v5883, %v5886
        %v5888 = vrot.slane %v5887, 4
        %v5890 = vshll.u32 %v5752, 16
        %v5892 = vrot.slane %v5890, 5
        %v5893 = vsel %vm1032, %v5888, %v5892
        %v5894 = vshrl.u32 %v5752, 16
        %v5896 = vrot.slane %v5894, 4
        %v5897 = vor.u32 %v5896, %v5892
        %v5898 = vrot.slane %v5897, 4
        %v5900 = vshll.u32 %v5753, 16
        %v5902 = vrot.slane %v5900, 5
        %v5903 = vsel %vm1032, %v5898, %v5902
        %v5905 = vshrl.u32 %v5754, 16
        %v5907 = vrot.slane %v5905, 4
        %v5908 = vshll.u32 %v5754, 16
        %v5910 = vrot.slane %v5908, 5
        %v5911 = vor.u32 %v5907, %v5910
        %v5912 = vrot.slane %v5911, 4
        %v5914 = vshll.u32 %v5755, 16
        %v5916 = vrot.slane %v5914, 5
        %v5917 = vsel %vm1032, %v5912, %v5916
        %v5918 = vshrl.u32 %v5755, 16
        %v5920 = vrot.slane %v5918, 4
        %v5921 = vor.u32 %v5920, %v5916
        %v5922 = vrot.slane %v5921, 4
        %v5924 = vshll.u32 %v5756, 16
        %v5926 = vrot.slane %v5924, 5
        %v5927 = vsel %vm1032, %v5922, %v5926
        %v5929 = vshrl.u32 %v5757, 16
        %v5931 = vrot.slane %v5929, 4
        %v5932 = vshll.u32 %v5757, 16
        %v5934 = vrot.slane %v5932, 5
        %v5935 = vor.u32 %v5931, %v5934
        %v5936 = vrot.slane %v5935, 4
        %v5938 = vshll.u32 %v5758, 16
        %v5940 = vrot.slane %v5938, 5
        %v5941 = vsel %vm1032, %v5936, %v5940
        %v5942 = vshrl.u32 %v5758, 16
        %v5944 = vrot.slane %v5942, 4
        %v5945 = vor.u32 %v5944, %v5940
        %v5946 = vrot.slane %v5945, 4
        %v5948 = vshll.u32 %v5759, 16
        %v5950 = vrot.slane %v5948, 5
        %v5951 = vsel %vm1032, %v5946, %v5950
        %v5952 = vld [vmem:[%s3087] sm:$0x3]
        %v5953 = vunpack.c.l.b16 %v5773
        %v5954 = vunpack.c.l.b16 %v5783
        %v5955 = vunpack.c.l.b16 %v5797
        %v5956 = vunpack.c.l.b16 %v5807
        %v5957 = vunpack.c.l.b16 %v5821
        %v5958 = vunpack.c.l.b16 %v5831
        %v5959 = vunpack.c.l.b16 %v5845
        %v5960 = vunpack.c.l.b16 %v5855
        %v5961 = vunpack.c.l.b16 %v5869
        %v5962 = vunpack.c.l.b16 %v5879
        %v5963 = vunpack.c.l.b16 %v5893
        %v5964 = vunpack.c.l.b16 %v5903
        %v5965 = vunpack.c.l.b16 %v5917
        %v5966 = vunpack.c.l.b16 %v5927
        %v5967 = vunpack.c.l.b16 %v5941
        %v5968 = vunpack.c.l.b16 %v5951
        %v5969 = vpack.c.b16 %v5954, %v5953
        %v5970 = vpack.c.b16 %v5956, %v5955
        %v5971 = vpack.c.b16 %v5958, %v5957
        %v5972 = vpack.c.b16 %v5960, %v5959
        %v5973 = vpack.c.b16 %v5962, %v5961
        %v5974 = vpack.c.b16 %v5964, %v5963
        %v5975 = vpack.c.b16 %v5966, %v5965
        %v5976 = vpack.c.b16 %v5968, %v5967
        %v5978 = vsel %vm732, %v5969, 0
        %v5981 = vsel %vm732, %v5970, 0
        %v5984 = vsel %vm732, %v5971, 0
        %v5987 = vsel %vm732, %v5972, 0
        %v5990 = vsel %vm732, %v5973, 0
        %v5993 = vsel %vm732, %v5974, 0
        %v5996 = vsel %vm732, %v5975, 0
        %v5999 = vsel %vm732, %v5976, 0
        %v6002 = vsel %vm757, %v5952, 0
        %6004 = vmatprep.subr.bf16.mxu0 0
        %6005 = vmatpush1.bf16.msra.mxu0 %v6002
        %6006 = vmatprep.subr.bf16.mxu0 0
        %6007 = vmatpush1.bf16.msra.mxu0 0
        %6008 = vmatprep.subr.bf16.mxu0 0
        %6009 = vmatpush1.bf16.msra.mxu0 0
        %6010 = vmatprep.subr.bf16.mxu0 0
        %6011 = vmatpush1.bf16.msra.mxu0 0
        %6012 = vmatprep.subr.bf16.mxu0 0
        %6013 = vmatpush1.bf16.msra.mxu0 0
        %6014 = vmatprep.subr.bf16.mxu0 0
        %6015 = vmatpush1.bf16.msra.mxu0 0
        %6016 = vmatprep.subr.bf16.mxu0 0
        %6017 = vmatpush1.bf16.msra.mxu0 0
        %6018 = vmatprep.subr.bf16.mxu0 0
        %6019 = vmatpush1.bf16.msra.mxu0 0
        %6020 = vmatprep.subr.bf16.mxu0 0
        %6021 = vmatpush1.bf16.msra.mxu0 0
        %6022 = vmatprep.subr.bf16.mxu0 0
        %6023 = vmatpush1.bf16.msra.mxu0 0
        %6024 = vmatprep.subr.bf16.mxu0 0
        %6025 = vmatpush1.bf16.msra.mxu0 0
        %6026 = vmatprep.subr.bf16.mxu0 0
        %6027 = vmatpush1.bf16.msra.mxu0 0
        %6028 = vmatprep.subr.bf16.mxu0 0
        %6029 = vmatpush1.bf16.msra.mxu0 0
        %6030 = vmatprep.subr.bf16.mxu0 0
        %6031 = vmatpush1.bf16.msra.mxu0 0
        %6032 = vmatprep.subr.bf16.mxu0 0
        %6033 = vmatpush1.bf16.msra.mxu0 0
        %6034 = vmatprep.subr.bf16.mxu0 0
        %6035 = vmatpush1.bf16.msra.mxu0 0
        %6036 = vmatprep.mubr.bf16.mxu0 0
        %6037 = vmatmul.mubr.bf16.gmra.mrb[0].mxu0 %v5978
        %v6038 = vpop.f32.mrb[0].mxu0
        %v6039 = vadd.f32 0.0, %v6038
        %v6040 = vpop.f32.mrb[0].mxu0
        %v6041 = vpop.f32.mrb[0].mxu0
        %v6042 = vadd.f32 0.0, %v6041
        %v6043 = vpop.f32.mrb[0].mxu0
        %6044 = vmatprep.mubr.bf16.mxu0 0
        %6045 = vmatmul.mubr.bf16.gmra.mrb[0].mxu0 %v5981
        %v6046 = vpop.f32.mrb[0].mxu0
        %v6047 = vadd.f32 0.0, %v6046
        %v6048 = vpop.f32.mrb[0].mxu0
        %v6049 = vpop.f32.mrb[0].mxu0
        %v6050 = vadd.f32 0.0, %v6049
        %v6051 = vpop.f32.mrb[0].mxu0
        %6052 = vmatprep.mubr.bf16.mxu0 0
        %6053 = vmatmul.mubr.bf16.gmra.mrb[0].mxu0 %v5984
        %v6054 = vpop.f32.mrb[0].mxu0
        %v6055 = vadd.f32 0.0, %v6054
        %v6056 = vpop.f32.mrb[0].mxu0
        %v6057 = vpop.f32.mrb[0].mxu0
        %v6058 = vadd.f32 0.0, %v6057
        %v6059 = vpop.f32.mrb[0].mxu0
        %6060 = vmatprep.mubr.bf16.mxu0 0
        %6061 = vmatmul.mubr.bf16.gmra.mrb[0].mxu0 %v5987
        %v6062 = vpop.f32.mrb[0].mxu0
        %v6063 = vadd.f32 0.0, %v6062
        %v6064 = vpop.f32.mrb[0].mxu0
        %v6065 = vpop.f32.mrb[0].mxu0
        %v6066 = vadd.f32 0.0, %v6065
        %v6067 = vpop.f32.mrb[0].mxu0
        %6068 = vmatprep.mubr.bf16.mxu0 0
        %6069 = vmatmul.mubr.bf16.gmra.mrb[0].mxu0 %v5990
        %v6070 = vpop.f32.mrb[0].mxu0
        %v6071 = vadd.f32 0.0, %v6070
        %v6072 = vpop.f32.mrb[0].mxu0
        %v6073 = vpop.f32.mrb[0].mxu0
        %v6074 = vadd.f32 0.0, %v6073
        %v6075 = vpop.f32.mrb[0].mxu0
        %6076 = vmatprep.mubr.bf16.mxu0 0
        %6077 = vmatmul.mubr.bf16.gmra.mrb[0].mxu0 %v5993
        %v6078 = vpop.f32.mrb[0].mxu0
        %v6079 = vadd.f32 0.0, %v6078
        %v6080 = vpop.f32.mrb[0].mxu0
        %v6081 = vpop.f32.mrb[0].mxu0
        %v6082 = vadd.f32 0.0, %v6081
        %v6083 = vpop.f32.mrb[0].mxu0
        %6084 = vmatprep.mubr.bf16.mxu0 0
        %6085 = vmatmul.mubr.bf16.gmra.mrb[0].mxu0 %v5996
        %v6086 = vpop.f32.mrb[0].mxu0
        %v6087 = vadd.f32 0.0, %v6086
        %v6088 = vpop.f32.mrb[0].mxu0
        %v6089 = vpop.f32.mrb[0].mxu0
        %v6090 = vadd.f32 0.0, %v6089
        %v6091 = vpop.f32.mrb[0].mxu0
        %6092 = vmatprep.mubr.bf16.mxu0 0
        %6093 = vmatmul.mubr.bf16.gmra.mrb[0].mxu0 %v5999
        %v6094 = vpop.f32.mrb[0].mxu0
        %v6095 = vadd.f32 0.0, %v6094
        %v6096 = vpop.f32.mrb[0].mxu0
        %v6097 = vpop.f32.mrb[0].mxu0
        %v6098 = vadd.f32 0.0, %v6097
        %v6099 = vpop.f32.mrb[0].mxu0
        %6100 = vdwg.mxu0
        %v6101 = vadd.f32 %v5720, %v6039
        %v6102 = vadd.f32 %v5721, %v6042
        %v6103 = vadd.f32 %v5722, %v6047
        %v6104 = vadd.f32 %v5723, %v6050
        %v6105 = vadd.f32 %v5724, %v6055
        %v6106 = vadd.f32 %v5725, %v6058
        %v6107 = vadd.f32 %v5726, %v6063
        %v6108 = vadd.f32 %v5727, %v6066
        %v6109 = vadd.f32 %v5728, %v6071
        %v6110 = vadd.f32 %v5729, %v6074
        %v6111 = vadd.f32 %v5730, %v6079
        %v6112 = vadd.f32 %v5731, %v6082
        %v6113 = vadd.f32 %v5732, %v6087
        %v6114 = vadd.f32 %v5733, %v6090
        %v6115 = vadd.f32 %v5734, %v6095
        %v6116 = vadd.f32 %v5735, %v6098
        %v6117 = vld [vmem:[#allocation8] sm:$0x1]
        %v6119 = vlaneseq
        %v6120 = vshrl.u32 %v6119, 7
        %v6121 = vsub.s32 0, %v6120
        %v6122 = vrot.slane %v6117, %v6121
        %v6124 = vmul.f32 %v6101, %v6122
        %v6125 = vmul.f32 %v6102, %v6122
        %v6126 = vmul.f32 %v6103, %v6122
        %v6127 = vmul.f32 %v6104, %v6122
        %v6128 = vmul.f32 %v6105, %v6122
        %v6129 = vmul.f32 %v6106, %v6122
        %v6130 = vmul.f32 %v6107, %v6122
        %v6131 = vmul.f32 %v6108, %v6122
        %v6132 = vmul.f32 %v6109, %v6122
        %v6133 = vmul.f32 %v6110, %v6122
        %v6134 = vmul.f32 %v6111, %v6122
        %v6135 = vmul.f32 %v6112, %v6122
        %v6136 = vmul.f32 %v6113, %v6122
        %v6137 = vmul.f32 %v6114, %v6122
        %v6138 = vmul.f32 %v6115, %v6122
        %v6139 = vmul.f32 %v6116, %v6122
        %v6140 = vld [vmem:[#allocation9] sm:$0x1]
        %v6142 = vlaneseq
        %v6143 = vshrl.u32 %v6142, 7
        %v6144 = vsub.s32 0, %v6143
        %v6145 = vrot.slane %v6140, %v6144
        %v6147 = vadd.f32 %v6124, %v6145
        %v6148 = vadd.f32 %v6125, %v6145
        %v6149 = vadd.f32 %v6126, %v6145
        %v6150 = vadd.f32 %v6127, %v6145
        %v6151 = vadd.f32 %v6128, %v6145
        %v6152 = vadd.f32 %v6129, %v6145
        %v6153 = vadd.f32 %v6130, %v6145
        %v6154 = vadd.f32 %v6131, %v6145
        %v6155 = vadd.f32 %v6132, %v6145
        %v6156 = vadd.f32 %v6133, %v6145
        %v6157 = vadd.f32 %v6134, %v6145
        %v6158 = vadd.f32 %v6135, %v6145
        %v6159 = vadd.f32 %v6136, %v6145
        %v6160 = vadd.f32 %v6137, %v6145
        %v6161 = vadd.f32 %v6138, %v6145
        %v6162 = vadd.f32 %v6139, %v6145
        %v6163 = vmax.f32 %v6147, 0.0
        %v6164 = vmax.f32 %v6148, 0.0
        %v6165 = vmax.f32 %v6149, 0.0
        %v6166 = vmax.f32 %v6150, 0.0
        %v6167 = vmax.f32 %v6151, 0.0
        %v6168 = vmax.f32 %v6152, 0.0
        %v6169 = vmax.f32 %v6153, 0.0
        %v6170 = vmax.f32 %v6154, 0.0
        %v6171 = vmax.f32 %v6155, 0.0
        %v6172 = vmax.f32 %v6156, 0.0
        %v6173 = vmax.f32 %v6157, 0.0
        %v6174 = vmax.f32 %v6158, 0.0
        %v6175 = vmax.f32 %v6159, 0.0
        %v6176 = vmax.f32 %v6160, 0.0
        %v6177 = vmax.f32 %v6161, 0.0
        %v6178 = vmax.f32 %v6162, 0.0
        %v6179 = vpack.c.bf16 %v6164, %v6163
        %v6180 = vpack.c.bf16 %v6166, %v6165
        %v6181 = vpack.c.bf16 %v6168, %v6167
        %v6182 = vpack.c.bf16 %v6170, %v6169
        %v6183 = vpack.c.bf16 %v6172, %v6171
        %v6184 = vpack.c.bf16 %v6174, %v6173
        %v6185 = vpack.c.bf16 %v6176, %v6175
        %v6186 = vpack.c.bf16 %v6178, %v6177
        %v6195 = vrot.slane %v6179, 4
        %v6196 = vrot.slane %v6180, 4
        %v6197 = vrot.slane %v6181, 4
        %v6198 = vrot.slane %v6182, 4
        %v6199 = vrot.slane %v6183, 4
        %v6200 = vrot.slane %v6184, 4
        %v6201 = vrot.slane %v6185, 4
        %v6202 = vrot.slane %v6186, 4
        %s6211 = scalar_lea.vmem [#allocation2], 144
        %6212 = vst.msk [vmem:[%s6211] sm:$0xf0] %vm3347, %v6195
        %6213 = vst.msk [vmem:[%s6211 + $0x8] sm:$0xf] %vm3349, %v6195
        %6214 = vst.msk [vmem:[%s6211 + $0x10] sm:$0xf0] %vm3347, %v6196
        %6215 = vst.msk [vmem:[%s6211 + $0x18] sm:$0xf] %vm3349, %v6196
        %6216 = vst.msk [vmem:[%s6211 + $0x20] sm:$0xf0] %vm3347, %v6197
        %6217 = vst.msk [vmem:[%s6211 + $0x28] sm:$0xf] %vm3349, %v6197
        %6218 = vst.msk [vmem:[%s6211 + $0x30] sm:$0xf0] %vm3347, %v6198
        %6219 = vst.msk [vmem:[%s6211 + $0x38] sm:$0xf] %vm3349, %v6198
        %6220 = vst.msk [vmem:[%s6211 + $0x40] sm:$0xf0] %vm3347, %v6199
        %6221 = vst.msk [vmem:[%s6211 + $0x48] sm:$0xf] %vm3349, %v6199
        %6222 = vst.msk [vmem:[%s6211 + $0x50] sm:$0xf0] %vm3347, %v6200
        %6223 = vst.msk [vmem:[%s6211 + $0x58] sm:$0xf] %vm3349, %v6200
        %6224 = vst.msk [vmem:[%s6211 + $0x60] sm:$0xf0] %vm3347, %v6201
        %6225 = vst.msk [vmem:[%s6211 + $0x68] sm:$0xf] %vm3349, %v6201
        %6226 = vst.msk [vmem:[%s6211 + $0x70] sm:$0xf0] %vm3347, %v6202
        %6227 = vst.msk [vmem:[%s6211 + $0x78] sm:$0xf] %vm3349, %v6202
        %v6228 = vld [vmem:[#allocation2] sm:$0xf8]
        %v6229 = vld [vmem:[#allocation2 + $0x8] sm:$0xf]
        %v6230 = vld [vmem:[#allocation2 + $0x10] sm:$0xf8]
        %v6231 = vld [vmem:[#allocation2 + $0x18] sm:$0xf]
        %v6232 = vld [vmem:[#allocation2 + $0x20] sm:$0xf8]
        %v6233 = vld [vmem:[#allocation2 + $0x28] sm:$0xf]
        %v6234 = vld [vmem:[#allocation2 + $0x30] sm:$0xf8]
        %v6235 = vld [vmem:[#allocation2 + $0x38] sm:$0xf]
        %v6236 = vld [vmem:[#allocation2 + $0x40] sm:$0xf8]
        %v6237 = vld [vmem:[#allocation2 + $0x48] sm:$0xf]
        %v6238 = vld [vmem:[#allocation2 + $0x50] sm:$0xf8]
        %v6239 = vld [vmem:[#allocation2 + $0x58] sm:$0xf]
        %v6240 = vld [vmem:[#allocation2 + $0x60] sm:$0xf8]
        %v6241 = vld [vmem:[#allocation2 + $0x68] sm:$0xf]
        %v6242 = vld [vmem:[#allocation2 + $0x70] sm:$0xf8]
        %v6243 = vld [vmem:[#allocation2 + $0x78] sm:$0xf]
        %v6245 = vshrl.u32 %v6228, 16
        %v6247 = vrot.slane %v6245, 3
        %v6248 = vshll.u32 %v6228, 16
        %v6250 = vrot.slane %v6248, 4
        %v6251 = vor.u32 %v6247, %v6250
        %v6253 = vshrl.u32 %v6229, 16
        %v6255 = vrot.slane %v6253, 3
        %v6256 = vshll.u32 %v6229, 16
        %v6258 = vrot.slane %v6256, 4
        %v6259 = vor.u32 %v6255, %v6258
        %v6260 = vsel %vm436, %v6251, %v6259
        %v6262 = vshrl.u32 %v6230, 16
        %v6264 = vrot.slane %v6262, 3
        %v6265 = vshll.u32 %v6230, 16
        %v6267 = vrot.slane %v6265, 4
        %v6268 = vor.u32 %v6264, %v6267
        %v6270 = vshrl.u32 %v6231, 16
        %v6272 = vrot.slane %v6270, 3
        %v6273 = vshll.u32 %v6231, 16
        %v6275 = vrot.slane %v6273, 4
        %v6276 = vor.u32 %v6272, %v6275
        %v6277 = vsel %vm436, %v6268, %v6276
        %v6279 = vshrl.u32 %v6232, 16
        %v6281 = vrot.slane %v6279, 3
        %v6282 = vshll.u32 %v6232, 16
        %v6284 = vrot.slane %v6282, 4
        %v6285 = vor.u32 %v6281, %v6284
        %v6287 = vshrl.u32 %v6233, 16
        %v6289 = vrot.slane %v6287, 3
        %v6290 = vshll.u32 %v6233, 16
        %v6292 = vrot.slane %v6290, 4
        %v6293 = vor.u32 %v6289, %v6292
        %v6294 = vsel %vm436, %v6285, %v6293
        %v6296 = vshrl.u32 %v6234, 16
        %v6298 = vrot.slane %v6296, 3
        %v6299 = vshll.u32 %v6234, 16
        %v6301 = vrot.slane %v6299, 4
        %v6302 = vor.u32 %v6298, %v6301
        %v6304 = vshrl.u32 %v6235, 16
        %v6306 = vrot.slane %v6304, 3
        %v6307 = vshll.u32 %v6235, 16
        %v6309 = vrot.slane %v6307, 4
        %v6310 = vor.u32 %v6306, %v6309
        %v6311 = vsel %vm436, %v6302, %v6310
        %v6313 = vshrl.u32 %v6236, 16
        %v6315 = vrot.slane %v6313, 3
        %v6316 = vshll.u32 %v6236, 16
        %v6318 = vrot.slane %v6316, 4
        %v6319 = vor.u32 %v6315, %v6318
        %v6321 = vshrl.u32 %v6237, 16
        %v6323 = vrot.slane %v6321, 3
        %v6324 = vshll.u32 %v6237, 16
        %v6326 = vrot.slane %v6324, 4
        %v6327 = vor.u32 %v6323, %v6326
        %v6328 = vsel %vm436, %v6319, %v6327
        %v6330 = vshrl.u32 %v6238, 16
        %v6332 = vrot.slane %v6330, 3
        %v6333 = vshll.u32 %v6238, 16
        %v6335 = vrot.slane %v6333, 4
        %v6336 = vor.u32 %v6332, %v6335
        %v6338 = vshrl.u32 %v6239, 16
        %v6340 = vrot.slane %v6338, 3
        %v6341 = vshll.u32 %v6239, 16
        %v6343 = vrot.slane %v6341, 4
        %v6344 = vor.u32 %v6340, %v6343
        %v6345 = vsel %vm436, %v6336, %v6344
        %v6347 = vshrl.u32 %v6240, 16
        %v6349 = vrot.slane %v6347, 3
        %v6350 = vshll.u32 %v6240, 16
        %v6352 = vrot.slane %v6350, 4
        %v6353 = vor.u32 %v6349, %v6352
        %v6355 = vshrl.u32 %v6241, 16
        %v6357 = vrot.slane %v6355, 3
        %v6358 = vshll.u32 %v6241, 16
        %v6360 = vrot.slane %v6358, 4
        %v6361 = vor.u32 %v6357, %v6360
        %v6362 = vsel %vm436, %v6353, %v6361
        %v6364 = vshrl.u32 %v6242, 16
        %v6366 = vrot.slane %v6364, 3
        %v6367 = vshll.u32 %v6242, 16
        %v6369 = vrot.slane %v6367, 4
        %v6370 = vor.u32 %v6366, %v6369
        %v6372 = vshrl.u32 %v6243, 16
        %v6374 = vrot.slane %v6372, 3
        %v6375 = vshll.u32 %v6243, 16
        %v6377 = vrot.slane %v6375, 4
        %v6378 = vor.u32 %v6374, %v6377
        %v6379 = vsel %vm436, %v6370, %v6378
        %v6380 = vld [vmem:[#allocation11] sm:$0xf]
        %v6381 = vld [vmem:[#allocation2] sm:$0xf0]
        %v6382 = vld [vmem:[#allocation2 + $0x10] sm:$0xf0]
        %v6383 = vld [vmem:[#allocation2 + $0x20] sm:$0xf0]
        %v6384 = vld [vmem:[#allocation2 + $0x30] sm:$0xf0]
        %v6385 = vld [vmem:[#allocation2 + $0x40] sm:$0xf0]
        %v6386 = vld [vmem:[#allocation2 + $0x50] sm:$0xf0]
        %v6387 = vld [vmem:[#allocation2 + $0x60] sm:$0xf0]
        %v6388 = vld [vmem:[#allocation2 + $0x70] sm:$0xf0]
        %vm6405 = vcmask 1043456
        %v6406 = vrot.slane %v6381, 4
        %v6407 = vrot.slane %v6229, 4
        %v6408 = vsel %vm6405, %v6406, %v6407
        %v6409 = vrot.slane %v6382, 4
        %v6410 = vrot.slane %v6231, 4
        %v6411 = vsel %vm6405, %v6409, %v6410
        %v6412 = vrot.slane %v6383, 4
        %v6413 = vrot.slane %v6233, 4
        %v6414 = vsel %vm6405, %v6412, %v6413
        %v6415 = vrot.slane %v6384, 4
        %v6416 = vrot.slane %v6235, 4
        %v6417 = vsel %vm6405, %v6415, %v6416
        %v6418 = vrot.slane %v6385, 4
        %v6419 = vrot.slane %v6237, 4
        %v6420 = vsel %vm6405, %v6418, %v6419
        %v6421 = vrot.slane %v6386, 4
        %v6422 = vrot.slane %v6239, 4
        %v6423 = vsel %vm6405, %v6421, %v6422
        %v6424 = vrot.slane %v6387, 4
        %v6425 = vrot.slane %v6241, 4
        %v6426 = vsel %vm6405, %v6424, %v6425
        %v6427 = vrot.slane %v6388, 4
        %v6428 = vrot.slane %v6243, 4
        %v6429 = vsel %vm6405, %v6427, %v6428
        %s6430 = scalar_lea.vmem [#allocation11], 4
        %v6431 = vld [vmem:[%s6430] sm:$0xf]
        %v6433 = vsel %vm377, %v6408, 0
        %v6436 = vsel %vm377, %v6411, 0
        %v6439 = vsel %vm377, %v6414, 0
        %v6442 = vsel %vm377, %v6417, 0
        %v6445 = vsel %vm377, %v6420, 0
        %v6448 = vsel %vm377, %v6423, 0
        %v6451 = vsel %vm377, %v6426, 0
        %v6454 = vsel %vm377, %v6429, 0
        %vm6456 = vcmask 1043456
        %v6458 = vsel %vm6456, %v6431, 0
        %6460 = vmatprep.subr.bf16.mxu0 0
        %6461 = vmatpush1.bf16.msra.mxu0 %v6458
        %6462 = vmatprep.subr.bf16.mxu0 0
        %6463 = vmatpush1.bf16.msra.mxu0 0
        %6464 = vmatprep.subr.bf16.mxu0 0
        %6465 = vmatpush1.bf16.msra.mxu0 0
        %6466 = vmatprep.subr.bf16.mxu0 0
        %6467 = vmatpush1.bf16.msra.mxu0 0
        %6468 = vmatprep.subr.bf16.mxu0 0
        %6469 = vmatpush1.bf16.msra.mxu0 0
        %6470 = vmatprep.subr.bf16.mxu0 0
        %6471 = vmatpush1.bf16.msra.mxu0 0
        %6472 = vmatprep.subr.bf16.mxu0 0
        %6473 = vmatpush1.bf16.msra.mxu0 0
        %6474 = vmatprep.subr.bf16.mxu0 0
        %6475 = vmatpush1.bf16.msra.mxu0 0
        %6476 = vmatprep.subr.bf16.mxu0 0
        %6477 = vmatpush1.bf16.msra.mxu0 0
        %6478 = vmatprep.subr.bf16.mxu0 0
        %6479 = vmatpush1.bf16.msra.mxu0 0
        %6480 = vmatprep.subr.bf16.mxu0 0
        %6481 = vmatpush1.bf16.msra.mxu0 0
        %6482 = vmatprep.subr.bf16.mxu0 0
        %6483 = vmatpush1.bf16.msra.mxu0 0
        %6484 = vmatprep.subr.bf16.mxu0 0
        %6485 = vmatpush1.bf16.msra.mxu0 0
        %6486 = vmatprep.subr.bf16.mxu0 0
        %6487 = vmatpush1.bf16.msra.mxu0 0
        %6488 = vmatprep.subr.bf16.mxu0 0
        %6489 = vmatpush1.bf16.msra.mxu0 0
        %6490 = vmatprep.subr.bf16.mxu0 0
        %6491 = vmatpush1.bf16.msra.mxu0 0
        %6492 = vmatprep.mubr.bf16.mxu0 0
        %6493 = vmatmul.mubr.bf16.gmra.mrb[0].mxu0 %v6433
        %v6494 = vpop.f32.mrb[0].mxu0
        %v6495 = vadd.f32 0.0, %v6494
        %v6496 = vpop.f32.mrb[0].mxu0
        %v6497 = vpop.f32.mrb[0].mxu0
        %v6498 = vadd.f32 0.0, %v6497
        %v6499 = vpop.f32.mrb[0].mxu0
        %6500 = vmatprep.mubr.bf16.mxu0 0
        %6501 = vmatmul.mubr.bf16.gmra.mrb[0].mxu0 %v6436
        %v6502 = vpop.f32.mrb[0].mxu0
        %v6503 = vadd.f32 0.0, %v6502
        %v6504 = vpop.f32.mrb[0].mxu0
        %v6505 = vpop.f32.mrb[0].mxu0
        %v6506 = vadd.f32 0.0, %v6505
        %v6507 = vpop.f32.mrb[0].mxu0
        %6508 = vmatprep.mubr.bf16.mxu0 0
        %6509 = vmatmul.mubr.bf16.gmra.mrb[0].mxu0 %v6439
        %v6510 = vpop.f32.mrb[0].mxu0
        %v6511 = vadd.f32 0.0, %v6510
        %v6512 = vpop.f32.mrb[0].mxu0
        %v6513 = vpop.f32.mrb[0].mxu0
        %v6514 = vadd.f32 0.0, %v6513
        %v6515 = vpop.f32.mrb[0].mxu0
        %6516 = vmatprep.mubr.bf16.mxu0 0
        %6517 = vmatmul.mubr.bf16.gmra.mrb[0].mxu0 %v6442
        %v6518 = vpop.f32.mrb[0].mxu0
        %v6519 = vadd.f32 0.0, %v6518
        %v6520 = vpop.f32.mrb[0].mxu0
        %v6521 = vpop.f32.mrb[0].mxu0
        %v6522 = vadd.f32 0.0, %v6521
        %v6523 = vpop.f32.mrb[0].mxu0
        %6524 = vmatprep.mubr.bf16.mxu0 0
        %6525 = vmatmul.mubr.bf16.gmra.mrb[0].mxu0 %v6445
        %v6526 = vpop.f32.mrb[0].mxu0
        %v6527 = vadd.f32 0.0, %v6526
        %v6528 = vpop.f32.mrb[0].mxu0
        %v6529 = vpop.f32.mrb[0].mxu0
        %v6530 = vadd.f32 0.0, %v6529
        %v6531 = vpop.f32.mrb[0].mxu0
        %6532 = vmatprep.mubr.bf16.mxu0 0
        %6533 = vmatmul.mubr.bf16.gmra.mrb[0].mxu0 %v6448
        %v6534 = vpop.f32.mrb[0].mxu0
        %v6535 = vadd.f32 0.0, %v6534
        %v6536 = vpop.f32.mrb[0].mxu0
        %v6537 = vpop.f32.mrb[0].mxu0
        %v6538 = vadd.f32 0.0, %v6537
        %v6539 = vpop.f32.mrb[0].mxu0
        %6540 = vmatprep.mubr.bf16.mxu0 0
        %6541 = vmatmul.mubr.bf16.gmra.mrb[0].mxu0 %v6451
        %v6542 = vpop.f32.mrb[0].mxu0
        %v6543 = vadd.f32 0.0, %v6542
        %v6544 = vpop.f32.mrb[0].mxu0
        %v6545 = vpop.f32.mrb[0].mxu0
        %v6546 = vadd.f32 0.0, %v6545
        %v6547 = vpop.f32.mrb[0].mxu0
        %6548 = vmatprep.mubr.bf16.mxu0 0
        %6549 = vmatmul.mubr.bf16.gmra.mrb[0].mxu0 %v6454
        %v6550 = vpop.f32.mrb[0].mxu0
        %v6551 = vadd.f32 0.0, %v6550
        %v6552 = vpop.f32.mrb[0].mxu0
        %v6553 = vpop.f32.mrb[0].mxu0
        %v6554 = vadd.f32 0.0, %v6553
        %v6555 = vpop.f32.mrb[0].mxu0
        %6556 = vdwg.mxu0
        %v6558 = vsel %vm377, %v6260, 0
        %v6561 = vsel %vm377, %v6277, 0
        %v6564 = vsel %vm377, %v6294, 0
        %v6567 = vsel %vm377, %v6311, 0
        %v6570 = vsel %vm377, %v6328, 0
        %v6573 = vsel %vm377, %v6345, 0
        %v6576 = vsel %vm377, %v6362, 0
        %v6579 = vsel %vm377, %v6379, 0
        %v6582 = vsel %vm6456, %v6380, 0
        %6584 = vmatprep.subr.bf16.mxu0 0
        %6585 = vmatpush1.bf16.msra.mxu0 %v6582
        %6586 = vmatprep.subr.bf16.mxu0 0
        %6587 = vmatpush1.bf16.msra.mxu0 0
        %6588 = vmatprep.subr.bf16.mxu0 0
        %6589 = vmatpush1.bf16.msra.mxu0 0
        %6590 = vmatprep.subr.bf16.mxu0 0
        %6591 = vmatpush1.bf16.msra.mxu0 0
        %6592 = vmatprep.subr.bf16.mxu0 0
        %6593 = vmatpush1.bf16.msra.mxu0 0
        %6594 = vmatprep.subr.bf16.mxu0 0
        %6595 = vmatpush1.bf16.msra.mxu0 0
        %6596 = vmatprep.subr.bf16.mxu0 0
        %6597 = vmatpush1.bf16.msra.mxu0 0
        %6598 = vmatprep.subr.bf16.mxu0 0
        %6599 = vmatpush1.bf16.msra.mxu0 0
        %6600 = vmatprep.subr.bf16.mxu0 0
        %6601 = vmatpush1.bf16.msra.mxu0 0
        %6602 = vmatprep.subr.bf16.mxu0 0
        %6603 = vmatpush1.bf16.msra.mxu0 0
        %6604 = vmatprep.subr.bf16.mxu0 0
        %6605 = vmatpush1.bf16.msra.mxu0 0
        %6606 = vmatprep.subr.bf16.mxu0 0
        %6607 = vmatpush1.bf16.msra.mxu0 0
        %6608 = vmatprep.subr.bf16.mxu0 0
        %6609 = vmatpush1.bf16.msra.mxu0 0
        %6610 = vmatprep.subr.bf16.mxu0 0
        %6611 = vmatpush1.bf16.msra.mxu0 0
        %6612 = vmatprep.subr.bf16.mxu0 0
        %6613 = vmatpush1.bf16.msra.mxu0 0
        %6614 = vmatprep.subr.bf16.mxu0 0
        %6615 = vmatpush1.bf16.msra.mxu0 0
        %6616 = vmatprep.mubr.bf16.mxu0 0
        %6617 = vmatmul.mubr.bf16.gmra.mrb[0].mxu0 %v6558
        %v6618 = vpop.f32.mrb[0].mxu0
        %v6619 = vadd.f32 %v6495, %v6618
        %v6620 = vpop.f32.mrb[0].mxu0
        %v6621 = vpop.f32.mrb[0].mxu0
        %v6622 = vadd.f32 %v6498, %v6621
        %v6623 = vpop.f32.mrb[0].mxu0
        %6624 = vmatprep.mubr.bf16.mxu0 0
        %6625 = vmatmul.mubr.bf16.gmra.mrb[0].mxu0 %v6561
        %v6626 = vpop.f32.mrb[0].mxu0
        %v6627 = vadd.f32 %v6503, %v6626
        %v6628 = vpop.f32.mrb[0].mxu0
        %v6629 = vpop.f32.mrb[0].mxu0
        %v6630 = vadd.f32 %v6506, %v6629
        %v6631 = vpop.f32.mrb[0].mxu0
        %6632 = vmatprep.mubr.bf16.mxu0 0
        %6633 = vmatmul.mubr.bf16.gmra.mrb[0].mxu0 %v6564
        %v6634 = vpop.f32.mrb[0].mxu0
        %v6635 = vadd.f32 %v6511, %v6634
        %v6636 = vpop.f32.mrb[0].mxu0
        %v6637 = vpop.f32.mrb[0].mxu0
        %v6638 = vadd.f32 %v6514, %v6637
        %v6639 = vpop.f32.mrb[0].mxu0
        %6640 = vmatprep.mubr.bf16.mxu0 0
        %6641 = vmatmul.mubr.bf16.gmra.mrb[0].mxu0 %v6567
        %v6642 = vpop.f32.mrb[0].mxu0
        %v6643 = vadd.f32 %v6519, %v6642
        %v6644 = vpop.f32.mrb[0].mxu0
        %v6645 = vpop.f32.mrb[0].mxu0
        %v6646 = vadd.f32 %v6522, %v6645
        %v6647 = vpop.f32.mrb[0].mxu0
        %6648 = vmatprep.mubr.bf16.mxu0 0
        %6649 = vmatmul.mubr.bf16.gmra.mrb[0].mxu0 %v6570
        %v6650 = vpop.f32.mrb[0].mxu0
        %v6651 = vadd.f32 %v6527, %v6650
        %v6652 = vpop.f32.mrb[0].mxu0
        %v6653 = vpop.f32.mrb[0].mxu0
        %v6654 = vadd.f32 %v6530, %v6653
        %v6655 = vpop.f32.mrb[0].mxu0
        %6656 = vmatprep.mubr.bf16.mxu0 0
        %6657 = vmatmul.mubr.bf16.gmra.mrb[0].mxu0 %v6573
        %v6658 = vpop.f32.mrb[0].mxu0
        %v6659 = vadd.f32 %v6535, %v6658
        %v6660 = vpop.f32.mrb[0].mxu0
        %v6661 = vpop.f32.mrb[0].mxu0
        %v6662 = vadd.f32 %v6538, %v6661
        %v6663 = vpop.f32.mrb[0].mxu0
        %6664 = vmatprep.mubr.bf16.mxu0 0
        %6665 = vmatmul.mubr.bf16.gmra.mrb[0].mxu0 %v6576
        %v6666 = vpop.f32.mrb[0].mxu0
        %v6667 = vadd.f32 %v6543, %v6666
        %v6668 = vpop.f32.mrb[0].mxu0
        %v6669 = vpop.f32.mrb[0].mxu0
        %v6670 = vadd.f32 %v6546, %v6669
        %v6671 = vpop.f32.mrb[0].mxu0
        %6672 = vmatprep.mubr.bf16.mxu0 0
        %6673 = vmatmul.mubr.bf16.gmra.mrb[0].mxu0 %v6579
        %v6674 = vpop.f32.mrb[0].mxu0
        %v6675 = vadd.f32 %v6551, %v6674
        %v6676 = vpop.f32.mrb[0].mxu0
        %v6677 = vpop.f32.mrb[0].mxu0
        %v6678 = vadd.f32 %v6554, %v6677
        %v6679 = vpop.f32.mrb[0].mxu0
        %6680 = vdwg.mxu0
        %v6681 = vld [vmem:[#allocation2 + $0x8] sm:$0x1f]
        %v6682 = vld [vmem:[#allocation2 + $0x18] sm:$0x1f]
        %v6683 = vld [vmem:[#allocation2 + $0x28] sm:$0x1f]
        %v6684 = vld [vmem:[#allocation2 + $0x38] sm:$0x1f]
        %v6685 = vld [vmem:[#allocation2 + $0x48] sm:$0x1f]
        %v6686 = vld [vmem:[#allocation2 + $0x58] sm:$0x1f]
        %v6687 = vld [vmem:[#allocation2 + $0x68] sm:$0x1f]
        %v6688 = vld [vmem:[#allocation2 + $0x78] sm:$0x1f]
        %v6690 = vshrl.u32 %v6381, 16
        %v6692 = vrot.slane %v6690, 4
        %v6693 = vshll.u32 %v6381, 16
        %v6695 = vrot.slane %v6693, 5
        %v6696 = vor.u32 %v6692, %v6695
        %v6698 = vshrl.u32 %v6681, 16
        %v6700 = vrot.slane %v6698, 4
        %v6701 = vshll.u32 %v6681, 16
        %v6703 = vrot.slane %v6701, 5
        %v6704 = vor.u32 %v6700, %v6703
        %v6705 = vsel %vm1030, %v6696, %v6704
        %v6707 = vshrl.u32 %v6382, 16
        %v6709 = vrot.slane %v6707, 4
        %v6710 = vshll.u32 %v6382, 16
        %v6712 = vrot.slane %v6710, 5
        %v6713 = vor.u32 %v6709, %v6712
        %v6715 = vshrl.u32 %v6682, 16
        %v6717 = vrot.slane %v6715, 4
        %v6718 = vshll.u32 %v6682, 16
        %v6720 = vrot.slane %v6718, 5
        %v6721 = vor.u32 %v6717, %v6720
        %v6722 = vsel %vm1030, %v6713, %v6721
        %v6724 = vshrl.u32 %v6383, 16
        %v6726 = vrot.slane %v6724, 4
        %v6727 = vshll.u32 %v6383, 16
        %v6729 = vrot.slane %v6727, 5
        %v6730 = vor.u32 %v6726, %v6729
        %v6732 = vshrl.u32 %v6683, 16
        %v6734 = vrot.slane %v6732, 4
        %v6735 = vshll.u32 %v6683, 16
        %v6737 = vrot.slane %v6735, 5
        %v6738 = vor.u32 %v6734, %v6737
        %v6739 = vsel %vm1030, %v6730, %v6738
        %v6741 = vshrl.u32 %v6384, 16
        %v6743 = vrot.slane %v6741, 4
        %v6744 = vshll.u32 %v6384, 16
        %v6746 = vrot.slane %v6744, 5
        %v6747 = vor.u32 %v6743, %v6746
        %v6749 = vshrl.u32 %v6684, 16
        %v6751 = vrot.slane %v6749, 4
        %v6752 = vshll.u32 %v6684, 16
        %v6754 = vrot.slane %v6752, 5
        %v6755 = vor.u32 %v6751, %v6754
        %v6756 = vsel %vm1030, %v6747, %v6755
        %v6758 = vshrl.u32 %v6385, 16
        %v6760 = vrot.slane %v6758, 4
        %v6761 = vshll.u32 %v6385, 16
        %v6763 = vrot.slane %v6761, 5
        %v6764 = vor.u32 %v6760, %v6763
        %v6766 = vshrl.u32 %v6685, 16
        %v6768 = vrot.slane %v6766, 4
        %v6769 = vshll.u32 %v6685, 16
        %v6771 = vrot.slane %v6769, 5
        %v6772 = vor.u32 %v6768, %v6771
        %v6773 = vsel %vm1030, %v6764, %v6772
        %v6775 = vshrl.u32 %v6386, 16
        %v6777 = vrot.slane %v6775, 4
        %v6778 = vshll.u32 %v6386, 16
        %v6780 = vrot.slane %v6778, 5
        %v6781 = vor.u32 %v6777, %v6780
        %v6783 = vshrl.u32 %v6686, 16
        %v6785 = vrot.slane %v6783, 4
        %v6786 = vshll.u32 %v6686, 16
        %v6788 = vrot.slane %v6786, 5
        %v6789 = vor.u32 %v6785, %v6788
        %v6790 = vsel %vm1030, %v6781, %v6789
        %v6792 = vshrl.u32 %v6387, 16
        %v6794 = vrot.slane %v6792, 4
        %v6795 = vshll.u32 %v6387, 16
        %v6797 = vrot.slane %v6795, 5
        %v6798 = vor.u32 %v6794, %v6797
        %v6800 = vshrl.u32 %v6687, 16
        %v6802 = vrot.slane %v6800, 4
        %v6803 = vshll.u32 %v6687, 16
        %v6805 = vrot.slane %v6803, 5
        %v6806 = vor.u32 %v6802, %v6805
        %v6807 = vsel %vm1030, %v6798, %v6806
        %v6809 = vshrl.u32 %v6388, 16
        %v6811 = vrot.slane %v6809, 4
        %v6812 = vshll.u32 %v6388, 16
        %v6814 = vrot.slane %v6812, 5
        %v6815 = vor.u32 %v6811, %v6814
        %v6817 = vshrl.u32 %v6688, 16
        %v6819 = vrot.slane %v6817, 4
        %v6820 = vshll.u32 %v6688, 16
        %v6822 = vrot.slane %v6820, 5
        %v6823 = vor.u32 %v6819, %v6822
        %v6824 = vsel %vm1030, %v6815, %v6823
        %s6825 = scalar_lea.vmem [#allocation11], 8
        %v6826 = vld [vmem:[%s6825] sm:$0xf]
        %v6828 = vsel %vm377, %v6705, 0
        %v6831 = vsel %vm377, %v6722, 0
        %v6834 = vsel %vm377, %v6739, 0
        %v6837 = vsel %vm377, %v6756, 0
        %v6840 = vsel %vm377, %v6773, 0
        %v6843 = vsel %vm377, %v6790, 0
        %v6846 = vsel %vm377, %v6807, 0
        %v6849 = vsel %vm377, %v6824, 0
        %v6852 = vsel %vm6456, %v6826, 0
        %6854 = vmatprep.subr.bf16.mxu0 0
        %6855 = vmatpush1.bf16.msra.mxu0 %v6852
        %6856 = vmatprep.subr.bf16.mxu0 0
        %6857 = vmatpush1.bf16.msra.mxu0 0
        %6858 = vmatprep.subr.bf16.mxu0 0
        %6859 = vmatpush1.bf16.msra.mxu0 0
        %6860 = vmatprep.subr.bf16.mxu0 0
        %6861 = vmatpush1.bf16.msra.mxu0 0
        %6862 = vmatprep.subr.bf16.mxu0 0
        %6863 = vmatpush1.bf16.msra.mxu0 0
        %6864 = vmatprep.subr.bf16.mxu0 0
        %6865 = vmatpush1.bf16.msra.mxu0 0
        %6866 = vmatprep.subr.bf16.mxu0 0
        %6867 = vmatpush1.bf16.msra.mxu0 0
        %6868 = vmatprep.subr.bf16.mxu0 0
        %6869 = vmatpush1.bf16.msra.mxu0 0
        %6870 = vmatprep.subr.bf16.mxu0 0
        %6871 = vmatpush1.bf16.msra.mxu0 0
        %6872 = vmatprep.subr.bf16.mxu0 0
        %6873 = vmatpush1.bf16.msra.mxu0 0
        %6874 = vmatprep.subr.bf16.mxu0 0
        %6875 = vmatpush1.bf16.msra.mxu0 0
        %6876 = vmatprep.subr.bf16.mxu0 0
        %6877 = vmatpush1.bf16.msra.mxu0 0
        %6878 = vmatprep.subr.bf16.mxu0 0
        %6879 = vmatpush1.bf16.msra.mxu0 0
        %6880 = vmatprep.subr.bf16.mxu0 0
        %6881 = vmatpush1.bf16.msra.mxu0 0
        %6882 = vmatprep.subr.bf16.mxu0 0
        %6883 = vmatpush1.bf16.msra.mxu0 0
        %6884 = vmatprep.subr.bf16.mxu0 0
        %6885 = vmatpush1.bf16.msra.mxu0 0
        %6886 = vmatprep.mubr.bf16.mxu0 0
        %6887 = vmatmul.mubr.bf16.gmra.mrb[0].mxu0 %v6828
        %v6888 = vpop.f32.mrb[0].mxu0
        %v6889 = vadd.f32 0.0, %v6888
        %v6890 = vpop.f32.mrb[0].mxu0
        %v6891 = vpop.f32.mrb[0].mxu0
        %v6892 = vadd.f32 0.0, %v6891
        %v6893 = vpop.f32.mrb[0].mxu0
        %6894 = vmatprep.mubr.bf16.mxu0 0
        %6895 = vmatmul.mubr.bf16.gmra.mrb[0].mxu0 %v6831
        %v6896 = vpop.f32.mrb[0].mxu0
        %v6897 = vadd.f32 0.0, %v6896
        %v6898 = vpop.f32.mrb[0].mxu0
        %v6899 = vpop.f32.mrb[0].mxu0
        %v6900 = vadd.f32 0.0, %v6899
        %v6901 = vpop.f32.mrb[0].mxu0
        %6902 = vmatprep.mubr.bf16.mxu0 0
        %6903 = vmatmul.mubr.bf16.gmra.mrb[0].mxu0 %v6834
        %v6904 = vpop.f32.mrb[0].mxu0
        %v6905 = vadd.f32 0.0, %v6904
        %v6906 = vpop.f32.mrb[0].mxu0
        %v6907 = vpop.f32.mrb[0].mxu0
        %v6908 = vadd.f32 0.0, %v6907
        %v6909 = vpop.f32.mrb[0].mxu0
        %6910 = vmatprep.mubr.bf16.mxu0 0
        %6911 = vmatmul.mubr.bf16.gmra.mrb[0].mxu0 %v6837
        %v6912 = vpop.f32.mrb[0].mxu0
        %v6913 = vadd.f32 0.0, %v6912
        %v6914 = vpop.f32.mrb[0].mxu0
        %v6915 = vpop.f32.mrb[0].mxu0
        %v6916 = vadd.f32 0.0, %v6915
        %v6917 = vpop.f32.mrb[0].mxu0
        %6918 = vmatprep.mubr.bf16.mxu0 0
        %6919 = vmatmul.mubr.bf16.gmra.mrb[0].mxu0 %v6840
        %v6920 = vpop.f32.mrb[0].mxu0
        %v6921 = vadd.f32 0.0, %v6920
        %v6922 = vpop.f32.mrb[0].mxu0
        %v6923 = vpop.f32.mrb[0].mxu0
        %v6924 = vadd.f32 0.0, %v6923
        %v6925 = vpop.f32.mrb[0].mxu0
        %6926 = vmatprep.mubr.bf16.mxu0 0
        %6927 = vmatmul.mubr.bf16.gmra.mrb[0].mxu0 %v6843
        %v6928 = vpop.f32.mrb[0].mxu0
        %v6929 = vadd.f32 0.0, %v6928
        %v6930 = vpop.f32.mrb[0].mxu0
        %v6931 = vpop.f32.mrb[0].mxu0
        %v6932 = vadd.f32 0.0, %v6931
        %v6933 = vpop.f32.mrb[0].mxu0
        %6934 = vmatprep.mubr.bf16.mxu0 0
        %6935 = vmatmul.mubr.bf16.gmra.mrb[0].mxu0 %v6846
        %v6936 = vpop.f32.mrb[0].mxu0
        %v6937 = vadd.f32 0.0, %v6936
        %v6938 = vpop.f32.mrb[0].mxu0
        %v6939 = vpop.f32.mrb[0].mxu0
        %v6940 = vadd.f32 0.0, %v6939
        %v6941 = vpop.f32.mrb[0].mxu0
        %6942 = vmatprep.mubr.bf16.mxu0 0
        %6943 = vmatmul.mubr.bf16.gmra.mrb[0].mxu0 %v6849
        %v6944 = vpop.f32.mrb[0].mxu0
        %v6945 = vadd.f32 0.0, %v6944
        %v6946 = vpop.f32.mrb[0].mxu0
        %v6947 = vpop.f32.mrb[0].mxu0
        %v6948 = vadd.f32 0.0, %v6947
        %v6949 = vpop.f32.mrb[0].mxu0
        %6950 = vdwg.mxu0
        %v6951 = vadd.f32 %v6619, %v6889
        %v6952 = vadd.f32 %v6622, %v6892
        %v6953 = vadd.f32 %v6627, %v6897
        %v6954 = vadd.f32 %v6630, %v6900
        %v6955 = vadd.f32 %v6635, %v6905
        %v6956 = vadd.f32 %v6638, %v6908
        %v6957 = vadd.f32 %v6643, %v6913
        %v6958 = vadd.f32 %v6646, %v6916
        %v6959 = vadd.f32 %v6651, %v6921
        %v6960 = vadd.f32 %v6654, %v6924
        %v6961 = vadd.f32 %v6659, %v6929
        %v6962 = vadd.f32 %v6662, %v6932
        %v6963 = vadd.f32 %v6667, %v6937
        %v6964 = vadd.f32 %v6670, %v6940
        %v6965 = vadd.f32 %v6675, %v6945
        %v6966 = vadd.f32 %v6678, %v6948
        %v6967 = vld [vmem:[%s383] sm:$0xf8]
        %v6968 = vld [vmem:[%s383 + $0x8] sm:$0xf]
        %v6969 = vld [vmem:[%s383 + $0x10] sm:$0xf8]
        %v6970 = vld [vmem:[%s383 + $0x18] sm:$0xf]
        %v6971 = vld [vmem:[%s383 + $0x20] sm:$0xf8]
        %v6972 = vld [vmem:[%s383 + $0x28] sm:$0xf]
        %v6973 = vld [vmem:[%s383 + $0x30] sm:$0xf8]
        %v6974 = vld [vmem:[%s383 + $0x38] sm:$0xf]
        %v6975 = vld [vmem:[%s383 + $0x40] sm:$0xf8]
        %v6976 = vld [vmem:[%s383 + $0x48] sm:$0xf]
        %v6977 = vld [vmem:[%s383 + $0x50] sm:$0xf8]
        %v6978 = vld [vmem:[%s383 + $0x58] sm:$0xf]
        %v6979 = vld [vmem:[%s383 + $0x60] sm:$0xf8]
        %v6980 = vld [vmem:[%s383 + $0x68] sm:$0xf]
        %v6981 = vld [vmem:[%s383 + $0x70] sm:$0xf8]
        %v6982 = vld [vmem:[%s383 + $0x78] sm:$0xf]
        %v6984 = vshrl.u32 %v6967, 16
        %v6986 = vrot.slane %v6984, 3
        %v6987 = vshll.u32 %v6967, 16
        %v6989 = vrot.slane %v6987, 4
        %v6990 = vor.u32 %v6986, %v6989
        %v6992 = vshrl.u32 %v6968, 16
        %v6994 = vrot.slane %v6992, 3
        %v6995 = vshll.u32 %v6968, 16
        %v6997 = vrot.slane %v6995, 4
        %v6998 = vor.u32 %v6994, %v6997
        %v6999 = vsel %vm436, %v6990, %v6998
        %v7001 = vshrl.u32 %v6969, 16
        %v7003 = vrot.slane %v7001, 3
        %v7004 = vshll.u32 %v6969, 16
        %v7006 = vrot.slane %v7004, 4
        %v7007 = vor.u32 %v7003, %v7006
        %v7009 = vshrl.u32 %v6970, 16
        %v7011 = vrot.slane %v7009, 3
        %v7012 = vshll.u32 %v6970, 16
        %v7014 = vrot.slane %v7012, 4
        %v7015 = vor.u32 %v7011, %v7014
        %v7016 = vsel %vm436, %v7007, %v7015
        %v7018 = vshrl.u32 %v6971, 16
        %v7020 = vrot.slane %v7018, 3
        %v7021 = vshll.u32 %v6971, 16
        %v7023 = vrot.slane %v7021, 4
        %v7024 = vor.u32 %v7020, %v7023
        %v7026 = vshrl.u32 %v6972, 16
        %v7028 = vrot.slane %v7026, 3
        %v7029 = vshll.u32 %v6972, 16
        %v7031 = vrot.slane %v7029, 4
        %v7032 = vor.u32 %v7028, %v7031
        %v7033 = vsel %vm436, %v7024, %v7032
        %v7035 = vshrl.u32 %v6973, 16
        %v7037 = vrot.slane %v7035, 3
        %v7038 = vshll.u32 %v6973, 16
        %v7040 = vrot.slane %v7038, 4
        %v7041 = vor.u32 %v7037, %v7040
        %v7043 = vshrl.u32 %v6974, 16
        %v7045 = vrot.slane %v7043, 3
        %v7046 = vshll.u32 %v6974, 16
        %v7048 = vrot.slane %v7046, 4
        %v7049 = vor.u32 %v7045, %v7048
        %v7050 = vsel %vm436, %v7041, %v7049
        %v7052 = vshrl.u32 %v6975, 16
        %v7054 = vrot.slane %v7052, 3
        %v7055 = vshll.u32 %v6975, 16
        %v7057 = vrot.slane %v7055, 4
        %v7058 = vor.u32 %v7054, %v7057
        %v7060 = vshrl.u32 %v6976, 16
        %v7062 = vrot.slane %v7060, 3
        %v7063 = vshll.u32 %v6976, 16
        %v7065 = vrot.slane %v7063, 4
        %v7066 = vor.u32 %v7062, %v7065
        %v7067 = vsel %vm436, %v7058, %v7066
        %v7069 = vshrl.u32 %v6977, 16
        %v7071 = vrot.slane %v7069, 3
        %v7072 = vshll.u32 %v6977, 16
        %v7074 = vrot.slane %v7072, 4
        %v7075 = vor.u32 %v7071, %v7074
        %v7077 = vshrl.u32 %v6978, 16
        %v7079 = vrot.slane %v7077, 3
        %v7080 = vshll.u32 %v6978, 16
        %v7082 = vrot.slane %v7080, 4
        %v7083 = vor.u32 %v7079, %v7082
        %v7084 = vsel %vm436, %v7075, %v7083
        %v7086 = vshrl.u32 %v6979, 16
        %v7088 = vrot.slane %v7086, 3
        %v7089 = vshll.u32 %v6979, 16
        %v7091 = vrot.slane %v7089, 4
        %v7092 = vor.u32 %v7088, %v7091
        %v7094 = vshrl.u32 %v6980, 16
        %v7096 = vrot.slane %v7094, 3
        %v7097 = vshll.u32 %v6980, 16
        %v7099 = vrot.slane %v7097, 4
        %v7100 = vor.u32 %v7096, %v7099
        %v7101 = vsel %vm436, %v7092, %v7100
        %v7103 = vshrl.u32 %v6981, 16
        %v7105 = vrot.slane %v7103, 3
        %v7106 = vshll.u32 %v6981, 16
        %v7108 = vrot.slane %v7106, 4
        %v7109 = vor.u32 %v7105, %v7108
        %v7111 = vshrl.u32 %v6982, 16
        %v7113 = vrot.slane %v7111, 3
        %v7114 = vshll.u32 %v6982, 16
        %v7116 = vrot.slane %v7114, 4
        %v7117 = vor.u32 %v7113, %v7116
        %v7118 = vsel %vm436, %v7109, %v7117
        %s7119 = scalar_lea.vmem [#allocation11], 12
        %v7120 = vld [vmem:[%s7119] sm:$0xf]
        %v7122 = vsel %vm377, %v6999, 0
        %v7125 = vsel %vm377, %v7016, 0
        %v7128 = vsel %vm377, %v7033, 0
        %v7131 = vsel %vm377, %v7050, 0
        %v7134 = vsel %vm377, %v7067, 0
        %v7137 = vsel %vm377, %v7084, 0
        %v7140 = vsel %vm377, %v7101, 0
        %v7143 = vsel %vm377, %v7118, 0
        %v7146 = vsel %vm6456, %v7120, 0
        %7148 = vmatprep.subr.bf16.mxu0 0
        %7149 = vmatpush1.bf16.msra.mxu0 %v7146
        %7150 = vmatprep.subr.bf16.mxu0 0
        %7151 = vmatpush1.bf16.msra.mxu0 0
        %7152 = vmatprep.subr.bf16.mxu0 0
        %7153 = vmatpush1.bf16.msra.mxu0 0
        %7154 = vmatprep.subr.bf16.mxu0 0
        %7155 = vmatpush1.bf16.msra.mxu0 0
        %7156 = vmatprep.subr.bf16.mxu0 0
        %7157 = vmatpush1.bf16.msra.mxu0 0
        %7158 = vmatprep.subr.bf16.mxu0 0
        %7159 = vmatpush1.bf16.msra.mxu0 0
        %7160 = vmatprep.subr.bf16.mxu0 0
        %7161 = vmatpush1.bf16.msra.mxu0 0
        %7162 = vmatprep.subr.bf16.mxu0 0
        %7163 = vmatpush1.bf16.msra.mxu0 0
        %7164 = vmatprep.subr.bf16.mxu0 0
        %7165 = vmatpush1.bf16.msra.mxu0 0
        %7166 = vmatprep.subr.bf16.mxu0 0
        %7167 = vmatpush1.bf16.msra.mxu0 0
        %7168 = vmatprep.subr.bf16.mxu0 0
        %7169 = vmatpush1.bf16.msra.mxu0 0
        %7170 = vmatprep.subr.bf16.mxu0 0
        %7171 = vmatpush1.bf16.msra.mxu0 0
        %7172 = vmatprep.subr.bf16.mxu0 0
        %7173 = vmatpush1.bf16.msra.mxu0 0
        %7174 = vmatprep.subr.bf16.mxu0 0
        %7175 = vmatpush1.bf16.msra.mxu0 0
        %7176 = vmatprep.subr.bf16.mxu0 0
        %7177 = vmatpush1.bf16.msra.mxu0 0
        %7178 = vmatprep.subr.bf16.mxu0 0
        %7179 = vmatpush1.bf16.msra.mxu0 0
        %7180 = vmatprep.mubr.bf16.mxu0 0
        %7181 = vmatmul.mubr.bf16.gmra.mrb[0].mxu0 %v7122
        %v7182 = vpop.f32.mrb[0].mxu0
        %v7183 = vadd.f32 0.0, %v7182
        %v7184 = vpop.f32.mrb[0].mxu0
        %v7185 = vpop.f32.mrb[0].mxu0
        %v7186 = vadd.f32 0.0, %v7185
        %v7187 = vpop.f32.mrb[0].mxu0
        %7188 = vmatprep.mubr.bf16.mxu0 0
        %7189 = vmatmul.mubr.bf16.gmra.mrb[0].mxu0 %v7125
        %v7190 = vpop.f32.mrb[0].mxu0
        %v7191 = vadd.f32 0.0, %v7190
        %v7192 = vpop.f32.mrb[0].mxu0
        %v7193 = vpop.f32.mrb[0].mxu0
        %v7194 = vadd.f32 0.0, %v7193
        %v7195 = vpop.f32.mrb[0].mxu0
        %7196 = vmatprep.mubr.bf16.mxu0 0
        %7197 = vmatmul.mubr.bf16.gmra.mrb[0].mxu0 %v7128
        %v7198 = vpop.f32.mrb[0].mxu0
        %v7199 = vadd.f32 0.0, %v7198
        %v7200 = vpop.f32.mrb[0].mxu0
        %v7201 = vpop.f32.mrb[0].mxu0
        %v7202 = vadd.f32 0.0, %v7201
        %v7203 = vpop.f32.mrb[0].mxu0
        %7204 = vmatprep.mubr.bf16.mxu0 0
        %7205 = vmatmul.mubr.bf16.gmra.mrb[0].mxu0 %v7131
        %v7206 = vpop.f32.mrb[0].mxu0
        %v7207 = vadd.f32 0.0, %v7206
        %v7208 = vpop.f32.mrb[0].mxu0
        %v7209 = vpop.f32.mrb[0].mxu0
        %v7210 = vadd.f32 0.0, %v7209
        %v7211 = vpop.f32.mrb[0].mxu0
        %7212 = vmatprep.mubr.bf16.mxu0 0
        %7213 = vmatmul.mubr.bf16.gmra.mrb[0].mxu0 %v7134
        %v7214 = vpop.f32.mrb[0].mxu0
        %v7215 = vadd.f32 0.0, %v7214
        %v7216 = vpop.f32.mrb[0].mxu0
        %v7217 = vpop.f32.mrb[0].mxu0
        %v7218 = vadd.f32 0.0, %v7217
        %v7219 = vpop.f32.mrb[0].mxu0
        %7220 = vmatprep.mubr.bf16.mxu0 0
        %7221 = vmatmul.mubr.bf16.gmra.mrb[0].mxu0 %v7137
        %v7222 = vpop.f32.mrb[0].mxu0
        %v7223 = vadd.f32 0.0, %v7222
        %v7224 = vpop.f32.mrb[0].mxu0
        %v7225 = vpop.f32.mrb[0].mxu0
        %v7226 = vadd.f32 0.0, %v7225
        %v7227 = vpop.f32.mrb[0].mxu0
        %7228 = vmatprep.mubr.bf16.mxu0 0
        %7229 = vmatmul.mubr.bf16.gmra.mrb[0].mxu0 %v7140
        %v7230 = vpop.f32.mrb[0].mxu0
        %v7231 = vadd.f32 0.0, %v7230
        %v7232 = vpop.f32.mrb[0].mxu0
        %v7233 = vpop.f32.mrb[0].mxu0
        %v7234 = vadd.f32 0.0, %v7233
        %v7235 = vpop.f32.mrb[0].mxu0
        %7236 = vmatprep.mubr.bf16.mxu0 0
        %7237 = vmatmul.mubr.bf16.gmra.mrb[0].mxu0 %v7143
        %v7238 = vpop.f32.mrb[0].mxu0
        %v7239 = vadd.f32 0.0, %v7238
        %v7240 = vpop.f32.mrb[0].mxu0
        %v7241 = vpop.f32.mrb[0].mxu0
        %v7242 = vadd.f32 0.0, %v7241
        %v7243 = vpop.f32.mrb[0].mxu0
        %7244 = vdwg.mxu0
        %v7245 = vadd.f32 %v6951, %v7183
        %v7246 = vadd.f32 %v6952, %v7186
        %v7247 = vadd.f32 %v6953, %v7191
        %v7248 = vadd.f32 %v6954, %v7194
        %v7249 = vadd.f32 %v6955, %v7199
        %v7250 = vadd.f32 %v6956, %v7202
        %v7251 = vadd.f32 %v6957, %v7207
        %v7252 = vadd.f32 %v6958, %v7210
        %v7253 = vadd.f32 %v6959, %v7215
        %v7254 = vadd.f32 %v6960, %v7218
        %v7255 = vadd.f32 %v6961, %v7223
        %v7256 = vadd.f32 %v6962, %v7226
        %v7257 = vadd.f32 %v6963, %v7231
        %v7258 = vadd.f32 %v6964, %v7234
        %v7259 = vadd.f32 %v6965, %v7239
        %v7260 = vadd.f32 %v6966, %v7242
        %v7261 = vld [vmem:[%s383] sm:$0xf0]
        %v7262 = vld [vmem:[%s383 + $0x10] sm:$0xf0]
        %v7263 = vld [vmem:[%s383 + $0x20] sm:$0xf0]
        %v7264 = vld [vmem:[%s383 + $0x30] sm:$0xf0]
        %v7265 = vld [vmem:[%s383 + $0x40] sm:$0xf0]
        %v7266 = vld [vmem:[%s383 + $0x50] sm:$0xf0]
        %v7267 = vld [vmem:[%s383 + $0x60] sm:$0xf0]
        %v7268 = vld [vmem:[%s383 + $0x70] sm:$0xf0]
        %v7285 = vrot.slane %v7261, 4
        %v7286 = vrot.slane %v6968, 4
        %v7287 = vsel %vm6405, %v7285, %v7286
        %v7288 = vrot.slane %v7262, 4
        %v7289 = vrot.slane %v6970, 4
        %v7290 = vsel %vm6405, %v7288, %v7289
        %v7291 = vrot.slane %v7263, 4
        %v7292 = vrot.slane %v6972, 4
        %v7293 = vsel %vm6405, %v7291, %v7292
        %v7294 = vrot.slane %v7264, 4
        %v7295 = vrot.slane %v6974, 4
        %v7296 = vsel %vm6405, %v7294, %v7295
        %v7297 = vrot.slane %v7265, 4
        %v7298 = vrot.slane %v6976, 4
        %v7299 = vsel %vm6405, %v7297, %v7298
        %v7300 = vrot.slane %v7266, 4
        %v7301 = vrot.slane %v6978, 4
        %v7302 = vsel %vm6405, %v7300, %v7301
        %v7303 = vrot.slane %v7267, 4
        %v7304 = vrot.slane %v6980, 4
        %v7305 = vsel %vm6405, %v7303, %v7304
        %v7306 = vrot.slane %v7268, 4
        %v7307 = vrot.slane %v6982, 4
        %v7308 = vsel %vm6405, %v7306, %v7307
        %s7309 = scalar_lea.vmem [#allocation11], 16
        %v7310 = vld [vmem:[%s7309] sm:$0xf]
        %v7312 = vsel %vm377, %v7287, 0
        %v7315 = vsel %vm377, %v7290, 0
        %v7318 = vsel %vm377, %v7293, 0
        %v7321 = vsel %vm377, %v7296, 0
        %v7324 = vsel %vm377, %v7299, 0
        %v7327 = vsel %vm377, %v7302, 0
        %v7330 = vsel %vm377, %v7305, 0
        %v7333 = vsel %vm377, %v7308, 0
        %v7336 = vsel %vm6456, %v7310, 0
        %7338 = vmatprep.subr.bf16.mxu0 0
        %7339 = vmatpush1.bf16.msra.mxu0 %v7336
        %7340 = vmatprep.subr.bf16.mxu0 0
        %7341 = vmatpush1.bf16.msra.mxu0 0
        %7342 = vmatprep.subr.bf16.mxu0 0
        %7343 = vmatpush1.bf16.msra.mxu0 0
        %7344 = vmatprep.subr.bf16.mxu0 0
        %7345 = vmatpush1.bf16.msra.mxu0 0
        %7346 = vmatprep.subr.bf16.mxu0 0
        %7347 = vmatpush1.bf16.msra.mxu0 0
        %7348 = vmatprep.subr.bf16.mxu0 0
        %7349 = vmatpush1.bf16.msra.mxu0 0
        %7350 = vmatprep.subr.bf16.mxu0 0
        %7351 = vmatpush1.bf16.msra.mxu0 0
        %7352 = vmatprep.subr.bf16.mxu0 0
        %7353 = vmatpush1.bf16.msra.mxu0 0
        %7354 = vmatprep.subr.bf16.mxu0 0
        %7355 = vmatpush1.bf16.msra.mxu0 0
        %7356 = vmatprep.subr.bf16.mxu0 0
        %7357 = vmatpush1.bf16.msra.mxu0 0
        %7358 = vmatprep.subr.bf16.mxu0 0
        %7359 = vmatpush1.bf16.msra.mxu0 0
        %7360 = vmatprep.subr.bf16.mxu0 0
        %7361 = vmatpush1.bf16.msra.mxu0 0
        %7362 = vmatprep.subr.bf16.mxu0 0
        %7363 = vmatpush1.bf16.msra.mxu0 0
        %7364 = vmatprep.subr.bf16.mxu0 0
        %7365 = vmatpush1.bf16.msra.mxu0 0
        %7366 = vmatprep.subr.bf16.mxu0 0
        %7367 = vmatpush1.bf16.msra.mxu0 0
        %7368 = vmatprep.subr.bf16.mxu0 0
        %7369 = vmatpush1.bf16.msra.mxu0 0
        %7370 = vmatprep.mubr.bf16.mxu0 0
        %7371 = vmatmul.mubr.bf16.gmra.mrb[0].mxu0 %v7312
        %v7372 = vpop.f32.mrb[0].mxu0
        %v7373 = vadd.f32 0.0, %v7372
        %v7374 = vpop.f32.mrb[0].mxu0
        %v7375 = vpop.f32.mrb[0].mxu0
        %v7376 = vadd.f32 0.0, %v7375
        %v7377 = vpop.f32.mrb[0].mxu0
        %7378 = vmatprep.mubr.bf16.mxu0 0
        %7379 = vmatmul.mubr.bf16.gmra.mrb[0].mxu0 %v7315
        %v7380 = vpop.f32.mrb[0].mxu0
        %v7381 = vadd.f32 0.0, %v7380
        %v7382 = vpop.f32.mrb[0].mxu0
        %v7383 = vpop.f32.mrb[0].mxu0
        %v7384 = vadd.f32 0.0, %v7383
        %v7385 = vpop.f32.mrb[0].mxu0
        %7386 = vmatprep.mubr.bf16.mxu0 0
        %7387 = vmatmul.mubr.bf16.gmra.mrb[0].mxu0 %v7318
        %v7388 = vpop.f32.mrb[0].mxu0
        %v7389 = vadd.f32 0.0, %v7388
        %v7390 = vpop.f32.mrb[0].mxu0
        %v7391 = vpop.f32.mrb[0].mxu0
        %v7392 = vadd.f32 0.0, %v7391
        %v7393 = vpop.f32.mrb[0].mxu0
        %7394 = vmatprep.mubr.bf16.mxu0 0
        %7395 = vmatmul.mubr.bf16.gmra.mrb[0].mxu0 %v7321
        %v7396 = vpop.f32.mrb[0].mxu0
        %v7397 = vadd.f32 0.0, %v7396
        %v7398 = vpop.f32.mrb[0].mxu0
        %v7399 = vpop.f32.mrb[0].mxu0
        %v7400 = vadd.f32 0.0, %v7399
        %v7401 = vpop.f32.mrb[0].mxu0
        %7402 = vmatprep.mubr.bf16.mxu0 0
        %7403 = vmatmul.mubr.bf16.gmra.mrb[0].mxu0 %v7324
        %v7404 = vpop.f32.mrb[0].mxu0
        %v7405 = vadd.f32 0.0, %v7404
        %v7406 = vpop.f32.mrb[0].mxu0
        %v7407 = vpop.f32.mrb[0].mxu0
        %v7408 = vadd.f32 0.0, %v7407
        %v7409 = vpop.f32.mrb[0].mxu0
        %7410 = vmatprep.mubr.bf16.mxu0 0
        %7411 = vmatmul.mubr.bf16.gmra.mrb[0].mxu0 %v7327
        %v7412 = vpop.f32.mrb[0].mxu0
        %v7413 = vadd.f32 0.0, %v7412
        %v7414 = vpop.f32.mrb[0].mxu0
        %v7415 = vpop.f32.mrb[0].mxu0
        %v7416 = vadd.f32 0.0, %v7415
        %v7417 = vpop.f32.mrb[0].mxu0
        %7418 = vmatprep.mubr.bf16.mxu0 0
        %7419 = vmatmul.mubr.bf16.gmra.mrb[0].mxu0 %v7330
        %v7420 = vpop.f32.mrb[0].mxu0
        %v7421 = vadd.f32 0.0, %v7420
        %v7422 = vpop.f32.mrb[0].mxu0
        %v7423 = vpop.f32.mrb[0].mxu0
        %v7424 = vadd.f32 0.0, %v7423
        %v7425 = vpop.f32.mrb[0].mxu0
        %7426 = vmatprep.mubr.bf16.mxu0 0
        %7427 = vmatmul.mubr.bf16.gmra.mrb[0].mxu0 %v7333
        %v7428 = vpop.f32.mrb[0].mxu0
        %v7429 = vadd.f32 0.0, %v7428
        %v7430 = vpop.f32.mrb[0].mxu0
        %v7431 = vpop.f32.mrb[0].mxu0
        %v7432 = vadd.f32 0.0, %v7431
        %v7433 = vpop.f32.mrb[0].mxu0
        %7434 = vdwg.mxu0
        %v7435 = vadd.f32 %v7245, %v7373
        %v7436 = vadd.f32 %v7246, %v7376
        %v7437 = vadd.f32 %v7247, %v7381
        %v7438 = vadd.f32 %v7248, %v7384
        %v7439 = vadd.f32 %v7249, %v7389
        %v7440 = vadd.f32 %v7250, %v7392
        %v7441 = vadd.f32 %v7251, %v7397
        %v7442 = vadd.f32 %v7252, %v7400
        %v7443 = vadd.f32 %v7253, %v7405
        %v7444 = vadd.f32 %v7254, %v7408
        %v7445 = vadd.f32 %v7255, %v7413
        %v7446 = vadd.f32 %v7256, %v7416
        %v7447 = vadd.f32 %v7257, %v7421
        %v7448 = vadd.f32 %v7258, %v7424
        %v7449 = vadd.f32 %v7259, %v7429
        %v7450 = vadd.f32 %v7260, %v7432
        %v7451 = vld [vmem:[%s383 + $0x8] sm:$0x1f]
        %v7452 = vld [vmem:[%s383 + $0x18] sm:$0x1f]
        %v7453 = vld [vmem:[%s383 + $0x28] sm:$0x1f]
        %v7454 = vld [vmem:[%s383 + $0x38] sm:$0x1f]
        %v7455 = vld [vmem:[%s383 + $0x48] sm:$0x1f]
        %v7456 = vld [vmem:[%s383 + $0x58] sm:$0x1f]
        %v7457 = vld [vmem:[%s383 + $0x68] sm:$0x1f]
        %v7458 = vld [vmem:[%s383 + $0x78] sm:$0x1f]
        %v7460 = vshrl.u32 %v7261, 16
        %v7462 = vrot.slane %v7460, 4
        %v7463 = vshll.u32 %v7261, 16
        %v7465 = vrot.slane %v7463, 5
        %v7466 = vor.u32 %v7462, %v7465
        %v7468 = vshrl.u32 %v7451, 16
        %v7470 = vrot.slane %v7468, 4
        %v7471 = vshll.u32 %v7451, 16
        %v7473 = vrot.slane %v7471, 5
        %v7474 = vor.u32 %v7470, %v7473
        %v7475 = vsel %vm1030, %v7466, %v7474
        %v7477 = vshrl.u32 %v7262, 16
        %v7479 = vrot.slane %v7477, 4
        %v7480 = vshll.u32 %v7262, 16
        %v7482 = vrot.slane %v7480, 5
        %v7483 = vor.u32 %v7479, %v7482
        %v7485 = vshrl.u32 %v7452, 16
        %v7487 = vrot.slane %v7485, 4
        %v7488 = vshll.u32 %v7452, 16
        %v7490 = vrot.slane %v7488, 5
        %v7491 = vor.u32 %v7487, %v7490
        %v7492 = vsel %vm1030, %v7483, %v7491
        %v7494 = vshrl.u32 %v7263, 16
        %v7496 = vrot.slane %v7494, 4
        %v7497 = vshll.u32 %v7263, 16
        %v7499 = vrot.slane %v7497, 5
        %v7500 = vor.u32 %v7496, %v7499
        %v7502 = vshrl.u32 %v7453, 16
        %v7504 = vrot.slane %v7502, 4
        %v7505 = vshll.u32 %v7453, 16
        %v7507 = vrot.slane %v7505, 5
        %v7508 = vor.u32 %v7504, %v7507
        %v7509 = vsel %vm1030, %v7500, %v7508
        %v7511 = vshrl.u32 %v7264, 16
        %v7513 = vrot.slane %v7511, 4
        %v7514 = vshll.u32 %v7264, 16
        %v7516 = vrot.slane %v7514, 5
        %v7517 = vor.u32 %v7513, %v7516
        %v7519 = vshrl.u32 %v7454, 16
        %v7521 = vrot.slane %v7519, 4
        %v7522 = vshll.u32 %v7454, 16
        %v7524 = vrot.slane %v7522, 5
        %v7525 = vor.u32 %v7521, %v7524
        %v7526 = vsel %vm1030, %v7517, %v7525
        %v7528 = vshrl.u32 %v7265, 16
        %v7530 = vrot.slane %v7528, 4
        %v7531 = vshll.u32 %v7265, 16
        %v7533 = vrot.slane %v7531, 5
        %v7534 = vor.u32 %v7530, %v7533
        %v7536 = vshrl.u32 %v7455, 16
        %v7538 = vrot.slane %v7536, 4
        %v7539 = vshll.u32 %v7455, 16
        %v7541 = vrot.slane %v7539, 5
        %v7542 = vor.u32 %v7538, %v7541
        %v7543 = vsel %vm1030, %v7534, %v7542
        %v7545 = vshrl.u32 %v7266, 16
        %v7547 = vrot.slane %v7545, 4
        %v7548 = vshll.u32 %v7266, 16
        %v7550 = vrot.slane %v7548, 5
        %v7551 = vor.u32 %v7547, %v7550
        %v7553 = vshrl.u32 %v7456, 16
        %v7555 = vrot.slane %v7553, 4
        %v7556 = vshll.u32 %v7456, 16
        %v7558 = vrot.slane %v7556, 5
        %v7559 = vor.u32 %v7555, %v7558
        %v7560 = vsel %vm1030, %v7551, %v7559
        %v7562 = vshrl.u32 %v7267, 16
        %v7564 = vrot.slane %v7562, 4
        %v7565 = vshll.u32 %v7267, 16
        %v7567 = vrot.slane %v7565, 5
        %v7568 = vor.u32 %v7564, %v7567
        %v7570 = vshrl.u32 %v7457, 16
        %v7572 = vrot.slane %v7570, 4
        %v7573 = vshll.u32 %v7457, 16
        %v7575 = vrot.slane %v7573, 5
        %v7576 = vor.u32 %v7572, %v7575
        %v7577 = vsel %vm1030, %v7568, %v7576
        %v7579 = vshrl.u32 %v7268, 16
        %v7581 = vrot.slane %v7579, 4
        %v7582 = vshll.u32 %v7268, 16
        %v7584 = vrot.slane %v7582, 5
        %v7585 = vor.u32 %v7581, %v7584
        %v7587 = vshrl.u32 %v7458, 16
        %v7589 = vrot.slane %v7587, 4
        %v7590 = vshll.u32 %v7458, 16
        %v7592 = vrot.slane %v7590, 5
        %v7593 = vor.u32 %v7589, %v7592
        %v7594 = vsel %vm1030, %v7585, %v7593
        %s7595 = scalar_lea.vmem [#allocation11], 20
        %v7596 = vld [vmem:[%s7595] sm:$0xf]
        %v7598 = vsel %vm377, %v7475, 0
        %v7601 = vsel %vm377, %v7492, 0
        %v7604 = vsel %vm377, %v7509, 0
        %v7607 = vsel %vm377, %v7526, 0
        %v7610 = vsel %vm377, %v7543, 0
        %v7613 = vsel %vm377, %v7560, 0
        %v7616 = vsel %vm377, %v7577, 0
        %v7619 = vsel %vm377, %v7594, 0
        %v7622 = vsel %vm6456, %v7596, 0
        %7624 = vmatprep.subr.bf16.mxu0 0
        %7625 = vmatpush1.bf16.msra.mxu0 %v7622
        %7626 = vmatprep.subr.bf16.mxu0 0
        %7627 = vmatpush1.bf16.msra.mxu0 0
        %7628 = vmatprep.subr.bf16.mxu0 0
        %7629 = vmatpush1.bf16.msra.mxu0 0
        %7630 = vmatprep.subr.bf16.mxu0 0
        %7631 = vmatpush1.bf16.msra.mxu0 0
        %7632 = vmatprep.subr.bf16.mxu0 0
        %7633 = vmatpush1.bf16.msra.mxu0 0
        %7634 = vmatprep.subr.bf16.mxu0 0
        %7635 = vmatpush1.bf16.msra.mxu0 0
        %7636 = vmatprep.subr.bf16.mxu0 0
        %7637 = vmatpush1.bf16.msra.mxu0 0
        %7638 = vmatprep.subr.bf16.mxu0 0
        %7639 = vmatpush1.bf16.msra.mxu0 0
        %7640 = vmatprep.subr.bf16.mxu0 0
        %7641 = vmatpush1.bf16.msra.mxu0 0
        %7642 = vmatprep.subr.bf16.mxu0 0
        %7643 = vmatpush1.bf16.msra.mxu0 0
        %7644 = vmatprep.subr.bf16.mxu0 0
        %7645 = vmatpush1.bf16.msra.mxu0 0
        %7646 = vmatprep.subr.bf16.mxu0 0
        %7647 = vmatpush1.bf16.msra.mxu0 0
        %7648 = vmatprep.subr.bf16.mxu0 0
        %7649 = vmatpush1.bf16.msra.mxu0 0
        %7650 = vmatprep.subr.bf16.mxu0 0
        %7651 = vmatpush1.bf16.msra.mxu0 0
        %7652 = vmatprep.subr.bf16.mxu0 0
        %7653 = vmatpush1.bf16.msra.mxu0 0
        %7654 = vmatprep.subr.bf16.mxu0 0
        %7655 = vmatpush1.bf16.msra.mxu0 0
        %7656 = vmatprep.mubr.bf16.mxu0 0
        %7657 = vmatmul.mubr.bf16.gmra.mrb[0].mxu0 %v7598
        %v7658 = vpop.f32.mrb[0].mxu0
        %v7659 = vadd.f32 0.0, %v7658
        %v7660 = vpop.f32.mrb[0].mxu0
        %v7661 = vpop.f32.mrb[0].mxu0
        %v7662 = vadd.f32 0.0, %v7661
        %v7663 = vpop.f32.mrb[0].mxu0
        %7664 = vmatprep.mubr.bf16.mxu0 0
        %7665 = vmatmul.mubr.bf16.gmra.mrb[0].mxu0 %v7601
        %v7666 = vpop.f32.mrb[0].mxu0
        %v7667 = vadd.f32 0.0, %v7666
        %v7668 = vpop.f32.mrb[0].mxu0
        %v7669 = vpop.f32.mrb[0].mxu0
        %v7670 = vadd.f32 0.0, %v7669
        %v7671 = vpop.f32.mrb[0].mxu0
        %7672 = vmatprep.mubr.bf16.mxu0 0
        %7673 = vmatmul.mubr.bf16.gmra.mrb[0].mxu0 %v7604
        %v7674 = vpop.f32.mrb[0].mxu0
        %v7675 = vadd.f32 0.0, %v7674
        %v7676 = vpop.f32.mrb[0].mxu0
        %v7677 = vpop.f32.mrb[0].mxu0
        %v7678 = vadd.f32 0.0, %v7677
        %v7679 = vpop.f32.mrb[0].mxu0
        %7680 = vmatprep.mubr.bf16.mxu0 0
        %7681 = vmatmul.mubr.bf16.gmra.mrb[0].mxu0 %v7607
        %v7682 = vpop.f32.mrb[0].mxu0
        %v7683 = vadd.f32 0.0, %v7682
        %v7684 = vpop.f32.mrb[0].mxu0
        %v7685 = vpop.f32.mrb[0].mxu0
        %v7686 = vadd.f32 0.0, %v7685
        %v7687 = vpop.f32.mrb[0].mxu0
        %7688 = vmatprep.mubr.bf16.mxu0 0
        %7689 = vmatmul.mubr.bf16.gmra.mrb[0].mxu0 %v7610
        %v7690 = vpop.f32.mrb[0].mxu0
        %v7691 = vadd.f32 0.0, %v7690
        %v7692 = vpop.f32.mrb[0].mxu0
        %v7693 = vpop.f32.mrb[0].mxu0
        %v7694 = vadd.f32 0.0, %v7693
        %v7695 = vpop.f32.mrb[0].mxu0
        %7696 = vmatprep.mubr.bf16.mxu0 0
        %7697 = vmatmul.mubr.bf16.gmra.mrb[0].mxu0 %v7613
        %v7698 = vpop.f32.mrb[0].mxu0
        %v7699 = vadd.f32 0.0, %v7698
        %v7700 = vpop.f32.mrb[0].mxu0
        %v7701 = vpop.f32.mrb[0].mxu0
        %v7702 = vadd.f32 0.0, %v7701
        %v7703 = vpop.f32.mrb[0].mxu0
        %7704 = vmatprep.mubr.bf16.mxu0 0
        %7705 = vmatmul.mubr.bf16.gmra.mrb[0].mxu0 %v7616
        %v7706 = vpop.f32.mrb[0].mxu0
        %v7707 = vadd.f32 0.0, %v7706
        %v7708 = vpop.f32.mrb[0].mxu0
        %v7709 = vpop.f32.mrb[0].mxu0
        %v7710 = vadd.f32 0.0, %v7709
        %v7711 = vpop.f32.mrb[0].mxu0
        %7712 = vmatprep.mubr.bf16.mxu0 0
        %7713 = vmatmul.mubr.bf16.gmra.mrb[0].mxu0 %v7619
        %v7714 = vpop.f32.mrb[0].mxu0
        %v7715 = vadd.f32 0.0, %v7714
        %v7716 = vpop.f32.mrb[0].mxu0
        %v7717 = vpop.f32.mrb[0].mxu0
        %v7718 = vadd.f32 0.0, %v7717
        %v7719 = vpop.f32.mrb[0].mxu0
        %7720 = vdwg.mxu0
        %v7721 = vadd.f32 %v7435, %v7659
        %v7722 = vadd.f32 %v7436, %v7662
        %v7723 = vadd.f32 %v7437, %v7667
        %v7724 = vadd.f32 %v7438, %v7670
        %v7725 = vadd.f32 %v7439, %v7675
        %v7726 = vadd.f32 %v7440, %v7678
        %v7727 = vadd.f32 %v7441, %v7683
        %v7728 = vadd.f32 %v7442, %v7686
        %v7729 = vadd.f32 %v7443, %v7691
        %v7730 = vadd.f32 %v7444, %v7694
        %v7731 = vadd.f32 %v7445, %v7699
        %v7732 = vadd.f32 %v7446, %v7702
        %v7733 = vadd.f32 %v7447, %v7707
        %v7734 = vadd.f32 %v7448, %v7710
        %v7735 = vadd.f32 %v7449, %v7715
        %v7736 = vadd.f32 %v7450, %v7718
        %s7737 = scalar_lea.vmem [#allocation2], 32
        %v7738 = vld [vmem:[%s7737] sm:$0xf8]
        %v7739 = vld [vmem:[%s7737 + $0x8] sm:$0xf]
        %v7740 = vld [vmem:[%s7737 + $0x10] sm:$0xf8]
        %v7741 = vld [vmem:[%s7737 + $0x18] sm:$0xf]
        %v7742 = vld [vmem:[%s7737 + $0x20] sm:$0xf8]
        %v7743 = vld [vmem:[%s7737 + $0x28] sm:$0xf]
        %v7744 = vld [vmem:[%s7737 + $0x30] sm:$0xf8]
        %v7745 = vld [vmem:[%s7737 + $0x38] sm:$0xf]
        %v7746 = vld [vmem:[%s7737 + $0x40] sm:$0xf8]
        %v7747 = vld [vmem:[%s7737 + $0x48] sm:$0xf]
        %v7748 = vld [vmem:[%s7737 + $0x50] sm:$0xf8]
        %v7749 = vld [vmem:[%s7737 + $0x58] sm:$0xf]
        %v7750 = vld [vmem:[%s7737 + $0x60] sm:$0xf8]
        %v7751 = vld [vmem:[%s7737 + $0x68] sm:$0xf]
        %v7752 = vld [vmem:[%s7737 + $0x70] sm:$0xf8]
        %v7753 = vld [vmem:[%s7737 + $0x78] sm:$0xf]
        %v7755 = vshrl.u32 %v7738, 16
        %v7757 = vrot.slane %v7755, 3
        %v7758 = vshll.u32 %v7738, 16
        %v7760 = vrot.slane %v7758, 4
        %v7761 = vor.u32 %v7757, %v7760
        %v7763 = vshrl.u32 %v7739, 16
        %v7765 = vrot.slane %v7763, 3
        %v7766 = vshll.u32 %v7739, 16
        %v7768 = vrot.slane %v7766, 4
        %v7769 = vor.u32 %v7765, %v7768
        %v7770 = vsel %vm436, %v7761, %v7769
        %v7772 = vshrl.u32 %v7740, 16
        %v7774 = vrot.slane %v7772, 3
        %v7775 = vshll.u32 %v7740, 16
        %v7777 = vrot.slane %v7775, 4
        %v7778 = vor.u32 %v7774, %v7777
        %v7780 = vshrl.u32 %v7741, 16
        %v7782 = vrot.slane %v7780, 3
        %v7783 = vshll.u32 %v7741, 16
        %v7785 = vrot.slane %v7783, 4
        %v7786 = vor.u32 %v7782, %v7785
        %v7787 = vsel %vm436, %v7778, %v7786
        %v7789 = vshrl.u32 %v7742, 16
        %v7791 = vrot.slane %v7789, 3
        %v7792 = vshll.u32 %v7742, 16
        %v7794 = vrot.slane %v7792, 4
        %v7795 = vor.u32 %v7791, %v7794
        %v7797 = vshrl.u32 %v7743, 16
        %v7799 = vrot.slane %v7797, 3
        %v7800 = vshll.u32 %v7743, 16
        %v7802 = vrot.slane %v7800, 4
        %v7803 = vor.u32 %v7799, %v7802
        %v7804 = vsel %vm436, %v7795, %v7803
        %v7806 = vshrl.u32 %v7744, 16
        %v7808 = vrot.slane %v7806, 3
        %v7809 = vshll.u32 %v7744, 16
        %v7811 = vrot.slane %v7809, 4
        %v7812 = vor.u32 %v7808, %v7811
        %v7814 = vshrl.u32 %v7745, 16
        %v7816 = vrot.slane %v7814, 3
        %v7817 = vshll.u32 %v7745, 16
        %v7819 = vrot.slane %v7817, 4
        %v7820 = vor.u32 %v7816, %v7819
        %v7821 = vsel %vm436, %v7812, %v7820
        %v7823 = vshrl.u32 %v7746, 16
        %v7825 = vrot.slane %v7823, 3
        %v7826 = vshll.u32 %v7746, 16
        %v7828 = vrot.slane %v7826, 4
        %v7829 = vor.u32 %v7825, %v7828
        %v7831 = vshrl.u32 %v7747, 16
        %v7833 = vrot.slane %v7831, 3
        %v7834 = vshll.u32 %v7747, 16
        %v7836 = vrot.slane %v7834, 4
        %v7837 = vor.u32 %v7833, %v7836
        %v7838 = vsel %vm436, %v7829, %v7837
        %v7840 = vshrl.u32 %v7748, 16
        %v7842 = vrot.slane %v7840, 3
        %v7843 = vshll.u32 %v7748, 16
        %v7845 = vrot.slane %v7843, 4
        %v7846 = vor.u32 %v7842, %v7845
        %v7848 = vshrl.u32 %v7749, 16
        %v7850 = vrot.slane %v7848, 3
        %v7851 = vshll.u32 %v7749, 16
        %v7853 = vrot.slane %v7851, 4
        %v7854 = vor.u32 %v7850, %v7853
        %v7855 = vsel %vm436, %v7846, %v7854
        %v7857 = vshrl.u32 %v7750, 16
        %v7859 = vrot.slane %v7857, 3
        %v7860 = vshll.u32 %v7750, 16
        %v7862 = vrot.slane %v7860, 4
        %v7863 = vor.u32 %v7859, %v7862
        %v7865 = vshrl.u32 %v7751, 16
        %v7867 = vrot.slane %v7865, 3
        %v7868 = vshll.u32 %v7751, 16
        %v7870 = vrot.slane %v7868, 4
        %v7871 = vor.u32 %v7867, %v7870
        %v7872 = vsel %vm436, %v7863, %v7871
        %v7874 = vshrl.u32 %v7752, 16
        %v7876 = vrot.slane %v7874, 3
        %v7877 = vshll.u32 %v7752, 16
        %v7879 = vrot.slane %v7877, 4
        %v7880 = vor.u32 %v7876, %v7879
        %v7882 = vshrl.u32 %v7753, 16
        %v7884 = vrot.slane %v7882, 3
        %v7885 = vshll.u32 %v7753, 16
        %v7887 = vrot.slane %v7885, 4
        %v7888 = vor.u32 %v7884, %v7887
        %v7889 = vsel %vm436, %v7880, %v7888
        %s7890 = scalar_lea.vmem [#allocation11], 24
        %v7891 = vld [vmem:[%s7890] sm:$0xf]
        %v7893 = vsel %vm377, %v7770, 0
        %v7896 = vsel %vm377, %v7787, 0
        %v7899 = vsel %vm377, %v7804, 0
        %v7902 = vsel %vm377, %v7821, 0
        %v7905 = vsel %vm377, %v7838, 0
        %v7908 = vsel %vm377, %v7855, 0
        %v7911 = vsel %vm377, %v7872, 0
        %v7914 = vsel %vm377, %v7889, 0
        %v7917 = vsel %vm6456, %v7891, 0
        %7919 = vmatprep.subr.bf16.mxu0 0
        %7920 = vmatpush1.bf16.msra.mxu0 %v7917
        %7921 = vmatprep.subr.bf16.mxu0 0
        %7922 = vmatpush1.bf16.msra.mxu0 0
        %7923 = vmatprep.subr.bf16.mxu0 0
        %7924 = vmatpush1.bf16.msra.mxu0 0
        %7925 = vmatprep.subr.bf16.mxu0 0
        %7926 = vmatpush1.bf16.msra.mxu0 0
        %7927 = vmatprep.subr.bf16.mxu0 0
        %7928 = vmatpush1.bf16.msra.mxu0 0
        %7929 = vmatprep.subr.bf16.mxu0 0
        %7930 = vmatpush1.bf16.msra.mxu0 0
        %7931 = vmatprep.subr.bf16.mxu0 0
        %7932 = vmatpush1.bf16.msra.mxu0 0
        %7933 = vmatprep.subr.bf16.mxu0 0
        %7934 = vmatpush1.bf16.msra.mxu0 0
        %7935 = vmatprep.subr.bf16.mxu0 0
        %7936 = vmatpush1.bf16.msra.mxu0 0
        %7937 = vmatprep.subr.bf16.mxu0 0
        %7938 = vmatpush1.bf16.msra.mxu0 0
        %7939 = vmatprep.subr.bf16.mxu0 0
        %7940 = vmatpush1.bf16.msra.mxu0 0
        %7941 = vmatprep.subr.bf16.mxu0 0
        %7942 = vmatpush1.bf16.msra.mxu0 0
        %7943 = vmatprep.subr.bf16.mxu0 0
        %7944 = vmatpush1.bf16.msra.mxu0 0
        %7945 = vmatprep.subr.bf16.mxu0 0
        %7946 = vmatpush1.bf16.msra.mxu0 0
        %7947 = vmatprep.subr.bf16.mxu0 0
        %7948 = vmatpush1.bf16.msra.mxu0 0
        %7949 = vmatprep.subr.bf16.mxu0 0
        %7950 = vmatpush1.bf16.msra.mxu0 0
        %7951 = vmatprep.mubr.bf16.mxu0 0
        %7952 = vmatmul.mubr.bf16.gmra.mrb[0].mxu0 %v7893
        %v7953 = vpop.f32.mrb[0].mxu0
        %v7954 = vadd.f32 0.0, %v7953
        %v7955 = vpop.f32.mrb[0].mxu0
        %v7956 = vpop.f32.mrb[0].mxu0
        %v7957 = vadd.f32 0.0, %v7956
        %v7958 = vpop.f32.mrb[0].mxu0
        %7959 = vmatprep.mubr.bf16.mxu0 0
        %7960 = vmatmul.mubr.bf16.gmra.mrb[0].mxu0 %v7896
        %v7961 = vpop.f32.mrb[0].mxu0
        %v7962 = vadd.f32 0.0, %v7961
        %v7963 = vpop.f32.mrb[0].mxu0
        %v7964 = vpop.f32.mrb[0].mxu0
        %v7965 = vadd.f32 0.0, %v7964
        %v7966 = vpop.f32.mrb[0].mxu0
        %7967 = vmatprep.mubr.bf16.mxu0 0
        %7968 = vmatmul.mubr.bf16.gmra.mrb[0].mxu0 %v7899
        %v7969 = vpop.f32.mrb[0].mxu0
        %v7970 = vadd.f32 0.0, %v7969
        %v7971 = vpop.f32.mrb[0].mxu0
        %v7972 = vpop.f32.mrb[0].mxu0
        %v7973 = vadd.f32 0.0, %v7972
        %v7974 = vpop.f32.mrb[0].mxu0
        %7975 = vmatprep.mubr.bf16.mxu0 0
        %7976 = vmatmul.mubr.bf16.gmra.mrb[0].mxu0 %v7902
        %v7977 = vpop.f32.mrb[0].mxu0
        %v7978 = vadd.f32 0.0, %v7977
        %v7979 = vpop.f32.mrb[0].mxu0
        %v7980 = vpop.f32.mrb[0].mxu0
        %v7981 = vadd.f32 0.0, %v7980
        %v7982 = vpop.f32.mrb[0].mxu0
        %7983 = vmatprep.mubr.bf16.mxu0 0
        %7984 = vmatmul.mubr.bf16.gmra.mrb[0].mxu0 %v7905
        %v7985 = vpop.f32.mrb[0].mxu0
        %v7986 = vadd.f32 0.0, %v7985
        %v7987 = vpop.f32.mrb[0].mxu0
        %v7988 = vpop.f32.mrb[0].mxu0
        %v7989 = vadd.f32 0.0, %v7988
        %v7990 = vpop.f32.mrb[0].mxu0
        %7991 = vmatprep.mubr.bf16.mxu0 0
        %7992 = vmatmul.mubr.bf16.gmra.mrb[0].mxu0 %v7908
        %v7993 = vpop.f32.mrb[0].mxu0
        %v7994 = vadd.f32 0.0, %v7993
        %v7995 = vpop.f32.mrb[0].mxu0
        %v7996 = vpop.f32.mrb[0].mxu0
        %v7997 = vadd.f32 0.0, %v7996
        %v7998 = vpop.f32.mrb[0].mxu0
        %7999 = vmatprep.mubr.bf16.mxu0 0
        %8000 = vmatmul.mubr.bf16.gmra.mrb[0].mxu0 %v7911
        %v8001 = vpop.f32.mrb[0].mxu0
        %v8002 = vadd.f32 0.0, %v8001
        %v8003 = vpop.f32.mrb[0].mxu0
        %v8004 = vpop.f32.mrb[0].mxu0
        %v8005 = vadd.f32 0.0, %v8004
        %v8006 = vpop.f32.mrb[0].mxu0
        %8007 = vmatprep.mubr.bf16.mxu0 0
        %8008 = vmatmul.mubr.bf16.gmra.mrb[0].mxu0 %v7914
        %v8009 = vpop.f32.mrb[0].mxu0
        %v8010 = vadd.f32 0.0, %v8009
        %v8011 = vpop.f32.mrb[0].mxu0
        %v8012 = vpop.f32.mrb[0].mxu0
        %v8013 = vadd.f32 0.0, %v8012
        %v8014 = vpop.f32.mrb[0].mxu0
        %8015 = vdwg.mxu0
        %v8016 = vadd.f32 %v7721, %v7954
        %v8017 = vadd.f32 %v7722, %v7957
        %v8018 = vadd.f32 %v7723, %v7962
        %v8019 = vadd.f32 %v7724, %v7965
        %v8020 = vadd.f32 %v7725, %v7970
        %v8021 = vadd.f32 %v7726, %v7973
        %v8022 = vadd.f32 %v7727, %v7978
        %v8023 = vadd.f32 %v7728, %v7981
        %v8024 = vadd.f32 %v7729, %v7986
        %v8025 = vadd.f32 %v7730, %v7989
        %v8026 = vadd.f32 %v7731, %v7994
        %v8027 = vadd.f32 %v7732, %v7997
        %v8028 = vadd.f32 %v7733, %v8002
        %v8029 = vadd.f32 %v7734, %v8005
        %v8030 = vadd.f32 %v7735, %v8010
        %v8031 = vadd.f32 %v7736, %v8013
        %v8032 = vld [vmem:[%s7737] sm:$0xf0]
        %v8033 = vld [vmem:[%s7737 + $0x10] sm:$0xf0]
        %v8034 = vld [vmem:[%s7737 + $0x20] sm:$0xf0]
        %v8035 = vld [vmem:[%s7737 + $0x30] sm:$0xf0]
        %v8036 = vld [vmem:[%s7737 + $0x40] sm:$0xf0]
        %v8037 = vld [vmem:[%s7737 + $0x50] sm:$0xf0]
        %v8038 = vld [vmem:[%s7737 + $0x60] sm:$0xf0]
        %v8039 = vld [vmem:[%s7737 + $0x70] sm:$0xf0]
        %v8056 = vrot.slane %v8032, 4
        %v8057 = vrot.slane %v7739, 4
        %v8058 = vsel %vm6405, %v8056, %v8057
        %v8059 = vrot.slane %v8033, 4
        %v8060 = vrot.slane %v7741, 4
        %v8061 = vsel %vm6405, %v8059, %v8060
        %v8062 = vrot.slane %v8034, 4
        %v8063 = vrot.slane %v7743, 4
        %v8064 = vsel %vm6405, %v8062, %v8063
        %v8065 = vrot.slane %v8035, 4
        %v8066 = vrot.slane %v7745, 4
        %v8067 = vsel %vm6405, %v8065, %v8066
        %v8068 = vrot.slane %v8036, 4
        %v8069 = vrot.slane %v7747, 4
        %v8070 = vsel %vm6405, %v8068, %v8069
        %v8071 = vrot.slane %v8037, 4
        %v8072 = vrot.slane %v7749, 4
        %v8073 = vsel %vm6405, %v8071, %v8072
        %v8074 = vrot.slane %v8038, 4
        %v8075 = vrot.slane %v7751, 4
        %v8076 = vsel %vm6405, %v8074, %v8075
        %v8077 = vrot.slane %v8039, 4
        %v8078 = vrot.slane %v7753, 4
        %v8079 = vsel %vm6405, %v8077, %v8078
        %s8080 = scalar_lea.vmem [#allocation11], 28
        %v8081 = vld [vmem:[%s8080] sm:$0xf]
        %v8083 = vsel %vm377, %v8058, 0
        %v8086 = vsel %vm377, %v8061, 0
        %v8089 = vsel %vm377, %v8064, 0
        %v8092 = vsel %vm377, %v8067, 0
        %v8095 = vsel %vm377, %v8070, 0
        %v8098 = vsel %vm377, %v8073, 0
        %v8101 = vsel %vm377, %v8076, 0
        %v8104 = vsel %vm377, %v8079, 0
        %v8107 = vsel %vm6456, %v8081, 0
        %8109 = vmatprep.subr.bf16.mxu0 0
        %8110 = vmatpush1.bf16.msra.mxu0 %v8107
        %8111 = vmatprep.subr.bf16.mxu0 0
        %8112 = vmatpush1.bf16.msra.mxu0 0
        %8113 = vmatprep.subr.bf16.mxu0 0
        %8114 = vmatpush1.bf16.msra.mxu0 0
        %8115 = vmatprep.subr.bf16.mxu0 0
        %8116 = vmatpush1.bf16.msra.mxu0 0
        %8117 = vmatprep.subr.bf16.mxu0 0
        %8118 = vmatpush1.bf16.msra.mxu0 0
        %8119 = vmatprep.subr.bf16.mxu0 0
        %8120 = vmatpush1.bf16.msra.mxu0 0
        %8121 = vmatprep.subr.bf16.mxu0 0
        %8122 = vmatpush1.bf16.msra.mxu0 0
        %8123 = vmatprep.subr.bf16.mxu0 0
        %8124 = vmatpush1.bf16.msra.mxu0 0
        %8125 = vmatprep.subr.bf16.mxu0 0
        %8126 = vmatpush1.bf16.msra.mxu0 0
        %8127 = vmatprep.subr.bf16.mxu0 0
        %8128 = vmatpush1.bf16.msra.mxu0 0
        %8129 = vmatprep.subr.bf16.mxu0 0
        %8130 = vmatpush1.bf16.msra.mxu0 0
        %8131 = vmatprep.subr.bf16.mxu0 0
        %8132 = vmatpush1.bf16.msra.mxu0 0
        %8133 = vmatprep.subr.bf16.mxu0 0
        %8134 = vmatpush1.bf16.msra.mxu0 0
        %8135 = vmatprep.subr.bf16.mxu0 0
        %8136 = vmatpush1.bf16.msra.mxu0 0
        %8137 = vmatprep.subr.bf16.mxu0 0
        %8138 = vmatpush1.bf16.msra.mxu0 0
        %8139 = vmatprep.subr.bf16.mxu0 0
        %8140 = vmatpush1.bf16.msra.mxu0 0
        %8141 = vmatprep.mubr.bf16.mxu0 0
        %8142 = vmatmul.mubr.bf16.gmra.mrb[0].mxu0 %v8083
        %v8143 = vpop.f32.mrb[0].mxu0
        %v8144 = vadd.f32 0.0, %v8143
        %v8145 = vpop.f32.mrb[0].mxu0
        %v8146 = vpop.f32.mrb[0].mxu0
        %v8147 = vadd.f32 0.0, %v8146
        %v8148 = vpop.f32.mrb[0].mxu0
        %8149 = vmatprep.mubr.bf16.mxu0 0
        %8150 = vmatmul.mubr.bf16.gmra.mrb[0].mxu0 %v8086
        %v8151 = vpop.f32.mrb[0].mxu0
        %v8152 = vadd.f32 0.0, %v8151
        %v8153 = vpop.f32.mrb[0].mxu0
        %v8154 = vpop.f32.mrb[0].mxu0
        %v8155 = vadd.f32 0.0, %v8154
        %v8156 = vpop.f32.mrb[0].mxu0
        %8157 = vmatprep.mubr.bf16.mxu0 0
        %8158 = vmatmul.mubr.bf16.gmra.mrb[0].mxu0 %v8089
        %v8159 = vpop.f32.mrb[0].mxu0
        %v8160 = vadd.f32 0.0, %v8159
        %v8161 = vpop.f32.mrb[0].mxu0
        %v8162 = vpop.f32.mrb[0].mxu0
        %v8163 = vadd.f32 0.0, %v8162
        %v8164 = vpop.f32.mrb[0].mxu0
        %8165 = vmatprep.mubr.bf16.mxu0 0
        %8166 = vmatmul.mubr.bf16.gmra.mrb[0].mxu0 %v8092
        %v8167 = vpop.f32.mrb[0].mxu0
        %v8168 = vadd.f32 0.0, %v8167
        %v8169 = vpop.f32.mrb[0].mxu0
        %v8170 = vpop.f32.mrb[0].mxu0
        %v8171 = vadd.f32 0.0, %v8170
        %v8172 = vpop.f32.mrb[0].mxu0
        %8173 = vmatprep.mubr.bf16.mxu0 0
        %8174 = vmatmul.mubr.bf16.gmra.mrb[0].mxu0 %v8095
        %v8175 = vpop.f32.mrb[0].mxu0
        %v8176 = vadd.f32 0.0, %v8175
        %v8177 = vpop.f32.mrb[0].mxu0
        %v8178 = vpop.f32.mrb[0].mxu0
        %v8179 = vadd.f32 0.0, %v8178
        %v8180 = vpop.f32.mrb[0].mxu0
        %8181 = vmatprep.mubr.bf16.mxu0 0
        %8182 = vmatmul.mubr.bf16.gmra.mrb[0].mxu0 %v8098
        %v8183 = vpop.f32.mrb[0].mxu0
        %v8184 = vadd.f32 0.0, %v8183
        %v8185 = vpop.f32.mrb[0].mxu0
        %v8186 = vpop.f32.mrb[0].mxu0
        %v8187 = vadd.f32 0.0, %v8186
        %v8188 = vpop.f32.mrb[0].mxu0
        %8189 = vmatprep.mubr.bf16.mxu0 0
        %8190 = vmatmul.mubr.bf16.gmra.mrb[0].mxu0 %v8101
        %v8191 = vpop.f32.mrb[0].mxu0
        %v8192 = vadd.f32 0.0, %v8191
        %v8193 = vpop.f32.mrb[0].mxu0
        %v8194 = vpop.f32.mrb[0].mxu0
        %v8195 = vadd.f32 0.0, %v8194
        %v8196 = vpop.f32.mrb[0].mxu0
        %8197 = vmatprep.mubr.bf16.mxu0 0
        %8198 = vmatmul.mubr.bf16.gmra.mrb[0].mxu0 %v8104
        %v8199 = vpop.f32.mrb[0].mxu0
        %v8200 = vadd.f32 0.0, %v8199
        %v8201 = vpop.f32.mrb[0].mxu0
        %v8202 = vpop.f32.mrb[0].mxu0
        %v8203 = vadd.f32 0.0, %v8202
        %v8204 = vpop.f32.mrb[0].mxu0
        %8205 = vdwg.mxu0
        %v8206 = vadd.f32 %v8016, %v8144
        %v8207 = vadd.f32 %v8017, %v8147
        %v8208 = vadd.f32 %v8018, %v8152
        %v8209 = vadd.f32 %v8019, %v8155
        %v8210 = vadd.f32 %v8020, %v8160
        %v8211 = vadd.f32 %v8021, %v8163
        %v8212 = vadd.f32 %v8022, %v8168
        %v8213 = vadd.f32 %v8023, %v8171
        %v8214 = vadd.f32 %v8024, %v8176
        %v8215 = vadd.f32 %v8025, %v8179
        %v8216 = vadd.f32 %v8026, %v8184
        %v8217 = vadd.f32 %v8027, %v8187
        %v8218 = vadd.f32 %v8028, %v8192
        %v8219 = vadd.f32 %v8029, %v8195
        %v8220 = vadd.f32 %v8030, %v8200
        %v8221 = vadd.f32 %v8031, %v8203
        %v8222 = vld [vmem:[%s7737 + $0x8] sm:$0x1f]
        %v8223 = vld [vmem:[%s7737 + $0x18] sm:$0x1f]
        %v8224 = vld [vmem:[%s7737 + $0x28] sm:$0x1f]
        %v8225 = vld [vmem:[%s7737 + $0x38] sm:$0x1f]
        %v8226 = vld [vmem:[%s7737 + $0x48] sm:$0x1f]
        %v8227 = vld [vmem:[%s7737 + $0x58] sm:$0x1f]
        %v8228 = vld [vmem:[%s7737 + $0x68] sm:$0x1f]
        %v8229 = vld [vmem:[%s7737 + $0x78] sm:$0x1f]
        %v8231 = vshrl.u32 %v8032, 16
        %v8233 = vrot.slane %v8231, 4
        %v8234 = vshll.u32 %v8032, 16
        %v8236 = vrot.slane %v8234, 5
        %v8237 = vor.u32 %v8233, %v8236
        %v8239 = vshrl.u32 %v8222, 16
        %v8241 = vrot.slane %v8239, 4
        %v8242 = vshll.u32 %v8222, 16
        %v8244 = vrot.slane %v8242, 5
        %v8245 = vor.u32 %v8241, %v8244
        %v8246 = vsel %vm1030, %v8237, %v8245
        %v8248 = vshrl.u32 %v8033, 16
        %v8250 = vrot.slane %v8248, 4
        %v8251 = vshll.u32 %v8033, 16
        %v8253 = vrot.slane %v8251, 5
        %v8254 = vor.u32 %v8250, %v8253
        %v8256 = vshrl.u32 %v8223, 16
        %v8258 = vrot.slane %v8256, 4
        %v8259 = vshll.u32 %v8223, 16
        %v8261 = vrot.slane %v8259, 5
        %v8262 = vor.u32 %v8258, %v8261
        %v8263 = vsel %vm1030, %v8254, %v8262
        %v8265 = vshrl.u32 %v8034, 16
        %v8267 = vrot.slane %v8265, 4
        %v8268 = vshll.u32 %v8034, 16
        %v8270 = vrot.slane %v8268, 5
        %v8271 = vor.u32 %v8267, %v8270
        %v8273 = vshrl.u32 %v8224, 16
        %v8275 = vrot.slane %v8273, 4
        %v8276 = vshll.u32 %v8224, 16
        %v8278 = vrot.slane %v8276, 5
        %v8279 = vor.u32 %v8275, %v8278
        %v8280 = vsel %vm1030, %v8271, %v8279
        %v8282 = vshrl.u32 %v8035, 16
        %v8284 = vrot.slane %v8282, 4
        %v8285 = vshll.u32 %v8035, 16
        %v8287 = vrot.slane %v8285, 5
        %v8288 = vor.u32 %v8284, %v8287
        %v8290 = vshrl.u32 %v8225, 16
        %v8292 = vrot.slane %v8290, 4
        %v8293 = vshll.u32 %v8225, 16
        %v8295 = vrot.slane %v8293, 5
        %v8296 = vor.u32 %v8292, %v8295
        %v8297 = vsel %vm1030, %v8288, %v8296
        %v8299 = vshrl.u32 %v8036, 16
        %v8301 = vrot.slane %v8299, 4
        %v8302 = vshll.u32 %v8036, 16
        %v8304 = vrot.slane %v8302, 5
        %v8305 = vor.u32 %v8301, %v8304
        %v8307 = vshrl.u32 %v8226, 16
        %v8309 = vrot.slane %v8307, 4
        %v8310 = vshll.u32 %v8226, 16
        %v8312 = vrot.slane %v8310, 5
        %v8313 = vor.u32 %v8309, %v8312
        %v8314 = vsel %vm1030, %v8305, %v8313
        %v8316 = vshrl.u32 %v8037, 16
        %v8318 = vrot.slane %v8316, 4
        %v8319 = vshll.u32 %v8037, 16
        %v8321 = vrot.slane %v8319, 5
        %v8322 = vor.u32 %v8318, %v8321
        %v8324 = vshrl.u32 %v8227, 16
        %v8326 = vrot.slane %v8324, 4
        %v8327 = vshll.u32 %v8227, 16
        %v8329 = vrot.slane %v8327, 5
        %v8330 = vor.u32 %v8326, %v8329
        %v8331 = vsel %vm1030, %v8322, %v8330
        %v8333 = vshrl.u32 %v8038, 16
        %v8335 = vrot.slane %v8333, 4
        %v8336 = vshll.u32 %v8038, 16
        %v8338 = vrot.slane %v8336, 5
        %v8339 = vor.u32 %v8335, %v8338
        %v8341 = vshrl.u32 %v8228, 16
        %v8343 = vrot.slane %v8341, 4
        %v8344 = vshll.u32 %v8228, 16
        %v8346 = vrot.slane %v8344, 5
        %v8347 = vor.u32 %v8343, %v8346
        %v8348 = vsel %vm1030, %v8339, %v8347
        %v8350 = vshrl.u32 %v8039, 16
        %v8352 = vrot.slane %v8350, 4
        %v8353 = vshll.u32 %v8039, 16
        %v8355 = vrot.slane %v8353, 5
        %v8356 = vor.u32 %v8352, %v8355
        %v8358 = vshrl.u32 %v8229, 16
        %v8360 = vrot.slane %v8358, 4
        %v8361 = vshll.u32 %v8229, 16
        %v8363 = vrot.slane %v8361, 5
        %v8364 = vor.u32 %v8360, %v8363
        %v8365 = vsel %vm1030, %v8356, %v8364
        %s8366 = scalar_lea.vmem [#allocation11], 32
        %v8367 = vld [vmem:[%s8366] sm:$0xf]
        %v8369 = vsel %vm377, %v8246, 0
        %v8372 = vsel %vm377, %v8263, 0
        %v8375 = vsel %vm377, %v8280, 0
        %v8378 = vsel %vm377, %v8297, 0
        %v8381 = vsel %vm377, %v8314, 0
        %v8384 = vsel %vm377, %v8331, 0
        %v8387 = vsel %vm377, %v8348, 0
        %v8390 = vsel %vm377, %v8365, 0
        %v8393 = vsel %vm6456, %v8367, 0
        %8395 = vmatprep.subr.bf16.mxu0 0
        %8396 = vmatpush1.bf16.msra.mxu0 %v8393
        %8397 = vmatprep.subr.bf16.mxu0 0
        %8398 = vmatpush1.bf16.msra.mxu0 0
        %8399 = vmatprep.subr.bf16.mxu0 0
        %8400 = vmatpush1.bf16.msra.mxu0 0
        %8401 = vmatprep.subr.bf16.mxu0 0
        %8402 = vmatpush1.bf16.msra.mxu0 0
        %8403 = vmatprep.subr.bf16.mxu0 0
        %8404 = vmatpush1.bf16.msra.mxu0 0
        %8405 = vmatprep.subr.bf16.mxu0 0
        %8406 = vmatpush1.bf16.msra.mxu0 0
        %8407 = vmatprep.subr.bf16.mxu0 0
        %8408 = vmatpush1.bf16.msra.mxu0 0
        %8409 = vmatprep.subr.bf16.mxu0 0
        %8410 = vmatpush1.bf16.msra.mxu0 0
        %8411 = vmatprep.subr.bf16.mxu0 0
        %8412 = vmatpush1.bf16.msra.mxu0 0
        %8413 = vmatprep.subr.bf16.mxu0 0
        %8414 = vmatpush1.bf16.msra.mxu0 0
        %8415 = vmatprep.subr.bf16.mxu0 0
        %8416 = vmatpush1.bf16.msra.mxu0 0
        %8417 = vmatprep.subr.bf16.mxu0 0
        %8418 = vmatpush1.bf16.msra.mxu0 0
        %8419 = vmatprep.subr.bf16.mxu0 0
        %8420 = vmatpush1.bf16.msra.mxu0 0
        %8421 = vmatprep.subr.bf16.mxu0 0
        %8422 = vmatpush1.bf16.msra.mxu0 0
        %8423 = vmatprep.subr.bf16.mxu0 0
        %8424 = vmatpush1.bf16.msra.mxu0 0
        %8425 = vmatprep.subr.bf16.mxu0 0
        %8426 = vmatpush1.bf16.msra.mxu0 0
        %8427 = vmatprep.mubr.bf16.mxu0 0
        %8428 = vmatmul.mubr.bf16.gmra.mrb[0].mxu0 %v8369
        %v8429 = vpop.f32.mrb[0].mxu0
        %v8430 = vadd.f32 0.0, %v8429
        %v8431 = vpop.f32.mrb[0].mxu0
        %v8432 = vpop.f32.mrb[0].mxu0
        %v8433 = vadd.f32 0.0, %v8432
        %v8434 = vpop.f32.mrb[0].mxu0
        %8435 = vmatprep.mubr.bf16.mxu0 0
        %8436 = vmatmul.mubr.bf16.gmra.mrb[0].mxu0 %v8372
        %v8437 = vpop.f32.mrb[0].mxu0
        %v8438 = vadd.f32 0.0, %v8437
        %v8439 = vpop.f32.mrb[0].mxu0
        %v8440 = vpop.f32.mrb[0].mxu0
        %v8441 = vadd.f32 0.0, %v8440
        %v8442 = vpop.f32.mrb[0].mxu0
        %8443 = vmatprep.mubr.bf16.mxu0 0
        %8444 = vmatmul.mubr.bf16.gmra.mrb[0].mxu0 %v8375
        %v8445 = vpop.f32.mrb[0].mxu0
        %v8446 = vadd.f32 0.0, %v8445
        %v8447 = vpop.f32.mrb[0].mxu0
        %v8448 = vpop.f32.mrb[0].mxu0
        %v8449 = vadd.f32 0.0, %v8448
        %v8450 = vpop.f32.mrb[0].mxu0
        %8451 = vmatprep.mubr.bf16.mxu0 0
        %8452 = vmatmul.mubr.bf16.gmra.mrb[0].mxu0 %v8378
        %v8453 = vpop.f32.mrb[0].mxu0
        %v8454 = vadd.f32 0.0, %v8453
        %v8455 = vpop.f32.mrb[0].mxu0
        %v8456 = vpop.f32.mrb[0].mxu0
        %v8457 = vadd.f32 0.0, %v8456
        %v8458 = vpop.f32.mrb[0].mxu0
        %8459 = vmatprep.mubr.bf16.mxu0 0
        %8460 = vmatmul.mubr.bf16.gmra.mrb[0].mxu0 %v8381
        %v8461 = vpop.f32.mrb[0].mxu0
        %v8462 = vadd.f32 0.0, %v8461
        %v8463 = vpop.f32.mrb[0].mxu0
        %v8464 = vpop.f32.mrb[0].mxu0
        %v8465 = vadd.f32 0.0, %v8464
        %v8466 = vpop.f32.mrb[0].mxu0
        %8467 = vmatprep.mubr.bf16.mxu0 0
        %8468 = vmatmul.mubr.bf16.gmra.mrb[0].mxu0 %v8384
        %v8469 = vpop.f32.mrb[0].mxu0
        %v8470 = vadd.f32 0.0, %v8469
        %v8471 = vpop.f32.mrb[0].mxu0
        %v8472 = vpop.f32.mrb[0].mxu0
        %v8473 = vadd.f32 0.0, %v8472
        %v8474 = vpop.f32.mrb[0].mxu0
        %8475 = vmatprep.mubr.bf16.mxu0 0
        %8476 = vmatmul.mubr.bf16.gmra.mrb[0].mxu0 %v8387
        %v8477 = vpop.f32.mrb[0].mxu0
        %v8478 = vadd.f32 0.0, %v8477
        %v8479 = vpop.f32.mrb[0].mxu0
        %v8480 = vpop.f32.mrb[0].mxu0
        %v8481 = vadd.f32 0.0, %v8480
        %v8482 = vpop.f32.mrb[0].mxu0
        %8483 = vmatprep.mubr.bf16.mxu0 0
        %8484 = vmatmul.mubr.bf16.gmra.mrb[0].mxu0 %v8390
        %v8485 = vpop.f32.mrb[0].mxu0
        %v8486 = vadd.f32 0.0, %v8485
        %v8487 = vpop.f32.mrb[0].mxu0
        %v8488 = vpop.f32.mrb[0].mxu0
        %v8489 = vadd.f32 0.0, %v8488
        %v8490 = vpop.f32.mrb[0].mxu0
        %8491 = vdwg.mxu0
        %v8492 = vadd.f32 %v8206, %v8430
        %v8493 = vadd.f32 %v8207, %v8433
        %v8494 = vadd.f32 %v8208, %v8438
        %v8495 = vadd.f32 %v8209, %v8441
        %v8496 = vadd.f32 %v8210, %v8446
        %v8497 = vadd.f32 %v8211, %v8449
        %v8498 = vadd.f32 %v8212, %v8454
        %v8499 = vadd.f32 %v8213, %v8457
        %v8500 = vadd.f32 %v8214, %v8462
        %v8501 = vadd.f32 %v8215, %v8465
        %v8502 = vadd.f32 %v8216, %v8470
        %v8503 = vadd.f32 %v8217, %v8473
        %v8504 = vadd.f32 %v8218, %v8478
        %v8505 = vadd.f32 %v8219, %v8481
        %v8506 = vadd.f32 %v8220, %v8486
        %v8507 = vadd.f32 %v8221, %v8489
        %v8508 = vld [vmem:[#allocation12] sm:$0x1]
        %v8510 = vlaneseq
        %v8511 = vshrl.u32 %v8510, 7
        %v8512 = vsub.s32 0, %v8511
        %v8513 = vrot.slane %v8508, %v8512
        %v8515 = vmul.f32 %v8492, %v8513
        %v8516 = vmul.f32 %v8493, %v8513
        %v8517 = vmul.f32 %v8494, %v8513
        %v8518 = vmul.f32 %v8495, %v8513
        %v8519 = vmul.f32 %v8496, %v8513
        %v8520 = vmul.f32 %v8497, %v8513
        %v8521 = vmul.f32 %v8498, %v8513
        %v8522 = vmul.f32 %v8499, %v8513
        %v8523 = vmul.f32 %v8500, %v8513
        %v8524 = vmul.f32 %v8501, %v8513
        %v8525 = vmul.f32 %v8502, %v8513
        %v8526 = vmul.f32 %v8503, %v8513
        %v8527 = vmul.f32 %v8504, %v8513
        %v8528 = vmul.f32 %v8505, %v8513
        %v8529 = vmul.f32 %v8506, %v8513
        %v8530 = vmul.f32 %v8507, %v8513
        %v8531 = vld [vmem:[#allocation14] sm:$0x1]
        %v8533 = vlaneseq
        %v8534 = vshrl.u32 %v8533, 7
        %v8535 = vsub.s32 0, %v8534
        %v8536 = vrot.slane %v8531, %v8535
        %v8538 = vadd.f32 %v8515, %v8536
        %v8539 = vadd.f32 %v8516, %v8536
        %v8540 = vadd.f32 %v8517, %v8536
        %v8541 = vadd.f32 %v8518, %v8536
        %v8542 = vadd.f32 %v8519, %v8536
        %v8543 = vadd.f32 %v8520, %v8536
        %v8544 = vadd.f32 %v8521, %v8536
        %v8545 = vadd.f32 %v8522, %v8536
        %v8546 = vadd.f32 %v8523, %v8536
        %v8547 = vadd.f32 %v8524, %v8536
        %v8548 = vadd.f32 %v8525, %v8536
        %v8549 = vadd.f32 %v8526, %v8536
        %v8550 = vadd.f32 %v8527, %v8536
        %v8551 = vadd.f32 %v8528, %v8536
        %v8552 = vadd.f32 %v8529, %v8536
        %v8553 = vadd.f32 %v8530, %v8536
        %v8554 = vld [vmem:[%s1391 + $0x4] sm:$0xf]
        %v8555 = vld [vmem:[%s1391 + $0x8] sm:$0xf]
        %v8556 = vld [vmem:[%s1391 + $0x14] sm:$0xf]
        %v8557 = vld [vmem:[%s1391 + $0x18] sm:$0xf]
        %v8558 = vld [vmem:[%s1391 + $0x24] sm:$0xf]
        %v8559 = vld [vmem:[%s1391 + $0x28] sm:$0xf]
        %v8560 = vld [vmem:[%s1391 + $0x34] sm:$0xf]
        %v8561 = vld [vmem:[%s1391 + $0x38] sm:$0xf]
        %v8562 = vld [vmem:[%s1391 + $0x44] sm:$0xf]
        %v8563 = vld [vmem:[%s1391 + $0x48] sm:$0xf]
        %v8564 = vld [vmem:[%s1391 + $0x54] sm:$0xf]
        %v8565 = vld [vmem:[%s1391 + $0x58] sm:$0xf]
        %v8566 = vld [vmem:[%s1391 + $0x64] sm:$0xf]
        %v8567 = vld [vmem:[%s1391 + $0x68] sm:$0xf]
        %v8568 = vld [vmem:[%s1391 + $0x74] sm:$0xf]
        %v8569 = vld [vmem:[%s1391 + $0x78] sm:$0xf]
        %v8570 = vunpack.c.l.bf16 %v8554
        %v8571 = vunpack.c.l.bf16 %v8555
        %v8572 = vunpack.c.l.bf16 %v8556
        %v8573 = vunpack.c.l.bf16 %v8557
        %v8574 = vunpack.c.l.bf16 %v8558
        %v8575 = vunpack.c.l.bf16 %v8559
        %v8576 = vunpack.c.l.bf16 %v8560
        %v8577 = vunpack.c.l.bf16 %v8561
        %v8578 = vunpack.c.l.bf16 %v8562
        %v8579 = vunpack.c.l.bf16 %v8563
        %v8580 = vunpack.c.l.bf16 %v8564
        %v8581 = vunpack.c.l.bf16 %v8565
        %v8582 = vunpack.c.l.bf16 %v8566
        %v8583 = vunpack.c.l.bf16 %v8567
        %v8584 = vunpack.c.l.bf16 %v8568
        %v8585 = vunpack.c.l.bf16 %v8569
        %v8586 = vadd.f32 %v8570, %v8538
        %v8587 = vadd.f32 %v8571, %v8539
        %v8588 = vadd.f32 %v8572, %v8540
        %v8589 = vadd.f32 %v8573, %v8541
        %v8590 = vadd.f32 %v8574, %v8542
        %v8591 = vadd.f32 %v8575, %v8543
        %v8592 = vadd.f32 %v8576, %v8544
        %v8593 = vadd.f32 %v8577, %v8545
        %v8594 = vadd.f32 %v8578, %v8546
        %v8595 = vadd.f32 %v8579, %v8547
        %v8596 = vadd.f32 %v8580, %v8548
        %v8597 = vadd.f32 %v8581, %v8549
        %v8598 = vadd.f32 %v8582, %v8550
        %v8599 = vadd.f32 %v8583, %v8551
        %v8600 = vadd.f32 %v8584, %v8552
        %v8601 = vadd.f32 %v8585, %v8553
        %v8602 = vmax.f32 %v8586, 0.0
        %v8603 = vmax.f32 %v8587, 0.0
        %v8604 = vmax.f32 %v8588, 0.0
        %v8605 = vmax.f32 %v8589, 0.0
        %v8606 = vmax.f32 %v8590, 0.0
        %v8607 = vmax.f32 %v8591, 0.0
        %v8608 = vmax.f32 %v8592, 0.0
        %v8609 = vmax.f32 %v8593, 0.0
        %v8610 = vmax.f32 %v8594, 0.0
        %v8611 = vmax.f32 %v8595, 0.0
        %v8612 = vmax.f32 %v8596, 0.0
        %v8613 = vmax.f32 %v8597, 0.0
        %v8614 = vmax.f32 %v8598, 0.0
        %v8615 = vmax.f32 %v8599, 0.0
        %v8616 = vmax.f32 %v8600, 0.0
        %v8617 = vmax.f32 %v8601, 0.0
        %8618 = vst.msk [vmem:[%s375] sm:$0xff] %vm732, %v8602
        %8619 = vst.msk [vmem:[%s375 + $0x8] sm:$0xff] %vm732, %v8603
        %8620 = vst.msk [vmem:[%s375 + $0x10] sm:$0xff] %vm732, %v8604
        %8621 = vst.msk [vmem:[%s375 + $0x18] sm:$0xff] %vm732, %v8605
        %8622 = vst.msk [vmem:[%s375 + $0x20] sm:$0xff] %vm732, %v8606
        %8623 = vst.msk [vmem:[%s375 + $0x28] sm:$0xff] %vm732, %v8607
        %8624 = vst.msk [vmem:[%s375 + $0x30] sm:$0xff] %vm732, %v8608
        %8625 = vst.msk [vmem:[%s375 + $0x38] sm:$0xff] %vm732, %v8609
        %8626 = vst.msk [vmem:[%s375 + $0x40] sm:$0xff] %vm732, %v8610
        %8627 = vst.msk [vmem:[%s375 + $0x48] sm:$0xff] %vm732, %v8611
        %8628 = vst.msk [vmem:[%s375 + $0x50] sm:$0xff] %vm732, %v8612
        %8629 = vst.msk [vmem:[%s375 + $0x58] sm:$0xff] %vm732, %v8613
        %8630 = vst.msk [vmem:[%s375 + $0x60] sm:$0xff] %vm732, %v8614
        %8631 = vst.msk [vmem:[%s375 + $0x68] sm:$0xff] %vm732, %v8615
        %8632 = vst.msk [vmem:[%s375 + $0x70] sm:$0xff] %vm732, %v8616
        %8633 = vst.msk [vmem:[%s375 + $0x78] sm:$0xff] %vm732, %v8617
        %s8634 = scalar_lea.vmem [#allocation2], 128
        %v8635 = vld [vmem:[%s8634] sm:$0xf8]
        %v8636 = vld [vmem:[%s8634 + $0x8] sm:$0xf]
        %v8637 = vld [vmem:[%s8634 + $0x10] sm:$0xf8]
        %v8638 = vld [vmem:[%s8634 + $0x18] sm:$0xf]
        %v8639 = vld [vmem:[%s8634 + $0x20] sm:$0xf8]
        %v8640 = vld [vmem:[%s8634 + $0x28] sm:$0xf]
        %v8641 = vld [vmem:[%s8634 + $0x30] sm:$0xf8]
        %v8642 = vld [vmem:[%s8634 + $0x38] sm:$0xf]
        %v8643 = vld [vmem:[%s8634 + $0x40] sm:$0xf8]
        %v8644 = vld [vmem:[%s8634 + $0x48] sm:$0xf]
        %v8645 = vld [vmem:[%s8634 + $0x50] sm:$0xf8]
        %v8646 = vld [vmem:[%s8634 + $0x58] sm:$0xf]
        %v8647 = vld [vmem:[%s8634 + $0x60] sm:$0xf8]
        %v8648 = vld [vmem:[%s8634 + $0x68] sm:$0xf]
        %v8649 = vld [vmem:[%s8634 + $0x70] sm:$0xf8]
        %v8650 = vld [vmem:[%s8634 + $0x78] sm:$0xf]
        %v8652 = vshrl.u32 %v8635, 16
        %v8654 = vrot.slane %v8652, 3
        %v8655 = vshll.u32 %v8635, 16
        %v8657 = vrot.slane %v8655, 4
        %v8658 = vor.u32 %v8654, %v8657
        %v8660 = vshrl.u32 %v8636, 16
        %v8662 = vrot.slane %v8660, 3
        %v8663 = vshll.u32 %v8636, 16
        %v8665 = vrot.slane %v8663, 4
        %v8666 = vor.u32 %v8662, %v8665
        %v8667 = vsel %vm436, %v8658, %v8666
        %v8669 = vshrl.u32 %v8637, 16
        %v8671 = vrot.slane %v8669, 3
        %v8672 = vshll.u32 %v8637, 16
        %v8674 = vrot.slane %v8672, 4
        %v8675 = vor.u32 %v8671, %v8674
        %v8677 = vshrl.u32 %v8638, 16
        %v8679 = vrot.slane %v8677, 3
        %v8680 = vshll.u32 %v8638, 16
        %v8682 = vrot.slane %v8680, 4
        %v8683 = vor.u32 %v8679, %v8682
        %v8684 = vsel %vm436, %v8675, %v8683
        %v8686 = vshrl.u32 %v8639, 16
        %v8688 = vrot.slane %v8686, 3
        %v8689 = vshll.u32 %v8639, 16
        %v8691 = vrot.slane %v8689, 4
        %v8692 = vor.u32 %v8688, %v8691
        %v8694 = vshrl.u32 %v8640, 16
        %v8696 = vrot.slane %v8694, 3
        %v8697 = vshll.u32 %v8640, 16
        %v8699 = vrot.slane %v8697, 4
        %v8700 = vor.u32 %v8696, %v8699
        %v8701 = vsel %vm436, %v8692, %v8700
        %v8703 = vshrl.u32 %v8641, 16
        %v8705 = vrot.slane %v8703, 3
        %v8706 = vshll.u32 %v8641, 16
        %v8708 = vrot.slane %v8706, 4
        %v8709 = vor.u32 %v8705, %v8708
        %v8711 = vshrl.u32 %v8642, 16
        %v8713 = vrot.slane %v8711, 3
        %v8714 = vshll.u32 %v8642, 16
        %v8716 = vrot.slane %v8714, 4
        %v8717 = vor.u32 %v8713, %v8716
        %v8718 = vsel %vm436, %v8709, %v8717
        %v8720 = vshrl.u32 %v8643, 16
        %v8722 = vrot.slane %v8720, 3
        %v8723 = vshll.u32 %v8643, 16
        %v8725 = vrot.slane %v8723, 4
        %v8726 = vor.u32 %v8722, %v8725
        %v8728 = vshrl.u32 %v8644, 16
        %v8730 = vrot.slane %v8728, 3
        %v8731 = vshll.u32 %v8644, 16
        %v8733 = vrot.slane %v8731, 4
        %v8734 = vor.u32 %v8730, %v8733
        %v8735 = vsel %vm436, %v8726, %v8734
        %v8737 = vshrl.u32 %v8645, 16
        %v8739 = vrot.slane %v8737, 3
        %v8740 = vshll.u32 %v8645, 16
        %v8742 = vrot.slane %v8740, 4
        %v8743 = vor.u32 %v8739, %v8742
        %v8745 = vshrl.u32 %v8646, 16
        %v8747 = vrot.slane %v8745, 3
        %v8748 = vshll.u32 %v8646, 16
        %v8750 = vrot.slane %v8748, 4
        %v8751 = vor.u32 %v8747, %v8750
        %v8752 = vsel %vm436, %v8743, %v8751
        %v8754 = vshrl.u32 %v8647, 16
        %v8756 = vrot.slane %v8754, 3
        %v8757 = vshll.u32 %v8647, 16
        %v8759 = vrot.slane %v8757, 4
        %v8760 = vor.u32 %v8756, %v8759
        %v8762 = vshrl.u32 %v8648, 16
        %v8764 = vrot.slane %v8762, 3
        %v8765 = vshll.u32 %v8648, 16
        %v8767 = vrot.slane %v8765, 4
        %v8768 = vor.u32 %v8764, %v8767
        %v8769 = vsel %vm436, %v8760, %v8768
        %v8771 = vshrl.u32 %v8649, 16
        %v8773 = vrot.slane %v8771, 3
        %v8774 = vshll.u32 %v8649, 16
        %v8776 = vrot.slane %v8774, 4
        %v8777 = vor.u32 %v8773, %v8776
        %v8779 = vshrl.u32 %v8650, 16
        %v8781 = vrot.slane %v8779, 3
        %v8782 = vshll.u32 %v8650, 16
        %v8784 = vrot.slane %v8782, 4
        %v8785 = vor.u32 %v8781, %v8784
        %v8786 = vsel %vm436, %v8777, %v8785
        %v8787 = vld [vmem:[#allocation11] sm:$0xf]
        %v8788 = vld [vmem:[%s8634] sm:$0xf0]
        %v8789 = vld [vmem:[%s8634 + $0x10] sm:$0xf0]
        %v8790 = vld [vmem:[%s8634 + $0x20] sm:$0xf0]
        %v8791 = vld [vmem:[%s8634 + $0x30] sm:$0xf0]
        %v8792 = vld [vmem:[%s8634 + $0x40] sm:$0xf0]
        %v8793 = vld [vmem:[%s8634 + $0x50] sm:$0xf0]
        %v8794 = vld [vmem:[%s8634 + $0x60] sm:$0xf0]
        %v8795 = vld [vmem:[%s8634 + $0x70] sm:$0xf0]
        %v8812 = vrot.slane %v8788, 4
        %v8813 = vrot.slane %v8636, 4
        %v8814 = vsel %vm6405, %v8812, %v8813
        %v8815 = vrot.slane %v8789, 4
        %v8816 = vrot.slane %v8638, 4
        %v8817 = vsel %vm6405, %v8815, %v8816
        %v8818 = vrot.slane %v8790, 4
        %v8819 = vrot.slane %v8640, 4
        %v8820 = vsel %vm6405, %v8818, %v8819
        %v8821 = vrot.slane %v8791, 4
        %v8822 = vrot.slane %v8642, 4
        %v8823 = vsel %vm6405, %v8821, %v8822
        %v8824 = vrot.slane %v8792, 4
        %v8825 = vrot.slane %v8644, 4
        %v8826 = vsel %vm6405, %v8824, %v8825
        %v8827 = vrot.slane %v8793, 4
        %v8828 = vrot.slane %v8646, 4
        %v8829 = vsel %vm6405, %v8827, %v8828
        %v8830 = vrot.slane %v8794, 4
        %v8831 = vrot.slane %v8648, 4
        %v8832 = vsel %vm6405, %v8830, %v8831
        %v8833 = vrot.slane %v8795, 4
        %v8834 = vrot.slane %v8650, 4
        %v8835 = vsel %vm6405, %v8833, %v8834
        %v8836 = vld [vmem:[%s6430] sm:$0xf]
        %v8838 = vsel %vm377, %v8814, 0
        %v8841 = vsel %vm377, %v8817, 0
        %v8844 = vsel %vm377, %v8820, 0
        %v8847 = vsel %vm377, %v8823, 0
        %v8850 = vsel %vm377, %v8826, 0
        %v8853 = vsel %vm377, %v8829, 0
        %v8856 = vsel %vm377, %v8832, 0
        %v8859 = vsel %vm377, %v8835, 0
        %v8862 = vsel %vm6456, %v8836, 0
        %8864 = vmatprep.subr.bf16.mxu0 0
        %8865 = vmatpush1.bf16.msra.mxu0 %v8862
        %8866 = vmatprep.subr.bf16.mxu0 0
        %8867 = vmatpush1.bf16.msra.mxu0 0
        %8868 = vmatprep.subr.bf16.mxu0 0
        %8869 = vmatpush1.bf16.msra.mxu0 0
        %8870 = vmatprep.subr.bf16.mxu0 0
        %8871 = vmatpush1.bf16.msra.mxu0 0
        %8872 = vmatprep.subr.bf16.mxu0 0
        %8873 = vmatpush1.bf16.msra.mxu0 0
        %8874 = vmatprep.subr.bf16.mxu0 0
        %8875 = vmatpush1.bf16.msra.mxu0 0
        %8876 = vmatprep.subr.bf16.mxu0 0
        %8877 = vmatpush1.bf16.msra.mxu0 0
        %8878 = vmatprep.subr.bf16.mxu0 0
        %8879 = vmatpush1.bf16.msra.mxu0 0
        %8880 = vmatprep.subr.bf16.mxu0 0
        %8881 = vmatpush1.bf16.msra.mxu0 0
        %8882 = vmatprep.subr.bf16.mxu0 0
        %8883 = vmatpush1.bf16.msra.mxu0 0
        %8884 = vmatprep.subr.bf16.mxu0 0
        %8885 = vmatpush1.bf16.msra.mxu0 0
        %8886 = vmatprep.subr.bf16.mxu0 0
        %8887 = vmatpush1.bf16.msra.mxu0 0
        %8888 = vmatprep.subr.bf16.mxu0 0
        %8889 = vmatpush1.bf16.msra.mxu0 0
        %8890 = vmatprep.subr.bf16.mxu0 0
        %8891 = vmatpush1.bf16.msra.mxu0 0
        %8892 = vmatprep.subr.bf16.mxu0 0
        %8893 = vmatpush1.bf16.msra.mxu0 0
        %8894 = vmatprep.subr.bf16.mxu0 0
        %8895 = vmatpush1.bf16.msra.mxu0 0
        %8896 = vmatprep.mubr.bf16.mxu0 0
        %8897 = vmatmul.mubr.bf16.gmra.mrb[0].mxu0 %v8838
        %v8898 = vpop.f32.mrb[0].mxu0
        %v8899 = vadd.f32 0.0, %v8898
        %v8900 = vpop.f32.mrb[0].mxu0
        %v8901 = vpop.f32.mrb[0].mxu0
        %v8902 = vadd.f32 0.0, %v8901
        %v8903 = vpop.f32.mrb[0].mxu0
        %8904 = vmatprep.mubr.bf16.mxu0 0
        %8905 = vmatmul.mubr.bf16.gmra.mrb[0].mxu0 %v8841
        %v8906 = vpop.f32.mrb[0].mxu0
        %v8907 = vadd.f32 0.0, %v8906
        %v8908 = vpop.f32.mrb[0].mxu0
        %v8909 = vpop.f32.mrb[0].mxu0
        %v8910 = vadd.f32 0.0, %v8909
        %v8911 = vpop.f32.mrb[0].mxu0
        %8912 = vmatprep.mubr.bf16.mxu0 0
        %8913 = vmatmul.mubr.bf16.gmra.mrb[0].mxu0 %v8844
        %v8914 = vpop.f32.mrb[0].mxu0
        %v8915 = vadd.f32 0.0, %v8914
        %v8916 = vpop.f32.mrb[0].mxu0
        %v8917 = vpop.f32.mrb[0].mxu0
        %v8918 = vadd.f32 0.0, %v8917
        %v8919 = vpop.f32.mrb[0].mxu0
        %8920 = vmatprep.mubr.bf16.mxu0 0
        %8921 = vmatmul.mubr.bf16.gmra.mrb[0].mxu0 %v8847
        %v8922 = vpop.f32.mrb[0].mxu0
        %v8923 = vadd.f32 0.0, %v8922
        %v8924 = vpop.f32.mrb[0].mxu0
        %v8925 = vpop.f32.mrb[0].mxu0
        %v8926 = vadd.f32 0.0, %v8925
        %v8927 = vpop.f32.mrb[0].mxu0
        %8928 = vmatprep.mubr.bf16.mxu0 0
        %8929 = vmatmul.mubr.bf16.gmra.mrb[0].mxu0 %v8850
        %v8930 = vpop.f32.mrb[0].mxu0
        %v8931 = vadd.f32 0.0, %v8930
        %v8932 = vpop.f32.mrb[0].mxu0
        %v8933 = vpop.f32.mrb[0].mxu0
        %v8934 = vadd.f32 0.0, %v8933
        %v8935 = vpop.f32.mrb[0].mxu0
        %8936 = vmatprep.mubr.bf16.mxu0 0
        %8937 = vmatmul.mubr.bf16.gmra.mrb[0].mxu0 %v8853
        %v8938 = vpop.f32.mrb[0].mxu0
        %v8939 = vadd.f32 0.0, %v8938
        %v8940 = vpop.f32.mrb[0].mxu0
        %v8941 = vpop.f32.mrb[0].mxu0
        %v8942 = vadd.f32 0.0, %v8941
        %v8943 = vpop.f32.mrb[0].mxu0
        %8944 = vmatprep.mubr.bf16.mxu0 0
        %8945 = vmatmul.mubr.bf16.gmra.mrb[0].mxu0 %v8856
        %v8946 = vpop.f32.mrb[0].mxu0
        %v8947 = vadd.f32 0.0, %v8946
        %v8948 = vpop.f32.mrb[0].mxu0
        %v8949 = vpop.f32.mrb[0].mxu0
        %v8950 = vadd.f32 0.0, %v8949
        %v8951 = vpop.f32.mrb[0].mxu0
        %8952 = vmatprep.mubr.bf16.mxu0 0
        %8953 = vmatmul.mubr.bf16.gmra.mrb[0].mxu0 %v8859
        %v8954 = vpop.f32.mrb[0].mxu0
        %v8955 = vadd.f32 0.0, %v8954
        %v8956 = vpop.f32.mrb[0].mxu0
        %v8957 = vpop.f32.mrb[0].mxu0
        %v8958 = vadd.f32 0.0, %v8957
        %v8959 = vpop.f32.mrb[0].mxu0
        %8960 = vdwg.mxu0
        %v8962 = vsel %vm377, %v8667, 0
        %v8965 = vsel %vm377, %v8684, 0
        %v8968 = vsel %vm377, %v8701, 0
        %v8971 = vsel %vm377, %v8718, 0
        %v8974 = vsel %vm377, %v8735, 0
        %v8977 = vsel %vm377, %v8752, 0
        %v8980 = vsel %vm377, %v8769, 0
        %v8983 = vsel %vm377, %v8786, 0
        %v8986 = vsel %vm6456, %v8787, 0
        %8988 = vmatprep.subr.bf16.mxu0 0
        %8989 = vmatpush1.bf16.msra.mxu0 %v8986
        %8990 = vmatprep.subr.bf16.mxu0 0
        %8991 = vmatpush1.bf16.msra.mxu0 0
        %8992 = vmatprep.subr.bf16.mxu0 0
        %8993 = vmatpush1.bf16.msra.mxu0 0
        %8994 = vmatprep.subr.bf16.mxu0 0
        %8995 = vmatpush1.bf16.msra.mxu0 0
        %8996 = vmatprep.subr.bf16.mxu0 0
        %8997 = vmatpush1.bf16.msra.mxu0 0
        %8998 = vmatprep.subr.bf16.mxu0 0
        %8999 = vmatpush1.bf16.msra.mxu0 0
        %9000 = vmatprep.subr.bf16.mxu0 0
        %9001 = vmatpush1.bf16.msra.mxu0 0
        %9002 = vmatprep.subr.bf16.mxu0 0
        %9003 = vmatpush1.bf16.msra.mxu0 0
        %9004 = vmatprep.subr.bf16.mxu0 0
        %9005 = vmatpush1.bf16.msra.mxu0 0
        %9006 = vmatprep.subr.bf16.mxu0 0
        %9007 = vmatpush1.bf16.msra.mxu0 0
        %9008 = vmatprep.subr.bf16.mxu0 0
        %9009 = vmatpush1.bf16.msra.mxu0 0
        %9010 = vmatprep.subr.bf16.mxu0 0
        %9011 = vmatpush1.bf16.msra.mxu0 0
        %9012 = vmatprep.subr.bf16.mxu0 0
        %9013 = vmatpush1.bf16.msra.mxu0 0
        %9014 = vmatprep.subr.bf16.mxu0 0
        %9015 = vmatpush1.bf16.msra.mxu0 0
        %9016 = vmatprep.subr.bf16.mxu0 0
        %9017 = vmatpush1.bf16.msra.mxu0 0
        %9018 = vmatprep.subr.bf16.mxu0 0
        %9019 = vmatpush1.bf16.msra.mxu0 0
        %9020 = vmatprep.mubr.bf16.mxu0 0
        %9021 = vmatmul.mubr.bf16.gmra.mrb[0].mxu0 %v8962
        %v9022 = vpop.f32.mrb[0].mxu0
        %v9023 = vadd.f32 %v8899, %v9022
        %v9024 = vpop.f32.mrb[0].mxu0
        %v9025 = vpop.f32.mrb[0].mxu0
        %v9026 = vadd.f32 %v8902, %v9025
        %v9027 = vpop.f32.mrb[0].mxu0
        %9028 = vmatprep.mubr.bf16.mxu0 0
        %9029 = vmatmul.mubr.bf16.gmra.mrb[0].mxu0 %v8965
        %v9030 = vpop.f32.mrb[0].mxu0
        %v9031 = vadd.f32 %v8907, %v9030
        %v9032 = vpop.f32.mrb[0].mxu0
        %v9033 = vpop.f32.mrb[0].mxu0
        %v9034 = vadd.f32 %v8910, %v9033
        %v9035 = vpop.f32.mrb[0].mxu0
        %9036 = vmatprep.mubr.bf16.mxu0 0
        %9037 = vmatmul.mubr.bf16.gmra.mrb[0].mxu0 %v8968
        %v9038 = vpop.f32.mrb[0].mxu0
        %v9039 = vadd.f32 %v8915, %v9038
        %v9040 = vpop.f32.mrb[0].mxu0
        %v9041 = vpop.f32.mrb[0].mxu0
        %v9042 = vadd.f32 %v8918, %v9041
        %v9043 = vpop.f32.mrb[0].mxu0
        %9044 = vmatprep.mubr.bf16.mxu0 0
        %9045 = vmatmul.mubr.bf16.gmra.mrb[0].mxu0 %v8971
        %v9046 = vpop.f32.mrb[0].mxu0
        %v9047 = vadd.f32 %v8923, %v9046
        %v9048 = vpop.f32.mrb[0].mxu0
        %v9049 = vpop.f32.mrb[0].mxu0
        %v9050 = vadd.f32 %v8926, %v9049
        %v9051 = vpop.f32.mrb[0].mxu0
        %9052 = vmatprep.mubr.bf16.mxu0 0
        %9053 = vmatmul.mubr.bf16.gmra.mrb[0].mxu0 %v8974
        %v9054 = vpop.f32.mrb[0].mxu0
        %v9055 = vadd.f32 %v8931, %v9054
        %v9056 = vpop.f32.mrb[0].mxu0
        %v9057 = vpop.f32.mrb[0].mxu0
        %v9058 = vadd.f32 %v8934, %v9057
        %v9059 = vpop.f32.mrb[0].mxu0
        %9060 = vmatprep.mubr.bf16.mxu0 0
        %9061 = vmatmul.mubr.bf16.gmra.mrb[0].mxu0 %v8977
        %v9062 = vpop.f32.mrb[0].mxu0
        %v9063 = vadd.f32 %v8939, %v9062
        %v9064 = vpop.f32.mrb[0].mxu0
        %v9065 = vpop.f32.mrb[0].mxu0
        %v9066 = vadd.f32 %v8942, %v9065
        %v9067 = vpop.f32.mrb[0].mxu0
        %9068 = vmatprep.mubr.bf16.mxu0 0
        %9069 = vmatmul.mubr.bf16.gmra.mrb[0].mxu0 %v8980
        %v9070 = vpop.f32.mrb[0].mxu0
        %v9071 = vadd.f32 %v8947, %v9070
        %v9072 = vpop.f32.mrb[0].mxu0
        %v9073 = vpop.f32.mrb[0].mxu0
        %v9074 = vadd.f32 %v8950, %v9073
        %v9075 = vpop.f32.mrb[0].mxu0
        %9076 = vmatprep.mubr.bf16.mxu0 0
        %9077 = vmatmul.mubr.bf16.gmra.mrb[0].mxu0 %v8983
        %v9078 = vpop.f32.mrb[0].mxu0
        %v9079 = vadd.f32 %v8955, %v9078
        %v9080 = vpop.f32.mrb[0].mxu0
        %v9081 = vpop.f32.mrb[0].mxu0
        %v9082 = vadd.f32 %v8958, %v9081
        %v9083 = vpop.f32.mrb[0].mxu0
        %9084 = vdwg.mxu0
        %v9085 = vld [vmem:[%s8634 + $0x8] sm:$0x1f]
        %v9086 = vld [vmem:[%s8634 + $0x18] sm:$0x1f]
        %v9087 = vld [vmem:[%s8634 + $0x28] sm:$0x1f]
        %v9088 = vld [vmem:[%s8634 + $0x38] sm:$0x1f]
        %v9089 = vld [vmem:[%s8634 + $0x48] sm:$0x1f]
        %v9090 = vld [vmem:[%s8634 + $0x58] sm:$0x1f]
        %v9091 = vld [vmem:[%s8634 + $0x68] sm:$0x1f]
        %v9092 = vld [vmem:[%s8634 + $0x78] sm:$0x1f]
        %v9094 = vshrl.u32 %v8788, 16
        %v9096 = vrot.slane %v9094, 4
        %v9097 = vshll.u32 %v8788, 16
        %v9099 = vrot.slane %v9097, 5
        %v9100 = vor.u32 %v9096, %v9099
        %v9102 = vshrl.u32 %v9085, 16
        %v9104 = vrot.slane %v9102, 4
        %v9105 = vshll.u32 %v9085, 16
        %v9107 = vrot.slane %v9105, 5
        %v9108 = vor.u32 %v9104, %v9107
        %v9109 = vsel %vm1030, %v9100, %v9108
        %v9111 = vshrl.u32 %v8789, 16
        %v9113 = vrot.slane %v9111, 4
        %v9114 = vshll.u32 %v8789, 16
        %v9116 = vrot.slane %v9114, 5
        %v9117 = vor.u32 %v9113, %v9116
        %v9119 = vshrl.u32 %v9086, 16
        %v9121 = vrot.slane %v9119, 4
        %v9122 = vshll.u32 %v9086, 16
        %v9124 = vrot.slane %v9122, 5
        %v9125 = vor.u32 %v9121, %v9124
        %v9126 = vsel %vm1030, %v9117, %v9125
        %v9128 = vshrl.u32 %v8790, 16
        %v9130 = vrot.slane %v9128, 4
        %v9131 = vshll.u32 %v8790, 16
        %v9133 = vrot.slane %v9131, 5
        %v9134 = vor.u32 %v9130, %v9133
        %v9136 = vshrl.u32 %v9087, 16
        %v9138 = vrot.slane %v9136, 4
        %v9139 = vshll.u32 %v9087, 16
        %v9141 = vrot.slane %v9139, 5
        %v9142 = vor.u32 %v9138, %v9141
        %v9143 = vsel %vm1030, %v9134, %v9142
        %v9145 = vshrl.u32 %v8791, 16
        %v9147 = vrot.slane %v9145, 4
        %v9148 = vshll.u32 %v8791, 16
        %v9150 = vrot.slane %v9148, 5
        %v9151 = vor.u32 %v9147, %v9150
        %v9153 = vshrl.u32 %v9088, 16
        %v9155 = vrot.slane %v9153, 4
        %v9156 = vshll.u32 %v9088, 16
        %v9158 = vrot.slane %v9156, 5
        %v9159 = vor.u32 %v9155, %v9158
        %v9160 = vsel %vm1030, %v9151, %v9159
        %v9162 = vshrl.u32 %v8792, 16
        %v9164 = vrot.slane %v9162, 4
        %v9165 = vshll.u32 %v8792, 16
        %v9167 = vrot.slane %v9165, 5
        %v9168 = vor.u32 %v9164, %v9167
        %v9170 = vshrl.u32 %v9089, 16
        %v9172 = vrot.slane %v9170, 4
        %v9173 = vshll.u32 %v9089, 16
        %v9175 = vrot.slane %v9173, 5
        %v9176 = vor.u32 %v9172, %v9175
        %v9177 = vsel %vm1030, %v9168, %v9176
        %v9179 = vshrl.u32 %v8793, 16
        %v9181 = vrot.slane %v9179, 4
        %v9182 = vshll.u32 %v8793, 16
        %v9184 = vrot.slane %v9182, 5
        %v9185 = vor.u32 %v9181, %v9184
        %v9187 = vshrl.u32 %v9090, 16
        %v9189 = vrot.slane %v9187, 4
        %v9190 = vshll.u32 %v9090, 16
        %v9192 = vrot.slane %v9190, 5
        %v9193 = vor.u32 %v9189, %v9192
        %v9194 = vsel %vm1030, %v9185, %v9193
        %v9196 = vshrl.u32 %v8794, 16
        %v9198 = vrot.slane %v9196, 4
        %v9199 = vshll.u32 %v8794, 16
        %v9201 = vrot.slane %v9199, 5
        %v9202 = vor.u32 %v9198, %v9201
        %v9204 = vshrl.u32 %v9091, 16
        %v9206 = vrot.slane %v9204, 4
        %v9207 = vshll.u32 %v9091, 16
        %v9209 = vrot.slane %v9207, 5
        %v9210 = vor.u32 %v9206, %v9209
        %v9211 = vsel %vm1030, %v9202, %v9210
        %v9213 = vshrl.u32 %v8795, 16
        %v9215 = vrot.slane %v9213, 4
        %v9216 = vshll.u32 %v8795, 16
        %v9218 = vrot.slane %v9216, 5
        %v9219 = vor.u32 %v9215, %v9218
        %v9221 = vshrl.u32 %v9092, 16
        %v9223 = vrot.slane %v9221, 4
        %v9224 = vshll.u32 %v9092, 16
        %v9226 = vrot.slane %v9224, 5
        %v9227 = vor.u32 %v9223, %v9226
        %v9228 = vsel %vm1030, %v9219, %v9227
        %v9229 = vld [vmem:[%s6825] sm:$0xf]
        %v9231 = vsel %vm377, %v9109, 0
        %v9234 = vsel %vm377, %v9126, 0
        %v9237 = vsel %vm377, %v9143, 0
        %v9240 = vsel %vm377, %v9160, 0
        %v9243 = vsel %vm377, %v9177, 0
        %v9246 = vsel %vm377, %v9194, 0
        %v9249 = vsel %vm377, %v9211, 0
        %v9252 = vsel %vm377, %v9228, 0
        %v9255 = vsel %vm6456, %v9229, 0
        %9257 = vmatprep.subr.bf16.mxu0 0
        %9258 = vmatpush1.bf16.msra.mxu0 %v9255
        %9259 = vmatprep.subr.bf16.mxu0 0
        %9260 = vmatpush1.bf16.msra.mxu0 0
        %9261 = vmatprep.subr.bf16.mxu0 0
        %9262 = vmatpush1.bf16.msra.mxu0 0
        %9263 = vmatprep.subr.bf16.mxu0 0
        %9264 = vmatpush1.bf16.msra.mxu0 0
        %9265 = vmatprep.subr.bf16.mxu0 0
        %9266 = vmatpush1.bf16.msra.mxu0 0
        %9267 = vmatprep.subr.bf16.mxu0 0
        %9268 = vmatpush1.bf16.msra.mxu0 0
        %9269 = vmatprep.subr.bf16.mxu0 0
        %9270 = vmatpush1.bf16.msra.mxu0 0
        %9271 = vmatprep.subr.bf16.mxu0 0
        %9272 = vmatpush1.bf16.msra.mxu0 0
        %9273 = vmatprep.subr.bf16.mxu0 0
        %9274 = vmatpush1.bf16.msra.mxu0 0
        %9275 = vmatprep.subr.bf16.mxu0 0
        %9276 = vmatpush1.bf16.msra.mxu0 0
        %9277 = vmatprep.subr.bf16.mxu0 0
        %9278 = vmatpush1.bf16.msra.mxu0 0
        %9279 = vmatprep.subr.bf16.mxu0 0
        %9280 = vmatpush1.bf16.msra.mxu0 0
        %9281 = vmatprep.subr.bf16.mxu0 0
        %9282 = vmatpush1.bf16.msra.mxu0 0
        %9283 = vmatprep.subr.bf16.mxu0 0
        %9284 = vmatpush1.bf16.msra.mxu0 0
        %9285 = vmatprep.subr.bf16.mxu0 0
        %9286 = vmatpush1.bf16.msra.mxu0 0
        %9287 = vmatprep.subr.bf16.mxu0 0
        %9288 = vmatpush1.bf16.msra.mxu0 0
        %9289 = vmatprep.mubr.bf16.mxu0 0
        %9290 = vmatmul.mubr.bf16.gmra.mrb[0].mxu0 %v9231
        %v9291 = vpop.f32.mrb[0].mxu0
        %v9292 = vadd.f32 0.0, %v9291
        %v9293 = vpop.f32.mrb[0].mxu0
        %v9294 = vpop.f32.mrb[0].mxu0
        %v9295 = vadd.f32 0.0, %v9294
        %v9296 = vpop.f32.mrb[0].mxu0
        %9297 = vmatprep.mubr.bf16.mxu0 0
        %9298 = vmatmul.mubr.bf16.gmra.mrb[0].mxu0 %v9234
        %v9299 = vpop.f32.mrb[0].mxu0
        %v9300 = vadd.f32 0.0, %v9299
        %v9301 = vpop.f32.mrb[0].mxu0
        %v9302 = vpop.f32.mrb[0].mxu0
        %v9303 = vadd.f32 0.0, %v9302
        %v9304 = vpop.f32.mrb[0].mxu0
        %9305 = vmatprep.mubr.bf16.mxu0 0
        %9306 = vmatmul.mubr.bf16.gmra.mrb[0].mxu0 %v9237
        %v9307 = vpop.f32.mrb[0].mxu0
        %v9308 = vadd.f32 0.0, %v9307
        %v9309 = vpop.f32.mrb[0].mxu0
        %v9310 = vpop.f32.mrb[0].mxu0
        %v9311 = vadd.f32 0.0, %v9310
        %v9312 = vpop.f32.mrb[0].mxu0
        %9313 = vmatprep.mubr.bf16.mxu0 0
        %9314 = vmatmul.mubr.bf16.gmra.mrb[0].mxu0 %v9240
        %v9315 = vpop.f32.mrb[0].mxu0
        %v9316 = vadd.f32 0.0, %v9315
        %v9317 = vpop.f32.mrb[0].mxu0
        %v9318 = vpop.f32.mrb[0].mxu0
        %v9319 = vadd.f32 0.0, %v9318
        %v9320 = vpop.f32.mrb[0].mxu0
        %9321 = vmatprep.mubr.bf16.mxu0 0
        %9322 = vmatmul.mubr.bf16.gmra.mrb[0].mxu0 %v9243
        %v9323 = vpop.f32.mrb[0].mxu0
        %v9324 = vadd.f32 0.0, %v9323
        %v9325 = vpop.f32.mrb[0].mxu0
        %v9326 = vpop.f32.mrb[0].mxu0
        %v9327 = vadd.f32 0.0, %v9326
        %v9328 = vpop.f32.mrb[0].mxu0
        %9329 = vmatprep.mubr.bf16.mxu0 0
        %9330 = vmatmul.mubr.bf16.gmra.mrb[0].mxu0 %v9246
        %v9331 = vpop.f32.mrb[0].mxu0
        %v9332 = vadd.f32 0.0, %v9331
        %v9333 = vpop.f32.mrb[0].mxu0
        %v9334 = vpop.f32.mrb[0].mxu0
        %v9335 = vadd.f32 0.0, %v9334
        %v9336 = vpop.f32.mrb[0].mxu0
        %9337 = vmatprep.mubr.bf16.mxu0 0
        %9338 = vmatmul.mubr.bf16.gmra.mrb[0].mxu0 %v9249
        %v9339 = vpop.f32.mrb[0].mxu0
        %v9340 = vadd.f32 0.0, %v9339
        %v9341 = vpop.f32.mrb[0].mxu0
        %v9342 = vpop.f32.mrb[0].mxu0
        %v9343 = vadd.f32 0.0, %v9342
        %v9344 = vpop.f32.mrb[0].mxu0
        %9345 = vmatprep.mubr.bf16.mxu0 0
        %9346 = vmatmul.mubr.bf16.gmra.mrb[0].mxu0 %v9252
        %v9347 = vpop.f32.mrb[0].mxu0
        %v9348 = vadd.f32 0.0, %v9347
        %v9349 = vpop.f32.mrb[0].mxu0
        %v9350 = vpop.f32.mrb[0].mxu0
        %v9351 = vadd.f32 0.0, %v9350
        %v9352 = vpop.f32.mrb[0].mxu0
        %9353 = vdwg.mxu0
        %v9354 = vadd.f32 %v9023, %v9292
        %v9355 = vadd.f32 %v9026, %v9295
        %v9356 = vadd.f32 %v9031, %v9300
        %v9357 = vadd.f32 %v9034, %v9303
        %v9358 = vadd.f32 %v9039, %v9308
        %v9359 = vadd.f32 %v9042, %v9311
        %v9360 = vadd.f32 %v9047, %v9316
        %v9361 = vadd.f32 %v9050, %v9319
        %v9362 = vadd.f32 %v9055, %v9324
        %v9363 = vadd.f32 %v9058, %v9327
        %v9364 = vadd.f32 %v9063, %v9332
        %v9365 = vadd.f32 %v9066, %v9335
        %v9366 = vadd.f32 %v9071, %v9340
        %v9367 = vadd.f32 %v9074, %v9343
        %v9368 = vadd.f32 %v9079, %v9348
        %v9369 = vadd.f32 %v9082, %v9351
        %v9370 = vld [vmem:[%s6211] sm:$0xf8]
        %v9371 = vld [vmem:[%s6211 + $0x8] sm:$0xf]
        %v9372 = vld [vmem:[%s6211 + $0x10] sm:$0xf8]
        %v9373 = vld [vmem:[%s6211 + $0x18] sm:$0xf]
        %v9374 = vld [vmem:[%s6211 + $0x20] sm:$0xf8]
        %v9375 = vld [vmem:[%s6211 + $0x28] sm:$0xf]
        %v9376 = vld [vmem:[%s6211 + $0x30] sm:$0xf8]
        %v9377 = vld [vmem:[%s6211 + $0x38] sm:$0xf]
        %v9378 = vld [vmem:[%s6211 + $0x40] sm:$0xf8]
        %v9379 = vld [vmem:[%s6211 + $0x48] sm:$0xf]
        %v9380 = vld [vmem:[%s6211 + $0x50] sm:$0xf8]
        %v9381 = vld [vmem:[%s6211 + $0x58] sm:$0xf]
        %v9382 = vld [vmem:[%s6211 + $0x60] sm:$0xf8]
        %v9383 = vld [vmem:[%s6211 + $0x68] sm:$0xf]
        %v9384 = vld [vmem:[%s6211 + $0x70] sm:$0xf8]
        %v9385 = vld [vmem:[%s6211 + $0x78] sm:$0xf]
        %v9387 = vshrl.u32 %v9370, 16
        %v9389 = vrot.slane %v9387, 3
        %v9390 = vshll.u32 %v9370, 16
        %v9392 = vrot.slane %v9390, 4
        %v9393 = vor.u32 %v9389, %v9392
        %v9395 = vshrl.u32 %v9371, 16
        %v9397 = vrot.slane %v9395, 3
        %v9398 = vshll.u32 %v9371, 16
        %v9400 = vrot.slane %v9398, 4
        %v9401 = vor.u32 %v9397, %v9400
        %v9402 = vsel %vm436, %v9393, %v9401
        %v9404 = vshrl.u32 %v9372, 16
        %v9406 = vrot.slane %v9404, 3
        %v9407 = vshll.u32 %v9372, 16
        %v9409 = vrot.slane %v9407, 4
        %v9410 = vor.u32 %v9406, %v9409
        %v9412 = vshrl.u32 %v9373, 16
        %v9414 = vrot.slane %v9412, 3
        %v9415 = vshll.u32 %v9373, 16
        %v9417 = vrot.slane %v9415, 4
        %v9418 = vor.u32 %v9414, %v9417
        %v9419 = vsel %vm436, %v9410, %v9418
        %v9421 = vshrl.u32 %v9374, 16
        %v9423 = vrot.slane %v9421, 3
        %v9424 = vshll.u32 %v9374, 16
        %v9426 = vrot.slane %v9424, 4
        %v9427 = vor.u32 %v9423, %v9426
        %v9429 = vshrl.u32 %v9375, 16
        %v9431 = vrot.slane %v9429, 3
        %v9432 = vshll.u32 %v9375, 16
        %v9434 = vrot.slane %v9432, 4
        %v9435 = vor.u32 %v9431, %v9434
        %v9436 = vsel %vm436, %v9427, %v9435
        %v9438 = vshrl.u32 %v9376, 16
        %v9440 = vrot.slane %v9438, 3
        %v9441 = vshll.u32 %v9376, 16
        %v9443 = vrot.slane %v9441, 4
        %v9444 = vor.u32 %v9440, %v9443
        %v9446 = vshrl.u32 %v9377, 16
        %v9448 = vrot.slane %v9446, 3
        %v9449 = vshll.u32 %v9377, 16
        %v9451 = vrot.slane %v9449, 4
        %v9452 = vor.u32 %v9448, %v9451
        %v9453 = vsel %vm436, %v9444, %v9452
        %v9455 = vshrl.u32 %v9378, 16
        %v9457 = vrot.slane %v9455, 3
        %v9458 = vshll.u32 %v9378, 16
        %v9460 = vrot.slane %v9458, 4
        %v9461 = vor.u32 %v9457, %v9460
        %v9463 = vshrl.u32 %v9379, 16
        %v9465 = vrot.slane %v9463, 3
        %v9466 = vshll.u32 %v9379, 16
        %v9468 = vrot.slane %v9466, 4
        %v9469 = vor.u32 %v9465, %v9468
        %v9470 = vsel %vm436, %v9461, %v9469
        %v9472 = vshrl.u32 %v9380, 16
        %v9474 = vrot.slane %v9472, 3
        %v9475 = vshll.u32 %v9380, 16
        %v9477 = vrot.slane %v9475, 4
        %v9478 = vor.u32 %v9474, %v9477
        %v9480 = vshrl.u32 %v9381, 16
        %v9482 = vrot.slane %v9480, 3
        %v9483 = vshll.u32 %v9381, 16
        %v9485 = vrot.slane %v9483, 4
        %v9486 = vor.u32 %v9482, %v9485
        %v9487 = vsel %vm436, %v9478, %v9486
        %v9489 = vshrl.u32 %v9382, 16
        %v9491 = vrot.slane %v9489, 3
        %v9492 = vshll.u32 %v9382, 16
        %v9494 = vrot.slane %v9492, 4
        %v9495 = vor.u32 %v9491, %v9494
        %v9497 = vshrl.u32 %v9383, 16
        %v9499 = vrot.slane %v9497, 3
        %v9500 = vshll.u32 %v9383, 16
        %v9502 = vrot.slane %v9500, 4
        %v9503 = vor.u32 %v9499, %v9502
        %v9504 = vsel %vm436, %v9495, %v9503
        %v9506 = vshrl.u32 %v9384, 16
        %v9508 = vrot.slane %v9506, 3
        %v9509 = vshll.u32 %v9384, 16
        %v9511 = vrot.slane %v9509, 4
        %v9512 = vor.u32 %v9508, %v9511
        %v9514 = vshrl.u32 %v9385, 16
        %v9516 = vrot.slane %v9514, 3
        %v9517 = vshll.u32 %v9385, 16
        %v9519 = vrot.slane %v9517, 4
        %v9520 = vor.u32 %v9516, %v9519
        %v9521 = vsel %vm436, %v9512, %v9520
        %v9522 = vld [vmem:[%s7119] sm:$0xf]
        %v9524 = vsel %vm377, %v9402, 0
        %v9527 = vsel %vm377, %v9419, 0
        %v9530 = vsel %vm377, %v9436, 0
        %v9533 = vsel %vm377, %v9453, 0
        %v9536 = vsel %vm377, %v9470, 0
        %v9539 = vsel %vm377, %v9487, 0
        %v9542 = vsel %vm377, %v9504, 0
        %v9545 = vsel %vm377, %v9521, 0
        %v9548 = vsel %vm6456, %v9522, 0
        %9550 = vmatprep.subr.bf16.mxu0 0
        %9551 = vmatpush1.bf16.msra.mxu0 %v9548
        %9552 = vmatprep.subr.bf16.mxu0 0
        %9553 = vmatpush1.bf16.msra.mxu0 0
        %9554 = vmatprep.subr.bf16.mxu0 0
        %9555 = vmatpush1.bf16.msra.mxu0 0
        %9556 = vmatprep.subr.bf16.mxu0 0
        %9557 = vmatpush1.bf16.msra.mxu0 0
        %9558 = vmatprep.subr.bf16.mxu0 0
        %9559 = vmatpush1.bf16.msra.mxu0 0
        %9560 = vmatprep.subr.bf16.mxu0 0
        %9561 = vmatpush1.bf16.msra.mxu0 0
        %9562 = vmatprep.subr.bf16.mxu0 0
        %9563 = vmatpush1.bf16.msra.mxu0 0
        %9564 = vmatprep.subr.bf16.mxu0 0
        %9565 = vmatpush1.bf16.msra.mxu0 0
        %9566 = vmatprep.subr.bf16.mxu0 0
        %9567 = vmatpush1.bf16.msra.mxu0 0
        %9568 = vmatprep.subr.bf16.mxu0 0
        %9569 = vmatpush1.bf16.msra.mxu0 0
        %9570 = vmatprep.subr.bf16.mxu0 0
        %9571 = vmatpush1.bf16.msra.mxu0 0
        %9572 = vmatprep.subr.bf16.mxu0 0
        %9573 = vmatpush1.bf16.msra.mxu0 0
        %9574 = vmatprep.subr.bf16.mxu0 0
        %9575 = vmatpush1.bf16.msra.mxu0 0
        %9576 = vmatprep.subr.bf16.mxu0 0
        %9577 = vmatpush1.bf16.msra.mxu0 0
        %9578 = vmatprep.subr.bf16.mxu0 0
        %9579 = vmatpush1.bf16.msra.mxu0 0
        %9580 = vmatprep.subr.bf16.mxu0 0
        %9581 = vmatpush1.bf16.msra.mxu0 0
        %9582 = vmatprep.mubr.bf16.mxu0 0
        %9583 = vmatmul.mubr.bf16.gmra.mrb[0].mxu0 %v9524
        %v9584 = vpop.f32.mrb[0].mxu0
        %v9585 = vadd.f32 0.0, %v9584
        %v9586 = vpop.f32.mrb[0].mxu0
        %v9587 = vpop.f32.mrb[0].mxu0
        %v9588 = vadd.f32 0.0, %v9587
        %v9589 = vpop.f32.mrb[0].mxu0
        %9590 = vmatprep.mubr.bf16.mxu0 0
        %9591 = vmatmul.mubr.bf16.gmra.mrb[0].mxu0 %v9527
        %v9592 = vpop.f32.mrb[0].mxu0
        %v9593 = vadd.f32 0.0, %v9592
        %v9594 = vpop.f32.mrb[0].mxu0
        %v9595 = vpop.f32.mrb[0].mxu0
        %v9596 = vadd.f32 0.0, %v9595
        %v9597 = vpop.f32.mrb[0].mxu0
        %9598 = vmatprep.mubr.bf16.mxu0 0
        %9599 = vmatmul.mubr.bf16.gmra.mrb[0].mxu0 %v9530
        %v9600 = vpop.f32.mrb[0].mxu0
        %v9601 = vadd.f32 0.0, %v9600
        %v9602 = vpop.f32.mrb[0].mxu0
        %v9603 = vpop.f32.mrb[0].mxu0
        %v9604 = vadd.f32 0.0, %v9603
        %v9605 = vpop.f32.mrb[0].mxu0
        %9606 = vmatprep.mubr.bf16.mxu0 0
        %9607 = vmatmul.mubr.bf16.gmra.mrb[0].mxu0 %v9533
        %v9608 = vpop.f32.mrb[0].mxu0
        %v9609 = vadd.f32 0.0, %v9608
        %v9610 = vpop.f32.mrb[0].mxu0
        %v9611 = vpop.f32.mrb[0].mxu0
        %v9612 = vadd.f32 0.0, %v9611
        %v9613 = vpop.f32.mrb[0].mxu0
        %9614 = vmatprep.mubr.bf16.mxu0 0
        %9615 = vmatmul.mubr.bf16.gmra.mrb[0].mxu0 %v9536
        %v9616 = vpop.f32.mrb[0].mxu0
        %v9617 = vadd.f32 0.0, %v9616
        %v9618 = vpop.f32.mrb[0].mxu0
        %v9619 = vpop.f32.mrb[0].mxu0
        %v9620 = vadd.f32 0.0, %v9619
        %v9621 = vpop.f32.mrb[0].mxu0
        %9622 = vmatprep.mubr.bf16.mxu0 0
        %9623 = vmatmul.mubr.bf16.gmra.mrb[0].mxu0 %v9539
        %v9624 = vpop.f32.mrb[0].mxu0
        %v9625 = vadd.f32 0.0, %v9624
        %v9626 = vpop.f32.mrb[0].mxu0
        %v9627 = vpop.f32.mrb[0].mxu0
        %v9628 = vadd.f32 0.0, %v9627
        %v9629 = vpop.f32.mrb[0].mxu0
        %9630 = vmatprep.mubr.bf16.mxu0 0
        %9631 = vmatmul.mubr.bf16.gmra.mrb[0].mxu0 %v9542
        %v9632 = vpop.f32.mrb[0].mxu0
        %v9633 = vadd.f32 0.0, %v9632
        %v9634 = vpop.f32.mrb[0].mxu0
        %v9635 = vpop.f32.mrb[0].mxu0
        %v9636 = vadd.f32 0.0, %v9635
        %v9637 = vpop.f32.mrb[0].mxu0
        %9638 = vmatprep.mubr.bf16.mxu0 0
        %9639 = vmatmul.mubr.bf16.gmra.mrb[0].mxu0 %v9545
        %v9640 = vpop.f32.mrb[0].mxu0
        %v9641 = vadd.f32 0.0, %v9640
        %v9642 = vpop.f32.mrb[0].mxu0
        %v9643 = vpop.f32.mrb[0].mxu0
        %v9644 = vadd.f32 0.0, %v9643
        %v9645 = vpop.f32.mrb[0].mxu0
        %9646 = vdwg.mxu0
        %v9647 = vadd.f32 %v9354, %v9585
        %v9648 = vadd.f32 %v9355, %v9588
        %v9649 = vadd.f32 %v9356, %v9593
        %v9650 = vadd.f32 %v9357, %v9596
        %v9651 = vadd.f32 %v9358, %v9601
        %v9652 = vadd.f32 %v9359, %v9604
        %v9653 = vadd.f32 %v9360, %v9609
        %v9654 = vadd.f32 %v9361, %v9612
        %v9655 = vadd.f32 %v9362, %v9617
        %v9656 = vadd.f32 %v9363, %v9620
        %v9657 = vadd.f32 %v9364, %v9625
        %v9658 = vadd.f32 %v9365, %v9628
        %v9659 = vadd.f32 %v9366, %v9633
        %v9660 = vadd.f32 %v9367, %v9636
        %v9661 = vadd.f32 %v9368, %v9641
        %v9662 = vadd.f32 %v9369, %v9644
        %v9663 = vld [vmem:[%s6211] sm:$0xf0]
        %v9664 = vld [vmem:[%s6211 + $0x10] sm:$0xf0]
        %v9665 = vld [vmem:[%s6211 + $0x20] sm:$0xf0]
        %v9666 = vld [vmem:[%s6211 + $0x30] sm:$0xf0]
        %v9667 = vld [vmem:[%s6211 + $0x40] sm:$0xf0]
        %v9668 = vld [vmem:[%s6211 + $0x50] sm:$0xf0]
        %v9669 = vld [vmem:[%s6211 + $0x60] sm:$0xf0]
        %v9670 = vld [vmem:[%s6211 + $0x70] sm:$0xf0]
        %v9687 = vrot.slane %v9663, 4
        %v9688 = vrot.slane %v9371, 4
        %v9689 = vsel %vm6405, %v9687, %v9688
        %v9690 = vrot.slane %v9664, 4
        %v9691 = vrot.slane %v9373, 4
        %v9692 = vsel %vm6405, %v9690, %v9691
        %v9693 = vrot.slane %v9665, 4
        %v9694 = vrot.slane %v9375, 4
        %v9695 = vsel %vm6405, %v9693, %v9694
        %v9696 = vrot.slane %v9666, 4
        %v9697 = vrot.slane %v9377, 4
        %v9698 = vsel %vm6405, %v9696, %v9697
        %v9699 = vrot.slane %v9667, 4
        %v9700 = vrot.slane %v9379, 4
        %v9701 = vsel %vm6405, %v9699, %v9700
        %v9702 = vrot.slane %v9668, 4
        %v9703 = vrot.slane %v9381, 4
        %v9704 = vsel %vm6405, %v9702, %v9703
        %v9705 = vrot.slane %v9669, 4
        %v9706 = vrot.slane %v9383, 4
        %v9707 = vsel %vm6405, %v9705, %v9706
        %v9708 = vrot.slane %v9670, 4
        %v9709 = vrot.slane %v9385, 4
        %v9710 = vsel %vm6405, %v9708, %v9709
        %v9711 = vld [vmem:[%s7309] sm:$0xf]
        %v9713 = vsel %vm377, %v9689, 0
        %v9716 = vsel %vm377, %v9692, 0
        %v9719 = vsel %vm377, %v9695, 0
        %v9722 = vsel %vm377, %v9698, 0
        %v9725 = vsel %vm377, %v9701, 0
        %v9728 = vsel %vm377, %v9704, 0
        %v9731 = vsel %vm377, %v9707, 0
        %v9734 = vsel %vm377, %v9710, 0
        %v9737 = vsel %vm6456, %v9711, 0
        %9739 = vmatprep.subr.bf16.mxu0 0
        %9740 = vmatpush1.bf16.msra.mxu0 %v9737
        %9741 = vmatprep.subr.bf16.mxu0 0
        %9742 = vmatpush1.bf16.msra.mxu0 0
        %9743 = vmatprep.subr.bf16.mxu0 0
        %9744 = vmatpush1.bf16.msra.mxu0 0
        %9745 = vmatprep.subr.bf16.mxu0 0
        %9746 = vmatpush1.bf16.msra.mxu0 0
        %9747 = vmatprep.subr.bf16.mxu0 0
        %9748 = vmatpush1.bf16.msra.mxu0 0
        %9749 = vmatprep.subr.bf16.mxu0 0
        %9750 = vmatpush1.bf16.msra.mxu0 0
        %9751 = vmatprep.subr.bf16.mxu0 0
        %9752 = vmatpush1.bf16.msra.mxu0 0
        %9753 = vmatprep.subr.bf16.mxu0 0
        %9754 = vmatpush1.bf16.msra.mxu0 0
        %9755 = vmatprep.subr.bf16.mxu0 0
        %9756 = vmatpush1.bf16.msra.mxu0 0
        %9757 = vmatprep.subr.bf16.mxu0 0
        %9758 = vmatpush1.bf16.msra.mxu0 0
        %9759 = vmatprep.subr.bf16.mxu0 0
        %9760 = vmatpush1.bf16.msra.mxu0 0
        %9761 = vmatprep.subr.bf16.mxu0 0
        %9762 = vmatpush1.bf16.msra.mxu0 0
        %9763 = vmatprep.subr.bf16.mxu0 0
        %9764 = vmatpush1.bf16.msra.mxu0 0
        %9765 = vmatprep.subr.bf16.mxu0 0
        %9766 = vmatpush1.bf16.msra.mxu0 0
        %9767 = vmatprep.subr.bf16.mxu0 0
        %9768 = vmatpush1.bf16.msra.mxu0 0
        %9769 = vmatprep.subr.bf16.mxu0 0
        %9770 = vmatpush1.bf16.msra.mxu0 0
        %9771 = vmatprep.mubr.bf16.mxu0 0
        %9772 = vmatmul.mubr.bf16.gmra.mrb[0].mxu0 %v9713
        %v9773 = vpop.f32.mrb[0].mxu0
        %v9774 = vadd.f32 0.0, %v9773
        %v9775 = vpop.f32.mrb[0].mxu0
        %v9776 = vpop.f32.mrb[0].mxu0
        %v9777 = vadd.f32 0.0, %v9776
        %v9778 = vpop.f32.mrb[0].mxu0
        %9779 = vmatprep.mubr.bf16.mxu0 0
        %9780 = vmatmul.mubr.bf16.gmra.mrb[0].mxu0 %v9716
        %v9781 = vpop.f32.mrb[0].mxu0
        %v9782 = vadd.f32 0.0, %v9781
        %v9783 = vpop.f32.mrb[0].mxu0
        %v9784 = vpop.f32.mrb[0].mxu0
        %v9785 = vadd.f32 0.0, %v9784
        %v9786 = vpop.f32.mrb[0].mxu0
        %9787 = vmatprep.mubr.bf16.mxu0 0
        %9788 = vmatmul.mubr.bf16.gmra.mrb[0].mxu0 %v9719
        %v9789 = vpop.f32.mrb[0].mxu0
        %v9790 = vadd.f32 0.0, %v9789
        %v9791 = vpop.f32.mrb[0].mxu0
        %v9792 = vpop.f32.mrb[0].mxu0
        %v9793 = vadd.f32 0.0, %v9792
        %v9794 = vpop.f32.mrb[0].mxu0
        %9795 = vmatprep.mubr.bf16.mxu0 0
        %9796 = vmatmul.mubr.bf16.gmra.mrb[0].mxu0 %v9722
        %v9797 = vpop.f32.mrb[0].mxu0
        %v9798 = vadd.f32 0.0, %v9797
        %v9799 = vpop.f32.mrb[0].mxu0
        %v9800 = vpop.f32.mrb[0].mxu0
        %v9801 = vadd.f32 0.0, %v9800
        %v9802 = vpop.f32.mrb[0].mxu0
        %9803 = vmatprep.mubr.bf16.mxu0 0
        %9804 = vmatmul.mubr.bf16.gmra.mrb[0].mxu0 %v9725
        %v9805 = vpop.f32.mrb[0].mxu0
        %v9806 = vadd.f32 0.0, %v9805
        %v9807 = vpop.f32.mrb[0].mxu0
        %v9808 = vpop.f32.mrb[0].mxu0
        %v9809 = vadd.f32 0.0, %v9808
        %v9810 = vpop.f32.mrb[0].mxu0
        %9811 = vmatprep.mubr.bf16.mxu0 0
        %9812 = vmatmul.mubr.bf16.gmra.mrb[0].mxu0 %v9728
        %v9813 = vpop.f32.mrb[0].mxu0
        %v9814 = vadd.f32 0.0, %v9813
        %v9815 = vpop.f32.mrb[0].mxu0
        %v9816 = vpop.f32.mrb[0].mxu0
        %v9817 = vadd.f32 0.0, %v9816
        %v9818 = vpop.f32.mrb[0].mxu0
        %9819 = vmatprep.mubr.bf16.mxu0 0
        %9820 = vmatmul.mubr.bf16.gmra.mrb[0].mxu0 %v9731
        %v9821 = vpop.f32.mrb[0].mxu0
        %v9822 = vadd.f32 0.0, %v9821
        %v9823 = vpop.f32.mrb[0].mxu0
        %v9824 = vpop.f32.mrb[0].mxu0
        %v9825 = vadd.f32 0.0, %v9824
        %v9826 = vpop.f32.mrb[0].mxu0
        %9827 = vmatprep.mubr.bf16.mxu0 0
        %9828 = vmatmul.mubr.bf16.gmra.mrb[0].mxu0 %v9734
        %v9829 = vpop.f32.mrb[0].mxu0
        %v9830 = vadd.f32 0.0, %v9829
        %v9831 = vpop.f32.mrb[0].mxu0
        %v9832 = vpop.f32.mrb[0].mxu0
        %v9833 = vadd.f32 0.0, %v9832
        %v9834 = vpop.f32.mrb[0].mxu0
        %9835 = vdwg.mxu0
        %v9836 = vadd.f32 %v9647, %v9774
        %v9837 = vadd.f32 %v9648, %v9777
        %v9838 = vadd.f32 %v9649, %v9782
        %v9839 = vadd.f32 %v9650, %v9785
        %v9840 = vadd.f32 %v9651, %v9790
        %v9841 = vadd.f32 %v9652, %v9793
        %v9842 = vadd.f32 %v9653, %v9798
        %v9843 = vadd.f32 %v9654, %v9801
        %v9844 = vadd.f32 %v9655, %v9806
        %v9845 = vadd.f32 %v9656, %v9809
        %v9846 = vadd.f32 %v9657, %v9814
        %v9847 = vadd.f32 %v9658, %v9817
        %v9848 = vadd.f32 %v9659, %v9822
        %v9849 = vadd.f32 %v9660, %v9825
        %v9850 = vadd.f32 %v9661, %v9830
        %v9851 = vadd.f32 %v9662, %v9833
        %v9852 = vld [vmem:[%s6211 + $0x8] sm:$0x1f]
        %v9853 = vld [vmem:[%s6211 + $0x18] sm:$0x1f]
        %v9854 = vld [vmem:[%s6211 + $0x28] sm:$0x1f]
        %v9855 = vld [vmem:[%s6211 + $0x38] sm:$0x1f]
        %v9856 = vld [vmem:[%s6211 + $0x48] sm:$0x1f]
        %v9857 = vld [vmem:[%s6211 + $0x58] sm:$0x1f]
        %v9858 = vld [vmem:[%s6211 + $0x68] sm:$0x1f]
        %v9859 = vld [vmem:[%s6211 + $0x78] sm:$0x1f]
        %v9861 = vshrl.u32 %v9663, 16
        %v9863 = vrot.slane %v9861, 4
        %v9864 = vshll.u32 %v9663, 16
        %v9866 = vrot.slane %v9864, 5
        %v9867 = vor.u32 %v9863, %v9866
        %v9869 = vshrl.u32 %v9852, 16
        %v9871 = vrot.slane %v9869, 4
        %v9872 = vshll.u32 %v9852, 16
        %v9874 = vrot.slane %v9872, 5
        %v9875 = vor.u32 %v9871, %v9874
        %v9876 = vsel %vm1030, %v9867, %v9875
        %v9878 = vshrl.u32 %v9664, 16
        %v9880 = vrot.slane %v9878, 4
        %v9881 = vshll.u32 %v9664, 16
        %v9883 = vrot.slane %v9881, 5
        %v9884 = vor.u32 %v9880, %v9883
        %v9886 = vshrl.u32 %v9853, 16
        %v9888 = vrot.slane %v9886, 4
        %v9889 = vshll.u32 %v9853, 16
        %v9891 = vrot.slane %v9889, 5
        %v9892 = vor.u32 %v9888, %v9891
        %v9893 = vsel %vm1030, %v9884, %v9892
        %v9895 = vshrl.u32 %v9665, 16
        %v9897 = vrot.slane %v9895, 4
        %v9898 = vshll.u32 %v9665, 16
        %v9900 = vrot.slane %v9898, 5
        %v9901 = vor.u32 %v9897, %v9900
        %v9903 = vshrl.u32 %v9854, 16
        %v9905 = vrot.slane %v9903, 4
        %v9906 = vshll.u32 %v9854, 16
        %v9908 = vrot.slane %v9906, 5
        %v9909 = vor.u32 %v9905, %v9908
        %v9910 = vsel %vm1030, %v9901, %v9909
        %v9912 = vshrl.u32 %v9666, 16
        %v9914 = vrot.slane %v9912, 4
        %v9915 = vshll.u32 %v9666, 16
        %v9917 = vrot.slane %v9915, 5
        %v9918 = vor.u32 %v9914, %v9917
        %v9920 = vshrl.u32 %v9855, 16
        %v9922 = vrot.slane %v9920, 4
        %v9923 = vshll.u32 %v9855, 16
        %v9925 = vrot.slane %v9923, 5
        %v9926 = vor.u32 %v9922, %v9925
        %v9927 = vsel %vm1030, %v9918, %v9926
        %v9929 = vshrl.u32 %v9667, 16
        %v9931 = vrot.slane %v9929, 4
        %v9932 = vshll.u32 %v9667, 16
        %v9934 = vrot.slane %v9932, 5
        %v9935 = vor.u32 %v9931, %v9934
        %v9937 = vshrl.u32 %v9856, 16
        %v9939 = vrot.slane %v9937, 4
        %v9940 = vshll.u32 %v9856, 16
        %v9942 = vrot.slane %v9940, 5
        %v9943 = vor.u32 %v9939, %v9942
        %v9944 = vsel %vm1030, %v9935, %v9943
        %v9946 = vshrl.u32 %v9668, 16
        %v9948 = vrot.slane %v9946, 4
        %v9949 = vshll.u32 %v9668, 16
        %v9951 = vrot.slane %v9949, 5
        %v9952 = vor.u32 %v9948, %v9951
        %v9954 = vshrl.u32 %v9857, 16
        %v9956 = vrot.slane %v9954, 4
        %v9957 = vshll.u32 %v9857, 16
        %v9959 = vrot.slane %v9957, 5
        %v9960 = vor.u32 %v9956, %v9959
        %v9961 = vsel %vm1030, %v9952, %v9960
        %v9963 = vshrl.u32 %v9669, 16
        %v9965 = vrot.slane %v9963, 4
        %v9966 = vshll.u32 %v9669, 16
        %v9968 = vrot.slane %v9966, 5
        %v9969 = vor.u32 %v9965, %v9968
        %v9971 = vshrl.u32 %v9858, 16
        %v9973 = vrot.slane %v9971, 4
        %v9974 = vshll.u32 %v9858, 16
        %v9976 = vrot.slane %v9974, 5
        %v9977 = vor.u32 %v9973, %v9976
        %v9978 = vsel %vm1030, %v9969, %v9977
        %v9980 = vshrl.u32 %v9670, 16
        %v9982 = vrot.slane %v9980, 4
        %v9983 = vshll.u32 %v9670, 16
        %v9985 = vrot.slane %v9983, 5
        %v9986 = vor.u32 %v9982, %v9985
        %v9988 = vshrl.u32 %v9859, 16
        %v9990 = vrot.slane %v9988, 4
        %v9991 = vshll.u32 %v9859, 16
        %v9993 = vrot.slane %v9991, 5
        %v9994 = vor.u32 %v9990, %v9993
        %v9995 = vsel %vm1030, %v9986, %v9994
        %v9996 = vld [vmem:[%s7595] sm:$0xf]
        %v9998 = vsel %vm377, %v9876, 0
        %v10001 = vsel %vm377, %v9893, 0
        %v10004 = vsel %vm377, %v9910, 0
        %v10007 = vsel %vm377, %v9927, 0
        %v10010 = vsel %vm377, %v9944, 0
        %v10013 = vsel %vm377, %v9961, 0
        %v10016 = vsel %vm377, %v9978, 0
        %v10019 = vsel %vm377, %v9995, 0
        %v10022 = vsel %vm6456, %v9996, 0
        %10024 = vmatprep.subr.bf16.mxu0 0
        %10025 = vmatpush1.bf16.msra.mxu0 %v10022
        %10026 = vmatprep.subr.bf16.mxu0 0
        %10027 = vmatpush1.bf16.msra.mxu0 0
        %10028 = vmatprep.subr.bf16.mxu0 0
        %10029 = vmatpush1.bf16.msra.mxu0 0
        %10030 = vmatprep.subr.bf16.mxu0 0
        %10031 = vmatpush1.bf16.msra.mxu0 0
        %10032 = vmatprep.subr.bf16.mxu0 0
        %10033 = vmatpush1.bf16.msra.mxu0 0
        %10034 = vmatprep.subr.bf16.mxu0 0
        %10035 = vmatpush1.bf16.msra.mxu0 0
        %10036 = vmatprep.subr.bf16.mxu0 0
        %10037 = vmatpush1.bf16.msra.mxu0 0
        %10038 = vmatprep.subr.bf16.mxu0 0
        %10039 = vmatpush1.bf16.msra.mxu0 0
        %10040 = vmatprep.subr.bf16.mxu0 0
        %10041 = vmatpush1.bf16.msra.mxu0 0
        %10042 = vmatprep.subr.bf16.mxu0 0
        %10043 = vmatpush1.bf16.msra.mxu0 0
        %10044 = vmatprep.subr.bf16.mxu0 0
        %10045 = vmatpush1.bf16.msra.mxu0 0
        %10046 = vmatprep.subr.bf16.mxu0 0
        %10047 = vmatpush1.bf16.msra.mxu0 0
        %10048 = vmatprep.subr.bf16.mxu0 0
        %10049 = vmatpush1.bf16.msra.mxu0 0
        %10050 = vmatprep.subr.bf16.mxu0 0
        %10051 = vmatpush1.bf16.msra.mxu0 0
        %10052 = vmatprep.subr.bf16.mxu0 0
        %10053 = vmatpush1.bf16.msra.mxu0 0
        %10054 = vmatprep.subr.bf16.mxu0 0
        %10055 = vmatpush1.bf16.msra.mxu0 0
        %10056 = vmatprep.mubr.bf16.mxu0 0
        %10057 = vmatmul.mubr.bf16.gmra.mrb[0].mxu0 %v9998
        %v10058 = vpop.f32.mrb[0].mxu0
        %v10059 = vadd.f32 0.0, %v10058
        %v10060 = vpop.f32.mrb[0].mxu0
        %v10061 = vpop.f32.mrb[0].mxu0
        %v10062 = vadd.f32 0.0, %v10061
        %v10063 = vpop.f32.mrb[0].mxu0
        %10064 = vmatprep.mubr.bf16.mxu0 0
        %10065 = vmatmul.mubr.bf16.gmra.mrb[0].mxu0 %v10001
        %v10066 = vpop.f32.mrb[0].mxu0
        %v10067 = vadd.f32 0.0, %v10066
        %v10068 = vpop.f32.mrb[0].mxu0
        %v10069 = vpop.f32.mrb[0].mxu0
        %v10070 = vadd.f32 0.0, %v10069
        %v10071 = vpop.f32.mrb[0].mxu0
        %10072 = vmatprep.mubr.bf16.mxu0 0
        %10073 = vmatmul.mubr.bf16.gmra.mrb[0].mxu0 %v10004
        %v10074 = vpop.f32.mrb[0].mxu0
        %v10075 = vadd.f32 0.0, %v10074
        %v10076 = vpop.f32.mrb[0].mxu0
        %v10077 = vpop.f32.mrb[0].mxu0
        %v10078 = vadd.f32 0.0, %v10077
        %v10079 = vpop.f32.mrb[0].mxu0
        %10080 = vmatprep.mubr.bf16.mxu0 0
        %10081 = vmatmul.mubr.bf16.gmra.mrb[0].mxu0 %v10007
        %v10082 = vpop.f32.mrb[0].mxu0
        %v10083 = vadd.f32 0.0, %v10082
        %v10084 = vpop.f32.mrb[0].mxu0
        %v10085 = vpop.f32.mrb[0].mxu0
        %v10086 = vadd.f32 0.0, %v10085
        %v10087 = vpop.f32.mrb[0].mxu0
        %10088 = vmatprep.mubr.bf16.mxu0 0
        %10089 = vmatmul.mubr.bf16.gmra.mrb[0].mxu0 %v10010
        %v10090 = vpop.f32.mrb[0].mxu0
        %v10091 = vadd.f32 0.0, %v10090
        %v10092 = vpop.f32.mrb[0].mxu0
        %v10093 = vpop.f32.mrb[0].mxu0
        %v10094 = vadd.f32 0.0, %v10093
        %v10095 = vpop.f32.mrb[0].mxu0
        %10096 = vmatprep.mubr.bf16.mxu0 0
        %10097 = vmatmul.mubr.bf16.gmra.mrb[0].mxu0 %v10013
        %v10098 = vpop.f32.mrb[0].mxu0
        %v10099 = vadd.f32 0.0, %v10098
        %v10100 = vpop.f32.mrb[0].mxu0
        %v10101 = vpop.f32.mrb[0].mxu0
        %v10102 = vadd.f32 0.0, %v10101
        %v10103 = vpop.f32.mrb[0].mxu0
        %10104 = vmatprep.mubr.bf16.mxu0 0
        %10105 = vmatmul.mubr.bf16.gmra.mrb[0].mxu0 %v10016
        %v10106 = vpop.f32.mrb[0].mxu0
        %v10107 = vadd.f32 0.0, %v10106
        %v10108 = vpop.f32.mrb[0].mxu0
        %v10109 = vpop.f32.mrb[0].mxu0
        %v10110 = vadd.f32 0.0, %v10109
        %v10111 = vpop.f32.mrb[0].mxu0
        %10112 = vmatprep.mubr.bf16.mxu0 0
        %10113 = vmatmul.mubr.bf16.gmra.mrb[0].mxu0 %v10019
        %v10114 = vpop.f32.mrb[0].mxu0
        %v10115 = vadd.f32 0.0, %v10114
        %v10116 = vpop.f32.mrb[0].mxu0
        %v10117 = vpop.f32.mrb[0].mxu0
        %v10118 = vadd.f32 0.0, %v10117
        %v10119 = vpop.f32.mrb[0].mxu0
        %10120 = vdwg.mxu0
        %v10121 = vadd.f32 %v9836, %v10059
        %v10122 = vadd.f32 %v9837, %v10062
        %v10123 = vadd.f32 %v9838, %v10067
        %v10124 = vadd.f32 %v9839, %v10070
        %v10125 = vadd.f32 %v9840, %v10075
        %v10126 = vadd.f32 %v9841, %v10078
        %v10127 = vadd.f32 %v9842, %v10083
        %v10128 = vadd.f32 %v9843, %v10086
        %v10129 = vadd.f32 %v9844, %v10091
        %v10130 = vadd.f32 %v9845, %v10094
        %v10131 = vadd.f32 %v9846, %v10099
        %v10132 = vadd.f32 %v9847, %v10102
        %v10133 = vadd.f32 %v9848, %v10107
        %v10134 = vadd.f32 %v9849, %v10110
        %v10135 = vadd.f32 %v9850, %v10115
        %v10136 = vadd.f32 %v9851, %v10118
        %s10137 = scalar_lea.vmem [#allocation2], 160
        %v10138 = vld [vmem:[%s10137] sm:$0xf8]
        %v10139 = vld [vmem:[%s10137 + $0x8] sm:$0xf]
        %v10140 = vld [vmem:[%s10137 + $0x10] sm:$0xf8]
        %v10141 = vld [vmem:[%s10137 + $0x18] sm:$0xf]
        %v10142 = vld [vmem:[%s10137 + $0x20] sm:$0xf8]
        %v10143 = vld [vmem:[%s10137 + $0x28] sm:$0xf]
        %v10144 = vld [vmem:[%s10137 + $0x30] sm:$0xf8]
        %v10145 = vld [vmem:[%s10137 + $0x38] sm:$0xf]
        %v10146 = vld [vmem:[%s10137 + $0x40] sm:$0xf8]
        %v10147 = vld [vmem:[%s10137 + $0x48] sm:$0xf]
        %v10148 = vld [vmem:[%s10137 + $0x50] sm:$0xf8]
        %v10149 = vld [vmem:[%s10137 + $0x58] sm:$0xf]
        %v10150 = vld [vmem:[%s10137 + $0x60] sm:$0xf8]
        %v10151 = vld [vmem:[%s10137 + $0x68] sm:$0xf]
        %v10152 = vld [vmem:[%s10137 + $0x70] sm:$0xf8]
        %v10153 = vld [vmem:[%s10137 + $0x78] sm:$0xf]
        %v10155 = vshrl.u32 %v10138, 16
        %v10157 = vrot.slane %v10155, 3
        %v10158 = vshll.u32 %v10138, 16
        %v10160 = vrot.slane %v10158, 4
        %v10161 = vor.u32 %v10157, %v10160
        %v10163 = vshrl.u32 %v10139, 16
        %v10165 = vrot.slane %v10163, 3
        %v10166 = vshll.u32 %v10139, 16
        %v10168 = vrot.slane %v10166, 4
        %v10169 = vor.u32 %v10165, %v10168
        %v10170 = vsel %vm436, %v10161, %v10169
        %v10172 = vshrl.u32 %v10140, 16
        %v10174 = vrot.slane %v10172, 3
        %v10175 = vshll.u32 %v10140, 16
        %v10177 = vrot.slane %v10175, 4
        %v10178 = vor.u32 %v10174, %v10177
        %v10180 = vshrl.u32 %v10141, 16
        %v10182 = vrot.slane %v10180, 3
        %v10183 = vshll.u32 %v10141, 16
        %v10185 = vrot.slane %v10183, 4
        %v10186 = vor.u32 %v10182, %v10185
        %v10187 = vsel %vm436, %v10178, %v10186
        %v10189 = vshrl.u32 %v10142, 16
        %v10191 = vrot.slane %v10189, 3
        %v10192 = vshll.u32 %v10142, 16
        %v10194 = vrot.slane %v10192, 4
        %v10195 = vor.u32 %v10191, %v10194
        %v10197 = vshrl.u32 %v10143, 16
        %v10199 = vrot.slane %v10197, 3
        %v10200 = vshll.u32 %v10143, 16
        %v10202 = vrot.slane %v10200, 4
        %v10203 = vor.u32 %v10199, %v10202
        %v10204 = vsel %vm436, %v10195, %v10203
        %v10206 = vshrl.u32 %v10144, 16
        %v10208 = vrot.slane %v10206, 3
        %v10209 = vshll.u32 %v10144, 16
        %v10211 = vrot.slane %v10209, 4
        %v10212 = vor.u32 %v10208, %v10211
        %v10214 = vshrl.u32 %v10145, 16
        %v10216 = vrot.slane %v10214, 3
        %v10217 = vshll.u32 %v10145, 16
        %v10219 = vrot.slane %v10217, 4
        %v10220 = vor.u32 %v10216, %v10219
        %v10221 = vsel %vm436, %v10212, %v10220
        %v10223 = vshrl.u32 %v10146, 16
        %v10225 = vrot.slane %v10223, 3
        %v10226 = vshll.u32 %v10146, 16
        %v10228 = vrot.slane %v10226, 4
        %v10229 = vor.u32 %v10225, %v10228
        %v10231 = vshrl.u32 %v10147, 16
        %v10233 = vrot.slane %v10231, 3
        %v10234 = vshll.u32 %v10147, 16
        %v10236 = vrot.slane %v10234, 4
        %v10237 = vor.u32 %v10233, %v10236
        %v10238 = vsel %vm436, %v10229, %v10237
        %v10240 = vshrl.u32 %v10148, 16
        %v10242 = vrot.slane %v10240, 3
        %v10243 = vshll.u32 %v10148, 16
        %v10245 = vrot.slane %v10243, 4
        %v10246 = vor.u32 %v10242, %v10245
        %v10248 = vshrl.u32 %v10149, 16
        %v10250 = vrot.slane %v10248, 3
        %v10251 = vshll.u32 %v10149, 16
        %v10253 = vrot.slane %v10251, 4
        %v10254 = vor.u32 %v10250, %v10253
        %v10255 = vsel %vm436, %v10246, %v10254
        %v10257 = vshrl.u32 %v10150, 16
        %v10259 = vrot.slane %v10257, 3
        %v10260 = vshll.u32 %v10150, 16
        %v10262 = vrot.slane %v10260, 4
        %v10263 = vor.u32 %v10259, %v10262
        %v10265 = vshrl.u32 %v10151, 16
        %v10267 = vrot.slane %v10265, 3
        %v10268 = vshll.u32 %v10151, 16
        %v10270 = vrot.slane %v10268, 4
        %v10271 = vor.u32 %v10267, %v10270
        %v10272 = vsel %vm436, %v10263, %v10271
        %v10274 = vshrl.u32 %v10152, 16
        %v10276 = vrot.slane %v10274, 3
        %v10277 = vshll.u32 %v10152, 16
        %v10279 = vrot.slane %v10277, 4
        %v10280 = vor.u32 %v10276, %v10279
        %v10282 = vshrl.u32 %v10153, 16
        %v10284 = vrot.slane %v10282, 3
        %v10285 = vshll.u32 %v10153, 16
        %v10287 = vrot.slane %v10285, 4
        %v10288 = vor.u32 %v10284, %v10287
        %v10289 = vsel %vm436, %v10280, %v10288
        %v10290 = vld [vmem:[%s7890] sm:$0xf]
        %v10292 = vsel %vm377, %v10170, 0
        %v10295 = vsel %vm377, %v10187, 0
        %v10298 = vsel %vm377, %v10204, 0
        %v10301 = vsel %vm377, %v10221, 0
        %v10304 = vsel %vm377, %v10238, 0
        %v10307 = vsel %vm377, %v10255, 0
        %v10310 = vsel %vm377, %v10272, 0
        %v10313 = vsel %vm377, %v10289, 0
        %v10316 = vsel %vm6456, %v10290, 0
        %10318 = vmatprep.subr.bf16.mxu0 0
        %10319 = vmatpush1.bf16.msra.mxu0 %v10316
        %10320 = vmatprep.subr.bf16.mxu0 0
        %10321 = vmatpush1.bf16.msra.mxu0 0
        %10322 = vmatprep.subr.bf16.mxu0 0
        %10323 = vmatpush1.bf16.msra.mxu0 0
        %10324 = vmatprep.subr.bf16.mxu0 0
        %10325 = vmatpush1.bf16.msra.mxu0 0
        %10326 = vmatprep.subr.bf16.mxu0 0
        %10327 = vmatpush1.bf16.msra.mxu0 0
        %10328 = vmatprep.subr.bf16.mxu0 0
        %10329 = vmatpush1.bf16.msra.mxu0 0
        %10330 = vmatprep.subr.bf16.mxu0 0
        %10331 = vmatpush1.bf16.msra.mxu0 0
        %10332 = vmatprep.subr.bf16.mxu0 0
        %10333 = vmatpush1.bf16.msra.mxu0 0
        %10334 = vmatprep.subr.bf16.mxu0 0
        %10335 = vmatpush1.bf16.msra.mxu0 0
        %10336 = vmatprep.subr.bf16.mxu0 0
        %10337 = vmatpush1.bf16.msra.mxu0 0
        %10338 = vmatprep.subr.bf16.mxu0 0
        %10339 = vmatpush1.bf16.msra.mxu0 0
        %10340 = vmatprep.subr.bf16.mxu0 0
        %10341 = vmatpush1.bf16.msra.mxu0 0
        %10342 = vmatprep.subr.bf16.mxu0 0
        %10343 = vmatpush1.bf16.msra.mxu0 0
        %10344 = vmatprep.subr.bf16.mxu0 0
        %10345 = vmatpush1.bf16.msra.mxu0 0
        %10346 = vmatprep.subr.bf16.mxu0 0
        %10347 = vmatpush1.bf16.msra.mxu0 0
        %10348 = vmatprep.subr.bf16.mxu0 0
        %10349 = vmatpush1.bf16.msra.mxu0 0
        %10350 = vmatprep.mubr.bf16.mxu0 0
        %10351 = vmatmul.mubr.bf16.gmra.mrb[0].mxu0 %v10292
        %v10352 = vpop.f32.mrb[0].mxu0
        %v10353 = vadd.f32 0.0, %v10352
        %v10354 = vpop.f32.mrb[0].mxu0
        %v10355 = vpop.f32.mrb[0].mxu0
        %v10356 = vadd.f32 0.0, %v10355
        %v10357 = vpop.f32.mrb[0].mxu0
        %10358 = vmatprep.mubr.bf16.mxu0 0
        %10359 = vmatmul.mubr.bf16.gmra.mrb[0].mxu0 %v10295
        %v10360 = vpop.f32.mrb[0].mxu0
        %v10361 = vadd.f32 0.0, %v10360
        %v10362 = vpop.f32.mrb[0].mxu0
        %v10363 = vpop.f32.mrb[0].mxu0
        %v10364 = vadd.f32 0.0, %v10363
        %v10365 = vpop.f32.mrb[0].mxu0
        %10366 = vmatprep.mubr.bf16.mxu0 0
        %10367 = vmatmul.mubr.bf16.gmra.mrb[0].mxu0 %v10298
        %v10368 = vpop.f32.mrb[0].mxu0
        %v10369 = vadd.f32 0.0, %v10368
        %v10370 = vpop.f32.mrb[0].mxu0
        %v10371 = vpop.f32.mrb[0].mxu0
        %v10372 = vadd.f32 0.0, %v10371
        %v10373 = vpop.f32.mrb[0].mxu0
        %10374 = vmatprep.mubr.bf16.mxu0 0
        %10375 = vmatmul.mubr.bf16.gmra.mrb[0].mxu0 %v10301
        %v10376 = vpop.f32.mrb[0].mxu0
        %v10377 = vadd.f32 0.0, %v10376
        %v10378 = vpop.f32.mrb[0].mxu0
        %v10379 = vpop.f32.mrb[0].mxu0
        %v10380 = vadd.f32 0.0, %v10379
        %v10381 = vpop.f32.mrb[0].mxu0
        %10382 = vmatprep.mubr.bf16.mxu0 0
        %10383 = vmatmul.mubr.bf16.gmra.mrb[0].mxu0 %v10304
        %v10384 = vpop.f32.mrb[0].mxu0
        %v10385 = vadd.f32 0.0, %v10384
        %v10386 = vpop.f32.mrb[0].mxu0
        %v10387 = vpop.f32.mrb[0].mxu0
        %v10388 = vadd.f32 0.0, %v10387
        %v10389 = vpop.f32.mrb[0].mxu0
        %10390 = vmatprep.mubr.bf16.mxu0 0
        %10391 = vmatmul.mubr.bf16.gmra.mrb[0].mxu0 %v10307
        %v10392 = vpop.f32.mrb[0].mxu0
        %v10393 = vadd.f32 0.0, %v10392
        %v10394 = vpop.f32.mrb[0].mxu0
        %v10395 = vpop.f32.mrb[0].mxu0
        %v10396 = vadd.f32 0.0, %v10395
        %v10397 = vpop.f32.mrb[0].mxu0
        %10398 = vmatprep.mubr.bf16.mxu0 0
        %10399 = vmatmul.mubr.bf16.gmra.mrb[0].mxu0 %v10310
        %v10400 = vpop.f32.mrb[0].mxu0
        %v10401 = vadd.f32 0.0, %v10400
        %v10402 = vpop.f32.mrb[0].mxu0
        %v10403 = vpop.f32.mrb[0].mxu0
        %v10404 = vadd.f32 0.0, %v10403
        %v10405 = vpop.f32.mrb[0].mxu0
        %10406 = vmatprep.mubr.bf16.mxu0 0
        %10407 = vmatmul.mubr.bf16.gmra.mrb[0].mxu0 %v10313
        %v10408 = vpop.f32.mrb[0].mxu0
        %v10409 = vadd.f32 0.0, %v10408
        %v10410 = vpop.f32.mrb[0].mxu0
        %v10411 = vpop.f32.mrb[0].mxu0
        %v10412 = vadd.f32 0.0, %v10411
        %v10413 = vpop.f32.mrb[0].mxu0
        %10414 = vdwg.mxu0
        %v10415 = vadd.f32 %v10121, %v10353
        %v10416 = vadd.f32 %v10122, %v10356
        %v10417 = vadd.f32 %v10123, %v10361
        %v10418 = vadd.f32 %v10124, %v10364
        %v10419 = vadd.f32 %v10125, %v10369
        %v10420 = vadd.f32 %v10126, %v10372
        %v10421 = vadd.f32 %v10127, %v10377
        %v10422 = vadd.f32 %v10128, %v10380
        %v10423 = vadd.f32 %v10129, %v10385
        %v10424 = vadd.f32 %v10130, %v10388
        %v10425 = vadd.f32 %v10131, %v10393
        %v10426 = vadd.f32 %v10132, %v10396
        %v10427 = vadd.f32 %v10133, %v10401
        %v10428 = vadd.f32 %v10134, %v10404
        %v10429 = vadd.f32 %v10135, %v10409
        %v10430 = vadd.f32 %v10136, %v10412
        %v10431 = vld [vmem:[%s10137] sm:$0xf0]
        %v10432 = vld [vmem:[%s10137 + $0x10] sm:$0xf0]
        %v10433 = vld [vmem:[%s10137 + $0x20] sm:$0xf0]
        %v10434 = vld [vmem:[%s10137 + $0x30] sm:$0xf0]
        %v10435 = vld [vmem:[%s10137 + $0x40] sm:$0xf0]
        %v10436 = vld [vmem:[%s10137 + $0x50] sm:$0xf0]
        %v10437 = vld [vmem:[%s10137 + $0x60] sm:$0xf0]
        %v10438 = vld [vmem:[%s10137 + $0x70] sm:$0xf0]
        %v10455 = vrot.slane %v10431, 4
        %v10456 = vrot.slane %v10139, 4
        %v10457 = vsel %vm6405, %v10455, %v10456
        %v10458 = vrot.slane %v10432, 4
        %v10459 = vrot.slane %v10141, 4
        %v10460 = vsel %vm6405, %v10458, %v10459
        %v10461 = vrot.slane %v10433, 4
        %v10462 = vrot.slane %v10143, 4
        %v10463 = vsel %vm6405, %v10461, %v10462
        %v10464 = vrot.slane %v10434, 4
        %v10465 = vrot.slane %v10145, 4
        %v10466 = vsel %vm6405, %v10464, %v10465
        %v10467 = vrot.slane %v10435, 4
        %v10468 = vrot.slane %v10147, 4
        %v10469 = vsel %vm6405, %v10467, %v10468
        %v10470 = vrot.slane %v10436, 4
        %v10471 = vrot.slane %v10149, 4
        %v10472 = vsel %vm6405, %v10470, %v10471
        %v10473 = vrot.slane %v10437, 4
        %v10474 = vrot.slane %v10151, 4
        %v10475 = vsel %vm6405, %v10473, %v10474
        %v10476 = vrot.slane %v10438, 4
        %v10477 = vrot.slane %v10153, 4
        %v10478 = vsel %vm6405, %v10476, %v10477
        %v10479 = vld [vmem:[%s8080] sm:$0xf]
        %v10481 = vsel %vm377, %v10457, 0
        %v10484 = vsel %vm377, %v10460, 0
        %v10487 = vsel %vm377, %v10463, 0
        %v10490 = vsel %vm377, %v10466, 0
        %v10493 = vsel %vm377, %v10469, 0
        %v10496 = vsel %vm377, %v10472, 0
        %v10499 = vsel %vm377, %v10475, 0
        %v10502 = vsel %vm377, %v10478, 0
        %v10505 = vsel %vm6456, %v10479, 0
        %10507 = vmatprep.subr.bf16.mxu0 0
        %10508 = vmatpush1.bf16.msra.mxu0 %v10505
        %10509 = vmatprep.subr.bf16.mxu0 0
        %10510 = vmatpush1.bf16.msra.mxu0 0
        %10511 = vmatprep.subr.bf16.mxu0 0
        %10512 = vmatpush1.bf16.msra.mxu0 0
        %10513 = vmatprep.subr.bf16.mxu0 0
        %10514 = vmatpush1.bf16.msra.mxu0 0
        %10515 = vmatprep.subr.bf16.mxu0 0
        %10516 = vmatpush1.bf16.msra.mxu0 0
        %10517 = vmatprep.subr.bf16.mxu0 0
        %10518 = vmatpush1.bf16.msra.mxu0 0
        %10519 = vmatprep.subr.bf16.mxu0 0
        %10520 = vmatpush1.bf16.msra.mxu0 0
        %10521 = vmatprep.subr.bf16.mxu0 0
        %10522 = vmatpush1.bf16.msra.mxu0 0
        %10523 = vmatprep.subr.bf16.mxu0 0
        %10524 = vmatpush1.bf16.msra.mxu0 0
        %10525 = vmatprep.subr.bf16.mxu0 0
        %10526 = vmatpush1.bf16.msra.mxu0 0
        %10527 = vmatprep.subr.bf16.mxu0 0
        %10528 = vmatpush1.bf16.msra.mxu0 0
        %10529 = vmatprep.subr.bf16.mxu0 0
        %10530 = vmatpush1.bf16.msra.mxu0 0
        %10531 = vmatprep.subr.bf16.mxu0 0
        %10532 = vmatpush1.bf16.msra.mxu0 0
        %10533 = vmatprep.subr.bf16.mxu0 0
        %10534 = vmatpush1.bf16.msra.mxu0 0
        %10535 = vmatprep.subr.bf16.mxu0 0
        %10536 = vmatpush1.bf16.msra.mxu0 0
        %10537 = vmatprep.subr.bf16.mxu0 0
        %10538 = vmatpush1.bf16.msra.mxu0 0
        %10539 = vmatprep.mubr.bf16.mxu0 0
        %10540 = vmatmul.mubr.bf16.gmra.mrb[0].mxu0 %v10481
        %v10541 = vpop.f32.mrb[0].mxu0
        %v10542 = vadd.f32 0.0, %v10541
        %v10543 = vpop.f32.mrb[0].mxu0
        %v10544 = vpop.f32.mrb[0].mxu0
        %v10545 = vadd.f32 0.0, %v10544
        %v10546 = vpop.f32.mrb[0].mxu0
        %10547 = vmatprep.mubr.bf16.mxu0 0
        %10548 = vmatmul.mubr.bf16.gmra.mrb[0].mxu0 %v10484
        %v10549 = vpop.f32.mrb[0].mxu0
        %v10550 = vadd.f32 0.0, %v10549
        %v10551 = vpop.f32.mrb[0].mxu0
        %v10552 = vpop.f32.mrb[0].mxu0
        %v10553 = vadd.f32 0.0, %v10552
        %v10554 = vpop.f32.mrb[0].mxu0
        %10555 = vmatprep.mubr.bf16.mxu0 0
        %10556 = vmatmul.mubr.bf16.gmra.mrb[0].mxu0 %v10487
        %v10557 = vpop.f32.mrb[0].mxu0
        %v10558 = vadd.f32 0.0, %v10557
        %v10559 = vpop.f32.mrb[0].mxu0
        %v10560 = vpop.f32.mrb[0].mxu0
        %v10561 = vadd.f32 0.0, %v10560
        %v10562 = vpop.f32.mrb[0].mxu0
        %10563 = vmatprep.mubr.bf16.mxu0 0
        %10564 = vmatmul.mubr.bf16.gmra.mrb[0].mxu0 %v10490
        %v10565 = vpop.f32.mrb[0].mxu0
        %v10566 = vadd.f32 0.0, %v10565
        %v10567 = vpop.f32.mrb[0].mxu0
        %v10568 = vpop.f32.mrb[0].mxu0
        %v10569 = vadd.f32 0.0, %v10568
        %v10570 = vpop.f32.mrb[0].mxu0
        %10571 = vmatprep.mubr.bf16.mxu0 0
        %10572 = vmatmul.mubr.bf16.gmra.mrb[0].mxu0 %v10493
        %v10573 = vpop.f32.mrb[0].mxu0
        %v10574 = vadd.f32 0.0, %v10573
        %v10575 = vpop.f32.mrb[0].mxu0
        %v10576 = vpop.f32.mrb[0].mxu0
        %v10577 = vadd.f32 0.0, %v10576
        %v10578 = vpop.f32.mrb[0].mxu0
        %10579 = vmatprep.mubr.bf16.mxu0 0
        %10580 = vmatmul.mubr.bf16.gmra.mrb[0].mxu0 %v10496
        %v10581 = vpop.f32.mrb[0].mxu0
        %v10582 = vadd.f32 0.0, %v10581
        %v10583 = vpop.f32.mrb[0].mxu0
        %v10584 = vpop.f32.mrb[0].mxu0
        %v10585 = vadd.f32 0.0, %v10584
        %v10586 = vpop.f32.mrb[0].mxu0
        %10587 = vmatprep.mubr.bf16.mxu0 0
        %10588 = vmatmul.mubr.bf16.gmra.mrb[0].mxu0 %v10499
        %v10589 = vpop.f32.mrb[0].mxu0
        %v10590 = vadd.f32 0.0, %v10589
        %v10591 = vpop.f32.mrb[0].mxu0
        %v10592 = vpop.f32.mrb[0].mxu0
        %v10593 = vadd.f32 0.0, %v10592
        %v10594 = vpop.f32.mrb[0].mxu0
        %10595 = vmatprep.mubr.bf16.mxu0 0
        %10596 = vmatmul.mubr.bf16.gmra.mrb[0].mxu0 %v10502
        %v10597 = vpop.f32.mrb[0].mxu0
        %v10598 = vadd.f32 0.0, %v10597
        %v10599 = vpop.f32.mrb[0].mxu0
        %v10600 = vpop.f32.mrb[0].mxu0
        %v10601 = vadd.f32 0.0, %v10600
        %v10602 = vpop.f32.mrb[0].mxu0
        %10603 = vdwg.mxu0
        %v10604 = vadd.f32 %v10415, %v10542
        %v10605 = vadd.f32 %v10416, %v10545
        %v10606 = vadd.f32 %v10417, %v10550
        %v10607 = vadd.f32 %v10418, %v10553
        %v10608 = vadd.f32 %v10419, %v10558
        %v10609 = vadd.f32 %v10420, %v10561
        %v10610 = vadd.f32 %v10421, %v10566
        %v10611 = vadd.f32 %v10422, %v10569
        %v10612 = vadd.f32 %v10423, %v10574
        %v10613 = vadd.f32 %v10424, %v10577
        %v10614 = vadd.f32 %v10425, %v10582
        %v10615 = vadd.f32 %v10426, %v10585
        %v10616 = vadd.f32 %v10427, %v10590
        %v10617 = vadd.f32 %v10428, %v10593
        %v10618 = vadd.f32 %v10429, %v10598
        %v10619 = vadd.f32 %v10430, %v10601
        %v10620 = vld [vmem:[%s10137 + $0x8] sm:$0x1f]
        %v10621 = vld [vmem:[%s10137 + $0x18] sm:$0x1f]
        %v10622 = vld [vmem:[%s10137 + $0x28] sm:$0x1f]
        %v10623 = vld [vmem:[%s10137 + $0x38] sm:$0x1f]
        %v10624 = vld [vmem:[%s10137 + $0x48] sm:$0x1f]
        %v10625 = vld [vmem:[%s10137 + $0x58] sm:$0x1f]
        %v10626 = vld [vmem:[%s10137 + $0x68] sm:$0x1f]
        %v10627 = vld [vmem:[%s10137 + $0x78] sm:$0x1f]
        %v10629 = vshrl.u32 %v10431, 16
        %v10631 = vrot.slane %v10629, 4
        %v10632 = vshll.u32 %v10431, 16
        %v10634 = vrot.slane %v10632, 5
        %v10635 = vor.u32 %v10631, %v10634
        %v10637 = vshrl.u32 %v10620, 16
        %v10639 = vrot.slane %v10637, 4
        %v10640 = vshll.u32 %v10620, 16
        %v10642 = vrot.slane %v10640, 5
        %v10643 = vor.u32 %v10639, %v10642
        %v10644 = vsel %vm1030, %v10635, %v10643
        %v10646 = vshrl.u32 %v10432, 16
        %v10648 = vrot.slane %v10646, 4
        %v10649 = vshll.u32 %v10432, 16
        %v10651 = vrot.slane %v10649, 5
        %v10652 = vor.u32 %v10648, %v10651
        %v10654 = vshrl.u32 %v10621, 16
        %v10656 = vrot.slane %v10654, 4
        %v10657 = vshll.u32 %v10621, 16
        %v10659 = vrot.slane %v10657, 5
        %v10660 = vor.u32 %v10656, %v10659
        %v10661 = vsel %vm1030, %v10652, %v10660
        %v10663 = vshrl.u32 %v10433, 16
        %v10665 = vrot.slane %v10663, 4
        %v10666 = vshll.u32 %v10433, 16
        %v10668 = vrot.slane %v10666, 5
        %v10669 = vor.u32 %v10665, %v10668
        %v10671 = vshrl.u32 %v10622, 16
        %v10673 = vrot.slane %v10671, 4
        %v10674 = vshll.u32 %v10622, 16
        %v10676 = vrot.slane %v10674, 5
        %v10677 = vor.u32 %v10673, %v10676
        %v10678 = vsel %vm1030, %v10669, %v10677
        %v10680 = vshrl.u32 %v10434, 16
        %v10682 = vrot.slane %v10680, 4
        %v10683 = vshll.u32 %v10434, 16
        %v10685 = vrot.slane %v10683, 5
        %v10686 = vor.u32 %v10682, %v10685
        %v10688 = vshrl.u32 %v10623, 16
        %v10690 = vrot.slane %v10688, 4
        %v10691 = vshll.u32 %v10623, 16
        %v10693 = vrot.slane %v10691, 5
        %v10694 = vor.u32 %v10690, %v10693
        %v10695 = vsel %vm1030, %v10686, %v10694
        %v10697 = vshrl.u32 %v10435, 16
        %v10699 = vrot.slane %v10697, 4
        %v10700 = vshll.u32 %v10435, 16
        %v10702 = vrot.slane %v10700, 5
        %v10703 = vor.u32 %v10699, %v10702
        %v10705 = vshrl.u32 %v10624, 16
        %v10707 = vrot.slane %v10705, 4
        %v10708 = vshll.u32 %v10624, 16
        %v10710 = vrot.slane %v10708, 5
        %v10711 = vor.u32 %v10707, %v10710
        %v10712 = vsel %vm1030, %v10703, %v10711
        %v10714 = vshrl.u32 %v10436, 16
        %v10716 = vrot.slane %v10714, 4
        %v10717 = vshll.u32 %v10436, 16
        %v10719 = vrot.slane %v10717, 5
        %v10720 = vor.u32 %v10716, %v10719
        %v10722 = vshrl.u32 %v10625, 16
        %v10724 = vrot.slane %v10722, 4
        %v10725 = vshll.u32 %v10625, 16
        %v10727 = vrot.slane %v10725, 5
        %v10728 = vor.u32 %v10724, %v10727
        %v10729 = vsel %vm1030, %v10720, %v10728
        %v10731 = vshrl.u32 %v10437, 16
        %v10733 = vrot.slane %v10731, 4
        %v10734 = vshll.u32 %v10437, 16
        %v10736 = vrot.slane %v10734, 5
        %v10737 = vor.u32 %v10733, %v10736
        %v10739 = vshrl.u32 %v10626, 16
        %v10741 = vrot.slane %v10739, 4
        %v10742 = vshll.u32 %v10626, 16
        %v10744 = vrot.slane %v10742, 5
        %v10745 = vor.u32 %v10741, %v10744
        %v10746 = vsel %vm1030, %v10737, %v10745
        %v10748 = vshrl.u32 %v10438, 16
        %v10750 = vrot.slane %v10748, 4
        %v10751 = vshll.u32 %v10438, 16
        %v10753 = vrot.slane %v10751, 5
        %v10754 = vor.u32 %v10750, %v10753
        %v10756 = vshrl.u32 %v10627, 16
        %v10758 = vrot.slane %v10756, 4
        %v10759 = vshll.u32 %v10627, 16
        %v10761 = vrot.slane %v10759, 5
        %v10762 = vor.u32 %v10758, %v10761
        %v10763 = vsel %vm1030, %v10754, %v10762
        %v10764 = vld [vmem:[%s8366] sm:$0xf]
        %v10766 = vsel %vm377, %v10644, 0
        %v10769 = vsel %vm377, %v10661, 0
        %v10772 = vsel %vm377, %v10678, 0
        %v10775 = vsel %vm377, %v10695, 0
        %v10778 = vsel %vm377, %v10712, 0
        %v10781 = vsel %vm377, %v10729, 0
        %v10784 = vsel %vm377, %v10746, 0
        %v10787 = vsel %vm377, %v10763, 0
        %v10790 = vsel %vm6456, %v10764, 0
        %10792 = vmatprep.subr.bf16.mxu0 0
        %10793 = vmatpush1.bf16.msra.mxu0 %v10790
        %10794 = vmatprep.subr.bf16.mxu0 0
        %10795 = vmatpush1.bf16.msra.mxu0 0
        %10796 = vmatprep.subr.bf16.mxu0 0
        %10797 = vmatpush1.bf16.msra.mxu0 0
        %10798 = vmatprep.subr.bf16.mxu0 0
        %10799 = vmatpush1.bf16.msra.mxu0 0
        %10800 = vmatprep.subr.bf16.mxu0 0
        %10801 = vmatpush1.bf16.msra.mxu0 0
        %10802 = vmatprep.subr.bf16.mxu0 0
        %10803 = vmatpush1.bf16.msra.mxu0 0
        %10804 = vmatprep.subr.bf16.mxu0 0
        %10805 = vmatpush1.bf16.msra.mxu0 0
        %10806 = vmatprep.subr.bf16.mxu0 0
        %10807 = vmatpush1.bf16.msra.mxu0 0
        %10808 = vmatprep.subr.bf16.mxu0 0
        %10809 = vmatpush1.bf16.msra.mxu0 0
        %10810 = vmatprep.subr.bf16.mxu0 0
        %10811 = vmatpush1.bf16.msra.mxu0 0
        %10812 = vmatprep.subr.bf16.mxu0 0
        %10813 = vmatpush1.bf16.msra.mxu0 0
        %10814 = vmatprep.subr.bf16.mxu0 0
        %10815 = vmatpush1.bf16.msra.mxu0 0
        %10816 = vmatprep.subr.bf16.mxu0 0
        %10817 = vmatpush1.bf16.msra.mxu0 0
        %10818 = vmatprep.subr.bf16.mxu0 0
        %10819 = vmatpush1.bf16.msra.mxu0 0
        %10820 = vmatprep.subr.bf16.mxu0 0
        %10821 = vmatpush1.bf16.msra.mxu0 0
        %10822 = vmatprep.subr.bf16.mxu0 0
        %10823 = vmatpush1.bf16.msra.mxu0 0
        %10824 = vmatprep.mubr.bf16.mxu0 0
        %10825 = vmatmul.mubr.bf16.gmra.mrb[0].mxu0 %v10766
        %v10826 = vpop.f32.mrb[0].mxu0
        %v10827 = vadd.f32 0.0, %v10826
        %v10828 = vpop.f32.mrb[0].mxu0
        %v10829 = vpop.f32.mrb[0].mxu0
        %v10830 = vadd.f32 0.0, %v10829
        %v10831 = vpop.f32.mrb[0].mxu0
        %10832 = vmatprep.mubr.bf16.mxu0 0
        %10833 = vmatmul.mubr.bf16.gmra.mrb[0].mxu0 %v10769
        %v10834 = vpop.f32.mrb[0].mxu0
        %v10835 = vadd.f32 0.0, %v10834
        %v10836 = vpop.f32.mrb[0].mxu0
        %v10837 = vpop.f32.mrb[0].mxu0
        %v10838 = vadd.f32 0.0, %v10837
        %v10839 = vpop.f32.mrb[0].mxu0
        %10840 = vmatprep.mubr.bf16.mxu0 0
        %10841 = vmatmul.mubr.bf16.gmra.mrb[0].mxu0 %v10772
        %v10842 = vpop.f32.mrb[0].mxu0
        %v10843 = vadd.f32 0.0, %v10842
        %v10844 = vpop.f32.mrb[0].mxu0
        %v10845 = vpop.f32.mrb[0].mxu0
        %v10846 = vadd.f32 0.0, %v10845
        %v10847 = vpop.f32.mrb[0].mxu0
        %10848 = vmatprep.mubr.bf16.mxu0 0
        %10849 = vmatmul.mubr.bf16.gmra.mrb[0].mxu0 %v10775
        %v10850 = vpop.f32.mrb[0].mxu0
        %v10851 = vadd.f32 0.0, %v10850
        %v10852 = vpop.f32.mrb[0].mxu0
        %v10853 = vpop.f32.mrb[0].mxu0
        %v10854 = vadd.f32 0.0, %v10853
        %v10855 = vpop.f32.mrb[0].mxu0
        %10856 = vmatprep.mubr.bf16.mxu0 0
        %10857 = vmatmul.mubr.bf16.gmra.mrb[0].mxu0 %v10778
        %v10858 = vpop.f32.mrb[0].mxu0
        %v10859 = vadd.f32 0.0, %v10858
        %v10860 = vpop.f32.mrb[0].mxu0
        %v10861 = vpop.f32.mrb[0].mxu0
        %v10862 = vadd.f32 0.0, %v10861
        %v10863 = vpop.f32.mrb[0].mxu0
        %10864 = vmatprep.mubr.bf16.mxu0 0
        %10865 = vmatmul.mubr.bf16.gmra.mrb[0].mxu0 %v10781
        %v10866 = vpop.f32.mrb[0].mxu0
        %v10867 = vadd.f32 0.0, %v10866
        %v10868 = vpop.f32.mrb[0].mxu0
        %v10869 = vpop.f32.mrb[0].mxu0
        %v10870 = vadd.f32 0.0, %v10869
        %v10871 = vpop.f32.mrb[0].mxu0
        %10872 = vmatprep.mubr.bf16.mxu0 0
        %10873 = vmatmul.mubr.bf16.gmra.mrb[0].mxu0 %v10784
        %v10874 = vpop.f32.mrb[0].mxu0
        %v10875 = vadd.f32 0.0, %v10874
        %v10876 = vpop.f32.mrb[0].mxu0
        %v10877 = vpop.f32.mrb[0].mxu0
        %v10878 = vadd.f32 0.0, %v10877
        %v10879 = vpop.f32.mrb[0].mxu0
        %10880 = vmatprep.mubr.bf16.mxu0 0
        %10881 = vmatmul.mubr.bf16.gmra.mrb[0].mxu0 %v10787
        %v10882 = vpop.f32.mrb[0].mxu0
        %v10883 = vadd.f32 0.0, %v10882
        %v10884 = vpop.f32.mrb[0].mxu0
        %v10885 = vpop.f32.mrb[0].mxu0
        %v10886 = vadd.f32 0.0, %v10885
        %v10887 = vpop.f32.mrb[0].mxu0
        %10888 = vdwg.mxu0
        %v10889 = vadd.f32 %v10604, %v10827
        %v10890 = vadd.f32 %v10605, %v10830
        %v10891 = vadd.f32 %v10606, %v10835
        %v10892 = vadd.f32 %v10607, %v10838
        %v10893 = vadd.f32 %v10608, %v10843
        %v10894 = vadd.f32 %v10609, %v10846
        %v10895 = vadd.f32 %v10610, %v10851
        %v10896 = vadd.f32 %v10611, %v10854
        %v10897 = vadd.f32 %v10612, %v10859
        %v10898 = vadd.f32 %v10613, %v10862
        %v10899 = vadd.f32 %v10614, %v10867
        %v10900 = vadd.f32 %v10615, %v10870
        %v10901 = vadd.f32 %v10616, %v10875
        %v10902 = vadd.f32 %v10617, %v10878
        %v10903 = vadd.f32 %v10618, %v10883
        %v10904 = vadd.f32 %v10619, %v10886
        %v10905 = vld [vmem:[#allocation12] sm:$0x1]
        %v10907 = vlaneseq
        %v10908 = vshrl.u32 %v10907, 7
        %v10909 = vsub.s32 0, %v10908
        %v10910 = vrot.slane %v10905, %v10909
        %v10912 = vmul.f32 %v10889, %v10910
        %v10913 = vmul.f32 %v10890, %v10910
        %v10914 = vmul.f32 %v10891, %v10910
        %v10915 = vmul.f32 %v10892, %v10910
        %v10916 = vmul.f32 %v10893, %v10910
        %v10917 = vmul.f32 %v10894, %v10910
        %v10918 = vmul.f32 %v10895, %v10910
        %v10919 = vmul.f32 %v10896, %v10910
        %v10920 = vmul.f32 %v10897, %v10910
        %v10921 = vmul.f32 %v10898, %v10910
        %v10922 = vmul.f32 %v10899, %v10910
        %v10923 = vmul.f32 %v10900, %v10910
        %v10924 = vmul.f32 %v10901, %v10910
        %v10925 = vmul.f32 %v10902, %v10910
        %v10926 = vmul.f32 %v10903, %v10910
        %v10927 = vmul.f32 %v10904, %v10910
        %v10928 = vld [vmem:[#allocation14] sm:$0x1]
        %v10930 = vlaneseq
        %v10931 = vshrl.u32 %v10930, 7
        %v10932 = vsub.s32 0, %v10931
        %v10933 = vrot.slane %v10928, %v10932
        %v10935 = vadd.f32 %v10912, %v10933
        %v10936 = vadd.f32 %v10913, %v10933
        %v10937 = vadd.f32 %v10914, %v10933
        %v10938 = vadd.f32 %v10915, %v10933
        %v10939 = vadd.f32 %v10916, %v10933
        %v10940 = vadd.f32 %v10917, %v10933
        %v10941 = vadd.f32 %v10918, %v10933
        %v10942 = vadd.f32 %v10919, %v10933
        %v10943 = vadd.f32 %v10920, %v10933
        %v10944 = vadd.f32 %v10921, %v10933
        %v10945 = vadd.f32 %v10922, %v10933
        %v10946 = vadd.f32 %v10923, %v10933
        %v10947 = vadd.f32 %v10924, %v10933
        %v10948 = vadd.f32 %v10925, %v10933
        %v10949 = vadd.f32 %v10926, %v10933
        %v10950 = vadd.f32 %v10927, %v10933
        %v10951 = vld [vmem:[%s4261 + $0x4] sm:$0xf]
        %v10952 = vld [vmem:[%s4261 + $0x8] sm:$0xf]
        %v10953 = vld [vmem:[%s4261 + $0x14] sm:$0xf]
        %v10954 = vld [vmem:[%s4261 + $0x18] sm:$0xf]
        %v10955 = vld [vmem:[%s4261 + $0x24] sm:$0xf]
        %v10956 = vld [vmem:[%s4261 + $0x28] sm:$0xf]
        %v10957 = vld [vmem:[%s4261 + $0x34] sm:$0xf]
        %v10958 = vld [vmem:[%s4261 + $0x38] sm:$0xf]
        %v10959 = vld [vmem:[%s4261 + $0x44] sm:$0xf]
        %v10960 = vld [vmem:[%s4261 + $0x48] sm:$0xf]
        %v10961 = vld [vmem:[%s4261 + $0x54] sm:$0xf]
        %v10962 = vld [vmem:[%s4261 + $0x58] sm:$0xf]
        %v10963 = vld [vmem:[%s4261 + $0x64] sm:$0xf]
        %v10964 = vld [vmem:[%s4261 + $0x68] sm:$0xf]
        %v10965 = vld [vmem:[%s4261 + $0x74] sm:$0xf]
        %v10966 = vld [vmem:[%s4261 + $0x78] sm:$0xf]
        %v10967 = vunpack.c.l.bf16 %v10951
        %v10968 = vunpack.c.l.bf16 %v10952
        %v10969 = vunpack.c.l.bf16 %v10953
        %v10970 = vunpack.c.l.bf16 %v10954
        %v10971 = vunpack.c.l.bf16 %v10955
        %v10972 = vunpack.c.l.bf16 %v10956
        %v10973 = vunpack.c.l.bf16 %v10957
        %v10974 = vunpack.c.l.bf16 %v10958
        %v10975 = vunpack.c.l.bf16 %v10959
        %v10976 = vunpack.c.l.bf16 %v10960
        %v10977 = vunpack.c.l.bf16 %v10961
        %v10978 = vunpack.c.l.bf16 %v10962
        %v10979 = vunpack.c.l.bf16 %v10963
        %v10980 = vunpack.c.l.bf16 %v10964
        %v10981 = vunpack.c.l.bf16 %v10965
        %v10982 = vunpack.c.l.bf16 %v10966
        %v10983 = vadd.f32 %v10967, %v10935
        %v10984 = vadd.f32 %v10968, %v10936
        %v10985 = vadd.f32 %v10969, %v10937
        %v10986 = vadd.f32 %v10970, %v10938
        %v10987 = vadd.f32 %v10971, %v10939
        %v10988 = vadd.f32 %v10972, %v10940
        %v10989 = vadd.f32 %v10973, %v10941
        %v10990 = vadd.f32 %v10974, %v10942
        %v10991 = vadd.f32 %v10975, %v10943
        %v10992 = vadd.f32 %v10976, %v10944
        %v10993 = vadd.f32 %v10977, %v10945
        %v10994 = vadd.f32 %v10978, %v10946
        %v10995 = vadd.f32 %v10979, %v10947
        %v10996 = vadd.f32 %v10980, %v10948
        %v10997 = vadd.f32 %v10981, %v10949
        %v10998 = vadd.f32 %v10982, %v10950
        %v10999 = vmax.f32 %v10983, 0.0
        %v11000 = vmax.f32 %v10984, 0.0
        %v11001 = vmax.f32 %v10985, 0.0
        %v11002 = vmax.f32 %v10986, 0.0
        %v11003 = vmax.f32 %v10987, 0.0
        %v11004 = vmax.f32 %v10988, 0.0
        %v11005 = vmax.f32 %v10989, 0.0
        %v11006 = vmax.f32 %v10990, 0.0
        %v11007 = vmax.f32 %v10991, 0.0
        %v11008 = vmax.f32 %v10992, 0.0
        %v11009 = vmax.f32 %v10993, 0.0
        %v11010 = vmax.f32 %v10994, 0.0
        %v11011 = vmax.f32 %v10995, 0.0
        %v11012 = vmax.f32 %v10996, 0.0
        %v11013 = vmax.f32 %v10997, 0.0
        %v11014 = vmax.f32 %v10998, 0.0
        %s11015 = scalar_lea.vmem %s375, 128 [#allocation15]
        %11016 = vst.msk [vmem:[%s11015] sm:$0xff] %vm732, %v10999
        %11017 = vst.msk [vmem:[%s11015 + $0x8] sm:$0xff] %vm732, %v11000
        %11018 = vst.msk [vmem:[%s11015 + $0x10] sm:$0xff] %vm732, %v11001
        %11019 = vst.msk [vmem:[%s11015 + $0x18] sm:$0xff] %vm732, %v11002
        %11020 = vst.msk [vmem:[%s11015 + $0x20] sm:$0xff] %vm732, %v11003
        %11021 = vst.msk [vmem:[%s11015 + $0x28] sm:$0xff] %vm732, %v11004
        %11022 = vst.msk [vmem:[%s11015 + $0x30] sm:$0xff] %vm732, %v11005
        %11023 = vst.msk [vmem:[%s11015 + $0x38] sm:$0xff] %vm732, %v11006
        %11024 = vst.msk [vmem:[%s11015 + $0x40] sm:$0xff] %vm732, %v11007
        %11025 = vst.msk [vmem:[%s11015 + $0x48] sm:$0xff] %vm732, %v11008
        %11026 = vst.msk [vmem:[%s11015 + $0x50] sm:$0xff] %vm732, %v11009
        %11027 = vst.msk [vmem:[%s11015 + $0x58] sm:$0xff] %vm732, %v11010
        %11028 = vst.msk [vmem:[%s11015 + $0x60] sm:$0xff] %vm732, %v11011
        %11029 = vst.msk [vmem:[%s11015 + $0x68] sm:$0xff] %vm732, %v11012
        %11030 = vst.msk [vmem:[%s11015 + $0x70] sm:$0xff] %vm732, %v11013
        %11031 = vst.msk [vmem:[%s11015 + $0x78] sm:$0xff] %vm732, %v11014
        %s11032 = sand.u32 %s187, 1
        %s11033 = scalar_lea.sflag [#allocation5], %s11032
        %s11034 = sand.u32 %s187, 1
        %s11035 = smul.addr %s11034, 256
        %s11036 = scalar_lea.vmem [#allocation15], %s11035
        // Predicated region
        $region77: #{resblock_pallas.1} parent=47 // pred_check
          %p11037 = pneg %p197
        $region78: #{resblock_pallas.1} parent=47 // pred_check_branch
          %11039 = sbr.rel (%p11037) target = $region80
        $region79: #{resblock_pallas.1} parent=47 // pred_region
          %s11041 = ssub.s32 4096, 4096
          %11042 = vsyncadd %s11033, %s11041
          %s11043 = smul.addr %s27, 32
          %s11044 = smul.addr %s11043, 128
          %s11045 = scalar_lea.hbm %s7, %s11044
          %s11046 = sshll.u32 %s11036, 4
          %s11047 = int_to_ptr.vmem [resolvable:$true] %s11046
          %11052 = dma.vmem_to_hbm [thread:$0]  %s11047, 4096, %s11045, %s11033, 128, 128, 8
        $region80: #{resblock_pallas.1} parent=47 // pred_fallthru
          _
      $region48: #{resblock_pallas.1} parent=5 // pred_fallthru
        _
      %p11053 = scmp.le.s32.totalorder 2, %s22
      // Predicated region
      $region81: #{resblock_pallas.1} parent=5 // pred_check
        %p11054 = pneg %p11053
      $region82: #{resblock_pallas.1} parent=5 // pred_check_branch
        %11056 = sbr.rel (%p11054) target = $region84
      $region83: #{resblock_pallas.1} parent=5 // pred_region
        %s11057 = ssub.s32 %s22, 2
        // Predicated region
        $region85: #{resblock_pallas.1} parent=83 // pred_check
          %p11058 = pneg %p203
        $region86: #{resblock_pallas.1} parent=83 // pred_check_branch
          %11060 = sbr.rel (%p11058) target = $region88
        $region87: #{resblock_pallas.1} parent=83 // pred_region
          %s11061 = sand.u32 %s188, 1
          %s11062 = scalar_lea.sflag [#allocation5], %s11061
          %s11063 = sand.u32 %s188, 1
          %s11064 = smul.addr %s11063, 256
          %s11065 = scalar_lea.vmem [#allocation15], %s11064
          %11066 = dma.done %s11062, 4096
        $region88: #{resblock_pallas.1} parent=83 // pred_fallthru
          _
      $region84: #{resblock_pallas.1} parent=5 // pred_fallthru
        _
    $region6: #{resblock_pallas.1} parent=1 // loop_footer
      %s26 = sadd.s32 1, %s22
    $region7: #{resblock_pallas.1} parent=1 // loop_footer_branch
      %21 = sbr.rel target = $region3
    $region8: #{resblock_pallas.1} parent=1 // loop_exit
      _
    %11067 = vsyncpa [#allocation4], 1
    %s11068 = scalar_lea.sflag [#allocation4], 1
    %11069 = vsyncpa %s11068, 1
    %11070 = vsyncpa [#allocation7], 1
    %11071 = vsyncpa [#allocation10], 1
    %11072 = vsyncpa [#allocation13], 1
    %11073 = vsyncpa [#allocation5], 1
    %s11074 = scalar_lea.sflag [#allocation5], 1
    %11075 = vsyncpa %s11074, 1

</llo_original>
